<compile_context>
chip_gen: v7x
topology: tpu7x:2x2x1
jax: 0.10.0
libtpu: 0.0.40
codegen_flags: <defaults>
</compile_context>

<pallas_src>
import functools

import jax
import jax.numpy as jnp
import numpy as np
from jax.experimental import pallas as pl
from jax.experimental.pallas import tpu as pltpu


def _leaky_relu(v):
    return jnp.where(v > 0, v, 0.1 * v)


# -----------------------------------------------------------------------------
# Fused whole-network kernel.
# -----------------------------------------------------------------------------
def _fused_depth_encoder_kernel(p0_ref, w0_ref, b0_ref,
                                w1_ref, b1_ref, w2_ref, b2_ref,
                                w3_ref, b3_ref, w4_ref, b4_ref,
                                out_ref, *pad_bufs, dims):
    """Whole DepthEncoder forward with every intermediate resident in VMEM.

    p0_ref : (B*H1*W1, 16)        im2col patches of the 1-channel input (layer 0)
    wN_ref : (16*CinN, CoutN)     conv weights as matmul matrices, rows ordered (kh, kw, cin)
    bN_ref : (1, CoutN)           biases
    out_ref: (B, Cout4)           pooled output
    pad_bufs[l]: (B, H+2, W+2, C) zero-padded input buffer of layer l+1 (VMEM scratch)
    dims   : static ((hin, win, cin), ...) for layers 1..4
    """
    batch = out_ref.shape[0]

    # ---- layer 0: Conv2d(1, 16) as a plain matmul on the prebuilt patches ----
    y = jnp.dot(p0_ref[...], w0_ref[...], preferred_element_type=jnp.float32)
    y = _leaky_relu(y + b0_ref[...])                          # (B*H1*W1, 16)

    layer_refs = ((w1_ref, b1_ref), (w2_ref, b2_ref),
                  (w3_ref, b3_ref), (w4_ref, b4_ref))

    # ---- layers 1..4: in-VMEM im2col + matmul + bias + LeakyReLU -------------
    for (hin, win, cin), (w_ref, b_ref), buf in zip(dims, layer_refs, pad_bufs):
        ho, wo = hin // 2, win // 2
        # Scatter the previous output into a zero-padded (pad=1) VMEM buffer.
        buf[...] = jnp.zeros_like(buf)
        buf[:, pl.ds(1, hin), pl.ds(1, win), :] = y.reshape(batch, hin, win, cin)
        # im2col: the 16 (kh, kw) taps of the k=4 / s=2 conv are strided windows.
        taps = []
        for i in range(4):
            for j in range(4):
                taps.append(buf[:, pl.ds(i, ho, 2), pl.ds(j, wo, 2), :])
        patches = jnp.concatenate(taps, axis=-1)              # (B, ho, wo, 16*cin)
        patches = patches.reshape(batch * ho * wo, 16 * cin)
        y = jnp.dot(patches, w_ref[...], preferred_element_type=jnp.float32)
        y = _leaky_relu(y + b_ref[...])                        # (B*ho*wo, cout)

    # ---- fused AdaptiveAvgPool2d((1, 1)) --------------------------------------
    m_final, cout = y.shape
    if m_final != batch:          # only taken for inputs larger than 32x32
        y = jnp.mean(y.reshape(batch, m_final // batch, cout), axis=1)
    out_ref[...] = y.astype(out_ref.dtype)                     # (B, cout)


# -----------------------------------------------------------------------------
# im2col for Conv2d(k=4, s=2, p=1) in NHWC (XLA; layer 0 of the fused path and
# the fallback path).  Patch column order is (kh, kw, cin) to match the weights.
# -----------------------------------------------------------------------------
def _im2col_nhwc(x, k=4, s=2, p=1):
    n, h, w, c = x.shape
    xp = jnp.pad(x, ((0, 0), (p, p), (p, p), (0, 0)))
    ho = (h + 2 * p - k) // s + 1
    wo = (w + 2 * p - k) // s + 1
    cols = []
    for i in range(k):
        for j in range(k):
            cols.append(xp[:, i:i + s * (ho - 1) + 1:s,
                           j:j + s * (wo - 1) + 1:s, :])
    patches = jnp.concatenate(cols, axis=-1)                   # (n, ho, wo, k*k*c)
    return patches.reshape(n * ho * wo, k * k * c), ho, wo


# -----------------------------------------------------------------------------
# Parameter init: torch-layout weights for the reference + matmul-layout weights
# (K = 16*Cin real channels, no padding) for the Pallas paths.
# -----------------------------------------------------------------------------
def init_depth_encoder_params(key, in_ch=1, out_dim=256, scale=0.05):
    chans = [in_ch, 16, 32, 64, 128, out_dim]
    keys = jax.random.split(key, 2 * 5)
    ref_layers, w_mats, biases = [], [], []
    for i in range(5):
        cin, cout = chans[i], chans[i + 1]
        w = jax.random.normal(keys[2 * i], (cout, cin, 4, 4), jnp.float32) * scale
        b = jax.random.normal(keys[2 * i + 1], (cout,), jnp.float32) * scale
        ref_layers.append((w, b))
        # (kh, kw, cin, cout) row order matches the kernel's tap/concat order.
        w_mats.append(w.transpose(2, 3, 1, 0).reshape(16 * cin, cout))
        biases.append(b.reshape(1, cout))
    return {"w_mats": w_mats, "biases": biases}, ref_layers


# -----------------------------------------------------------------------------
# Fused forward.  x: (B, 1, H, W) NCHW f32 (PyTorch layout), H % 32 == W % 32 == 0.
# Returns (B, out_dim, 1, 1) f32, matching nn.AdaptiveAvgPool2d((1,1)).
# -----------------------------------------------------------------------------
def depth_encoder_forward_fused(params, x):
    w_mats, biases = params["w_mats"], params["biases"]
    n, _, h, w = x.shape
    assert h % 32 == 0 and w % 32 == 0, "spatial dims must be multiples of 32"
    out_dim = w_mats[-1].shape[1]

    x_nhwc = jnp.transpose(x, (0, 2, 3, 1))                    # (B, H, W, 1)
    patches0, h1, w1 = _im2col_nhwc(x_nhwc)                    # (B*H1*W1, 16)

    # Static (H, W, Cin) of the inputs to layers 1..4.
    dims, sh, sw = [], h1, w1
    for li in range(1, 5):
        dims.append((sh, sw, w_mats[li].shape[0] // 16))
        sh, sw = sh // 2, sw // 2
    dims = tuple(dims)

    scratch_shapes = [pltpu.VMEM((n, d[0] + 2, d[1] + 2, d[2]), jnp.float32)
                      for d in dims]

    out = pl.pallas_call(
        functools.partial(_fused_depth_encoder_kernel, dims=dims),
        out_shape=jax.ShapeDtypeStruct((n, out_dim), jnp.float32),
        scratch_shapes=scratch_shapes,
    )(patches0,
      w_mats[0], biases[0], w_mats[1], biases[1], w_mats[2], biases[2],
      w_mats[3], biases[3], w_mats[4], biases[4])
    return out[:, :, None, None]                               # (B, out_dim, 1, 1)


# -----------------------------------------------------------------------------
# Robustness fallback only: one Pallas matmul(+bias+LeakyReLU) kernel per layer
# (no channel padding).  Used solely if the fused kernel fails to lower here.
# -----------------------------------------------------------------------------
def _matmul_bias_lrelu_kernel(x_ref, w_ref, b_ref, o_ref):
    acc = jnp.dot(x_ref[...], w_ref[...], preferred_element_type=jnp.float32)
    acc = acc + b_ref[...]
    o_ref[...] = jnp.where(acc > 0, acc, 0.1 * acc).astype(o_ref.dtype)


def _matmul_bias_lrelu(x, w, b, tm=256):
    m, k = x.shape
    n = w.shape[1]
    tm = min(tm, m)
    return pl.pallas_call(
        _matmul_bias_lrelu_kernel,
        out_shape=jax.ShapeDtypeStruct((m, n), jnp.float32),
        grid=(pl.cdiv(m, tm),),
        in_specs=[pl.BlockSpec((tm, k), lambda i: (i, 0)),
                  pl.BlockSpec((k, n), lambda i: (0, 0)),
                  pl.BlockSpec((1, n), lambda i: (0, 0))],
        out_specs=pl.BlockSpec((tm, n), lambda i: (i, 0)),
        compiler_params=pltpu.CompilerParams(dimension_semantics=("arbitrary",)),
    )(x, w, b)


def depth_encoder_forward_layered(params, x):
    n = x.shape[0]
    h = jnp.transpose(x, (0, 2, 3, 1))                         # NHWC f32
    for w_mat, b in zip(params["w_mats"], params["biases"]):
        patches, ho, wo = _im2col_nhwc(h)
        y = _matmul_bias_lrelu(patches, w_mat, b)
        h = y.reshape(n, ho, wo, y.shape[-1])
    pooled = jnp.mean(h, axis=(1, 2))                          # AdaptiveAvgPool2d((1,1))
    return pooled[:, :, None, None]


# -----------------------------------------------------------------------------
# Pure-XLA f32 reference (torch semantics) for the correctness check.
# -----------------------------------------------------------------------------
def reference_forward(x, ref_layers):
    y = x
    for w, b in ref_layers:
        y = jax.lax.conv_general_dilated(
            y, w, window_strides=(2, 2), padding=((1, 1), (1, 1)),
            dimension_numbers=("NCHW", "OIHW", "NCHW"),
            precision=jax.lax.Precision.HIGHEST)
        y = y + b[None, :, None, None]
        y = jnp.where(y > 0, y, 0.1 * y)
    return jnp.mean(y, axis=(2, 3), keepdims=True)             # (B, out_dim, 1, 1)


# -----------------------------------------------------------------------------
if __name__ == "__main__":
    key = jax.random.PRNGKey(0)
    pkey, xkey = jax.random.split(key)
    params, ref_layers = init_depth_encoder_params(pkey, in_ch=1, out_dim=256)

    # Shapes consistent with the module: 32x32 input -> five stride-2 convs -> 1x1.
    B, H, W = 2, 32, 32
    x = jax.random.normal(xkey, (B, 1, H, W), jnp.float32)

    try:
        out = jax.jit(depth_encoder_forward_fused)(params, x)
        jax.block_until_ready(out)
    except Exception:
        # Robustness only: if the fused kernel does not lower on this toolchain,
        # fall back to the per-layer Pallas path (same math, more launches).
        out = jax.jit(depth_encoder_forward_layered)(params, x)
        jax.block_until_ready(out)

    assert out.shape == (B, 256, 1, 1) and out.dtype == jnp.float32

    ref = reference_forward(x, ref_layers)
    out_np, ref_np = np.asarray(out), np.asarray(ref)
    max_diff = float(np.max(np.abs(out_np - ref_np)))
    assert np.allclose(out_np, ref_np, rtol=2e-2, atol=2e-3), (
        f"mismatch vs f32 reference, max abs diff = {max_diff}")

    print("KERNEL_OK")
</pallas_src>

<mosaic_0001>
module attributes {stable_mosaic.version = 11 : i64} {
  func.func @_fused_depth_encoder_kernel(%arg0: memref<512x16xf32, #tpu.memory_space<vmem>>, %arg1: memref<16x16xf32, #tpu.memory_space<vmem>>, %arg2: memref<1x16xf32, #tpu.memory_space<vmem>>, %arg3: memref<256x32xf32, #tpu.memory_space<vmem>>, %arg4: memref<1x32xf32, #tpu.memory_space<vmem>>, %arg5: memref<512x64xf32, #tpu.memory_space<vmem>>, %arg6: memref<1x64xf32, #tpu.memory_space<vmem>>, %arg7: memref<1024x128xf32, #tpu.memory_space<vmem>>, %arg8: memref<1x128xf32, #tpu.memory_space<vmem>>, %arg9: memref<2048x256xf32, #tpu.memory_space<vmem>>, %arg10: memref<1x256xf32, #tpu.memory_space<vmem>>, %arg11: memref<2x256xf32, #tpu.memory_space<vmem>>, %arg12: memref<2x18x18x16xf32, #tpu.memory_space<vmem>>, %arg13: memref<2x10x10x32xf32, #tpu.memory_space<vmem>>, %arg14: memref<2x6x6x64xf32, #tpu.memory_space<vmem>>, %arg15: memref<2x4x4x128xf32, #tpu.memory_space<vmem>>) attributes {dimension_semantics = [], scalar_prefetch = 0 : i64, scratch_operands = 4 : i64, tpu.core_type = #tpu.core_type<tc>} {
    %c0 = arith.constant 0 : index
    %c0_0 = arith.constant 0 : index
    %0 = vector.load %arg0[%c0, %c0_0] : memref<512x16xf32, #tpu.memory_space<vmem>>, vector<512x16xf32>
    %c0_1 = arith.constant 0 : index
    %c0_2 = arith.constant 0 : index
    %1 = vector.load %arg1[%c0_1, %c0_2] : memref<16x16xf32, #tpu.memory_space<vmem>>, vector<16x16xf32>
    %cst = arith.constant dense<0.000000e+00> : vector<512x16xf32>
    %2 = tpu.matmul %0, %1, %cst {dimension_numbers = #tpu.dot_dimension_numbers<[1], [0], [0], [1], [0, 0, 1, 1], [], []>} : vector<512x16xf32>, vector<16x16xf32>, vector<512x16xf32> -> vector<512x16xf32>
    %c0_3 = arith.constant 0 : index
    %c0_4 = arith.constant 0 : index
    %3 = vector.load %arg2[%c0_3, %c0_4] : memref<1x16xf32, #tpu.memory_space<vmem>>, vector<1x16xf32>
    %4 = vector.broadcast %3 : vector<1x16xf32> to vector<512x16xf32>
    %5 = arith.addf %2, %4 : vector<512x16xf32>
    %cst_5 = arith.constant 0.000000e+00 : f32
    %6 = vector.broadcast %cst_5 : f32 to vector<512x16xf32>
    %7 = arith.cmpf ogt, %5, %6 : vector<512x16xf32>
    %cst_6 = arith.constant 1.000000e-01 : f32
    %8 = vector.broadcast %cst_6 : f32 to vector<512x16xf32>
    %9 = arith.mulf %8, %5 : vector<512x16xf32>
    %10 = arith.select %7, %5, %9 : vector<512x16xi1>, vector<512x16xf32>
    %cst_7 = arith.constant 0.000000e+00 : f32
    %11 = vector.broadcast %cst_7 : f32 to vector<2x18x18x16xf32>
    %c0_8 = arith.constant 0 : index
    %c0_9 = arith.constant 0 : index
    %c0_10 = arith.constant 0 : index
    %c0_11 = arith.constant 0 : index
    %12 = vector.load %arg12[%c0_8, %c0_9, %c0_10, %c0_11] : memref<2x18x18x16xf32, #tpu.memory_space<vmem>>, vector<2x18x18x16xf32>
    tpu.vector_store %arg12[%c0_8, %c0_9, %c0_10, %c0_11], %11 {strides = array<i32>} : memref<2x18x18x16xf32, #tpu.memory_space<vmem>>, vector<2x18x18x16xf32>,
    %13 = vector.shape_cast %10 : vector<512x16xf32> to vector<2x16x16x16xf32>
    %c0_12 = arith.constant 0 : index
    %c1 = arith.constant 1 : index
    %c1_13 = arith.constant 1 : index
    %c0_14 = arith.constant 0 : index
    %14 = vector.load %arg12[%c0_12, %c1, %c1_13, %c0_14] : memref<2x18x18x16xf32, #tpu.memory_space<vmem>>, vector<2x16x16x16xf32>
    tpu.vector_store %arg12[%c0_12, %c1, %c1_13, %c0_14], %13 {strides = array<i32>} : memref<2x18x18x16xf32, #tpu.memory_space<vmem>>, vector<2x16x16x16xf32>,
    %c0_15 = arith.constant 0 : index
    %c0_16 = arith.constant 0 : index
    %c0_17 = arith.constant 0 : index
    %c0_18 = arith.constant 0 : index
    %15 = tpu.strided_load %arg12[%c0_15, %c0_16, %c0_17, %c0_18] {strides = array<i32: 1, 2, 2, 1>} : memref<2x18x18x16xf32, #tpu.memory_space<vmem>>, vector<2x8x8x16xf32>
    %c0_19 = arith.constant 0 : index
    %c0_20 = arith.constant 0 : index
    %c1_21 = arith.constant 1 : index
    %c0_22 = arith.constant 0 : index
    %16 = tpu.strided_load %arg12[%c0_19, %c0_20, %c1_21, %c0_22] {strides = array<i32: 1, 2, 2, 1>} : memref<2x18x18x16xf32, #tpu.memory_space<vmem>>, vector<2x8x8x16xf32>
    %c0_23 = arith.constant 0 : index
    %c0_24 = arith.constant 0 : index
    %c2 = arith.constant 2 : index
    %c0_25 = arith.constant 0 : index
    %17 = tpu.strided_load %arg12[%c0_23, %c0_24, %c2, %c0_25] {strides = array<i32: 1, 2, 2, 1>} : memref<2x18x18x16xf32, #tpu.memory_space<vmem>>, vector<2x8x8x16xf32>
    %c0_26 = arith.constant 0 : index
    %c0_27 = arith.constant 0 : index
    %c3 = arith.constant 3 : index
    %c0_28 = arith.constant 0 : index
    %18 = tpu.strided_load %arg12[%c0_26, %c0_27, %c3, %c0_28] {strides = array<i32: 1, 2, 2, 1>} : memref<2x18x18x16xf32, #tpu.memory_space<vmem>>, vector<2x8x8x16xf32>
    %c0_29 = arith.constant 0 : index
    %c1_30 = arith.constant 1 : index
    %c0_31 = arith.constant 0 : index
    %c0_32 = arith.constant 0 : index
    %19 = tpu.strided_load %arg12[%c0_29, %c1_30, %c0_31, %c0_32] {strides = array<i32: 1, 2, 2, 1>} : memref<2x18x18x16xf32, #tpu.memory_space<vmem>>, vector<2x8x8x16xf32>
    %c0_33 = arith.constant 0 : index
    %c1_34 = arith.constant 1 : index
    %c1_35 = arith.constant 1 : index
    %c0_36 = arith.constant 0 : index
    %20 = tpu.strided_load %arg12[%c0_33, %c1_34, %c1_35, %c0_36] {strides = array<i32: 1, 2, 2, 1>} : memref<2x18x18x16xf32, #tpu.memory_space<vmem>>, vector<2x8x8x16xf32>
    %c0_37 = arith.constant 0 : index
    %c1_38 = arith.constant 1 : index
    %c2_39 = arith.constant 2 : index
    %c0_40 = arith.constant 0 : index
    %21 = tpu.strided_load %arg12[%c0_37, %c1_38, %c2_39, %c0_40] {strides = array<i32: 1, 2, 2, 1>} : memref<2x18x18x16xf32, #tpu.memory_space<vmem>>, vector<2x8x8x16xf32>
    %c0_41 = arith.constant 0 : index
    %c1_42 = arith.constant 1 : index
    %c3_43 = arith.constant 3 : index
    %c0_44 = arith.constant 0 : index
    %22 = tpu.strided_load %arg12[%c0_41, %c1_42, %c3_43, %c0_44] {strides = array<i32: 1, 2, 2, 1>} : memref<2x18x18x16xf32, #tpu.memory_space<vmem>>, vector<2x8x8x16xf32>
    %c0_45 = arith.constant 0 : index
    %c2_46 = arith.constant 2 : index
    %c0_47 = arith.constant 0 : index
    %c0_48 = arith.constant 0 : index
    %23 = tpu.strided_load %arg12[%c0_45, %c2_46, %c0_47, %c0_48] {strides = array<i32: 1, 2, 2, 1>} : memref<2x18x18x16xf32, #tpu.memory_space<vmem>>, vector<2x8x8x16xf32>
    %c0_49 = arith.constant 0 : index
    %c2_50 = arith.constant 2 : index
    %c1_51 = arith.constant 1 : index
    %c0_52 = arith.constant 0 : index
    %24 = tpu.strided_load %arg12[%c0_49, %c2_50, %c1_51, %c0_52] {strides = array<i32: 1, 2, 2, 1>} : memref<2x18x18x16xf32, #tpu.memory_space<vmem>>, vector<2x8x8x16xf32>
    %c0_53 = arith.constant 0 : index
    %c2_54 = arith.constant 2 : index
    %c2_55 = arith.constant 2 : index
    %c0_56 = arith.constant 0 : index
    %25 = tpu.strided_load %arg12[%c0_53, %c2_54, %c2_55, %c0_56] {strides = array<i32: 1, 2, 2, 1>} : memref<2x18x18x16xf32, #tpu.memory_space<vmem>>, vector<2x8x8x16xf32>
    %c0_57 = arith.constant 0 : index
    %c2_58 = arith.constant 2 : index
    %c3_59 = arith.constant 3 : index
    %c0_60 = arith.constant 0 : index
    %26 = tpu.strided_load %arg12[%c0_57, %c2_58, %c3_59, %c0_60] {strides = array<i32: 1, 2, 2, 1>} : memref<2x18x18x16xf32, #tpu.memory_space<vmem>>, vector<2x8x8x16xf32>
    %c0_61 = arith.constant 0 : index
    %c3_62 = arith.constant 3 : index
    %c0_63 = arith.constant 0 : index
    %c0_64 = arith.constant 0 : index
    %27 = tpu.strided_load %arg12[%c0_61, %c3_62, %c0_63, %c0_64] {strides = array<i32: 1, 2, 2, 1>} : memref<2x18x18x16xf32, #tpu.memory_space<vmem>>, vector<2x8x8x16xf32>
    %c0_65 = arith.constant 0 : index
    %c3_66 = arith.constant 3 : index
    %c1_67 = arith.constant 1 : index
    %c0_68 = arith.constant 0 : index
    %28 = tpu.strided_load %arg12[%c0_65, %c3_66, %c1_67, %c0_68] {strides = array<i32: 1, 2, 2, 1>} : memref<2x18x18x16xf32, #tpu.memory_space<vmem>>, vector<2x8x8x16xf32>
    %c0_69 = arith.constant 0 : index
    %c3_70 = arith.constant 3 : index
    %c2_71 = arith.constant 2 : index
    %c0_72 = arith.constant 0 : index
    %29 = tpu.strided_load %arg12[%c0_69, %c3_70, %c2_71, %c0_72] {strides = array<i32: 1, 2, 2, 1>} : memref<2x18x18x16xf32, #tpu.memory_space<vmem>>, vector<2x8x8x16xf32>
    %c0_73 = arith.constant 0 : index
    %c3_74 = arith.constant 3 : index
    %c3_75 = arith.constant 3 : index
    %c0_76 = arith.constant 0 : index
    %30 = tpu.strided_load %arg12[%c0_73, %c3_74, %c3_75, %c0_76] {strides = array<i32: 1, 2, 2, 1>} : memref<2x18x18x16xf32, #tpu.memory_space<vmem>>, vector<2x8x8x16xf32>
    %31 = tpu.concatenate %15, %16, %17, %18, %19, %20, %21, %22, %23, %24, %25, %26, %27, %28, %29, %30 in 3 : vector<2x8x8x16xf32>, vector<2x8x8x16xf32>, vector<2x8x8x16xf32>, vector<2x8x8x16xf32>, vector<2x8x8x16xf32>, vector<2x8x8x16xf32>, vector<2x8x8x16xf32>, vector<2x8x8x16xf32>, vector<2x8x8x16xf32>, vector<2x8x8x16xf32>, vector<2x8x8x16xf32>, vector<2x8x8x16xf32>, vector<2x8x8x16xf32>, vector<2x8x8x16xf32>, vector<2x8x8x16xf32>, vector<2x8x8x16xf32> -> vector<2x8x8x256xf32>
    %32 = vector.shape_cast %31 : vector<2x8x8x256xf32> to vector<128x256xf32>
    %c0_77 = arith.constant 0 : index
    %c0_78 = arith.constant 0 : index
    %33 = vector.load %arg3[%c0_77, %c0_78] : memref<256x32xf32, #tpu.memory_space<vmem>>, vector<256x32xf32>
    %cst_79 = arith.constant dense<0.000000e+00> : vector<128x32xf32>
    %34 = tpu.matmul %32, %33, %cst_79 {dimension_numbers = #tpu.dot_dimension_numbers<[1], [0], [0], [1], [0, 0, 1, 1], [], []>} : vector<128x256xf32>, vector<256x32xf32>, vector<128x32xf32> -> vector<128x32xf32>
    %c0_80 = arith.constant 0 : index
    %c0_81 = arith.constant 0 : index
    %35 = vector.load %arg4[%c0_80, %c0_81] : memref<1x32xf32, #tpu.memory_space<vmem>>, vector<1x32xf32>
    %36 = vector.broadcast %35 : vector<1x32xf32> to vector<128x32xf32>
    %37 = arith.addf %34, %36 : vector<128x32xf32>
    %cst_82 = arith.constant 0.000000e+00 : f32
    %38 = vector.broadcast %cst_82 : f32 to vector<128x32xf32>
    %39 = arith.cmpf ogt, %37, %38 : vector<128x32xf32>
    %cst_83 = arith.constant 1.000000e-01 : f32
    %40 = vector.broadcast %cst_83 : f32 to vector<128x32xf32>
    %41 = arith.mulf %40, %37 : vector<128x32xf32>
    %42 = arith.select %39, %37, %41 : vector<128x32xi1>, vector<128x32xf32>
    %cst_84 = arith.constant 0.000000e+00 : f32
    %43 = vector.broadcast %cst_84 : f32 to vector<2x10x10x32xf32>
    %c0_85 = arith.constant 0 : index
    %c0_86 = arith.constant 0 : index
    %c0_87 = arith.constant 0 : index
    %c0_88 = arith.constant 0 : index
    %44 = vector.load %arg13[%c0_85, %c0_86, %c0_87, %c0_88] : memref<2x10x10x32xf32, #tpu.memory_space<vmem>>, vector<2x10x10x32xf32>
    tpu.vector_store %arg13[%c0_85, %c0_86, %c0_87, %c0_88], %43 {strides = array<i32>} : memref<2x10x10x32xf32, #tpu.memory_space<vmem>>, vector<2x10x10x32xf32>,
    %45 = vector.shape_cast %42 : vector<128x32xf32> to vector<2x8x8x32xf32>
    %c0_89 = arith.constant 0 : index
    %c1_90 = arith.constant 1 : index
    %c1_91 = arith.constant 1 : index
    %c0_92 = arith.constant 0 : index
    %46 = vector.load %arg13[%c0_89, %c1_90, %c1_91, %c0_92] : memref<2x10x10x32xf32, #tpu.memory_space<vmem>>, vector<2x8x8x32xf32>
    tpu.vector_store %arg13[%c0_89, %c1_90, %c1_91, %c0_92], %45 {strides = array<i32>} : memref<2x10x10x32xf32, #tpu.memory_space<vmem>>, vector<2x8x8x32xf32>,
    %c0_93 = arith.constant 0 : index
    %c0_94 = arith.constant 0 : index
    %c0_95 = arith.constant 0 : index
    %c0_96 = arith.constant 0 : index
    %47 = tpu.strided_load %arg13[%c0_93, %c0_94, %c0_95, %c0_96] {strides = array<i32: 1, 2, 2, 1>} : memref<2x10x10x32xf32, #tpu.memory_space<vmem>>, vector<2x4x4x32xf32>
    %c0_97 = arith.constant 0 : index
    %c0_98 = arith.constant 0 : index
    %c1_99 = arith.constant 1 : index
    %c0_100 = arith.constant 0 : index
    %48 = tpu.strided_load %arg13[%c0_97, %c0_98, %c1_99, %c0_100] {strides = array<i32: 1, 2, 2, 1>} : memref<2x10x10x32xf32, #tpu.memory_space<vmem>>, vector<2x4x4x32xf32>
    %c0_101 = arith.constant 0 : index
    %c0_102 = arith.constant 0 : index
    %c2_103 = arith.constant 2 : index
    %c0_104 = arith.constant 0 : index
    %49 = tpu.strided_load %arg13[%c0_101, %c0_102, %c2_103, %c0_104] {strides = array<i32: 1, 2, 2, 1>} : memref<2x10x10x32xf32, #tpu.memory_space<vmem>>, vector<2x4x4x32xf32>
    %c0_105 = arith.constant 0 : index
    %c0_106 = arith.constant 0 : index
    %c3_107 = arith.constant 3 : index
    %c0_108 = arith.constant 0 : index
    %50 = tpu.strided_load %arg13[%c0_105, %c0_106, %c3_107, %c0_108] {strides = array<i32: 1, 2, 2, 1>} : memref<2x10x10x32xf32, #tpu.memory_space<vmem>>, vector<2x4x4x32xf32>
    %c0_109 = arith.constant 0 : index
    %c1_110 = arith.constant 1 : index
    %c0_111 = arith.constant 0 : index
    %c0_112 = arith.constant 0 : index
    %51 = tpu.strided_load %arg13[%c0_109, %c1_110, %c0_111, %c0_112] {strides = array<i32: 1, 2, 2, 1>} : memref<2x10x10x32xf32, #tpu.memory_space<vmem>>, vector<2x4x4x32xf32>
    %c0_113 = arith.constant 0 : index
    %c1_114 = arith.constant 1 : index
    %c1_115 = arith.constant 1 : index
    %c0_116 = arith.constant 0 : index
    %52 = tpu.strided_load %arg13[%c0_113, %c1_114, %c1_115, %c0_116] {strides = array<i32: 1, 2, 2, 1>} : memref<2x10x10x32xf32, #tpu.memory_space<vmem>>, vector<2x4x4x32xf32>
    %c0_117 = arith.constant 0 : index
    %c1_118 = arith.constant 1 : index
    %c2_119 = arith.constant 2 : index
    %c0_120 = arith.constant 0 : index
    %53 = tpu.strided_load %arg13[%c0_117, %c1_118, %c2_119, %c0_120] {strides = array<i32: 1, 2, 2, 1>} : memref<2x10x10x32xf32, #tpu.memory_space<vmem>>, vector<2x4x4x32xf32>
    %c0_121 = arith.constant 0 : index
    %c1_122 = arith.constant 1 : index
    %c3_123 = arith.constant 3 : index
    %c0_124 = arith.constant 0 : index
    %54 = tpu.strided_load %arg13[%c0_121, %c1_122, %c3_123, %c0_124] {strides = array<i32: 1, 2, 2, 1>} : memref<2x10x10x32xf32, #tpu.memory_space<vmem>>, vector<2x4x4x32xf32>
    %c0_125 = arith.constant 0 : index
    %c2_126 = arith.constant 2 : index
    %c0_127 = arith.constant 0 : index
    %c0_128 = arith.constant 0 : index
    %55 = tpu.strided_load %arg13[%c0_125, %c2_126, %c0_127, %c0_128] {strides = array<i32: 1, 2, 2, 1>} : memref<2x10x10x32xf32, #tpu.memory_space<vmem>>, vector<2x4x4x32xf32>
    %c0_129 = arith.constant 0 : index
    %c2_130 = arith.constant 2 : index
    %c1_131 = arith.constant 1 : index
    %c0_132 = arith.constant 0 : index
    %56 = tpu.strided_load %arg13[%c0_129, %c2_130, %c1_131, %c0_132] {strides = array<i32: 1, 2, 2, 1>} : memref<2x10x10x32xf32, #tpu.memory_space<vmem>>, vector<2x4x4x32xf32>
    %c0_133 = arith.constant 0 : index
    %c2_134 = arith.constant 2 : index
    %c2_135 = arith.constant 2 : index
    %c0_136 = arith.constant 0 : index
    %57 = tpu.strided_load %arg13[%c0_133, %c2_134, %c2_135, %c0_136] {strides = array<i32: 1, 2, 2, 1>} : memref<2x10x10x32xf32, #tpu.memory_space<vmem>>, vector<2x4x4x32xf32>
    %c0_137 = arith.constant 0 : index
    %c2_138 = arith.constant 2 : index
    %c3_139 = arith.constant 3 : index
    %c0_140 = arith.constant 0 : index
    %58 = tpu.strided_load %arg13[%c0_137, %c2_138, %c3_139, %c0_140] {strides = array<i32: 1, 2, 2, 1>} : memref<2x10x10x32xf32, #tpu.memory_space<vmem>>, vector<2x4x4x32xf32>
    %c0_141 = arith.constant 0 : index
    %c3_142 = arith.constant 3 : index
    %c0_143 = arith.constant 0 : index
    %c0_144 = arith.constant 0 : index
    %59 = tpu.strided_load %arg13[%c0_141, %c3_142, %c0_143, %c0_144] {strides = array<i32: 1, 2, 2, 1>} : memref<2x10x10x32xf32, #tpu.memory_space<vmem>>, vector<2x4x4x32xf32>
    %c0_145 = arith.constant 0 : index
    %c3_146 = arith.constant 3 : index
    %c1_147 = arith.constant 1 : index
    %c0_148 = arith.constant 0 : index
    %60 = tpu.strided_load %arg13[%c0_145, %c3_146, %c1_147, %c0_148] {strides = array<i32: 1, 2, 2, 1>} : memref<2x10x10x32xf32, #tpu.memory_space<vmem>>, vector<2x4x4x32xf32>
    %c0_149 = arith.constant 0 : index
    %c3_150 = arith.constant 3 : index
    %c2_151 = arith.constant 2 : index
    %c0_152 = arith.constant 0 : index
    %61 = tpu.strided_load %arg13[%c0_149, %c3_150, %c2_151, %c0_152] {strides = array<i32: 1, 2, 2, 1>} : memref<2x10x10x32xf32, #tpu.memory_space<vmem>>, vector<2x4x4x32xf32>
    %c0_153 = arith.constant 0 : index
    %c3_154 = arith.constant 3 : index
    %c3_155 = arith.constant 3 : index
    %c0_156 = arith.constant 0 : index
    %62 = tpu.strided_load %arg13[%c0_153, %c3_154, %c3_155, %c0_156] {strides = array<i32: 1, 2, 2, 1>} : memref<2x10x10x32xf32, #tpu.memory_space<vmem>>, vector<2x4x4x32xf32>
    %63 = tpu.concatenate %47, %48, %49, %50, %51, %52, %53, %54, %55, %56, %57, %58, %59, %60, %61, %62 in 3 : vector<2x4x4x32xf32>, vector<2x4x4x32xf32>, vector<2x4x4x32xf32>, vector<2x4x4x32xf32>, vector<2x4x4x32xf32>, vector<2x4x4x32xf32>, vector<2x4x4x32xf32>, vector<2x4x4x32xf32>, vector<2x4x4x32xf32>, vector<2x4x4x32xf32>, vector<2x4x4x32xf32>, vector<2x4x4x32xf32>, vector<2x4x4x32xf32>, vector<2x4x4x32xf32>, vector<2x4x4x32xf32>, vector<2x4x4x32xf32> -> vector<2x4x4x512xf32>
    %64 = vector.shape_cast %63 : vector<2x4x4x512xf32> to vector<32x512xf32>
    %c0_157 = arith.constant 0 : index
    %c0_158 = arith.constant 0 : index
    %65 = vector.load %arg5[%c0_157, %c0_158] : memref<512x64xf32, #tpu.memory_space<vmem>>, vector<512x64xf32>
    %cst_159 = arith.constant dense<0.000000e+00> : vector<32x64xf32>
    %66 = tpu.matmul %64, %65, %cst_159 {dimension_numbers = #tpu.dot_dimension_numbers<[1], [0], [0], [1], [0, 0, 1, 1], [], []>} : vector<32x512xf32>, vector<512x64xf32>, vector<32x64xf32> -> vector<32x64xf32>
    %c0_160 = arith.constant 0 : index
    %c0_161 = arith.constant 0 : index
    %67 = vector.load %arg6[%c0_160, %c0_161] : memref<1x64xf32, #tpu.memory_space<vmem>>, vector<1x64xf32>
    %68 = vector.broadcast %67 : vector<1x64xf32> to vector<32x64xf32>
    %69 = arith.addf %66, %68 : vector<32x64xf32>
    %cst_162 = arith.constant 0.000000e+00 : f32
    %70 = vector.broadcast %cst_162 : f32 to vector<32x64xf32>
    %71 = arith.cmpf ogt, %69, %70 : vector<32x64xf32>
    %cst_163 = arith.constant 1.000000e-01 : f32
    %72 = vector.broadcast %cst_163 : f32 to vector<32x64xf32>
    %73 = arith.mulf %72, %69 : vector<32x64xf32>
    %74 = arith.select %71, %69, %73 : vector<32x64xi1>, vector<32x64xf32>
    %cst_164 = arith.constant 0.000000e+00 : f32
    %75 = vector.broadcast %cst_164 : f32 to vector<2x6x6x64xf32>
    %c0_165 = arith.constant 0 : index
    %c0_166 = arith.constant 0 : index
    %c0_167 = arith.constant 0 : index
    %c0_168 = arith.constant 0 : index
    %76 = vector.load %arg14[%c0_165, %c0_166, %c0_167, %c0_168] : memref<2x6x6x64xf32, #tpu.memory_space<vmem>>, vector<2x6x6x64xf32>
    tpu.vector_store %arg14[%c0_165, %c0_166, %c0_167, %c0_168], %75 {strides = array<i32>} : memref<2x6x6x64xf32, #tpu.memory_space<vmem>>, vector<2x6x6x64xf32>,
    %77 = vector.shape_cast %74 : vector<32x64xf32> to vector<2x4x4x64xf32>
    %c0_169 = arith.constant 0 : index
    %c1_170 = arith.constant 1 : index
    %c1_171 = arith.constant 1 : index
    %c0_172 = arith.constant 0 : index
    %78 = vector.load %arg14[%c0_169, %c1_170, %c1_171, %c0_172] : memref<2x6x6x64xf32, #tpu.memory_space<vmem>>, vector<2x4x4x64xf32>
    tpu.vector_store %arg14[%c0_169, %c1_170, %c1_171, %c0_172], %77 {strides = array<i32>} : memref<2x6x6x64xf32, #tpu.memory_space<vmem>>, vector<2x4x4x64xf32>,
    %c0_173 = arith.constant 0 : index
    %c0_174 = arith.constant 0 : index
    %c0_175 = arith.constant 0 : index
    %c0_176 = arith.constant 0 : index
    %79 = tpu.strided_load %arg14[%c0_173, %c0_174, %c0_175, %c0_176] {strides = array<i32: 1, 2, 2, 1>} : memref<2x6x6x64xf32, #tpu.memory_space<vmem>>, vector<2x2x2x64xf32>
    %c0_177 = arith.constant 0 : index
    %c0_178 = arith.constant 0 : index
    %c1_179 = arith.constant 1 : index
    %c0_180 = arith.constant 0 : index
    %80 = tpu.strided_load %arg14[%c0_177, %c0_178, %c1_179, %c0_180] {strides = array<i32: 1, 2, 2, 1>} : memref<2x6x6x64xf32, #tpu.memory_space<vmem>>, vector<2x2x2x64xf32>
    %c0_181 = arith.constant 0 : index
    %c0_182 = arith.constant 0 : index
    %c2_183 = arith.constant 2 : index
    %c0_184 = arith.constant 0 : index
    %81 = tpu.strided_load %arg14[%c0_181, %c0_182, %c2_183, %c0_184] {strides = array<i32: 1, 2, 2, 1>} : memref<2x6x6x64xf32, #tpu.memory_space<vmem>>, vector<2x2x2x64xf32>
    %c0_185 = arith.constant 0 : index
    %c0_186 = arith.constant 0 : index
    %c3_187 = arith.constant 3 : index
    %c0_188 = arith.constant 0 : index
    %82 = tpu.strided_load %arg14[%c0_185, %c0_186, %c3_187, %c0_188] {strides = array<i32: 1, 2, 2, 1>} : memref<2x6x6x64xf32, #tpu.memory_space<vmem>>, vector<2x2x2x64xf32>
    %c0_189 = arith.constant 0 : index
    %c1_190 = arith.constant 1 : index
    %c0_191 = arith.constant 0 : index
    %c0_192 = arith.constant 0 : index
    %83 = tpu.strided_load %arg14[%c0_189, %c1_190, %c0_191, %c0_192] {strides = array<i32: 1, 2, 2, 1>} : memref<2x6x6x64xf32, #tpu.memory_space<vmem>>, vector<2x2x2x64xf32>
    %c0_193 = arith.constant 0 : index
    %c1_194 = arith.constant 1 : index
    %c1_195 = arith.constant 1 : index
    %c0_196 = arith.constant 0 : index
    %84 = tpu.strided_load %arg14[%c0_193, %c1_194, %c1_195, %c0_196] {strides = array<i32: 1, 2, 2, 1>} : memref<2x6x6x64xf32, #tpu.memory_space<vmem>>, vector<2x2x2x64xf32>
    %c0_197 = arith.constant 0 : index
    %c1_198 = arith.constant 1 : index
    %c2_199 = arith.constant 2 : index
    %c0_200 = arith.constant 0 : index
    %85 = tpu.strided_load %arg14[%c0_197, %c1_198, %c2_199, %c0_200] {strides = array<i32: 1, 2, 2, 1>} : memref<2x6x6x64xf32, #tpu.memory_space<vmem>>, vector<2x2x2x64xf32>
    %c0_201 = arith.constant 0 : index
    %c1_202 = arith.constant 1 : index
    %c3_203 = arith.constant 3 : index
    %c0_204 = arith.constant 0 : index
    %86 = tpu.strided_load %arg14[%c0_201, %c1_202, %c3_203, %c0_204] {strides = array<i32: 1, 2, 2, 1>} : memref<2x6x6x64xf32, #tpu.memory_space<vmem>>, vector<2x2x2x64xf32>
    %c0_205 = arith.constant 0 : index
    %c2_206 = arith.constant 2 : index
    %c0_207 = arith.constant 0 : index
    %c0_208 = arith.constant 0 : index
    %87 = tpu.strided_load %arg14[%c0_205, %c2_206, %c0_207, %c0_208] {strides = array<i32: 1, 2, 2, 1>} : memref<2x6x6x64xf32, #tpu.memory_space<vmem>>, vector<2x2x2x64xf32>
    %c0_209 = arith.constant 0 : index
    %c2_210 = arith.constant 2 : index
    %c1_211 = arith.constant 1 : index
    %c0_212 = arith.constant 0 : index
    %88 = tpu.strided_load %arg14[%c0_209, %c2_210, %c1_211, %c0_212] {strides = array<i32: 1, 2, 2, 1>} : memref<2x6x6x64xf32, #tpu.memory_space<vmem>>, vector<2x2x2x64xf32>
    %c0_213 = arith.constant 0 : index
    %c2_214 = arith.constant 2 : index
    %c2_215 = arith.constant 2 : index
    %c0_216 = arith.constant 0 : index
    %89 = tpu.strided_load %arg14[%c0_213, %c2_214, %c2_215, %c0_216] {strides = array<i32: 1, 2, 2, 1>} : memref<2x6x6x64xf32, #tpu.memory_space<vmem>>, vector<2x2x2x64xf32>
    %c0_217 = arith.constant 0 : index
    %c2_218 = arith.constant 2 : index
    %c3_219 = arith.constant 3 : index
    %c0_220 = arith.constant 0 : index
    %90 = tpu.strided_load %arg14[%c0_217, %c2_218, %c3_219, %c0_220] {strides = array<i32: 1, 2, 2, 1>} : memref<2x6x6x64xf32, #tpu.memory_space<vmem>>, vector<2x2x2x64xf32>
    %c0_221 = arith.constant 0 : index
    %c3_222 = arith.constant 3 : index
    %c0_223 = arith.constant 0 : index
    %c0_224 = arith.constant 0 : index
    %91 = tpu.strided_load %arg14[%c0_221, %c3_222, %c0_223, %c0_224] {strides = array<i32: 1, 2, 2, 1>} : memref<2x6x6x64xf32, #tpu.memory_space<vmem>>, vector<2x2x2x64xf32>
    %c0_225 = arith.constant 0 : index
    %c3_226 = arith.constant 3 : index
    %c1_227 = arith.constant 1 : index
    %c0_228 = arith.constant 0 : index
    %92 = tpu.strided_load %arg14[%c0_225, %c3_226, %c1_227, %c0_228] {strides = array<i32: 1, 2, 2, 1>} : memref<2x6x6x64xf32, #tpu.memory_space<vmem>>, vector<2x2x2x64xf32>
    %c0_229 = arith.constant 0 : index
    %c3_230 = arith.constant 3 : index
    %c2_231 = arith.constant 2 : index
    %c0_232 = arith.constant 0 : index
    %93 = tpu.strided_load %arg14[%c0_229, %c3_230, %c2_231, %c0_232] {strides = array<i32: 1, 2, 2, 1>} : memref<2x6x6x64xf32, #tpu.memory_space<vmem>>, vector<2x2x2x64xf32>
    %c0_233 = arith.constant 0 : index
    %c3_234 = arith.constant 3 : index
    %c3_235 = arith.constant 3 : index
    %c0_236 = arith.constant 0 : index
    %94 = tpu.strided_load %arg14[%c0_233, %c3_234, %c3_235, %c0_236] {strides = array<i32: 1, 2, 2, 1>} : memref<2x6x6x64xf32, #tpu.memory_space<vmem>>, vector<2x2x2x64xf32>
    %95 = tpu.concatenate %79, %80, %81, %82, %83, %84, %85, %86, %87, %88, %89, %90, %91, %92, %93, %94 in 3 : vector<2x2x2x64xf32>, vector<2x2x2x64xf32>, vector<2x2x2x64xf32>, vector<2x2x2x64xf32>, vector<2x2x2x64xf32>, vector<2x2x2x64xf32>, vector<2x2x2x64xf32>, vector<2x2x2x64xf32>, vector<2x2x2x64xf32>, vector<2x2x2x64xf32>, vector<2x2x2x64xf32>, vector<2x2x2x64xf32>, vector<2x2x2x64xf32>, vector<2x2x2x64xf32>, vector<2x2x2x64xf32>, vector<2x2x2x64xf32> -> vector<2x2x2x1024xf32>
    %96 = vector.shape_cast %95 : vector<2x2x2x1024xf32> to vector<8x1024xf32>
    %c0_237 = arith.constant 0 : index
    %c0_238 = arith.constant 0 : index
    %97 = vector.load %arg7[%c0_237, %c0_238] : memref<1024x128xf32, #tpu.memory_space<vmem>>, vector<1024x128xf32>
    %cst_239 = arith.constant dense<0.000000e+00> : vector<8x128xf32>
    %98 = tpu.matmul %96, %97, %cst_239 {dimension_numbers = #tpu.dot_dimension_numbers<[1], [0], [0], [1], [0, 0, 1, 1], [], []>} : vector<8x1024xf32>, vector<1024x128xf32>, vector<8x128xf32> -> vector<8x128xf32>
    %c0_240 = arith.constant 0 : index
    %c0_241 = arith.constant 0 : index
    %99 = vector.load %arg8[%c0_240, %c0_241] : memref<1x128xf32, #tpu.memory_space<vmem>>, vector<1x128xf32>
    %100 = vector.broadcast %99 : vector<1x128xf32> to vector<8x128xf32>
    %101 = arith.addf %98, %100 : vector<8x128xf32>
    %cst_242 = arith.constant 0.000000e+00 : f32
    %102 = vector.broadcast %cst_242 : f32 to vector<8x128xf32>
    %103 = arith.cmpf ogt, %101, %102 : vector<8x128xf32>
    %cst_243 = arith.constant 1.000000e-01 : f32
    %104 = vector.broadcast %cst_243 : f32 to vector<8x128xf32>
    %105 = arith.mulf %104, %101 : vector<8x128xf32>
    %106 = arith.select %103, %101, %105 : vector<8x128xi1>, vector<8x128xf32>
    %cst_244 = arith.constant 0.000000e+00 : f32
    %107 = vector.broadcast %cst_244 : f32 to vector<2x4x4x128xf32>
    %c0_245 = arith.constant 0 : index
    %c0_246 = arith.constant 0 : index
    %c0_247 = arith.constant 0 : index
    %c0_248 = arith.constant 0 : index
    %108 = vector.load %arg15[%c0_245, %c0_246, %c0_247, %c0_248] : memref<2x4x4x128xf32, #tpu.memory_space<vmem>>, vector<2x4x4x128xf32>
    tpu.vector_store %arg15[%c0_245, %c0_246, %c0_247, %c0_248], %107 {strides = array<i32>} : memref<2x4x4x128xf32, #tpu.memory_space<vmem>>, vector<2x4x4x128xf32>,
    %109 = vector.shape_cast %106 : vector<8x128xf32> to vector<2x2x2x128xf32>
    %c0_249 = arith.constant 0 : index
    %c1_250 = arith.constant 1 : index
    %c1_251 = arith.constant 1 : index
    %c0_252 = arith.constant 0 : index
    %110 = vector.load %arg15[%c0_249, %c1_250, %c1_251, %c0_252] : memref<2x4x4x128xf32, #tpu.memory_space<vmem>>, vector<2x2x2x128xf32>
    tpu.vector_store %arg15[%c0_249, %c1_250, %c1_251, %c0_252], %109 {strides = array<i32>} : memref<2x4x4x128xf32, #tpu.memory_space<vmem>>, vector<2x2x2x128xf32>,
    %c0_253 = arith.constant 0 : index
    %c0_254 = arith.constant 0 : index
    %c0_255 = arith.constant 0 : index
    %c0_256 = arith.constant 0 : index
    %111 = tpu.strided_load %arg15[%c0_253, %c0_254, %c0_255, %c0_256] {strides = array<i32: 1, 2, 2, 1>} : memref<2x4x4x128xf32, #tpu.memory_space<vmem>>, vector<2x1x1x128xf32>
    %c0_257 = arith.constant 0 : index
    %c0_258 = arith.constant 0 : index
    %c1_259 = arith.constant 1 : index
    %c0_260 = arith.constant 0 : index
    %112 = tpu.strided_load %arg15[%c0_257, %c0_258, %c1_259, %c0_260] {strides = array<i32: 1, 2, 2, 1>} : memref<2x4x4x128xf32, #tpu.memory_space<vmem>>, vector<2x1x1x128xf32>
    %c0_261 = arith.constant 0 : index
    %c0_262 = arith.constant 0 : index
    %c2_263 = arith.constant 2 : index
    %c0_264 = arith.constant 0 : index
    %113 = tpu.strided_load %arg15[%c0_261, %c0_262, %c2_263, %c0_264] {strides = array<i32: 1, 2, 2, 1>} : memref<2x4x4x128xf32, #tpu.memory_space<vmem>>, vector<2x1x1x128xf32>
    %c0_265 = arith.constant 0 : index
    %c0_266 = arith.constant 0 : index
    %c3_267 = arith.constant 3 : index
    %c0_268 = arith.constant 0 : index
    %114 = tpu.strided_load %arg15[%c0_265, %c0_266, %c3_267, %c0_268] {strides = array<i32: 1, 2, 2, 1>} : memref<2x4x4x128xf32, #tpu.memory_space<vmem>>, vector<2x1x1x128xf32>
    %c0_269 = arith.constant 0 : index
    %c1_270 = arith.constant 1 : index
    %c0_271 = arith.constant 0 : index
    %c0_272 = arith.constant 0 : index
    %115 = tpu.strided_load %arg15[%c0_269, %c1_270, %c0_271, %c0_272] {strides = array<i32: 1, 2, 2, 1>} : memref<2x4x4x128xf32, #tpu.memory_space<vmem>>, vector<2x1x1x128xf32>
    %c0_273 = arith.constant 0 : index
    %c1_274 = arith.constant 1 : index
    %c1_275 = arith.constant 1 : index
    %c0_276 = arith.constant 0 : index
    %116 = tpu.strided_load %arg15[%c0_273, %c1_274, %c1_275, %c0_276] {strides = array<i32: 1, 2, 2, 1>} : memref<2x4x4x128xf32, #tpu.memory_space<vmem>>, vector<2x1x1x128xf32>
    %c0_277 = arith.constant 0 : index
    %c1_278 = arith.constant 1 : index
    %c2_279 = arith.constant 2 : index
    %c0_280 = arith.constant 0 : index
    %117 = tpu.strided_load %arg15[%c0_277, %c1_278, %c2_279, %c0_280] {strides = array<i32: 1, 2, 2, 1>} : memref<2x4x4x128xf32, #tpu.memory_space<vmem>>, vector<2x1x1x128xf32>
    %c0_281 = arith.constant 0 : index
    %c1_282 = arith.constant 1 : index
    %c3_283 = arith.constant 3 : index
    %c0_284 = arith.constant 0 : index
    %118 = tpu.strided_load %arg15[%c0_281, %c1_282, %c3_283, %c0_284] {strides = array<i32: 1, 2, 2, 1>} : memref<2x4x4x128xf32, #tpu.memory_space<vmem>>, vector<2x1x1x128xf32>
    %c0_285 = arith.constant 0 : index
    %c2_286 = arith.constant 2 : index
    %c0_287 = arith.constant 0 : index
    %c0_288 = arith.constant 0 : index
    %119 = tpu.strided_load %arg15[%c0_285, %c2_286, %c0_287, %c0_288] {strides = array<i32: 1, 2, 2, 1>} : memref<2x4x4x128xf32, #tpu.memory_space<vmem>>, vector<2x1x1x128xf32>
    %c0_289 = arith.constant 0 : index
    %c2_290 = arith.constant 2 : index
    %c1_291 = arith.constant 1 : index
    %c0_292 = arith.constant 0 : index
    %120 = tpu.strided_load %arg15[%c0_289, %c2_290, %c1_291, %c0_292] {strides = array<i32: 1, 2, 2, 1>} : memref<2x4x4x128xf32, #tpu.memory_space<vmem>>, vector<2x1x1x128xf32>
    %c0_293 = arith.constant 0 : index
    %c2_294 = arith.constant 2 : index
    %c2_295 = arith.constant 2 : index
    %c0_296 = arith.constant 0 : index
    %121 = tpu.strided_load %arg15[%c0_293, %c2_294, %c2_295, %c0_296] {strides = array<i32: 1, 2, 2, 1>} : memref<2x4x4x128xf32, #tpu.memory_space<vmem>>, vector<2x1x1x128xf32>
    %c0_297 = arith.constant 0 : index
    %c2_298 = arith.constant 2 : index
    %c3_299 = arith.constant 3 : index
    %c0_300 = arith.constant 0 : index
    %122 = tpu.strided_load %arg15[%c0_297, %c2_298, %c3_299, %c0_300] {strides = array<i32: 1, 2, 2, 1>} : memref<2x4x4x128xf32, #tpu.memory_space<vmem>>, vector<2x1x1x128xf32>
    %c0_301 = arith.constant 0 : index
    %c3_302 = arith.constant 3 : index
    %c0_303 = arith.constant 0 : index
    %c0_304 = arith.constant 0 : index
    %123 = tpu.strided_load %arg15[%c0_301, %c3_302, %c0_303, %c0_304] {strides = array<i32: 1, 2, 2, 1>} : memref<2x4x4x128xf32, #tpu.memory_space<vmem>>, vector<2x1x1x128xf32>
    %c0_305 = arith.constant 0 : index
    %c3_306 = arith.constant 3 : index
    %c1_307 = arith.constant 1 : index
    %c0_308 = arith.constant 0 : index
    %124 = tpu.strided_load %arg15[%c0_305, %c3_306, %c1_307, %c0_308] {strides = array<i32: 1, 2, 2, 1>} : memref<2x4x4x128xf32, #tpu.memory_space<vmem>>, vector<2x1x1x128xf32>
    %c0_309 = arith.constant 0 : index
    %c3_310 = arith.constant 3 : index
    %c2_311 = arith.constant 2 : index
    %c0_312 = arith.constant 0 : index
    %125 = tpu.strided_load %arg15[%c0_309, %c3_310, %c2_311, %c0_312] {strides = array<i32: 1, 2, 2, 1>} : memref<2x4x4x128xf32, #tpu.memory_space<vmem>>, vector<2x1x1x128xf32>
    %c0_313 = arith.constant 0 : index
    %c3_314 = arith.constant 3 : index
    %c3_315 = arith.constant 3 : index
    %c0_316 = arith.constant 0 : index
    %126 = tpu.strided_load %arg15[%c0_313, %c3_314, %c3_315, %c0_316] {strides = array<i32: 1, 2, 2, 1>} : memref<2x4x4x128xf32, #tpu.memory_space<vmem>>, vector<2x1x1x128xf32>
    %127 = tpu.concatenate %111, %112, %113, %114, %115, %116, %117, %118, %119, %120, %121, %122, %123, %124, %125, %126 in 3 : vector<2x1x1x128xf32>, vector<2x1x1x128xf32>, vector<2x1x1x128xf32>, vector<2x1x1x128xf32>, vector<2x1x1x128xf32>, vector<2x1x1x128xf32>, vector<2x1x1x128xf32>, vector<2x1x1x128xf32>, vector<2x1x1x128xf32>, vector<2x1x1x128xf32>, vector<2x1x1x128xf32>, vector<2x1x1x128xf32>, vector<2x1x1x128xf32>, vector<2x1x1x128xf32>, vector<2x1x1x128xf32>, vector<2x1x1x128xf32> -> vector<2x1x1x2048xf32>
    %128 = vector.shape_cast %127 : vector<2x1x1x2048xf32> to vector<2x2048xf32>
    %c0_317 = arith.constant 0 : index
    %c0_318 = arith.constant 0 : index
    %129 = vector.load %arg9[%c0_317, %c0_318] : memref<2048x256xf32, #tpu.memory_space<vmem>>, vector<2048x256xf32>
    %cst_319 = arith.constant dense<0.000000e+00> : vector<2x256xf32>
    %130 = tpu.matmul %128, %129, %cst_319 {dimension_numbers = #tpu.dot_dimension_numbers<[1], [0], [0], [1], [0, 0, 1, 1], [], []>} : vector<2x2048xf32>, vector<2048x256xf32>, vector<2x256xf32> -> vector<2x256xf32>
    %c0_320 = arith.constant 0 : index
    %c0_321 = arith.constant 0 : index
    %131 = vector.load %arg10[%c0_320, %c0_321] : memref<1x256xf32, #tpu.memory_space<vmem>>, vector<1x256xf32>
    %132 = vector.broadcast %131 : vector<1x256xf32> to vector<2x256xf32>
    %133 = arith.addf %130, %132 : vector<2x256xf32>
    %cst_322 = arith.constant 0.000000e+00 : f32
    %134 = vector.broadcast %cst_322 : f32 to vector<2x256xf32>
    %135 = arith.cmpf ogt, %133, %134 : vector<2x256xf32>
    %cst_323 = arith.constant 1.000000e-01 : f32
    %136 = vector.broadcast %cst_323 : f32 to vector<2x256xf32>
    %137 = arith.mulf %136, %133 : vector<2x256xf32>
    %138 = arith.select %135, %133, %137 : vector<2x256xi1>, vector<2x256xf32>
    %c0_324 = arith.constant 0 : index
    %c0_325 = arith.constant 0 : index
    %139 = vector.load %arg11[%c0_324, %c0_325] : memref<2x256xf32, #tpu.memory_space<vmem>>, vector<2x256xf32>
    tpu.vector_store %arg11[%c0_324, %c0_325], %138 {strides = array<i32>} : memref<2x256xf32, #tpu.memory_space<vmem>>, vector<2x256xf32>,
    return
  }
}

module attributes {stable_mosaic.version = 11 : i64} {
  func.func @_matmul_bias_lrelu_kernel(%arg0: i32, %arg1: memref<256x16xf32, #tpu.memory_space<vmem>>, %arg2: memref<16x16xf32, #tpu.memory_space<vmem>>, %arg3: memref<1x16xf32, #tpu.memory_space<vmem>>, %arg4: memref<256x16xf32, #tpu.memory_space<vmem>>) attributes {dimension_semantics = [#tpu.dimension_semantics<arbitrary>], iteration_bounds = array<i64: 2>, scalar_prefetch = 0 : i64, scratch_operands = 0 : i64, tpu.core_type = #tpu.core_type<tc>, window_params = [{transform_indices = @transform_0, window_bounds = array<i64: 256, 16>}, {pipeline_mode = #tpu.pipeline_mode<synchronous>, transform_indices = @transform_1, window_bounds = array<i64: 16, 16>}, {pipeline_mode = #tpu.pipeline_mode<synchronous>, transform_indices = @transform_2, window_bounds = array<i64: 1, 16>}, {transform_indices = @transform_3, window_bounds = array<i64: 256, 16>}]} {
    %c0 = arith.constant 0 : index
    %c0_0 = arith.constant 0 : index
    %0 = vector.load %arg1[%c0, %c0_0] : memref<256x16xf32, #tpu.memory_space<vmem>>, vector<256x16xf32>
    %c0_1 = arith.constant 0 : index
    %c0_2 = arith.constant 0 : index
    %1 = vector.load %arg2[%c0_1, %c0_2] : memref<16x16xf32, #tpu.memory_space<vmem>>, vector<16x16xf32>
    %cst = arith.constant dense<0.000000e+00> : vector<256x16xf32>
    %2 = tpu.matmul %0, %1, %cst {dimension_numbers = #tpu.dot_dimension_numbers<[1], [0], [0], [1], [0, 0, 1, 1], [], []>} : vector<256x16xf32>, vector<16x16xf32>, vector<256x16xf32> -> vector<256x16xf32>
    %c0_3 = arith.constant 0 : index
    %c0_4 = arith.constant 0 : index
    %3 = vector.load %arg3[%c0_3, %c0_4] : memref<1x16xf32, #tpu.memory_space<vmem>>, vector<1x16xf32>
    %4 = vector.broadcast %3 : vector<1x16xf32> to vector<256x16xf32>
    %5 = arith.addf %2, %4 : vector<256x16xf32>
    %cst_5 = arith.constant 0.000000e+00 : f32
    %6 = vector.broadcast %cst_5 : f32 to vector<256x16xf32>
    %7 = arith.cmpf ogt, %5, %6 : vector<256x16xf32>
    %cst_6 = arith.constant 1.000000e-01 : f32
    %8 = vector.broadcast %cst_6 : f32 to vector<256x16xf32>
    %9 = arith.mulf %8, %5 : vector<256x16xf32>
    %10 = arith.select %7, %5, %9 : vector<256x16xi1>, vector<256x16xf32>
    %c0_7 = arith.constant 0 : index
    %c0_8 = arith.constant 0 : index
    %11 = vector.load %arg4[%c0_7, %c0_8] : memref<256x16xf32, #tpu.memory_space<vmem>>, vector<256x16xf32>
    tpu.vector_store %arg4[%c0_7, %c0_8], %10 {strides = array<i32>} : memref<256x16xf32, #tpu.memory_space<vmem>>, vector<256x16xf32>,
    return
  }
  func.func @transform_0(%arg0: i32) -> (i32, i32) {
    %c0_i32 = arith.constant 0 : i32
    %c0_i32_0 = arith.constant 0 : i32
    return %arg0, %c0_i32 : i32, i32
  }
  func.func @transform_1(%arg0: i32) -> (i32, i32) {
    %c0_i32 = arith.constant 0 : i32
    %c0_i32_0 = arith.constant 0 : i32
    %c0_i32_1 = arith.constant 0 : i32
    return %c0_i32, %c0_i32_0 : i32, i32
  }
  func.func @transform_2(%arg0: i32) -> (i32, i32) {
    %c0_i32 = arith.constant 0 : i32
    %c0_i32_0 = arith.constant 0 : i32
    %c0_i32_1 = arith.constant 0 : i32
    return %c0_i32, %c0_i32_0 : i32, i32
  }
  func.func @transform_3(%arg0: i32) -> (i32, i32) {
    %c0_i32 = arith.constant 0 : i32
    %c0_i32_0 = arith.constant 0 : i32
    return %arg0, %c0_i32 : i32, i32
  }
}

module attributes {stable_mosaic.version = 11 : i64} {
  func.func @_matmul_bias_lrelu_kernel(%arg0: i32, %arg1: memref<128x256xf32, #tpu.memory_space<vmem>>, %arg2: memref<256x32xf32, #tpu.memory_space<vmem>>, %arg3: memref<1x32xf32, #tpu.memory_space<vmem>>, %arg4: memref<128x32xf32, #tpu.memory_space<vmem>>) attributes {dimension_semantics = [#tpu.dimension_semantics<arbitrary>], iteration_bounds = array<i64: 1>, scalar_prefetch = 0 : i64, scratch_operands = 0 : i64, tpu.core_type = #tpu.core_type<tc>, window_params = [{transform_indices = @transform_0, window_bounds = array<i64: 128, 256>}, {pipeline_mode = #tpu.pipeline_mode<synchronous>, transform_indices = @transform_1, window_bounds = array<i64: 256, 32>}, {pipeline_mode = #tpu.pipeline_mode<synchronous>, transform_indices = @transform_2, window_bounds = array<i64: 1, 32>}, {transform_indices = @transform_3, window_bounds = array<i64: 128, 32>}]} {
    %c0 = arith.constant 0 : index
    %c0_0 = arith.constant 0 : index
    %0 = vector.load %arg1[%c0, %c0_0] : memref<128x256xf32, #tpu.memory_space<vmem>>, vector<128x256xf32>
    %c0_1 = arith.constant 0 : index
    %c0_2 = arith.constant 0 : index
    %1 = vector.load %arg2[%c0_1, %c0_2] : memref<256x32xf32, #tpu.memory_space<vmem>>, vector<256x32xf32>
    %cst = arith.constant dense<0.000000e+00> : vector<128x32xf32>
    %2 = tpu.matmul %0, %1, %cst {dimension_numbers = #tpu.dot_dimension_numbers<[1], [0], [0], [1], [0, 0, 1, 1], [], []>} : vector<128x256xf32>, vector<256x32xf32>, vector<128x32xf32> -> vector<128x32xf32>
    %c0_3 = arith.constant 0 : index
    %c0_4 = arith.constant 0 : index
    %3 = vector.load %arg3[%c0_3, %c0_4] : memref<1x32xf32, #tpu.memory_space<vmem>>, vector<1x32xf32>
    %4 = vector.broadcast %3 : vector<1x32xf32> to vector<128x32xf32>
    %5 = arith.addf %2, %4 : vector<128x32xf32>
    %cst_5 = arith.constant 0.000000e+00 : f32
    %6 = vector.broadcast %cst_5 : f32 to vector<128x32xf32>
    %7 = arith.cmpf ogt, %5, %6 : vector<128x32xf32>
    %cst_6 = arith.constant 1.000000e-01 : f32
    %8 = vector.broadcast %cst_6 : f32 to vector<128x32xf32>
    %9 = arith.mulf %8, %5 : vector<128x32xf32>
    %10 = arith.select %7, %5, %9 : vector<128x32xi1>, vector<128x32xf32>
    %c0_7 = arith.constant 0 : index
    %c0_8 = arith.constant 0 : index
    %11 = vector.load %arg4[%c0_7, %c0_8] : memref<128x32xf32, #tpu.memory_space<vmem>>, vector<128x32xf32>
    tpu.vector_store %arg4[%c0_7, %c0_8], %10 {strides = array<i32>} : memref<128x32xf32, #tpu.memory_space<vmem>>, vector<128x32xf32>,
    return
  }
  func.func @transform_0(%arg0: i32) -> (i32, i32) {
    %c0_i32 = arith.constant 0 : i32
    %c0_i32_0 = arith.constant 0 : i32
    return %arg0, %c0_i32 : i32, i32
  }
  func.func @transform_1(%arg0: i32) -> (i32, i32) {
    %c0_i32 = arith.constant 0 : i32
    %c0_i32_0 = arith.constant 0 : i32
    %c0_i32_1 = arith.constant 0 : i32
    return %c0_i32, %c0_i32_0 : i32, i32
  }
  func.func @transform_2(%arg0: i32) -> (i32, i32) {
    %c0_i32 = arith.constant 0 : i32
    %c0_i32_0 = arith.constant 0 : i32
    %c0_i32_1 = arith.constant 0 : i32
    return %c0_i32, %c0_i32_0 : i32, i32
  }
  func.func @transform_3(%arg0: i32) -> (i32, i32) {
    %c0_i32 = arith.constant 0 : i32
    %c0_i32_0 = arith.constant 0 : i32
    return %arg0, %c0_i32 : i32, i32
  }
}

module attributes {stable_mosaic.version = 11 : i64} {
  func.func @_matmul_bias_lrelu_kernel(%arg0: i32, %arg1: memref<32x512xf32, #tpu.memory_space<vmem>>, %arg2: memref<512x64xf32, #tpu.memory_space<vmem>>, %arg3: memref<1x64xf32, #tpu.memory_space<vmem>>, %arg4: memref<32x64xf32, #tpu.memory_space<vmem>>) attributes {dimension_semantics = [#tpu.dimension_semantics<arbitrary>], iteration_bounds = array<i64: 1>, scalar_prefetch = 0 : i64, scratch_operands = 0 : i64, tpu.core_type = #tpu.core_type<tc>, window_params = [{transform_indices = @transform_0, window_bounds = array<i64: 32, 512>}, {pipeline_mode = #tpu.pipeline_mode<synchronous>, transform_indices = @transform_1, window_bounds = array<i64: 512, 64>}, {pipeline_mode = #tpu.pipeline_mode<synchronous>, transform_indices = @transform_2, window_bounds = array<i64: 1, 64>}, {transform_indices = @transform_3, window_bounds = array<i64: 32, 64>}]} {
    %c0 = arith.constant 0 : index
    %c0_0 = arith.constant 0 : index
    %0 = vector.load %arg1[%c0, %c0_0] : memref<32x512xf32, #tpu.memory_space<vmem>>, vector<32x512xf32>
    %c0_1 = arith.constant 0 : index
    %c0_2 = arith.constant 0 : index
    %1 = vector.load %arg2[%c0_1, %c0_2] : memref<512x64xf32, #tpu.memory_space<vmem>>, vector<512x64xf32>
    %cst = arith.constant dense<0.000000e+00> : vector<32x64xf32>
    %2 = tpu.matmul %0, %1, %cst {dimension_numbers = #tpu.dot_dimension_numbers<[1], [0], [0], [1], [0, 0, 1, 1], [], []>} : vector<32x512xf32>, vector<512x64xf32>, vector<32x64xf32> -> vector<32x64xf32>
    %c0_3 = arith.constant 0 : index
    %c0_4 = arith.constant 0 : index
    %3 = vector.load %arg3[%c0_3, %c0_4] : memref<1x64xf32, #tpu.memory_space<vmem>>, vector<1x64xf32>
    %4 = vector.broadcast %3 : vector<1x64xf32> to vector<32x64xf32>
    %5 = arith.addf %2, %4 : vector<32x64xf32>
    %cst_5 = arith.constant 0.000000e+00 : f32
    %6 = vector.broadcast %cst_5 : f32 to vector<32x64xf32>
    %7 = arith.cmpf ogt, %5, %6 : vector<32x64xf32>
    %cst_6 = arith.constant 1.000000e-01 : f32
    %8 = vector.broadcast %cst_6 : f32 to vector<32x64xf32>
    %9 = arith.mulf %8, %5 : vector<32x64xf32>
    %10 = arith.select %7, %5, %9 : vector<32x64xi1>, vector<32x64xf32>
    %c0_7 = arith.constant 0 : index
    %c0_8 = arith.constant 0 : index
    %11 = vector.load %arg4[%c0_7, %c0_8] : memref<32x64xf32, #tpu.memory_space<vmem>>, vector<32x64xf32>
    tpu.vector_store %arg4[%c0_7, %c0_8], %10 {strides = array<i32>} : memref<32x64xf32, #tpu.memory_space<vmem>>, vector<32x64xf32>,
    return
  }
  func.func @transform_0(%arg0: i32) -> (i32, i32) {
    %c0_i32 = arith.constant 0 : i32
    %c0_i32_0 = arith.constant 0 : i32
    return %arg0, %c0_i32 : i32, i32
  }
  func.func @transform_1(%arg0: i32) -> (i32, i32) {
    %c0_i32 = arith.constant 0 : i32
    %c0_i32_0 = arith.constant 0 : i32
    %c0_i32_1 = arith.constant 0 : i32
    return %c0_i32, %c0_i32_0 : i32, i32
  }
  func.func @transform_2(%arg0: i32) -> (i32, i32) {
    %c0_i32 = arith.constant 0 : i32
    %c0_i32_0 = arith.constant 0 : i32
    %c0_i32_1 = arith.constant 0 : i32
    return %c0_i32, %c0_i32_0 : i32, i32
  }
  func.func @transform_3(%arg0: i32) -> (i32, i32) {
    %c0_i32 = arith.constant 0 : i32
    %c0_i32_0 = arith.constant 0 : i32
    return %arg0, %c0_i32 : i32, i32
  }
}

module attributes {stable_mosaic.version = 11 : i64} {
  func.func @_matmul_bias_lrelu_kernel(%arg0: i32, %arg1: memref<8x1024xf32, #tpu.memory_space<vmem>>, %arg2: memref<1024x128xf32, #tpu.memory_space<vmem>>, %arg3: memref<1x128xf32, #tpu.memory_space<vmem>>, %arg4: memref<8x128xf32, #tpu.memory_space<vmem>>) attributes {dimension_semantics = [#tpu.dimension_semantics<arbitrary>], iteration_bounds = array<i64: 1>, scalar_prefetch = 0 : i64, scratch_operands = 0 : i64, tpu.core_type = #tpu.core_type<tc>, window_params = [{transform_indices = @transform_0, window_bounds = array<i64: 8, 1024>}, {pipeline_mode = #tpu.pipeline_mode<synchronous>, transform_indices = @transform_1, window_bounds = array<i64: 1024, 128>}, {pipeline_mode = #tpu.pipeline_mode<synchronous>, transform_indices = @transform_2, window_bounds = array<i64: 1, 128>}, {transform_indices = @transform_3, window_bounds = array<i64: 8, 128>}]} {
    %c0 = arith.constant 0 : index
    %c0_0 = arith.constant 0 : index
    %0 = vector.load %arg1[%c0, %c0_0] : memref<8x1024xf32, #tpu.memory_space<vmem>>, vector<8x1024xf32>
    %c0_1 = arith.constant 0 : index
    %c0_2 = arith.constant 0 : index
    %1 = vector.load %arg2[%c0_1, %c0_2] : memref<1024x128xf32, #tpu.memory_space<vmem>>, vector<1024x128xf32>
    %cst = arith.constant dense<0.000000e+00> : vector<8x128xf32>
    %2 = tpu.matmul %0, %1, %cst {dimension_numbers = #tpu.dot_dimension_numbers<[1], [0], [0], [1], [0, 0, 1, 1], [], []>} : vector<8x1024xf32>, vector<1024x128xf32>, vector<8x128xf32> -> vector<8x128xf32>
    %c0_3 = arith.constant 0 : index
    %c0_4 = arith.constant 0 : index
    %3 = vector.load %arg3[%c0_3, %c0_4] : memref<1x128xf32, #tpu.memory_space<vmem>>, vector<1x128xf32>
    %4 = vector.broadcast %3 : vector<1x128xf32> to vector<8x128xf32>
    %5 = arith.addf %2, %4 : vector<8x128xf32>
    %cst_5 = arith.constant 0.000000e+00 : f32
    %6 = vector.broadcast %cst_5 : f32 to vector<8x128xf32>
    %7 = arith.cmpf ogt, %5, %6 : vector<8x128xf32>
    %cst_6 = arith.constant 1.000000e-01 : f32
    %8 = vector.broadcast %cst_6 : f32 to vector<8x128xf32>
    %9 = arith.mulf %8, %5 : vector<8x128xf32>
    %10 = arith.select %7, %5, %9 : vector<8x128xi1>, vector<8x128xf32>
    %c0_7 = arith.constant 0 : index
    %c0_8 = arith.constant 0 : index
    %11 = vector.load %arg4[%c0_7, %c0_8] : memref<8x128xf32, #tpu.memory_space<vmem>>, vector<8x128xf32>
    tpu.vector_store %arg4[%c0_7, %c0_8], %10 {strides = array<i32>} : memref<8x128xf32, #tpu.memory_space<vmem>>, vector<8x128xf32>,
    return
  }
  func.func @transform_0(%arg0: i32) -> (i32, i32) {
    %c0_i32 = arith.constant 0 : i32
    %c0_i32_0 = arith.constant 0 : i32
    return %arg0, %c0_i32 : i32, i32
  }
  func.func @transform_1(%arg0: i32) -> (i32, i32) {
    %c0_i32 = arith.constant 0 : i32
    %c0_i32_0 = arith.constant 0 : i32
    %c0_i32_1 = arith.constant 0 : i32
    return %c0_i32, %c0_i32_0 : i32, i32
  }
  func.func @transform_2(%arg0: i32) -> (i32, i32) {
    %c0_i32 = arith.constant 0 : i32
    %c0_i32_0 = arith.constant 0 : i32
    %c0_i32_1 = arith.constant 0 : i32
    return %c0_i32, %c0_i32_0 : i32, i32
  }
  func.func @transform_3(%arg0: i32) -> (i32, i32) {
    %c0_i32 = arith.constant 0 : i32
    %c0_i32_0 = arith.constant 0 : i32
    return %arg0, %c0_i32 : i32, i32
  }
}

module attributes {stable_mosaic.version = 11 : i64} {
  func.func @_matmul_bias_lrelu_kernel(%arg0: i32, %arg1: memref<2x2048xf32, #tpu.memory_space<vmem>>, %arg2: memref<2048x256xf32, #tpu.memory_space<vmem>>, %arg3: memref<1x256xf32, #tpu.memory_space<vmem>>, %arg4: memref<2x256xf32, #tpu.memory_space<vmem>>) attributes {dimension_semantics = [#tpu.dimension_semantics<arbitrary>], iteration_bounds = array<i64: 1>, scalar_prefetch = 0 : i64, scratch_operands = 0 : i64, tpu.core_type = #tpu.core_type<tc>, window_params = [{transform_indices = @transform_0, window_bounds = array<i64: 2, 2048>}, {pipeline_mode = #tpu.pipeline_mode<synchronous>, transform_indices = @transform_1, window_bounds = array<i64: 2048, 256>}, {pipeline_mode = #tpu.pipeline_mode<synchronous>, transform_indices = @transform_2, window_bounds = array<i64: 1, 256>}, {transform_indices = @transform_3, window_bounds = array<i64: 2, 256>}]} {
    %c0 = arith.constant 0 : index
    %c0_0 = arith.constant 0 : index
    %0 = vector.load %arg1[%c0, %c0_0] : memref<2x2048xf32, #tpu.memory_space<vmem>>, vector<2x2048xf32>
    %c0_1 = arith.constant 0 : index
    %c0_2 = arith.constant 0 : index
    %1 = vector.load %arg2[%c0_1, %c0_2] : memref<2048x256xf32, #tpu.memory_space<vmem>>, vector<2048x256xf32>
    %cst = arith.constant dense<0.000000e+00> : vector<2x256xf32>
    %2 = tpu.matmul %0, %1, %cst {dimension_numbers = #tpu.dot_dimension_numbers<[1], [0], [0], [1], [0, 0, 1, 1], [], []>} : vector<2x2048xf32>, vector<2048x256xf32>, vector<2x256xf32> -> vector<2x256xf32>
    %c0_3 = arith.constant 0 : index
    %c0_4 = arith.constant 0 : index
    %3 = vector.load %arg3[%c0_3, %c0_4] : memref<1x256xf32, #tpu.memory_space<vmem>>, vector<1x256xf32>
    %4 = vector.broadcast %3 : vector<1x256xf32> to vector<2x256xf32>
    %5 = arith.addf %2, %4 : vector<2x256xf32>
    %cst_5 = arith.constant 0.000000e+00 : f32
    %6 = vector.broadcast %cst_5 : f32 to vector<2x256xf32>
    %7 = arith.cmpf ogt, %5, %6 : vector<2x256xf32>
    %cst_6 = arith.constant 1.000000e-01 : f32
    %8 = vector.broadcast %cst_6 : f32 to vector<2x256xf32>
    %9 = arith.mulf %8, %5 : vector<2x256xf32>
    %10 = arith.select %7, %5, %9 : vector<2x256xi1>, vector<2x256xf32>
    %c0_7 = arith.constant 0 : index
    %c0_8 = arith.constant 0 : index
    %11 = vector.load %arg4[%c0_7, %c0_8] : memref<2x256xf32, #tpu.memory_space<vmem>>, vector<2x256xf32>
    tpu.vector_store %arg4[%c0_7, %c0_8], %10 {strides = array<i32>} : memref<2x256xf32, #tpu.memory_space<vmem>>, vector<2x256xf32>,
    return
  }
  func.func @transform_0(%arg0: i32) -> (i32, i32) {
    %c0_i32 = arith.constant 0 : i32
    %c0_i32_0 = arith.constant 0 : i32
    return %arg0, %c0_i32 : i32, i32
  }
  func.func @transform_1(%arg0: i32) -> (i32, i32) {
    %c0_i32 = arith.constant 0 : i32
    %c0_i32_0 = arith.constant 0 : i32
    %c0_i32_1 = arith.constant 0 : i32
    return %c0_i32, %c0_i32_0 : i32, i32
  }
  func.func @transform_2(%arg0: i32) -> (i32, i32) {
    %c0_i32 = arith.constant 0 : i32
    %c0_i32_0 = arith.constant 0 : i32
    %c0_i32_1 = arith.constant 0 : i32
    return %c0_i32, %c0_i32_0 : i32, i32
  }
  func.func @transform_3(%arg0: i32) -> (i32, i32) {
    %c0_i32 = arith.constant 0 : i32
    %c0_i32_0 = arith.constant 0 : i32
    return %arg0, %c0_i32 : i32, i32
  }
}

</mosaic_0001>

<llo_original>
// kernel: depth_encoder_forward_fused.1
$region0: #{depth_encoder_forward_fused.1}
  #allocation0 [shape = 'u32[]', space=smem, size = 0x4, offset = 0x4, fixed_abs, tag = 'smem constant byte address 0x4 - core index']
  #allocation1 [shape = 'u32[144,128]{1,0:T(1,128)}', space=vmem, size = 0x12000, scoped, tag = 'internal scratch']
  #allocation2 [shape = 'f32[2,18,18,16]{3,2,1,0:T(8,128)}', space=vmem, size = 0x6c000, scoped, tag = 'scratch operand']
  #allocation3 [shape = 'f32[2,10,10,32]{3,2,1,0:T(8,128)}', space=vmem, size = 0x28000, scoped, tag = 'scratch operand']
  #allocation4 [shape = 'f32[2,6,6,64]{3,2,1,0:T(8,128)}', space=vmem, size = 0xc000, scoped, tag = 'scratch operand']
  #allocation5 [shape = 'f32[2,4,4,128]{3,2,1,0:T(4,128)}', space=vmem, size = 0x4000, scoped, tag = 'scratch operand']
  %s0 = inlined_call_operand.vmem [shape: f32[512,16], index: 0, kind: input, shape index: {}]
  %s1 = inlined_call_operand.vmem [shape: f32[16,16], index: 1, kind: input, shape index: {}]
  %s2 = inlined_call_operand.vmem [shape: f32[1,16], index: 2, kind: input, shape index: {}]
  %s3 = inlined_call_operand.vmem [shape: f32[256,32], index: 3, kind: input, shape index: {}]
  %s4 = inlined_call_operand.vmem [shape: f32[1,32], index: 4, kind: input, shape index: {}]
  %s5 = inlined_call_operand.vmem [shape: f32[512,64], index: 5, kind: input, shape index: {}]
  %s6 = inlined_call_operand.vmem [shape: f32[1,64], index: 6, kind: input, shape index: {}]
  %s7 = inlined_call_operand.hbm [shape: f32[1024,128], index: 7, kind: input, shape index: {}]
  %s8 = inlined_call_operand.vmem [shape: f32[1,128], index: 8, kind: input, shape index: {}]
  %s9 = inlined_call_operand.vmem [shape: f32[2048,256], index: 9, kind: input, shape index: {}]
  %s10 = inlined_call_operand.vmem [shape: f32[1,256], index: 10, kind: input, shape index: {}]
  %s11 = inlined_call_operand.vmem [shape: f32[2,256], index: 11, kind: output, shape index: {}]
  %s12 = sld [smem:[#allocation0]]
  $region58: #{depth_encoder_forward_fused.1} parent=0
    _
  %s14 = ssub.s32 1, %s12
  %s15 = scalar_select 0, %s14, %s12
  $region1: #{depth_encoder_forward_fused.1} parent=0
    #allocation6 [shape = 'u8[524288]{0}', space=vmem, size = 0x80000, scoped, tag = 'input window, operand 7, single buffered']
    #allocation7 [shape = 's32[1]{0}', space=sflag, size = 0x4, scoped, tag = 'scoped memory for depth_encoder_forward_fused.1']
    %16 = vsyncpa [#allocation7], 0
    // Predicated region
    $region2: #{depth_encoder_forward_fused.1} parent=1 // pred_check
      _
    $region3: #{depth_encoder_forward_fused.1} parent=1 // pred_check_branch
      %18 = sbr.rel (0) target = $region5
    $region4: #{depth_encoder_forward_fused.1} parent=1 // pred_region
      _
    $region5: #{depth_encoder_forward_fused.1} parent=1 // pred_fallthru
      _
    // Predicated region
    $region6: #{depth_encoder_forward_fused.1} parent=1 // pred_check
      _
    $region7: #{depth_encoder_forward_fused.1} parent=1 // pred_check_branch
      %20 = sbr.rel (0) target = $region9
    $region8: #{depth_encoder_forward_fused.1} parent=1 // pred_region
      _
    $region9: #{depth_encoder_forward_fused.1} parent=1 // pred_fallthru
      _
    // Predicated region
    $region10: #{depth_encoder_forward_fused.1} parent=1 // pred_check
      _
    $region11: #{depth_encoder_forward_fused.1} parent=1 // pred_check_branch
      %22 = sbr.rel (0) target = $region13
    $region12: #{depth_encoder_forward_fused.1} parent=1 // pred_region
      _
    $region13: #{depth_encoder_forward_fused.1} parent=1 // pred_fallthru
      _
    // Predicated region
    $region14: #{depth_encoder_forward_fused.1} parent=1 // pred_check
      _
    $region15: #{depth_encoder_forward_fused.1} parent=1 // pred_check_branch
      %24 = sbr.rel (0) target = $region17
    $region16: #{depth_encoder_forward_fused.1} parent=1 // pred_region
      _
    $region17: #{depth_encoder_forward_fused.1} parent=1 // pred_fallthru
      _
    // Predicated region
    $region18: #{depth_encoder_forward_fused.1} parent=1 // pred_check
      _
    $region19: #{depth_encoder_forward_fused.1} parent=1 // pred_check_branch
      %26 = sbr.rel (0) target = $region21
    $region20: #{depth_encoder_forward_fused.1} parent=1 // pred_region
      _
    $region21: #{depth_encoder_forward_fused.1} parent=1 // pred_fallthru
      _
    // Predicated region
    $region22: #{depth_encoder_forward_fused.1} parent=1 // pred_check
      _
    $region23: #{depth_encoder_forward_fused.1} parent=1 // pred_check_branch
      %28 = sbr.rel (0) target = $region25
    $region24: #{depth_encoder_forward_fused.1} parent=1 // pred_region
      _
    $region25: #{depth_encoder_forward_fused.1} parent=1 // pred_fallthru
      _
    // Predicated region
    $region26: #{depth_encoder_forward_fused.1} parent=1 // pred_check
      _
    $region27: #{depth_encoder_forward_fused.1} parent=1 // pred_check_branch
      %30 = sbr.rel (0) target = $region29
    $region28: #{depth_encoder_forward_fused.1} parent=1 // pred_region
      _
    $region29: #{depth_encoder_forward_fused.1} parent=1 // pred_fallthru
      _
    // Predicated region
    $region30: #{depth_encoder_forward_fused.1} parent=1 // pred_check
      _
    $region31: #{depth_encoder_forward_fused.1} parent=1 // pred_check_branch
      %32 = sbr.rel (0) target = $region33
    $region32: #{depth_encoder_forward_fused.1} parent=1 // pred_region
      %s34 = ssub.s32 16384, 16384
      %35 = vsyncadd [#allocation7], %s34
      %s36 = sshll.u32 [#allocation6], 4
      %s37 = int_to_ptr.vmem [resolvable:$true] %s36
      %42 = dma.hbm_to_vmem [thread:$0]  %s7, 16384, %s37, [#allocation7], 128, 128, 8
    $region33: #{depth_encoder_forward_fused.1} parent=1 // pred_fallthru
      _
    // Predicated region
    $region34: #{depth_encoder_forward_fused.1} parent=1 // pred_check
      _
    $region35: #{depth_encoder_forward_fused.1} parent=1 // pred_check_branch
      %44 = sbr.rel (0) target = $region37
    $region36: #{depth_encoder_forward_fused.1} parent=1 // pred_region
      _
    $region37: #{depth_encoder_forward_fused.1} parent=1 // pred_fallthru
      _
    // Predicated region
    $region38: #{depth_encoder_forward_fused.1} parent=1 // pred_check
      _
    $region39: #{depth_encoder_forward_fused.1} parent=1 // pred_check_branch
      %46 = sbr.rel (0) target = $region41
    $region40: #{depth_encoder_forward_fused.1} parent=1 // pred_region
      _
    $region41: #{depth_encoder_forward_fused.1} parent=1 // pred_fallthru
      _
    // Predicated region
    $region42: #{depth_encoder_forward_fused.1} parent=1 // pred_check
      _
    $region43: #{depth_encoder_forward_fused.1} parent=1 // pred_check_branch
      %48 = sbr.rel (0) target = $region45
    $region44: #{depth_encoder_forward_fused.1} parent=1 // pred_region
      _
    $region45: #{depth_encoder_forward_fused.1} parent=1 // pred_fallthru
      _
    // Predicated region
    $region46: #{depth_encoder_forward_fused.1} parent=1 // pred_check
      _
    $region47: #{depth_encoder_forward_fused.1} parent=1 // pred_check_branch
      %50 = sbr.rel (0) target = $region49
    $region48: #{depth_encoder_forward_fused.1} parent=1 // pred_region
      %51 = dma.done [#allocation7], 16384
    $region49: #{depth_encoder_forward_fused.1} parent=1 // pred_fallthru
      _
    %v52 = vld [vmem:[%s0] sm:$0xff]
    %v53 = vld [vmem:[%s0 + $0x8] sm:$0xff]
    %v54 = vld [vmem:[%s0 + $0x10] sm:$0xff]
    %v55 = vld [vmem:[%s0 + $0x18] sm:$0xff]
    %v56 = vld [vmem:[%s0 + $0x20] sm:$0xff]
    %v57 = vld [vmem:[%s0 + $0x28] sm:$0xff]
    %v58 = vld [vmem:[%s0 + $0x30] sm:$0xff]
    %v59 = vld [vmem:[%s0 + $0x38] sm:$0xff]
    %v60 = vld [vmem:[%s0 + $0x40] sm:$0xff]
    %v61 = vld [vmem:[%s0 + $0x48] sm:$0xff]
    %v62 = vld [vmem:[%s0 + $0x50] sm:$0xff]
    %v63 = vld [vmem:[%s0 + $0x58] sm:$0xff]
    %v64 = vld [vmem:[%s0 + $0x60] sm:$0xff]
    %v65 = vld [vmem:[%s0 + $0x68] sm:$0xff]
    %v66 = vld [vmem:[%s0 + $0x70] sm:$0xff]
    %v67 = vld [vmem:[%s0 + $0x78] sm:$0xff]
    %v68 = vld [vmem:[%s0 + $0x80] sm:$0xff]
    %v69 = vld [vmem:[%s0 + $0x88] sm:$0xff]
    %v70 = vld [vmem:[%s0 + $0x90] sm:$0xff]
    %v71 = vld [vmem:[%s0 + $0x98] sm:$0xff]
    %v72 = vld [vmem:[%s0 + $0xa0] sm:$0xff]
    %v73 = vld [vmem:[%s0 + $0xa8] sm:$0xff]
    %v74 = vld [vmem:[%s0 + $0xb0] sm:$0xff]
    %v75 = vld [vmem:[%s0 + $0xb8] sm:$0xff]
    %v76 = vld [vmem:[%s0 + $0xc0] sm:$0xff]
    %v77 = vld [vmem:[%s0 + $0xc8] sm:$0xff]
    %v78 = vld [vmem:[%s0 + $0xd0] sm:$0xff]
    %v79 = vld [vmem:[%s0 + $0xd8] sm:$0xff]
    %v80 = vld [vmem:[%s0 + $0xe0] sm:$0xff]
    %v81 = vld [vmem:[%s0 + $0xe8] sm:$0xff]
    %v82 = vld [vmem:[%s0 + $0xf0] sm:$0xff]
    %v83 = vld [vmem:[%s0 + $0xf8] sm:$0xff]
    %v84 = vld [vmem:[%s0 + $0x100] sm:$0xff]
    %v85 = vld [vmem:[%s0 + $0x108] sm:$0xff]
    %v86 = vld [vmem:[%s0 + $0x110] sm:$0xff]
    %v87 = vld [vmem:[%s0 + $0x118] sm:$0xff]
    %v88 = vld [vmem:[%s0 + $0x120] sm:$0xff]
    %v89 = vld [vmem:[%s0 + $0x128] sm:$0xff]
    %v90 = vld [vmem:[%s0 + $0x130] sm:$0xff]
    %v91 = vld [vmem:[%s0 + $0x138] sm:$0xff]
    %v92 = vld [vmem:[%s0 + $0x140] sm:$0xff]
    %v93 = vld [vmem:[%s0 + $0x148] sm:$0xff]
    %v94 = vld [vmem:[%s0 + $0x150] sm:$0xff]
    %v95 = vld [vmem:[%s0 + $0x158] sm:$0xff]
    %v96 = vld [vmem:[%s0 + $0x160] sm:$0xff]
    %v97 = vld [vmem:[%s0 + $0x168] sm:$0xff]
    %v98 = vld [vmem:[%s0 + $0x170] sm:$0xff]
    %v99 = vld [vmem:[%s0 + $0x178] sm:$0xff]
    %v100 = vld [vmem:[%s0 + $0x180] sm:$0xff]
    %v101 = vld [vmem:[%s0 + $0x188] sm:$0xff]
    %v102 = vld [vmem:[%s0 + $0x190] sm:$0xff]
    %v103 = vld [vmem:[%s0 + $0x198] sm:$0xff]
    %v104 = vld [vmem:[%s0 + $0x1a0] sm:$0xff]
    %v105 = vld [vmem:[%s0 + $0x1a8] sm:$0xff]
    %v106 = vld [vmem:[%s0 + $0x1b0] sm:$0xff]
    %v107 = vld [vmem:[%s0 + $0x1b8] sm:$0xff]
    %v108 = vld [vmem:[%s0 + $0x1c0] sm:$0xff]
    %v109 = vld [vmem:[%s0 + $0x1c8] sm:$0xff]
    %v110 = vld [vmem:[%s0 + $0x1d0] sm:$0xff]
    %v111 = vld [vmem:[%s0 + $0x1d8] sm:$0xff]
    %v112 = vld [vmem:[%s0 + $0x1e0] sm:$0xff]
    %v113 = vld [vmem:[%s0 + $0x1e8] sm:$0xff]
    %v114 = vld [vmem:[%s0 + $0x1f0] sm:$0xff]
    %v115 = vld [vmem:[%s0 + $0x1f8] sm:$0xff]
    %v116 = vld [vmem:[%s1] sm:$0xff]
    %v117 = vld [vmem:[%s1 + $0x8] sm:$0xff]
    %v118 = vld [vmem:[%s2] sm:$0x1]
    %v120 = vlaneseq
    %v121 = vshrl.u32 %v120, 7
    %v122 = vsub.s32 0, %v121
    %v123 = vrot.slane %v118, %v122
    %vm125 = vcmask 130048
    %v127 = vsel %vm125, %v52, 0
    %v130 = vsel %vm125, %v53, 0
    %v133 = vsel %vm125, %v54, 0
    %v136 = vsel %vm125, %v55, 0
    %v139 = vsel %vm125, %v56, 0
    %v142 = vsel %vm125, %v57, 0
    %v145 = vsel %vm125, %v58, 0
    %v148 = vsel %vm125, %v59, 0
    %v151 = vsel %vm125, %v60, 0
    %v154 = vsel %vm125, %v61, 0
    %v157 = vsel %vm125, %v62, 0
    %v160 = vsel %vm125, %v63, 0
    %v163 = vsel %vm125, %v64, 0
    %v166 = vsel %vm125, %v65, 0
    %v169 = vsel %vm125, %v66, 0
    %v172 = vsel %vm125, %v67, 0
    %v175 = vsel %vm125, %v68, 0
    %v178 = vsel %vm125, %v69, 0
    %v181 = vsel %vm125, %v70, 0
    %v184 = vsel %vm125, %v71, 0
    %v187 = vsel %vm125, %v72, 0
    %v190 = vsel %vm125, %v73, 0
    %v193 = vsel %vm125, %v74, 0
    %v196 = vsel %vm125, %v75, 0
    %v199 = vsel %vm125, %v76, 0
    %v202 = vsel %vm125, %v77, 0
    %v205 = vsel %vm125, %v78, 0
    %v208 = vsel %vm125, %v79, 0
    %v211 = vsel %vm125, %v80, 0
    %v214 = vsel %vm125, %v81, 0
    %v217 = vsel %vm125, %v82, 0
    %v220 = vsel %vm125, %v83, 0
    %v223 = vsel %vm125, %v84, 0
    %v226 = vsel %vm125, %v85, 0
    %v229 = vsel %vm125, %v86, 0
    %v232 = vsel %vm125, %v87, 0
    %v235 = vsel %vm125, %v88, 0
    %v238 = vsel %vm125, %v89, 0
    %v241 = vsel %vm125, %v90, 0
    %v244 = vsel %vm125, %v91, 0
    %v247 = vsel %vm125, %v92, 0
    %v250 = vsel %vm125, %v93, 0
    %v253 = vsel %vm125, %v94, 0
    %v256 = vsel %vm125, %v95, 0
    %v259 = vsel %vm125, %v96, 0
    %v262 = vsel %vm125, %v97, 0
    %v265 = vsel %vm125, %v98, 0
    %v268 = vsel %vm125, %v99, 0
    %v271 = vsel %vm125, %v100, 0
    %v274 = vsel %vm125, %v101, 0
    %v277 = vsel %vm125, %v102, 0
    %v280 = vsel %vm125, %v103, 0
    %v283 = vsel %vm125, %v104, 0
    %v286 = vsel %vm125, %v105, 0
    %v289 = vsel %vm125, %v106, 0
    %v292 = vsel %vm125, %v107, 0
    %v295 = vsel %vm125, %v108, 0
    %v298 = vsel %vm125, %v109, 0
    %v301 = vsel %vm125, %v110, 0
    %v304 = vsel %vm125, %v111, 0
    %v307 = vsel %vm125, %v112, 0
    %v310 = vsel %vm125, %v113, 0
    %v313 = vsel %vm125, %v114, 0
    %v316 = vsel %vm125, %v115, 0
    %318 = vmatprep.subr.mxu0 0.0
    %319 = vmatpush1.msra.mxu0 %v116
    %320 = vmatprep.subr.mxu0 0.0
    %321 = vmatpush1.msra.mxu0 %v117
    %322 = vmatprep.subr.mxu0 0.0
    %323 = vmatpush1.msra.mxu0 0.0
    %324 = vmatprep.subr.mxu0 0.0
    %325 = vmatpush1.msra.mxu0 0.0
    %326 = vmatprep.subr.mxu0 0.0
    %327 = vmatpush1.msra.mxu0 0.0
    %328 = vmatprep.subr.mxu0 0.0
    %329 = vmatpush1.msra.mxu0 0.0
    %330 = vmatprep.subr.mxu0 0.0
    %331 = vmatpush1.msra.mxu0 0.0
    %332 = vmatprep.subr.mxu0 0.0
    %333 = vmatpush1.msra.mxu0 0.0
    %334 = vmatprep.subr.mxu0 0.0
    %335 = vmatpush1.msra.mxu0 0.0
    %336 = vmatprep.subr.mxu0 0.0
    %337 = vmatpush1.msra.mxu0 0.0
    %338 = vmatprep.subr.mxu0 0.0
    %339 = vmatpush1.msra.mxu0 0.0
    %340 = vmatprep.subr.mxu0 0.0
    %341 = vmatpush1.msra.mxu0 0.0
    %342 = vmatprep.subr.mxu0 0.0
    %343 = vmatpush1.msra.mxu0 0.0
    %344 = vmatprep.subr.mxu0 0.0
    %345 = vmatpush1.msra.mxu0 0.0
    %346 = vmatprep.subr.mxu0 0.0
    %347 = vmatpush1.msra.mxu0 0.0
    %348 = vmatprep.subr.mxu0 0.0
    %349 = vmatpush1.msra.mxu0 0.0
    %350 = vmatprep.subr.mxu0 0.0
    %351 = vmatpush1.msra.mxu0 0.0
    %352 = vmatprep.subr.mxu0 0.0
    %353 = vmatpush1.msra.mxu0 0.0
    %354 = vmatprep.subr.mxu0 0.0
    %355 = vmatpush1.msra.mxu0 0.0
    %356 = vmatprep.subr.mxu0 0.0
    %357 = vmatpush1.msra.mxu0 0.0
    %358 = vmatprep.subr.mxu0 0.0
    %359 = vmatpush1.msra.mxu0 0.0
    %360 = vmatprep.subr.mxu0 0.0
    %361 = vmatpush1.msra.mxu0 0.0
    %362 = vmatprep.subr.mxu0 0.0
    %363 = vmatpush1.msra.mxu0 0.0
    %364 = vmatprep.subr.mxu0 0.0
    %365 = vmatpush1.msra.mxu0 0.0
    %366 = vmatprep.subr.mxu0 0.0
    %367 = vmatpush1.msra.mxu0 0.0
    %368 = vmatprep.subr.mxu0 0.0
    %369 = vmatpush1.msra.mxu0 0.0
    %370 = vmatprep.subr.mxu0 0.0
    %371 = vmatpush1.msra.mxu0 0.0
    %372 = vmatprep.subr.mxu0 0.0
    %373 = vmatpush1.msra.mxu0 0.0
    %374 = vmatprep.subr.mxu0 0.0
    %375 = vmatpush1.msra.mxu0 0.0
    %376 = vmatprep.subr.mxu0 0.0
    %377 = vmatpush1.msra.mxu0 0.0
    %378 = vmatprep.subr.mxu0 0.0
    %379 = vmatpush1.msra.mxu0 0.0
    %380 = vmatprep.subr.mxu0 0.0
    %381 = vmatpush1.msra.mxu0 0.0
    %382 = vmatprep.mubr.f32.mxu0 0.0
    %383 = vmatmul.mubr.f32.gmra.mrb[0].mxu0 %v127
    %v384 = vpop.f32.mrb[0].mxu0
    %v385 = vadd.f32 %v123, %v384
    %v386 = vpop.f32.mrb[0].mxu0
    %387 = vmatprep.mubr.f32.mxu0 0.0
    %388 = vmatmul.mubr.f32.gmra.mrb[0].mxu0 %v130
    %v389 = vpop.f32.mrb[0].mxu0
    %v390 = vadd.f32 %v123, %v389
    %v391 = vpop.f32.mrb[0].mxu0
    %392 = vmatprep.mubr.f32.mxu0 0.0
    %393 = vmatmul.mubr.f32.gmra.mrb[0].mxu0 %v133
    %v394 = vpop.f32.mrb[0].mxu0
    %v395 = vadd.f32 %v123, %v394
    %v396 = vpop.f32.mrb[0].mxu0
    %397 = vmatprep.mubr.f32.mxu0 0.0
    %398 = vmatmul.mubr.f32.gmra.mrb[0].mxu0 %v136
    %v399 = vpop.f32.mrb[0].mxu0
    %v400 = vadd.f32 %v123, %v399
    %v401 = vpop.f32.mrb[0].mxu0
    %402 = vmatprep.mubr.f32.mxu0 0.0
    %403 = vmatmul.mubr.f32.gmra.mrb[0].mxu0 %v139
    %v404 = vpop.f32.mrb[0].mxu0
    %v405 = vadd.f32 %v123, %v404
    %v406 = vpop.f32.mrb[0].mxu0
    %407 = vmatprep.mubr.f32.mxu0 0.0
    %408 = vmatmul.mubr.f32.gmra.mrb[0].mxu0 %v142
    %v409 = vpop.f32.mrb[0].mxu0
    %v410 = vadd.f32 %v123, %v409
    %v411 = vpop.f32.mrb[0].mxu0
    %412 = vmatprep.mubr.f32.mxu0 0.0
    %413 = vmatmul.mubr.f32.gmra.mrb[0].mxu0 %v145
    %v414 = vpop.f32.mrb[0].mxu0
    %v415 = vadd.f32 %v123, %v414
    %v416 = vpop.f32.mrb[0].mxu0
    %417 = vmatprep.mubr.f32.mxu0 0.0
    %418 = vmatmul.mubr.f32.gmra.mrb[0].mxu0 %v148
    %v419 = vpop.f32.mrb[0].mxu0
    %v420 = vadd.f32 %v123, %v419
    %v421 = vpop.f32.mrb[0].mxu0
    %422 = vmatprep.mubr.f32.mxu0 0.0
    %423 = vmatmul.mubr.f32.gmra.mrb[0].mxu0 %v151
    %v424 = vpop.f32.mrb[0].mxu0
    %v425 = vadd.f32 %v123, %v424
    %v426 = vpop.f32.mrb[0].mxu0
    %427 = vmatprep.mubr.f32.mxu0 0.0
    %428 = vmatmul.mubr.f32.gmra.mrb[0].mxu0 %v154
    %v429 = vpop.f32.mrb[0].mxu0
    %v430 = vadd.f32 %v123, %v429
    %v431 = vpop.f32.mrb[0].mxu0
    %432 = vmatprep.mubr.f32.mxu0 0.0
    %433 = vmatmul.mubr.f32.gmra.mrb[0].mxu0 %v157
    %v434 = vpop.f32.mrb[0].mxu0
    %v435 = vadd.f32 %v123, %v434
    %v436 = vpop.f32.mrb[0].mxu0
    %437 = vmatprep.mubr.f32.mxu0 0.0
    %438 = vmatmul.mubr.f32.gmra.mrb[0].mxu0 %v160
    %v439 = vpop.f32.mrb[0].mxu0
    %v440 = vadd.f32 %v123, %v439
    %v441 = vpop.f32.mrb[0].mxu0
    %442 = vmatprep.mubr.f32.mxu0 0.0
    %443 = vmatmul.mubr.f32.gmra.mrb[0].mxu0 %v163
    %v444 = vpop.f32.mrb[0].mxu0
    %v445 = vadd.f32 %v123, %v444
    %v446 = vpop.f32.mrb[0].mxu0
    %447 = vmatprep.mubr.f32.mxu0 0.0
    %448 = vmatmul.mubr.f32.gmra.mrb[0].mxu0 %v166
    %v449 = vpop.f32.mrb[0].mxu0
    %v450 = vadd.f32 %v123, %v449
    %v451 = vpop.f32.mrb[0].mxu0
    %452 = vmatprep.mubr.f32.mxu0 0.0
    %453 = vmatmul.mubr.f32.gmra.mrb[0].mxu0 %v169
    %v454 = vpop.f32.mrb[0].mxu0
    %v455 = vadd.f32 %v123, %v454
    %v456 = vpop.f32.mrb[0].mxu0
    %457 = vmatprep.mubr.f32.mxu0 0.0
    %458 = vmatmul.mubr.f32.gmra.mrb[0].mxu0 %v172
    %v459 = vpop.f32.mrb[0].mxu0
    %v460 = vadd.f32 %v123, %v459
    %v461 = vpop.f32.mrb[0].mxu0
    %462 = vmatprep.mubr.f32.mxu0 0.0
    %463 = vmatmul.mubr.f32.gmra.mrb[0].mxu0 %v175
    %v464 = vpop.f32.mrb[0].mxu0
    %v465 = vadd.f32 %v123, %v464
    %v466 = vpop.f32.mrb[0].mxu0
    %467 = vmatprep.mubr.f32.mxu0 0.0
    %468 = vmatmul.mubr.f32.gmra.mrb[0].mxu0 %v178
    %v469 = vpop.f32.mrb[0].mxu0
    %v470 = vadd.f32 %v123, %v469
    %v471 = vpop.f32.mrb[0].mxu0
    %472 = vmatprep.mubr.f32.mxu0 0.0
    %473 = vmatmul.mubr.f32.gmra.mrb[0].mxu0 %v181
    %v474 = vpop.f32.mrb[0].mxu0
    %v475 = vadd.f32 %v123, %v474
    %v476 = vpop.f32.mrb[0].mxu0
    %477 = vmatprep.mubr.f32.mxu0 0.0
    %478 = vmatmul.mubr.f32.gmra.mrb[0].mxu0 %v184
    %v479 = vpop.f32.mrb[0].mxu0
    %v480 = vadd.f32 %v123, %v479
    %v481 = vpop.f32.mrb[0].mxu0
    %482 = vmatprep.mubr.f32.mxu0 0.0
    %483 = vmatmul.mubr.f32.gmra.mrb[0].mxu0 %v187
    %v484 = vpop.f32.mrb[0].mxu0
    %v485 = vadd.f32 %v123, %v484
    %v486 = vpop.f32.mrb[0].mxu0
    %487 = vmatprep.mubr.f32.mxu0 0.0
    %488 = vmatmul.mubr.f32.gmra.mrb[0].mxu0 %v190
    %v489 = vpop.f32.mrb[0].mxu0
    %v490 = vadd.f32 %v123, %v489
    %v491 = vpop.f32.mrb[0].mxu0
    %492 = vmatprep.mubr.f32.mxu0 0.0
    %493 = vmatmul.mubr.f32.gmra.mrb[0].mxu0 %v193
    %v494 = vpop.f32.mrb[0].mxu0
    %v495 = vadd.f32 %v123, %v494
    %v496 = vpop.f32.mrb[0].mxu0
    %497 = vmatprep.mubr.f32.mxu0 0.0
    %498 = vmatmul.mubr.f32.gmra.mrb[0].mxu0 %v196
    %v499 = vpop.f32.mrb[0].mxu0
    %v500 = vadd.f32 %v123, %v499
    %v501 = vpop.f32.mrb[0].mxu0
    %502 = vmatprep.mubr.f32.mxu0 0.0
    %503 = vmatmul.mubr.f32.gmra.mrb[0].mxu0 %v199
    %v504 = vpop.f32.mrb[0].mxu0
    %v505 = vadd.f32 %v123, %v504
    %v506 = vpop.f32.mrb[0].mxu0
    %507 = vmatprep.mubr.f32.mxu0 0.0
    %508 = vmatmul.mubr.f32.gmra.mrb[0].mxu0 %v202
    %v509 = vpop.f32.mrb[0].mxu0
    %v510 = vadd.f32 %v123, %v509
    %v511 = vpop.f32.mrb[0].mxu0
    %512 = vmatprep.mubr.f32.mxu0 0.0
    %513 = vmatmul.mubr.f32.gmra.mrb[0].mxu0 %v205
    %v514 = vpop.f32.mrb[0].mxu0
    %v515 = vadd.f32 %v123, %v514
    %v516 = vpop.f32.mrb[0].mxu0
    %517 = vmatprep.mubr.f32.mxu0 0.0
    %518 = vmatmul.mubr.f32.gmra.mrb[0].mxu0 %v208
    %v519 = vpop.f32.mrb[0].mxu0
    %v520 = vadd.f32 %v123, %v519
    %v521 = vpop.f32.mrb[0].mxu0
    %522 = vmatprep.mubr.f32.mxu0 0.0
    %523 = vmatmul.mubr.f32.gmra.mrb[0].mxu0 %v211
    %v524 = vpop.f32.mrb[0].mxu0
    %v525 = vadd.f32 %v123, %v524
    %v526 = vpop.f32.mrb[0].mxu0
    %527 = vmatprep.mubr.f32.mxu0 0.0
    %528 = vmatmul.mubr.f32.gmra.mrb[0].mxu0 %v214
    %v529 = vpop.f32.mrb[0].mxu0
    %v530 = vadd.f32 %v123, %v529
    %v531 = vpop.f32.mrb[0].mxu0
    %532 = vmatprep.mubr.f32.mxu0 0.0
    %533 = vmatmul.mubr.f32.gmra.mrb[0].mxu0 %v217
    %v534 = vpop.f32.mrb[0].mxu0
    %v535 = vadd.f32 %v123, %v534
    %v536 = vpop.f32.mrb[0].mxu0
    %537 = vmatprep.mubr.f32.mxu0 0.0
    %538 = vmatmul.mubr.f32.gmra.mrb[0].mxu0 %v220
    %v539 = vpop.f32.mrb[0].mxu0
    %v540 = vadd.f32 %v123, %v539
    %v541 = vpop.f32.mrb[0].mxu0
    %542 = vmatprep.mubr.f32.mxu0 0.0
    %543 = vmatmul.mubr.f32.gmra.mrb[0].mxu0 %v223
    %v544 = vpop.f32.mrb[0].mxu0
    %v545 = vadd.f32 %v123, %v544
    %v546 = vpop.f32.mrb[0].mxu0
    %547 = vmatprep.mubr.f32.mxu0 0.0
    %548 = vmatmul.mubr.f32.gmra.mrb[0].mxu0 %v226
    %v549 = vpop.f32.mrb[0].mxu0
    %v550 = vadd.f32 %v123, %v549
    %v551 = vpop.f32.mrb[0].mxu0
    %552 = vmatprep.mubr.f32.mxu0 0.0
    %553 = vmatmul.mubr.f32.gmra.mrb[0].mxu0 %v229
    %v554 = vpop.f32.mrb[0].mxu0
    %v555 = vadd.f32 %v123, %v554
    %v556 = vpop.f32.mrb[0].mxu0
    %557 = vmatprep.mubr.f32.mxu0 0.0
    %558 = vmatmul.mubr.f32.gmra.mrb[0].mxu0 %v232
    %v559 = vpop.f32.mrb[0].mxu0
    %v560 = vadd.f32 %v123, %v559
    %v561 = vpop.f32.mrb[0].mxu0
    %562 = vmatprep.mubr.f32.mxu0 0.0
    %563 = vmatmul.mubr.f32.gmra.mrb[0].mxu0 %v235
    %v564 = vpop.f32.mrb[0].mxu0
    %v565 = vadd.f32 %v123, %v564
    %v566 = vpop.f32.mrb[0].mxu0
    %567 = vmatprep.mubr.f32.mxu0 0.0
    %568 = vmatmul.mubr.f32.gmra.mrb[0].mxu0 %v238
    %v569 = vpop.f32.mrb[0].mxu0
    %v570 = vadd.f32 %v123, %v569
    %v571 = vpop.f32.mrb[0].mxu0
    %572 = vmatprep.mubr.f32.mxu0 0.0
    %573 = vmatmul.mubr.f32.gmra.mrb[0].mxu0 %v241
    %v574 = vpop.f32.mrb[0].mxu0
    %v575 = vadd.f32 %v123, %v574
    %v576 = vpop.f32.mrb[0].mxu0
    %577 = vmatprep.mubr.f32.mxu0 0.0
    %578 = vmatmul.mubr.f32.gmra.mrb[0].mxu0 %v244
    %v579 = vpop.f32.mrb[0].mxu0
    %v580 = vadd.f32 %v123, %v579
    %v581 = vpop.f32.mrb[0].mxu0
    %582 = vmatprep.mubr.f32.mxu0 0.0
    %583 = vmatmul.mubr.f32.gmra.mrb[0].mxu0 %v247
    %v584 = vpop.f32.mrb[0].mxu0
    %v585 = vadd.f32 %v123, %v584
    %v586 = vpop.f32.mrb[0].mxu0
    %587 = vmatprep.mubr.f32.mxu0 0.0
    %588 = vmatmul.mubr.f32.gmra.mrb[0].mxu0 %v250
    %v589 = vpop.f32.mrb[0].mxu0
    %v590 = vadd.f32 %v123, %v589
    %v591 = vpop.f32.mrb[0].mxu0
    %592 = vmatprep.mubr.f32.mxu0 0.0
    %593 = vmatmul.mubr.f32.gmra.mrb[0].mxu0 %v253
    %v594 = vpop.f32.mrb[0].mxu0
    %v595 = vadd.f32 %v123, %v594
    %v596 = vpop.f32.mrb[0].mxu0
    %597 = vmatprep.mubr.f32.mxu0 0.0
    %598 = vmatmul.mubr.f32.gmra.mrb[0].mxu0 %v256
    %v599 = vpop.f32.mrb[0].mxu0
    %v600 = vadd.f32 %v123, %v599
    %v601 = vpop.f32.mrb[0].mxu0
    %602 = vmatprep.mubr.f32.mxu0 0.0
    %603 = vmatmul.mubr.f32.gmra.mrb[0].mxu0 %v259
    %v604 = vpop.f32.mrb[0].mxu0
    %v605 = vadd.f32 %v123, %v604
    %v606 = vpop.f32.mrb[0].mxu0
    %607 = vmatprep.mubr.f32.mxu0 0.0
    %608 = vmatmul.mubr.f32.gmra.mrb[0].mxu0 %v262
    %v609 = vpop.f32.mrb[0].mxu0
    %v610 = vadd.f32 %v123, %v609
    %v611 = vpop.f32.mrb[0].mxu0
    %612 = vmatprep.mubr.f32.mxu0 0.0
    %613 = vmatmul.mubr.f32.gmra.mrb[0].mxu0 %v265
    %v614 = vpop.f32.mrb[0].mxu0
    %v615 = vadd.f32 %v123, %v614
    %v616 = vpop.f32.mrb[0].mxu0
    %617 = vmatprep.mubr.f32.mxu0 0.0
    %618 = vmatmul.mubr.f32.gmra.mrb[0].mxu0 %v268
    %v619 = vpop.f32.mrb[0].mxu0
    %v620 = vadd.f32 %v123, %v619
    %v621 = vpop.f32.mrb[0].mxu0
    %622 = vmatprep.mubr.f32.mxu0 0.0
    %623 = vmatmul.mubr.f32.gmra.mrb[0].mxu0 %v271
    %v624 = vpop.f32.mrb[0].mxu0
    %v625 = vadd.f32 %v123, %v624
    %v626 = vpop.f32.mrb[0].mxu0
    %627 = vmatprep.mubr.f32.mxu0 0.0
    %628 = vmatmul.mubr.f32.gmra.mrb[0].mxu0 %v274
    %v629 = vpop.f32.mrb[0].mxu0
    %v630 = vadd.f32 %v123, %v629
    %v631 = vpop.f32.mrb[0].mxu0
    %632 = vmatprep.mubr.f32.mxu0 0.0
    %633 = vmatmul.mubr.f32.gmra.mrb[0].mxu0 %v277
    %v634 = vpop.f32.mrb[0].mxu0
    %v635 = vadd.f32 %v123, %v634
    %v636 = vpop.f32.mrb[0].mxu0
    %637 = vmatprep.mubr.f32.mxu0 0.0
    %638 = vmatmul.mubr.f32.gmra.mrb[0].mxu0 %v280
    %v639 = vpop.f32.mrb[0].mxu0
    %v640 = vadd.f32 %v123, %v639
    %v641 = vpop.f32.mrb[0].mxu0
    %642 = vmatprep.mubr.f32.mxu0 0.0
    %643 = vmatmul.mubr.f32.gmra.mrb[0].mxu0 %v283
    %v644 = vpop.f32.mrb[0].mxu0
    %v645 = vadd.f32 %v123, %v644
    %v646 = vpop.f32.mrb[0].mxu0
    %647 = vmatprep.mubr.f32.mxu0 0.0
    %648 = vmatmul.mubr.f32.gmra.mrb[0].mxu0 %v286
    %v649 = vpop.f32.mrb[0].mxu0
    %v650 = vadd.f32 %v123, %v649
    %v651 = vpop.f32.mrb[0].mxu0
    %652 = vmatprep.mubr.f32.mxu0 0.0
    %653 = vmatmul.mubr.f32.gmra.mrb[0].mxu0 %v289
    %v654 = vpop.f32.mrb[0].mxu0
    %v655 = vadd.f32 %v123, %v654
    %v656 = vpop.f32.mrb[0].mxu0
    %657 = vmatprep.mubr.f32.mxu0 0.0
    %658 = vmatmul.mubr.f32.gmra.mrb[0].mxu0 %v292
    %v659 = vpop.f32.mrb[0].mxu0
    %v660 = vadd.f32 %v123, %v659
    %v661 = vpop.f32.mrb[0].mxu0
    %662 = vmatprep.mubr.f32.mxu0 0.0
    %663 = vmatmul.mubr.f32.gmra.mrb[0].mxu0 %v295
    %v664 = vpop.f32.mrb[0].mxu0
    %v665 = vadd.f32 %v123, %v664
    %v666 = vpop.f32.mrb[0].mxu0
    %667 = vmatprep.mubr.f32.mxu0 0.0
    %668 = vmatmul.mubr.f32.gmra.mrb[0].mxu0 %v298
    %v669 = vpop.f32.mrb[0].mxu0
    %v670 = vadd.f32 %v123, %v669
    %v671 = vpop.f32.mrb[0].mxu0
    %672 = vmatprep.mubr.f32.mxu0 0.0
    %673 = vmatmul.mubr.f32.gmra.mrb[0].mxu0 %v301
    %v674 = vpop.f32.mrb[0].mxu0
    %v675 = vadd.f32 %v123, %v674
    %v676 = vpop.f32.mrb[0].mxu0
    %677 = vmatprep.mubr.f32.mxu0 0.0
    %678 = vmatmul.mubr.f32.gmra.mrb[0].mxu0 %v304
    %v679 = vpop.f32.mrb[0].mxu0
    %v680 = vadd.f32 %v123, %v679
    %v681 = vpop.f32.mrb[0].mxu0
    %682 = vmatprep.mubr.f32.mxu0 0.0
    %683 = vmatmul.mubr.f32.gmra.mrb[0].mxu0 %v307
    %v684 = vpop.f32.mrb[0].mxu0
    %v685 = vadd.f32 %v123, %v684
    %v686 = vpop.f32.mrb[0].mxu0
    %687 = vmatprep.mubr.f32.mxu0 0.0
    %688 = vmatmul.mubr.f32.gmra.mrb[0].mxu0 %v310
    %v689 = vpop.f32.mrb[0].mxu0
    %v690 = vadd.f32 %v123, %v689
    %v691 = vpop.f32.mrb[0].mxu0
    %692 = vmatprep.mubr.f32.mxu0 0.0
    %693 = vmatmul.mubr.f32.gmra.mrb[0].mxu0 %v313
    %v694 = vpop.f32.mrb[0].mxu0
    %v695 = vadd.f32 %v123, %v694
    %v696 = vpop.f32.mrb[0].mxu0
    %697 = vmatprep.mubr.f32.mxu0 0.0
    %698 = vmatmul.mubr.f32.gmra.mrb[0].mxu0 %v316
    %v699 = vpop.f32.mrb[0].mxu0
    %v700 = vadd.f32 %v123, %v699
    %v701 = vpop.f32.mrb[0].mxu0
    %702 = vdwg.mxu0
    %vm703 = vcmp.gt.f32.partialorder %v385, 0.0
    %vm704 = vcmp.gt.f32.partialorder %v390, 0.0
    %vm705 = vcmp.gt.f32.partialorder %v395, 0.0
    %vm706 = vcmp.gt.f32.partialorder %v400, 0.0
    %vm707 = vcmp.gt.f32.partialorder %v405, 0.0
    %vm708 = vcmp.gt.f32.partialorder %v410, 0.0
    %vm709 = vcmp.gt.f32.partialorder %v415, 0.0
    %vm710 = vcmp.gt.f32.partialorder %v420, 0.0
    %vm711 = vcmp.gt.f32.partialorder %v425, 0.0
    %vm712 = vcmp.gt.f32.partialorder %v430, 0.0
    %vm713 = vcmp.gt.f32.partialorder %v435, 0.0
    %vm714 = vcmp.gt.f32.partialorder %v440, 0.0
    %vm715 = vcmp.gt.f32.partialorder %v445, 0.0
    %vm716 = vcmp.gt.f32.partialorder %v450, 0.0
    %vm717 = vcmp.gt.f32.partialorder %v455, 0.0
    %vm718 = vcmp.gt.f32.partialorder %v460, 0.0
    %vm719 = vcmp.gt.f32.partialorder %v465, 0.0
    %vm720 = vcmp.gt.f32.partialorder %v470, 0.0
    %vm721 = vcmp.gt.f32.partialorder %v475, 0.0
    %vm722 = vcmp.gt.f32.partialorder %v480, 0.0
    %vm723 = vcmp.gt.f32.partialorder %v485, 0.0
    %vm724 = vcmp.gt.f32.partialorder %v490, 0.0
    %vm725 = vcmp.gt.f32.partialorder %v495, 0.0
    %vm726 = vcmp.gt.f32.partialorder %v500, 0.0
    %vm727 = vcmp.gt.f32.partialorder %v505, 0.0
    %vm728 = vcmp.gt.f32.partialorder %v510, 0.0
    %vm729 = vcmp.gt.f32.partialorder %v515, 0.0
    %vm730 = vcmp.gt.f32.partialorder %v520, 0.0
    %vm731 = vcmp.gt.f32.partialorder %v525, 0.0
    %vm732 = vcmp.gt.f32.partialorder %v530, 0.0
    %vm733 = vcmp.gt.f32.partialorder %v535, 0.0
    %vm734 = vcmp.gt.f32.partialorder %v540, 0.0
    %vm735 = vcmp.gt.f32.partialorder %v545, 0.0
    %vm736 = vcmp.gt.f32.partialorder %v550, 0.0
    %vm737 = vcmp.gt.f32.partialorder %v555, 0.0
    %vm738 = vcmp.gt.f32.partialorder %v560, 0.0
    %vm739 = vcmp.gt.f32.partialorder %v565, 0.0
    %vm740 = vcmp.gt.f32.partialorder %v570, 0.0
    %vm741 = vcmp.gt.f32.partialorder %v575, 0.0
    %vm742 = vcmp.gt.f32.partialorder %v580, 0.0
    %vm743 = vcmp.gt.f32.partialorder %v585, 0.0
    %vm744 = vcmp.gt.f32.partialorder %v590, 0.0
    %vm745 = vcmp.gt.f32.partialorder %v595, 0.0
    %vm746 = vcmp.gt.f32.partialorder %v600, 0.0
    %vm747 = vcmp.gt.f32.partialorder %v605, 0.0
    %vm748 = vcmp.gt.f32.partialorder %v610, 0.0
    %vm749 = vcmp.gt.f32.partialorder %v615, 0.0
    %vm750 = vcmp.gt.f32.partialorder %v620, 0.0
    %vm751 = vcmp.gt.f32.partialorder %v625, 0.0
    %vm752 = vcmp.gt.f32.partialorder %v630, 0.0
    %vm753 = vcmp.gt.f32.partialorder %v635, 0.0
    %vm754 = vcmp.gt.f32.partialorder %v640, 0.0
    %vm755 = vcmp.gt.f32.partialorder %v645, 0.0
    %vm756 = vcmp.gt.f32.partialorder %v650, 0.0
    %vm757 = vcmp.gt.f32.partialorder %v655, 0.0
    %vm758 = vcmp.gt.f32.partialorder %v660, 0.0
    %vm759 = vcmp.gt.f32.partialorder %v665, 0.0
    %vm760 = vcmp.gt.f32.partialorder %v670, 0.0
    %vm761 = vcmp.gt.f32.partialorder %v675, 0.0
    %vm762 = vcmp.gt.f32.partialorder %v680, 0.0
    %vm763 = vcmp.gt.f32.partialorder %v685, 0.0
    %vm764 = vcmp.gt.f32.partialorder %v690, 0.0
    %vm765 = vcmp.gt.f32.partialorder %v695, 0.0
    %vm766 = vcmp.gt.f32.partialorder %v700, 0.0
    %v767 = vmul.f32 %v385, 0.1
    %v768 = vmul.f32 %v390, 0.1
    %v769 = vmul.f32 %v395, 0.1
    %v770 = vmul.f32 %v400, 0.1
    %v771 = vmul.f32 %v405, 0.1
    %v772 = vmul.f32 %v410, 0.1
    %v773 = vmul.f32 %v415, 0.1
    %v774 = vmul.f32 %v420, 0.1
    %v775 = vmul.f32 %v425, 0.1
    %v776 = vmul.f32 %v430, 0.1
    %v777 = vmul.f32 %v435, 0.1
    %v778 = vmul.f32 %v440, 0.1
    %v779 = vmul.f32 %v445, 0.1
    %v780 = vmul.f32 %v450, 0.1
    %v781 = vmul.f32 %v455, 0.1
    %v782 = vmul.f32 %v460, 0.1
    %v783 = vmul.f32 %v465, 0.1
    %v784 = vmul.f32 %v470, 0.1
    %v785 = vmul.f32 %v475, 0.1
    %v786 = vmul.f32 %v480, 0.1
    %v787 = vmul.f32 %v485, 0.1
    %v788 = vmul.f32 %v490, 0.1
    %v789 = vmul.f32 %v495, 0.1
    %v790 = vmul.f32 %v500, 0.1
    %v791 = vmul.f32 %v505, 0.1
    %v792 = vmul.f32 %v510, 0.1
    %v793 = vmul.f32 %v515, 0.1
    %v794 = vmul.f32 %v520, 0.1
    %v795 = vmul.f32 %v525, 0.1
    %v796 = vmul.f32 %v530, 0.1
    %v797 = vmul.f32 %v535, 0.1
    %v798 = vmul.f32 %v540, 0.1
    %v799 = vmul.f32 %v545, 0.1
    %v800 = vmul.f32 %v550, 0.1
    %v801 = vmul.f32 %v555, 0.1
    %v802 = vmul.f32 %v560, 0.1
    %v803 = vmul.f32 %v565, 0.1
    %v804 = vmul.f32 %v570, 0.1
    %v805 = vmul.f32 %v575, 0.1
    %v806 = vmul.f32 %v580, 0.1
    %v807 = vmul.f32 %v585, 0.1
    %v808 = vmul.f32 %v590, 0.1
    %v809 = vmul.f32 %v595, 0.1
    %v810 = vmul.f32 %v600, 0.1
    %v811 = vmul.f32 %v605, 0.1
    %v812 = vmul.f32 %v610, 0.1
    %v813 = vmul.f32 %v615, 0.1
    %v814 = vmul.f32 %v620, 0.1
    %v815 = vmul.f32 %v625, 0.1
    %v816 = vmul.f32 %v630, 0.1
    %v817 = vmul.f32 %v635, 0.1
    %v818 = vmul.f32 %v640, 0.1
    %v819 = vmul.f32 %v645, 0.1
    %v820 = vmul.f32 %v650, 0.1
    %v821 = vmul.f32 %v655, 0.1
    %v822 = vmul.f32 %v660, 0.1
    %v823 = vmul.f32 %v665, 0.1
    %v824 = vmul.f32 %v670, 0.1
    %v825 = vmul.f32 %v675, 0.1
    %v826 = vmul.f32 %v680, 0.1
    %v827 = vmul.f32 %v685, 0.1
    %v828 = vmul.f32 %v690, 0.1
    %v829 = vmul.f32 %v695, 0.1
    %v830 = vmul.f32 %v700, 0.1
    %v831 = vsel %vm703, %v385, %v767
    %v832 = vsel %vm704, %v390, %v768
    %v833 = vsel %vm705, %v395, %v769
    %v834 = vsel %vm706, %v400, %v770
    %v835 = vsel %vm707, %v405, %v771
    %v836 = vsel %vm708, %v410, %v772
    %v837 = vsel %vm709, %v415, %v773
    %v838 = vsel %vm710, %v420, %v774
    %v839 = vsel %vm711, %v425, %v775
    %v840 = vsel %vm712, %v430, %v776
    %v841 = vsel %vm713, %v435, %v777
    %v842 = vsel %vm714, %v440, %v778
    %v843 = vsel %vm715, %v445, %v779
    %v844 = vsel %vm716, %v450, %v780
    %v845 = vsel %vm717, %v455, %v781
    %v846 = vsel %vm718, %v460, %v782
    %v847 = vsel %vm719, %v465, %v783
    %v848 = vsel %vm720, %v470, %v784
    %v849 = vsel %vm721, %v475, %v785
    %v850 = vsel %vm722, %v480, %v786
    %v851 = vsel %vm723, %v485, %v787
    %v852 = vsel %vm724, %v490, %v788
    %v853 = vsel %vm725, %v495, %v789
    %v854 = vsel %vm726, %v500, %v790
    %v855 = vsel %vm727, %v505, %v791
    %v856 = vsel %vm728, %v510, %v792
    %v857 = vsel %vm729, %v515, %v793
    %v858 = vsel %vm730, %v520, %v794
    %v859 = vsel %vm731, %v525, %v795
    %v860 = vsel %vm732, %v530, %v796
    %v861 = vsel %vm733, %v535, %v797
    %v862 = vsel %vm734, %v540, %v798
    %v863 = vsel %vm735, %v545, %v799
    %v864 = vsel %vm736, %v550, %v800
    %v865 = vsel %vm737, %v555, %v801
    %v866 = vsel %vm738, %v560, %v802
    %v867 = vsel %vm739, %v565, %v803
    %v868 = vsel %vm740, %v570, %v804
    %v869 = vsel %vm741, %v575, %v805
    %v870 = vsel %vm742, %v580, %v806
    %v871 = vsel %vm743, %v585, %v807
    %v872 = vsel %vm744, %v590, %v808
    %v873 = vsel %vm745, %v595, %v809
    %v874 = vsel %vm746, %v600, %v810
    %v875 = vsel %vm747, %v605, %v811
    %v876 = vsel %vm748, %v610, %v812
    %v877 = vsel %vm749, %v615, %v813
    %v878 = vsel %vm750, %v620, %v814
    %v879 = vsel %vm751, %v625, %v815
    %v880 = vsel %vm752, %v630, %v816
    %v881 = vsel %vm753, %v635, %v817
    %v882 = vsel %vm754, %v640, %v818
    %v883 = vsel %vm755, %v645, %v819
    %v884 = vsel %vm756, %v650, %v820
    %v885 = vsel %vm757, %v655, %v821
    %v886 = vsel %vm758, %v660, %v822
    %v887 = vsel %vm759, %v665, %v823
    %v888 = vsel %vm760, %v670, %v824
    %v889 = vsel %vm761, %v675, %v825
    %v890 = vsel %vm762, %v680, %v826
    %v891 = vsel %vm763, %v685, %v827
    %v892 = vsel %vm764, %v690, %v828
    %v893 = vsel %vm765, %v695, %v829
    %v894 = vsel %vm766, %v700, %v830
    %895 = vst.msk [vmem:[#allocation2] sm:$0xff] %vm125, 0.0
    %896 = vst.msk [vmem:[#allocation2 + $0x8] sm:$0xff] %vm125, 0.0
    %vm897 = vcmask 123904
    %898 = vst.msk [vmem:[#allocation2 + $0x10] sm:$0x3] %vm897, 0.0
    %899 = vst.msk [vmem:[#allocation2 + $0x18] sm:$0xff] %vm125, 0.0
    %900 = vst.msk [vmem:[#allocation2 + $0x20] sm:$0xff] %vm125, 0.0
    %901 = vst.msk [vmem:[#allocation2 + $0x28] sm:$0x3] %vm897, 0.0
    %902 = vst.msk [vmem:[#allocation2 + $0x30] sm:$0xff] %vm125, 0.0
    %903 = vst.msk [vmem:[#allocation2 + $0x38] sm:$0xff] %vm125, 0.0
    %904 = vst.msk [vmem:[#allocation2 + $0x40] sm:$0x3] %vm897, 0.0
    %905 = vst.msk [vmem:[#allocation2 + $0x48] sm:$0xff] %vm125, 0.0
    %906 = vst.msk [vmem:[#allocation2 + $0x50] sm:$0xff] %vm125, 0.0
    %907 = vst.msk [vmem:[#allocation2 + $0x58] sm:$0x3] %vm897, 0.0
    %908 = vst.msk [vmem:[#allocation2 + $0x60] sm:$0xff] %vm125, 0.0
    %909 = vst.msk [vmem:[#allocation2 + $0x68] sm:$0xff] %vm125, 0.0
    %910 = vst.msk [vmem:[#allocation2 + $0x70] sm:$0x3] %vm897, 0.0
    %911 = vst.msk [vmem:[#allocation2 + $0x78] sm:$0xff] %vm125, 0.0
    %912 = vst.msk [vmem:[#allocation2 + $0x80] sm:$0xff] %vm125, 0.0
    %913 = vst.msk [vmem:[#allocation2 + $0x88] sm:$0x3] %vm897, 0.0
    %914 = vst.msk [vmem:[#allocation2 + $0x90] sm:$0xff] %vm125, 0.0
    %915 = vst.msk [vmem:[#allocation2 + $0x98] sm:$0xff] %vm125, 0.0
    %916 = vst.msk [vmem:[#allocation2 + $0xa0] sm:$0x3] %vm897, 0.0
    %917 = vst.msk [vmem:[#allocation2 + $0xa8] sm:$0xff] %vm125, 0.0
    %918 = vst.msk [vmem:[#allocation2 + $0xb0] sm:$0xff] %vm125, 0.0
    %919 = vst.msk [vmem:[#allocation2 + $0xb8] sm:$0x3] %vm897, 0.0
    %920 = vst.msk [vmem:[#allocation2 + $0xc0] sm:$0xff] %vm125, 0.0
    %921 = vst.msk [vmem:[#allocation2 + $0xc8] sm:$0xff] %vm125, 0.0
    %922 = vst.msk [vmem:[#allocation2 + $0xd0] sm:$0x3] %vm897, 0.0
    %923 = vst.msk [vmem:[#allocation2 + $0xd8] sm:$0xff] %vm125, 0.0
    %924 = vst.msk [vmem:[#allocation2 + $0xe0] sm:$0xff] %vm125, 0.0
    %925 = vst.msk [vmem:[#allocation2 + $0xe8] sm:$0x3] %vm897, 0.0
    %926 = vst.msk [vmem:[#allocation2 + $0xf0] sm:$0xff] %vm125, 0.0
    %927 = vst.msk [vmem:[#allocation2 + $0xf8] sm:$0xff] %vm125, 0.0
    %928 = vst.msk [vmem:[#allocation2 + $0x100] sm:$0x3] %vm897, 0.0
    %929 = vst.msk [vmem:[#allocation2 + $0x108] sm:$0xff] %vm125, 0.0
    %930 = vst.msk [vmem:[#allocation2 + $0x110] sm:$0xff] %vm125, 0.0
    %931 = vst.msk [vmem:[#allocation2 + $0x118] sm:$0x3] %vm897, 0.0
    %932 = vst.msk [vmem:[#allocation2 + $0x120] sm:$0xff] %vm125, 0.0
    %933 = vst.msk [vmem:[#allocation2 + $0x128] sm:$0xff] %vm125, 0.0
    %934 = vst.msk [vmem:[#allocation2 + $0x130] sm:$0x3] %vm897, 0.0
    %935 = vst.msk [vmem:[#allocation2 + $0x138] sm:$0xff] %vm125, 0.0
    %936 = vst.msk [vmem:[#allocation2 + $0x140] sm:$0xff] %vm125, 0.0
    %937 = vst.msk [vmem:[#allocation2 + $0x148] sm:$0x3] %vm897, 0.0
    %938 = vst.msk [vmem:[#allocation2 + $0x150] sm:$0xff] %vm125, 0.0
    %939 = vst.msk [vmem:[#allocation2 + $0x158] sm:$0xff] %vm125, 0.0
    %940 = vst.msk [vmem:[#allocation2 + $0x160] sm:$0x3] %vm897, 0.0
    %941 = vst.msk [vmem:[#allocation2 + $0x168] sm:$0xff] %vm125, 0.0
    %942 = vst.msk [vmem:[#allocation2 + $0x170] sm:$0xff] %vm125, 0.0
    %943 = vst.msk [vmem:[#allocation2 + $0x178] sm:$0x3] %vm897, 0.0
    %944 = vst.msk [vmem:[#allocation2 + $0x180] sm:$0xff] %vm125, 0.0
    %945 = vst.msk [vmem:[#allocation2 + $0x188] sm:$0xff] %vm125, 0.0
    %946 = vst.msk [vmem:[#allocation2 + $0x190] sm:$0x3] %vm897, 0.0
    %947 = vst.msk [vmem:[#allocation2 + $0x198] sm:$0xff] %vm125, 0.0
    %948 = vst.msk [vmem:[#allocation2 + $0x1a0] sm:$0xff] %vm125, 0.0
    %949 = vst.msk [vmem:[#allocation2 + $0x1a8] sm:$0x3] %vm897, 0.0
    %950 = vst.msk [vmem:[#allocation2 + $0x1b0] sm:$0xff] %vm125, 0.0
    %951 = vst.msk [vmem:[#allocation2 + $0x1b8] sm:$0xff] %vm125, 0.0
    %952 = vst.msk [vmem:[#allocation2 + $0x1c0] sm:$0x3] %vm897, 0.0
    %953 = vst.msk [vmem:[#allocation2 + $0x1c8] sm:$0xff] %vm125, 0.0
    %954 = vst.msk [vmem:[#allocation2 + $0x1d0] sm:$0xff] %vm125, 0.0
    %955 = vst.msk [vmem:[#allocation2 + $0x1d8] sm:$0x3] %vm897, 0.0
    %956 = vst.msk [vmem:[#allocation2 + $0x1e0] sm:$0xff] %vm125, 0.0
    %957 = vst.msk [vmem:[#allocation2 + $0x1e8] sm:$0xff] %vm125, 0.0
    %958 = vst.msk [vmem:[#allocation2 + $0x1f0] sm:$0x3] %vm897, 0.0
    %959 = vst.msk [vmem:[#allocation2 + $0x1f8] sm:$0xff] %vm125, 0.0
    %960 = vst.msk [vmem:[#allocation2 + $0x200] sm:$0xff] %vm125, 0.0
    %961 = vst.msk [vmem:[#allocation2 + $0x208] sm:$0x3] %vm897, 0.0
    %962 = vst.msk [vmem:[#allocation2 + $0x210] sm:$0xff] %vm125, 0.0
    %963 = vst.msk [vmem:[#allocation2 + $0x218] sm:$0xff] %vm125, 0.0
    %964 = vst.msk [vmem:[#allocation2 + $0x220] sm:$0x3] %vm897, 0.0
    %965 = vst.msk [vmem:[#allocation2 + $0x228] sm:$0xff] %vm125, 0.0
    %966 = vst.msk [vmem:[#allocation2 + $0x230] sm:$0xff] %vm125, 0.0
    %967 = vst.msk [vmem:[#allocation2 + $0x238] sm:$0x3] %vm897, 0.0
    %968 = vst.msk [vmem:[#allocation2 + $0x240] sm:$0xff] %vm125, 0.0
    %969 = vst.msk [vmem:[#allocation2 + $0x248] sm:$0xff] %vm125, 0.0
    %970 = vst.msk [vmem:[#allocation2 + $0x250] sm:$0x3] %vm897, 0.0
    %971 = vst.msk [vmem:[#allocation2 + $0x258] sm:$0xff] %vm125, 0.0
    %972 = vst.msk [vmem:[#allocation2 + $0x260] sm:$0xff] %vm125, 0.0
    %973 = vst.msk [vmem:[#allocation2 + $0x268] sm:$0x3] %vm897, 0.0
    %974 = vst.msk [vmem:[#allocation2 + $0x270] sm:$0xff] %vm125, 0.0
    %975 = vst.msk [vmem:[#allocation2 + $0x278] sm:$0xff] %vm125, 0.0
    %976 = vst.msk [vmem:[#allocation2 + $0x280] sm:$0x3] %vm897, 0.0
    %977 = vst.msk [vmem:[#allocation2 + $0x288] sm:$0xff] %vm125, 0.0
    %978 = vst.msk [vmem:[#allocation2 + $0x290] sm:$0xff] %vm125, 0.0
    %979 = vst.msk [vmem:[#allocation2 + $0x298] sm:$0x3] %vm897, 0.0
    %980 = vst.msk [vmem:[#allocation2 + $0x2a0] sm:$0xff] %vm125, 0.0
    %981 = vst.msk [vmem:[#allocation2 + $0x2a8] sm:$0xff] %vm125, 0.0
    %982 = vst.msk [vmem:[#allocation2 + $0x2b0] sm:$0x3] %vm897, 0.0
    %983 = vst.msk [vmem:[#allocation2 + $0x2b8] sm:$0xff] %vm125, 0.0
    %984 = vst.msk [vmem:[#allocation2 + $0x2c0] sm:$0xff] %vm125, 0.0
    %985 = vst.msk [vmem:[#allocation2 + $0x2c8] sm:$0x3] %vm897, 0.0
    %986 = vst.msk [vmem:[#allocation2 + $0x2d0] sm:$0xff] %vm125, 0.0
    %987 = vst.msk [vmem:[#allocation2 + $0x2d8] sm:$0xff] %vm125, 0.0
    %988 = vst.msk [vmem:[#allocation2 + $0x2e0] sm:$0x3] %vm897, 0.0
    %989 = vst.msk [vmem:[#allocation2 + $0x2e8] sm:$0xff] %vm125, 0.0
    %990 = vst.msk [vmem:[#allocation2 + $0x2f0] sm:$0xff] %vm125, 0.0
    %991 = vst.msk [vmem:[#allocation2 + $0x2f8] sm:$0x3] %vm897, 0.0
    %992 = vst.msk [vmem:[#allocation2 + $0x300] sm:$0xff] %vm125, 0.0
    %993 = vst.msk [vmem:[#allocation2 + $0x308] sm:$0xff] %vm125, 0.0
    %994 = vst.msk [vmem:[#allocation2 + $0x310] sm:$0x3] %vm897, 0.0
    %995 = vst.msk [vmem:[#allocation2 + $0x318] sm:$0xff] %vm125, 0.0
    %996 = vst.msk [vmem:[#allocation2 + $0x320] sm:$0xff] %vm125, 0.0
    %997 = vst.msk [vmem:[#allocation2 + $0x328] sm:$0x3] %vm897, 0.0
    %998 = vst.msk [vmem:[#allocation2 + $0x330] sm:$0xff] %vm125, 0.0
    %999 = vst.msk [vmem:[#allocation2 + $0x338] sm:$0xff] %vm125, 0.0
    %1000 = vst.msk [vmem:[#allocation2 + $0x340] sm:$0x3] %vm897, 0.0
    %1001 = vst.msk [vmem:[#allocation2 + $0x348] sm:$0xff] %vm125, 0.0
    %1002 = vst.msk [vmem:[#allocation2 + $0x350] sm:$0xff] %vm125, 0.0
    %1003 = vst.msk [vmem:[#allocation2 + $0x358] sm:$0x3] %vm897, 0.0
    %s1004 = scalar_lea.vmem [#allocation2], 24
    %1005 = vst.msk [vmem:[%s1004 + $0x1] sm:$0xff] %vm125, %v831
    %1006 = vst.msk [vmem:[%s1004 + $0x9] sm:$0xff] %vm125, %v832
    %1007 = vst.msk [vmem:[%s1004 + $0x19] sm:$0xff] %vm125, %v833
    %1008 = vst.msk [vmem:[%s1004 + $0x21] sm:$0xff] %vm125, %v834
    %1009 = vst.msk [vmem:[%s1004 + $0x31] sm:$0xff] %vm125, %v835
    %1010 = vst.msk [vmem:[%s1004 + $0x39] sm:$0xff] %vm125, %v836
    %1011 = vst.msk [vmem:[%s1004 + $0x49] sm:$0xff] %vm125, %v837
    %1012 = vst.msk [vmem:[%s1004 + $0x51] sm:$0xff] %vm125, %v838
    %1013 = vst.msk [vmem:[%s1004 + $0x61] sm:$0xff] %vm125, %v839
    %1014 = vst.msk [vmem:[%s1004 + $0x69] sm:$0xff] %vm125, %v840
    %1015 = vst.msk [vmem:[%s1004 + $0x79] sm:$0xff] %vm125, %v841
    %1016 = vst.msk [vmem:[%s1004 + $0x81] sm:$0xff] %vm125, %v842
    %1017 = vst.msk [vmem:[%s1004 + $0x91] sm:$0xff] %vm125, %v843
    %1018 = vst.msk [vmem:[%s1004 + $0x99] sm:$0xff] %vm125, %v844
    %1019 = vst.msk [vmem:[%s1004 + $0xa9] sm:$0xff] %vm125, %v845
    %1020 = vst.msk [vmem:[%s1004 + $0xb1] sm:$0xff] %vm125, %v846
    %1021 = vst.msk [vmem:[%s1004 + $0xc1] sm:$0xff] %vm125, %v847
    %1022 = vst.msk [vmem:[%s1004 + $0xc9] sm:$0xff] %vm125, %v848
    %1023 = vst.msk [vmem:[%s1004 + $0xd9] sm:$0xff] %vm125, %v849
    %1024 = vst.msk [vmem:[%s1004 + $0xe1] sm:$0xff] %vm125, %v850
    %1025 = vst.msk [vmem:[%s1004 + $0xf1] sm:$0xff] %vm125, %v851
    %1026 = vst.msk [vmem:[%s1004 + $0xf9] sm:$0xff] %vm125, %v852
    %1027 = vst.msk [vmem:[%s1004 + $0x109] sm:$0xff] %vm125, %v853
    %1028 = vst.msk [vmem:[%s1004 + $0x111] sm:$0xff] %vm125, %v854
    %1029 = vst.msk [vmem:[%s1004 + $0x121] sm:$0xff] %vm125, %v855
    %1030 = vst.msk [vmem:[%s1004 + $0x129] sm:$0xff] %vm125, %v856
    %1031 = vst.msk [vmem:[%s1004 + $0x139] sm:$0xff] %vm125, %v857
    %1032 = vst.msk [vmem:[%s1004 + $0x141] sm:$0xff] %vm125, %v858
    %1033 = vst.msk [vmem:[%s1004 + $0x151] sm:$0xff] %vm125, %v859
    %1034 = vst.msk [vmem:[%s1004 + $0x159] sm:$0xff] %vm125, %v860
    %1035 = vst.msk [vmem:[%s1004 + $0x169] sm:$0xff] %vm125, %v861
    %1036 = vst.msk [vmem:[%s1004 + $0x171] sm:$0xff] %vm125, %v862
    %1037 = vst.msk [vmem:[%s1004 + $0x1b1] sm:$0xff] %vm125, %v863
    %1038 = vst.msk [vmem:[%s1004 + $0x1b9] sm:$0xff] %vm125, %v864
    %1039 = vst.msk [vmem:[%s1004 + $0x1c9] sm:$0xff] %vm125, %v865
    %1040 = vst.msk [vmem:[%s1004 + $0x1d1] sm:$0xff] %vm125, %v866
    %1041 = vst.msk [vmem:[%s1004 + $0x1e1] sm:$0xff] %vm125, %v867
    %1042 = vst.msk [vmem:[%s1004 + $0x1e9] sm:$0xff] %vm125, %v868
    %1043 = vst.msk [vmem:[%s1004 + $0x1f9] sm:$0xff] %vm125, %v869
    %1044 = vst.msk [vmem:[%s1004 + $0x201] sm:$0xff] %vm125, %v870
    %1045 = vst.msk [vmem:[%s1004 + $0x211] sm:$0xff] %vm125, %v871
    %1046 = vst.msk [vmem:[%s1004 + $0x219] sm:$0xff] %vm125, %v872
    %1047 = vst.msk [vmem:[%s1004 + $0x229] sm:$0xff] %vm125, %v873
    %1048 = vst.msk [vmem:[%s1004 + $0x231] sm:$0xff] %vm125, %v874
    %1049 = vst.msk [vmem:[%s1004 + $0x241] sm:$0xff] %vm125, %v875
    %1050 = vst.msk [vmem:[%s1004 + $0x249] sm:$0xff] %vm125, %v876
    %1051 = vst.msk [vmem:[%s1004 + $0x259] sm:$0xff] %vm125, %v877
    %1052 = vst.msk [vmem:[%s1004 + $0x261] sm:$0xff] %vm125, %v878
    %1053 = vst.msk [vmem:[%s1004 + $0x271] sm:$0xff] %vm125, %v879
    %1054 = vst.msk [vmem:[%s1004 + $0x279] sm:$0xff] %vm125, %v880
    %1055 = vst.msk [vmem:[%s1004 + $0x289] sm:$0xff] %vm125, %v881
    %1056 = vst.msk [vmem:[%s1004 + $0x291] sm:$0xff] %vm125, %v882
    %1057 = vst.msk [vmem:[%s1004 + $0x2a1] sm:$0xff] %vm125, %v883
    %1058 = vst.msk [vmem:[%s1004 + $0x2a9] sm:$0xff] %vm125, %v884
    %1059 = vst.msk [vmem:[%s1004 + $0x2b9] sm:$0xff] %vm125, %v885
    %1060 = vst.msk [vmem:[%s1004 + $0x2c1] sm:$0xff] %vm125, %v886
    %1061 = vst.msk [vmem:[%s1004 + $0x2d1] sm:$0xff] %vm125, %v887
    %1062 = vst.msk [vmem:[%s1004 + $0x2d9] sm:$0xff] %vm125, %v888
    %1063 = vst.msk [vmem:[%s1004 + $0x2e9] sm:$0xff] %vm125, %v889
    %1064 = vst.msk [vmem:[%s1004 + $0x2f1] sm:$0xff] %vm125, %v890
    %1065 = vst.msk [vmem:[%s1004 + $0x301] sm:$0xff] %vm125, %v891
    %1066 = vst.msk [vmem:[%s1004 + $0x309] sm:$0xff] %vm125, %v892
    %1067 = vst.msk [vmem:[%s1004 + $0x319] sm:$0xff] %vm125, %v893
    %1068 = vst.msk [vmem:[%s1004 + $0x321] sm:$0xff] %vm125, %v894
    %v1069 = vld [vmem:[#allocation2] ss:$2 sm:$0xff]
    %s1070 = scalar_lea.vmem [#allocation2], 48
    %v1071 = vld [vmem:[%s1070] ss:$2 sm:$0xff]
    %s1072 = scalar_lea.vmem [#allocation2], 96
    %v1073 = vld [vmem:[%s1072] ss:$2 sm:$0xff]
    %s1074 = scalar_lea.vmem [#allocation2], 144
    %v1075 = vld [vmem:[%s1074] ss:$2 sm:$0xff]
    %s1076 = scalar_lea.vmem [#allocation2], 192
    %v1077 = vld [vmem:[%s1076] ss:$2 sm:$0xff]
    %s1078 = scalar_lea.vmem [#allocation2], 240
    %v1079 = vld [vmem:[%s1078] ss:$2 sm:$0xff]
    %s1080 = scalar_lea.vmem [#allocation2], 288
    %v1081 = vld [vmem:[%s1080] ss:$2 sm:$0xff]
    %s1082 = scalar_lea.vmem [#allocation2], 336
    %v1083 = vld [vmem:[%s1082] ss:$2 sm:$0xff]
    %s1084 = scalar_lea.vmem [#allocation2], 432
    %v1085 = vld [vmem:[%s1084] ss:$2 sm:$0xff]
    %s1086 = scalar_lea.vmem [#allocation2], 480
    %v1087 = vld [vmem:[%s1086] ss:$2 sm:$0xff]
    %s1088 = scalar_lea.vmem [#allocation2], 528
    %v1089 = vld [vmem:[%s1088] ss:$2 sm:$0xff]
    %s1090 = scalar_lea.vmem [#allocation2], 576
    %v1091 = vld [vmem:[%s1090] ss:$2 sm:$0xff]
    %s1092 = scalar_lea.vmem [#allocation2], 624
    %v1093 = vld [vmem:[%s1092] ss:$2 sm:$0xff]
    %s1094 = scalar_lea.vmem [#allocation2], 672
    %v1095 = vld [vmem:[%s1094] ss:$2 sm:$0xff]
    %s1096 = scalar_lea.vmem [#allocation2], 720
    %v1097 = vld [vmem:[%s1096] ss:$2 sm:$0xff]
    %s1098 = scalar_lea.vmem [#allocation2], 768
    %v1099 = vld [vmem:[%s1098] ss:$2 sm:$0xff]
    %s1100 = scalar_lea.vmem [#allocation2], 1
    %v1101 = vld [vmem:[%s1100] ss:$2 sm:$0xff]
    %s1102 = scalar_lea.vmem [#allocation2], 49
    %v1103 = vld [vmem:[%s1102] ss:$2 sm:$0xff]
    %s1104 = scalar_lea.vmem [#allocation2], 97
    %v1105 = vld [vmem:[%s1104] ss:$2 sm:$0xff]
    %s1106 = scalar_lea.vmem [#allocation2], 145
    %v1107 = vld [vmem:[%s1106] ss:$2 sm:$0xff]
    %s1108 = scalar_lea.vmem [#allocation2], 193
    %v1109 = vld [vmem:[%s1108] ss:$2 sm:$0xff]
    %s1110 = scalar_lea.vmem [#allocation2], 241
    %v1111 = vld [vmem:[%s1110] ss:$2 sm:$0xff]
    %s1112 = scalar_lea.vmem [#allocation2], 289
    %v1113 = vld [vmem:[%s1112] ss:$2 sm:$0xff]
    %s1114 = scalar_lea.vmem [#allocation2], 337
    %v1115 = vld [vmem:[%s1114] ss:$2 sm:$0xff]
    %s1116 = scalar_lea.vmem [#allocation2], 433
    %v1117 = vld [vmem:[%s1116] ss:$2 sm:$0xff]
    %s1118 = scalar_lea.vmem [#allocation2], 481
    %v1119 = vld [vmem:[%s1118] ss:$2 sm:$0xff]
    %s1120 = scalar_lea.vmem [#allocation2], 529
    %v1121 = vld [vmem:[%s1120] ss:$2 sm:$0xff]
    %s1122 = scalar_lea.vmem [#allocation2], 577
    %v1123 = vld [vmem:[%s1122] ss:$2 sm:$0xff]
    %s1124 = scalar_lea.vmem [#allocation2], 625
    %v1125 = vld [vmem:[%s1124] ss:$2 sm:$0xff]
    %s1126 = scalar_lea.vmem [#allocation2], 673
    %v1127 = vld [vmem:[%s1126] ss:$2 sm:$0xff]
    %s1128 = scalar_lea.vmem [#allocation2], 721
    %v1129 = vld [vmem:[%s1128] ss:$2 sm:$0xff]
    %s1130 = scalar_lea.vmem [#allocation2], 769
    %v1131 = vld [vmem:[%s1130] ss:$2 sm:$0xff]
    %s1132 = scalar_lea.vmem [#allocation2], 2
    %v1133 = vld [vmem:[%s1132] ss:$2 sm:$0xff]
    %s1134 = scalar_lea.vmem [#allocation2], 50
    %v1135 = vld [vmem:[%s1134] ss:$2 sm:$0xff]
    %s1136 = scalar_lea.vmem [#allocation2], 98
    %v1137 = vld [vmem:[%s1136] ss:$2 sm:$0xff]
    %s1138 = scalar_lea.vmem [#allocation2], 146
    %v1139 = vld [vmem:[%s1138] ss:$2 sm:$0xff]
    %s1140 = scalar_lea.vmem [#allocation2], 194
    %v1141 = vld [vmem:[%s1140] ss:$2 sm:$0xff]
    %s1142 = scalar_lea.vmem [#allocation2], 242
    %v1143 = vld [vmem:[%s1142] ss:$2 sm:$0xff]
    %s1144 = scalar_lea.vmem [#allocation2], 290
    %v1145 = vld [vmem:[%s1144] ss:$2 sm:$0xff]
    %s1146 = scalar_lea.vmem [#allocation2], 338
    %v1147 = vld [vmem:[%s1146] ss:$2 sm:$0xff]
    %s1148 = scalar_lea.vmem [#allocation2], 434
    %v1149 = vld [vmem:[%s1148] ss:$2 sm:$0xff]
    %s1150 = scalar_lea.vmem [#allocation2], 482
    %v1151 = vld [vmem:[%s1150] ss:$2 sm:$0xff]
    %s1152 = scalar_lea.vmem [#allocation2], 530
    %v1153 = vld [vmem:[%s1152] ss:$2 sm:$0xff]
    %s1154 = scalar_lea.vmem [#allocation2], 578
    %v1155 = vld [vmem:[%s1154] ss:$2 sm:$0xff]
    %s1156 = scalar_lea.vmem [#allocation2], 626
    %v1157 = vld [vmem:[%s1156] ss:$2 sm:$0xff]
    %s1158 = scalar_lea.vmem [#allocation2], 674
    %v1159 = vld [vmem:[%s1158] ss:$2 sm:$0xff]
    %s1160 = scalar_lea.vmem [#allocation2], 722
    %v1161 = vld [vmem:[%s1160] ss:$2 sm:$0xff]
    %s1162 = scalar_lea.vmem [#allocation2], 770
    %v1163 = vld [vmem:[%s1162] ss:$2 sm:$0xff]
    %s1164 = scalar_lea.vmem [#allocation2], 3
    %v1165 = vld [vmem:[%s1164] ss:$2 sm:$0xff]
    %s1166 = scalar_lea.vmem [#allocation2], 51
    %v1167 = vld [vmem:[%s1166] ss:$2 sm:$0xff]
    %s1168 = scalar_lea.vmem [#allocation2], 99
    %v1169 = vld [vmem:[%s1168] ss:$2 sm:$0xff]
    %s1170 = scalar_lea.vmem [#allocation2], 147
    %v1171 = vld [vmem:[%s1170] ss:$2 sm:$0xff]
    %s1172 = scalar_lea.vmem [#allocation2], 195
    %v1173 = vld [vmem:[%s1172] ss:$2 sm:$0xff]
    %s1174 = scalar_lea.vmem [#allocation2], 243
    %v1175 = vld [vmem:[%s1174] ss:$2 sm:$0xff]
    %s1176 = scalar_lea.vmem [#allocation2], 291
    %v1177 = vld [vmem:[%s1176] ss:$2 sm:$0xff]
    %s1178 = scalar_lea.vmem [#allocation2], 339
    %v1179 = vld [vmem:[%s1178] ss:$2 sm:$0xff]
    %s1180 = scalar_lea.vmem [#allocation2], 435
    %v1181 = vld [vmem:[%s1180] ss:$2 sm:$0xff]
    %s1182 = scalar_lea.vmem [#allocation2], 483
    %v1183 = vld [vmem:[%s1182] ss:$2 sm:$0xff]
    %s1184 = scalar_lea.vmem [#allocation2], 531
    %v1185 = vld [vmem:[%s1184] ss:$2 sm:$0xff]
    %s1186 = scalar_lea.vmem [#allocation2], 579
    %v1187 = vld [vmem:[%s1186] ss:$2 sm:$0xff]
    %s1188 = scalar_lea.vmem [#allocation2], 627
    %v1189 = vld [vmem:[%s1188] ss:$2 sm:$0xff]
    %s1190 = scalar_lea.vmem [#allocation2], 675
    %v1191 = vld [vmem:[%s1190] ss:$2 sm:$0xff]
    %s1192 = scalar_lea.vmem [#allocation2], 723
    %v1193 = vld [vmem:[%s1192] ss:$2 sm:$0xff]
    %s1194 = scalar_lea.vmem [#allocation2], 771
    %v1195 = vld [vmem:[%s1194] ss:$2 sm:$0xff]
    %v1196 = vld [vmem:[%s1004] ss:$2 sm:$0xff]
    %s1197 = scalar_lea.vmem %s1004, 48 [#allocation2]
    %v1198 = vld [vmem:[%s1197] ss:$2 sm:$0xff]
    %s1199 = scalar_lea.vmem %s1004, 96 [#allocation2]
    %v1200 = vld [vmem:[%s1199] ss:$2 sm:$0xff]
    %s1201 = scalar_lea.vmem %s1004, 144 [#allocation2]
    %v1202 = vld [vmem:[%s1201] ss:$2 sm:$0xff]
    %s1203 = scalar_lea.vmem %s1004, 192 [#allocation2]
    %v1204 = vld [vmem:[%s1203] ss:$2 sm:$0xff]
    %s1205 = scalar_lea.vmem %s1004, 240 [#allocation2]
    %v1206 = vld [vmem:[%s1205] ss:$2 sm:$0xff]
    %s1207 = scalar_lea.vmem %s1004, 288 [#allocation2]
    %v1208 = vld [vmem:[%s1207] ss:$2 sm:$0xff]
    %s1209 = scalar_lea.vmem %s1004, 336 [#allocation2]
    %v1210 = vld [vmem:[%s1209] ss:$2 sm:$0xff]
    %s1211 = scalar_lea.vmem %s1004, 432 [#allocation2]
    %v1212 = vld [vmem:[%s1211] ss:$2 sm:$0xff]
    %s1213 = scalar_lea.vmem %s1004, 480 [#allocation2]
    %v1214 = vld [vmem:[%s1213] ss:$2 sm:$0xff]
    %s1215 = scalar_lea.vmem %s1004, 528 [#allocation2]
    %v1216 = vld [vmem:[%s1215] ss:$2 sm:$0xff]
    %s1217 = scalar_lea.vmem %s1004, 576 [#allocation2]
    %v1218 = vld [vmem:[%s1217] ss:$2 sm:$0xff]
    %s1219 = scalar_lea.vmem %s1004, 624 [#allocation2]
    %v1220 = vld [vmem:[%s1219] ss:$2 sm:$0xff]
    %s1221 = scalar_lea.vmem %s1004, 672 [#allocation2]
    %v1222 = vld [vmem:[%s1221] ss:$2 sm:$0xff]
    %s1223 = scalar_lea.vmem %s1004, 720 [#allocation2]
    %v1224 = vld [vmem:[%s1223] ss:$2 sm:$0xff]
    %s1225 = scalar_lea.vmem %s1004, 768 [#allocation2]
    %v1226 = vld [vmem:[%s1225] ss:$2 sm:$0xff]
    %s1227 = scalar_lea.vmem %s1004, 1 [#allocation2]
    %v1228 = vld [vmem:[%s1227] ss:$2 sm:$0xff]
    %s1229 = scalar_lea.vmem %s1004, 49 [#allocation2]
    %v1230 = vld [vmem:[%s1229] ss:$2 sm:$0xff]
    %s1231 = scalar_lea.vmem %s1004, 97 [#allocation2]
    %v1232 = vld [vmem:[%s1231] ss:$2 sm:$0xff]
    %s1233 = scalar_lea.vmem %s1004, 145 [#allocation2]
    %v1234 = vld [vmem:[%s1233] ss:$2 sm:$0xff]
    %s1235 = scalar_lea.vmem %s1004, 193 [#allocation2]
    %v1236 = vld [vmem:[%s1235] ss:$2 sm:$0xff]
    %s1237 = scalar_lea.vmem %s1004, 241 [#allocation2]
    %v1238 = vld [vmem:[%s1237] ss:$2 sm:$0xff]
    %s1239 = scalar_lea.vmem %s1004, 289 [#allocation2]
    %v1240 = vld [vmem:[%s1239] ss:$2 sm:$0xff]
    %s1241 = scalar_lea.vmem %s1004, 337 [#allocation2]
    %v1242 = vld [vmem:[%s1241] ss:$2 sm:$0xff]
    %s1243 = scalar_lea.vmem %s1004, 433 [#allocation2]
    %v1244 = vld [vmem:[%s1243] ss:$2 sm:$0xff]
    %s1245 = scalar_lea.vmem %s1004, 481 [#allocation2]
    %v1246 = vld [vmem:[%s1245] ss:$2 sm:$0xff]
    %s1247 = scalar_lea.vmem %s1004, 529 [#allocation2]
    %v1248 = vld [vmem:[%s1247] ss:$2 sm:$0xff]
    %s1249 = scalar_lea.vmem %s1004, 577 [#allocation2]
    %v1250 = vld [vmem:[%s1249] ss:$2 sm:$0xff]
    %s1251 = scalar_lea.vmem %s1004, 625 [#allocation2]
    %v1252 = vld [vmem:[%s1251] ss:$2 sm:$0xff]
    %s1253 = scalar_lea.vmem %s1004, 673 [#allocation2]
    %v1254 = vld [vmem:[%s1253] ss:$2 sm:$0xff]
    %s1255 = scalar_lea.vmem %s1004, 721 [#allocation2]
    %v1256 = vld [vmem:[%s1255] ss:$2 sm:$0xff]
    %s1257 = scalar_lea.vmem %s1004, 769 [#allocation2]
    %v1258 = vld [vmem:[%s1257] ss:$2 sm:$0xff]
    %s1259 = scalar_lea.vmem %s1004, 2 [#allocation2]
    %v1260 = vld [vmem:[%s1259] ss:$2 sm:$0xff]
    %s1261 = scalar_lea.vmem %s1004, 50 [#allocation2]
    %v1262 = vld [vmem:[%s1261] ss:$2 sm:$0xff]
    %s1263 = scalar_lea.vmem %s1004, 98 [#allocation2]
    %v1264 = vld [vmem:[%s1263] ss:$2 sm:$0xff]
    %s1265 = scalar_lea.vmem %s1004, 146 [#allocation2]
    %v1266 = vld [vmem:[%s1265] ss:$2 sm:$0xff]
    %s1267 = scalar_lea.vmem %s1004, 194 [#allocation2]
    %v1268 = vld [vmem:[%s1267] ss:$2 sm:$0xff]
    %s1269 = scalar_lea.vmem %s1004, 242 [#allocation2]
    %v1270 = vld [vmem:[%s1269] ss:$2 sm:$0xff]
    %s1271 = scalar_lea.vmem %s1004, 290 [#allocation2]
    %v1272 = vld [vmem:[%s1271] ss:$2 sm:$0xff]
    %s1273 = scalar_lea.vmem %s1004, 338 [#allocation2]
    %v1274 = vld [vmem:[%s1273] ss:$2 sm:$0xff]
    %s1275 = scalar_lea.vmem %s1004, 434 [#allocation2]
    %v1276 = vld [vmem:[%s1275] ss:$2 sm:$0xff]
    %s1277 = scalar_lea.vmem %s1004, 482 [#allocation2]
    %v1278 = vld [vmem:[%s1277] ss:$2 sm:$0xff]
    %s1279 = scalar_lea.vmem %s1004, 530 [#allocation2]
    %v1280 = vld [vmem:[%s1279] ss:$2 sm:$0xff]
    %s1281 = scalar_lea.vmem %s1004, 578 [#allocation2]
    %v1282 = vld [vmem:[%s1281] ss:$2 sm:$0xff]
    %s1283 = scalar_lea.vmem %s1004, 626 [#allocation2]
    %v1284 = vld [vmem:[%s1283] ss:$2 sm:$0xff]
    %s1285 = scalar_lea.vmem %s1004, 674 [#allocation2]
    %v1286 = vld [vmem:[%s1285] ss:$2 sm:$0xff]
    %s1287 = scalar_lea.vmem %s1004, 722 [#allocation2]
    %v1288 = vld [vmem:[%s1287] ss:$2 sm:$0xff]
    %s1289 = scalar_lea.vmem %s1004, 770 [#allocation2]
    %v1290 = vld [vmem:[%s1289] ss:$2 sm:$0xff]
    %s1291 = scalar_lea.vmem %s1004, 3 [#allocation2]
    %v1292 = vld [vmem:[%s1291] ss:$2 sm:$0xff]
    %s1293 = scalar_lea.vmem %s1004, 51 [#allocation2]
    %v1294 = vld [vmem:[%s1293] ss:$2 sm:$0xff]
    %s1295 = scalar_lea.vmem %s1004, 99 [#allocation2]
    %v1296 = vld [vmem:[%s1295] ss:$2 sm:$0xff]
    %s1297 = scalar_lea.vmem %s1004, 147 [#allocation2]
    %v1298 = vld [vmem:[%s1297] ss:$2 sm:$0xff]
    %s1299 = scalar_lea.vmem %s1004, 195 [#allocation2]
    %v1300 = vld [vmem:[%s1299] ss:$2 sm:$0xff]
    %s1301 = scalar_lea.vmem %s1004, 243 [#allocation2]
    %v1302 = vld [vmem:[%s1301] ss:$2 sm:$0xff]
    %s1303 = scalar_lea.vmem %s1004, 291 [#allocation2]
    %v1304 = vld [vmem:[%s1303] ss:$2 sm:$0xff]
    %s1305 = scalar_lea.vmem %s1004, 339 [#allocation2]
    %v1306 = vld [vmem:[%s1305] ss:$2 sm:$0xff]
    %s1307 = scalar_lea.vmem %s1004, 435 [#allocation2]
    %v1308 = vld [vmem:[%s1307] ss:$2 sm:$0xff]
    %s1309 = scalar_lea.vmem %s1004, 483 [#allocation2]
    %v1310 = vld [vmem:[%s1309] ss:$2 sm:$0xff]
    %s1311 = scalar_lea.vmem %s1004, 531 [#allocation2]
    %v1312 = vld [vmem:[%s1311] ss:$2 sm:$0xff]
    %s1313 = scalar_lea.vmem %s1004, 579 [#allocation2]
    %v1314 = vld [vmem:[%s1313] ss:$2 sm:$0xff]
    %s1315 = scalar_lea.vmem %s1004, 627 [#allocation2]
    %v1316 = vld [vmem:[%s1315] ss:$2 sm:$0xff]
    %s1317 = scalar_lea.vmem %s1004, 675 [#allocation2]
    %v1318 = vld [vmem:[%s1317] ss:$2 sm:$0xff]
    %s1319 = scalar_lea.vmem %s1004, 723 [#allocation2]
    %v1320 = vld [vmem:[%s1319] ss:$2 sm:$0xff]
    %s1321 = scalar_lea.vmem %s1004, 771 [#allocation2]
    %v1322 = vld [vmem:[%s1321] ss:$2 sm:$0xff]
    %s1323 = scalar_lea.vmem [#allocation2], 48
    %v1324 = vld [vmem:[%s1323] ss:$2 sm:$0xff]
    %s1325 = scalar_lea.vmem %s1323, 48 [#allocation2]
    %v1326 = vld [vmem:[%s1325] ss:$2 sm:$0xff]
    %s1327 = scalar_lea.vmem %s1323, 96 [#allocation2]
    %v1328 = vld [vmem:[%s1327] ss:$2 sm:$0xff]
    %s1329 = scalar_lea.vmem %s1323, 144 [#allocation2]
    %v1330 = vld [vmem:[%s1329] ss:$2 sm:$0xff]
    %s1331 = scalar_lea.vmem %s1323, 192 [#allocation2]
    %v1332 = vld [vmem:[%s1331] ss:$2 sm:$0xff]
    %s1333 = scalar_lea.vmem %s1323, 240 [#allocation2]
    %v1334 = vld [vmem:[%s1333] ss:$2 sm:$0xff]
    %s1335 = scalar_lea.vmem %s1323, 288 [#allocation2]
    %v1336 = vld [vmem:[%s1335] ss:$2 sm:$0xff]
    %s1337 = scalar_lea.vmem %s1323, 336 [#allocation2]
    %v1338 = vld [vmem:[%s1337] ss:$2 sm:$0xff]
    %s1339 = scalar_lea.vmem %s1323, 432 [#allocation2]
    %v1340 = vld [vmem:[%s1339] ss:$2 sm:$0xff]
    %s1341 = scalar_lea.vmem %s1323, 480 [#allocation2]
    %v1342 = vld [vmem:[%s1341] ss:$2 sm:$0xff]
    %s1343 = scalar_lea.vmem %s1323, 528 [#allocation2]
    %v1344 = vld [vmem:[%s1343] ss:$2 sm:$0xff]
    %s1345 = scalar_lea.vmem %s1323, 576 [#allocation2]
    %v1346 = vld [vmem:[%s1345] ss:$2 sm:$0xff]
    %s1347 = scalar_lea.vmem %s1323, 624 [#allocation2]
    %v1348 = vld [vmem:[%s1347] ss:$2 sm:$0xff]
    %s1349 = scalar_lea.vmem %s1323, 672 [#allocation2]
    %v1350 = vld [vmem:[%s1349] ss:$2 sm:$0xff]
    %s1351 = scalar_lea.vmem %s1323, 720 [#allocation2]
    %v1352 = vld [vmem:[%s1351] ss:$2 sm:$0xff]
    %s1353 = scalar_lea.vmem %s1323, 768 [#allocation2]
    %v1354 = vld [vmem:[%s1353] ss:$2 sm:$0xff]
    %s1355 = scalar_lea.vmem %s1323, 1 [#allocation2]
    %v1356 = vld [vmem:[%s1355] ss:$2 sm:$0xff]
    %s1357 = scalar_lea.vmem %s1323, 49 [#allocation2]
    %v1358 = vld [vmem:[%s1357] ss:$2 sm:$0xff]
    %s1359 = scalar_lea.vmem %s1323, 97 [#allocation2]
    %v1360 = vld [vmem:[%s1359] ss:$2 sm:$0xff]
    %s1361 = scalar_lea.vmem %s1323, 145 [#allocation2]
    %v1362 = vld [vmem:[%s1361] ss:$2 sm:$0xff]
    %s1363 = scalar_lea.vmem %s1323, 193 [#allocation2]
    %v1364 = vld [vmem:[%s1363] ss:$2 sm:$0xff]
    %s1365 = scalar_lea.vmem %s1323, 241 [#allocation2]
    %v1366 = vld [vmem:[%s1365] ss:$2 sm:$0xff]
    %s1367 = scalar_lea.vmem %s1323, 289 [#allocation2]
    %v1368 = vld [vmem:[%s1367] ss:$2 sm:$0xff]
    %s1369 = scalar_lea.vmem %s1323, 337 [#allocation2]
    %v1370 = vld [vmem:[%s1369] ss:$2 sm:$0xff]
    %s1371 = scalar_lea.vmem %s1323, 433 [#allocation2]
    %v1372 = vld [vmem:[%s1371] ss:$2 sm:$0xff]
    %s1373 = scalar_lea.vmem %s1323, 481 [#allocation2]
    %v1374 = vld [vmem:[%s1373] ss:$2 sm:$0xff]
    %s1375 = scalar_lea.vmem %s1323, 529 [#allocation2]
    %v1376 = vld [vmem:[%s1375] ss:$2 sm:$0xff]
    %s1377 = scalar_lea.vmem %s1323, 577 [#allocation2]
    %v1378 = vld [vmem:[%s1377] ss:$2 sm:$0xff]
    %s1379 = scalar_lea.vmem %s1323, 625 [#allocation2]
    %v1380 = vld [vmem:[%s1379] ss:$2 sm:$0xff]
    %s1381 = scalar_lea.vmem %s1323, 673 [#allocation2]
    %v1382 = vld [vmem:[%s1381] ss:$2 sm:$0xff]
    %s1383 = scalar_lea.vmem %s1323, 721 [#allocation2]
    %v1384 = vld [vmem:[%s1383] ss:$2 sm:$0xff]
    %s1385 = scalar_lea.vmem %s1323, 769 [#allocation2]
    %v1386 = vld [vmem:[%s1385] ss:$2 sm:$0xff]
    %s1387 = scalar_lea.vmem %s1323, 2 [#allocation2]
    %v1388 = vld [vmem:[%s1387] ss:$2 sm:$0xff]
    %s1389 = scalar_lea.vmem %s1323, 50 [#allocation2]
    %v1390 = vld [vmem:[%s1389] ss:$2 sm:$0xff]
    %s1391 = scalar_lea.vmem %s1323, 98 [#allocation2]
    %v1392 = vld [vmem:[%s1391] ss:$2 sm:$0xff]
    %s1393 = scalar_lea.vmem %s1323, 146 [#allocation2]
    %v1394 = vld [vmem:[%s1393] ss:$2 sm:$0xff]
    %s1395 = scalar_lea.vmem %s1323, 194 [#allocation2]
    %v1396 = vld [vmem:[%s1395] ss:$2 sm:$0xff]
    %s1397 = scalar_lea.vmem %s1323, 242 [#allocation2]
    %v1398 = vld [vmem:[%s1397] ss:$2 sm:$0xff]
    %s1399 = scalar_lea.vmem %s1323, 290 [#allocation2]
    %v1400 = vld [vmem:[%s1399] ss:$2 sm:$0xff]
    %s1401 = scalar_lea.vmem %s1323, 338 [#allocation2]
    %v1402 = vld [vmem:[%s1401] ss:$2 sm:$0xff]
    %s1403 = scalar_lea.vmem %s1323, 434 [#allocation2]
    %v1404 = vld [vmem:[%s1403] ss:$2 sm:$0xff]
    %s1405 = scalar_lea.vmem %s1323, 482 [#allocation2]
    %v1406 = vld [vmem:[%s1405] ss:$2 sm:$0xff]
    %s1407 = scalar_lea.vmem %s1323, 530 [#allocation2]
    %v1408 = vld [vmem:[%s1407] ss:$2 sm:$0xff]
    %s1409 = scalar_lea.vmem %s1323, 578 [#allocation2]
    %v1410 = vld [vmem:[%s1409] ss:$2 sm:$0xff]
    %s1411 = scalar_lea.vmem %s1323, 626 [#allocation2]
    %v1412 = vld [vmem:[%s1411] ss:$2 sm:$0xff]
    %s1413 = scalar_lea.vmem %s1323, 674 [#allocation2]
    %v1414 = vld [vmem:[%s1413] ss:$2 sm:$0xff]
    %s1415 = scalar_lea.vmem %s1323, 722 [#allocation2]
    %v1416 = vld [vmem:[%s1415] ss:$2 sm:$0xff]
    %s1417 = scalar_lea.vmem %s1323, 770 [#allocation2]
    %v1418 = vld [vmem:[%s1417] ss:$2 sm:$0xff]
    %s1419 = scalar_lea.vmem %s1323, 3 [#allocation2]
    %v1420 = vld [vmem:[%s1419] ss:$2 sm:$0xff]
    %s1421 = scalar_lea.vmem %s1323, 51 [#allocation2]
    %v1422 = vld [vmem:[%s1421] ss:$2 sm:$0xff]
    %s1423 = scalar_lea.vmem %s1323, 99 [#allocation2]
    %v1424 = vld [vmem:[%s1423] ss:$2 sm:$0xff]
    %s1425 = scalar_lea.vmem %s1323, 147 [#allocation2]
    %v1426 = vld [vmem:[%s1425] ss:$2 sm:$0xff]
    %s1427 = scalar_lea.vmem %s1323, 195 [#allocation2]
    %v1428 = vld [vmem:[%s1427] ss:$2 sm:$0xff]
    %s1429 = scalar_lea.vmem %s1323, 243 [#allocation2]
    %v1430 = vld [vmem:[%s1429] ss:$2 sm:$0xff]
    %s1431 = scalar_lea.vmem %s1323, 291 [#allocation2]
    %v1432 = vld [vmem:[%s1431] ss:$2 sm:$0xff]
    %s1433 = scalar_lea.vmem %s1323, 339 [#allocation2]
    %v1434 = vld [vmem:[%s1433] ss:$2 sm:$0xff]
    %s1435 = scalar_lea.vmem %s1323, 435 [#allocation2]
    %v1436 = vld [vmem:[%s1435] ss:$2 sm:$0xff]
    %s1437 = scalar_lea.vmem %s1323, 483 [#allocation2]
    %v1438 = vld [vmem:[%s1437] ss:$2 sm:$0xff]
    %s1439 = scalar_lea.vmem %s1323, 531 [#allocation2]
    %v1440 = vld [vmem:[%s1439] ss:$2 sm:$0xff]
    %s1441 = scalar_lea.vmem %s1323, 579 [#allocation2]
    %v1442 = vld [vmem:[%s1441] ss:$2 sm:$0xff]
    %s1443 = scalar_lea.vmem %s1323, 627 [#allocation2]
    %v1444 = vld [vmem:[%s1443] ss:$2 sm:$0xff]
    %s1445 = scalar_lea.vmem %s1323, 675 [#allocation2]
    %v1446 = vld [vmem:[%s1445] ss:$2 sm:$0xff]
    %s1447 = scalar_lea.vmem %s1323, 723 [#allocation2]
    %v1448 = vld [vmem:[%s1447] ss:$2 sm:$0xff]
    %s1449 = scalar_lea.vmem %s1323, 771 [#allocation2]
    %v1450 = vld [vmem:[%s1449] ss:$2 sm:$0xff]
    %s1451 = scalar_lea.vmem [#allocation2], 72
    %v1452 = vld [vmem:[%s1451] ss:$2 sm:$0xff]
    %s1453 = scalar_lea.vmem %s1451, 48 [#allocation2]
    %v1454 = vld [vmem:[%s1453] ss:$2 sm:$0xff]
    %s1455 = scalar_lea.vmem %s1451, 96 [#allocation2]
    %v1456 = vld [vmem:[%s1455] ss:$2 sm:$0xff]
    %s1457 = scalar_lea.vmem %s1451, 144 [#allocation2]
    %v1458 = vld [vmem:[%s1457] ss:$2 sm:$0xff]
    %s1459 = scalar_lea.vmem %s1451, 192 [#allocation2]
    %v1460 = vld [vmem:[%s1459] ss:$2 sm:$0xff]
    %s1461 = scalar_lea.vmem %s1451, 240 [#allocation2]
    %v1462 = vld [vmem:[%s1461] ss:$2 sm:$0xff]
    %s1463 = scalar_lea.vmem %s1451, 288 [#allocation2]
    %v1464 = vld [vmem:[%s1463] ss:$2 sm:$0xff]
    %s1465 = scalar_lea.vmem %s1451, 336 [#allocation2]
    %v1466 = vld [vmem:[%s1465] ss:$2 sm:$0xff]
    %s1467 = scalar_lea.vmem %s1451, 432 [#allocation2]
    %v1468 = vld [vmem:[%s1467] ss:$2 sm:$0xff]
    %s1469 = scalar_lea.vmem %s1451, 480 [#allocation2]
    %v1470 = vld [vmem:[%s1469] ss:$2 sm:$0xff]
    %s1471 = scalar_lea.vmem %s1451, 528 [#allocation2]
    %v1472 = vld [vmem:[%s1471] ss:$2 sm:$0xff]
    %s1473 = scalar_lea.vmem %s1451, 576 [#allocation2]
    %v1474 = vld [vmem:[%s1473] ss:$2 sm:$0xff]
    %s1475 = scalar_lea.vmem %s1451, 624 [#allocation2]
    %v1476 = vld [vmem:[%s1475] ss:$2 sm:$0xff]
    %s1477 = scalar_lea.vmem %s1451, 672 [#allocation2]
    %v1478 = vld [vmem:[%s1477] ss:$2 sm:$0xff]
    %s1479 = scalar_lea.vmem %s1451, 720 [#allocation2]
    %v1480 = vld [vmem:[%s1479] ss:$2 sm:$0xff]
    %s1481 = scalar_lea.vmem %s1451, 768 [#allocation2]
    %v1482 = vld [vmem:[%s1481] ss:$2 sm:$0xff]
    %s1483 = scalar_lea.vmem %s1451, 1 [#allocation2]
    %v1484 = vld [vmem:[%s1483] ss:$2 sm:$0xff]
    %s1485 = scalar_lea.vmem %s1451, 49 [#allocation2]
    %v1486 = vld [vmem:[%s1485] ss:$2 sm:$0xff]
    %s1487 = scalar_lea.vmem %s1451, 97 [#allocation2]
    %v1488 = vld [vmem:[%s1487] ss:$2 sm:$0xff]
    %s1489 = scalar_lea.vmem %s1451, 145 [#allocation2]
    %v1490 = vld [vmem:[%s1489] ss:$2 sm:$0xff]
    %s1491 = scalar_lea.vmem %s1451, 193 [#allocation2]
    %v1492 = vld [vmem:[%s1491] ss:$2 sm:$0xff]
    %s1493 = scalar_lea.vmem %s1451, 241 [#allocation2]
    %v1494 = vld [vmem:[%s1493] ss:$2 sm:$0xff]
    %s1495 = scalar_lea.vmem %s1451, 289 [#allocation2]
    %v1496 = vld [vmem:[%s1495] ss:$2 sm:$0xff]
    %s1497 = scalar_lea.vmem %s1451, 337 [#allocation2]
    %v1498 = vld [vmem:[%s1497] ss:$2 sm:$0xff]
    %s1499 = scalar_lea.vmem %s1451, 433 [#allocation2]
    %v1500 = vld [vmem:[%s1499] ss:$2 sm:$0xff]
    %s1501 = scalar_lea.vmem %s1451, 481 [#allocation2]
    %v1502 = vld [vmem:[%s1501] ss:$2 sm:$0xff]
    %s1503 = scalar_lea.vmem %s1451, 529 [#allocation2]
    %v1504 = vld [vmem:[%s1503] ss:$2 sm:$0xff]
    %s1505 = scalar_lea.vmem %s1451, 577 [#allocation2]
    %v1506 = vld [vmem:[%s1505] ss:$2 sm:$0xff]
    %s1507 = scalar_lea.vmem %s1451, 625 [#allocation2]
    %v1508 = vld [vmem:[%s1507] ss:$2 sm:$0xff]
    %s1509 = scalar_lea.vmem %s1451, 673 [#allocation2]
    %v1510 = vld [vmem:[%s1509] ss:$2 sm:$0xff]
    %s1511 = scalar_lea.vmem %s1451, 721 [#allocation2]
    %v1512 = vld [vmem:[%s1511] ss:$2 sm:$0xff]
    %s1513 = scalar_lea.vmem %s1451, 769 [#allocation2]
    %v1514 = vld [vmem:[%s1513] ss:$2 sm:$0xff]
    %s1515 = scalar_lea.vmem %s1451, 2 [#allocation2]
    %v1516 = vld [vmem:[%s1515] ss:$2 sm:$0xff]
    %s1517 = scalar_lea.vmem %s1451, 50 [#allocation2]
    %v1518 = vld [vmem:[%s1517] ss:$2 sm:$0xff]
    %s1519 = scalar_lea.vmem %s1451, 98 [#allocation2]
    %v1520 = vld [vmem:[%s1519] ss:$2 sm:$0xff]
    %s1521 = scalar_lea.vmem %s1451, 146 [#allocation2]
    %v1522 = vld [vmem:[%s1521] ss:$2 sm:$0xff]
    %s1523 = scalar_lea.vmem %s1451, 194 [#allocation2]
    %v1524 = vld [vmem:[%s1523] ss:$2 sm:$0xff]
    %s1525 = scalar_lea.vmem %s1451, 242 [#allocation2]
    %v1526 = vld [vmem:[%s1525] ss:$2 sm:$0xff]
    %s1527 = scalar_lea.vmem %s1451, 290 [#allocation2]
    %v1528 = vld [vmem:[%s1527] ss:$2 sm:$0xff]
    %s1529 = scalar_lea.vmem %s1451, 338 [#allocation2]
    %v1530 = vld [vmem:[%s1529] ss:$2 sm:$0xff]
    %s1531 = scalar_lea.vmem %s1451, 434 [#allocation2]
    %v1532 = vld [vmem:[%s1531] ss:$2 sm:$0xff]
    %s1533 = scalar_lea.vmem %s1451, 482 [#allocation2]
    %v1534 = vld [vmem:[%s1533] ss:$2 sm:$0xff]
    %s1535 = scalar_lea.vmem %s1451, 530 [#allocation2]
    %v1536 = vld [vmem:[%s1535] ss:$2 sm:$0xff]
    %s1537 = scalar_lea.vmem %s1451, 578 [#allocation2]
    %v1538 = vld [vmem:[%s1537] ss:$2 sm:$0xff]
    %s1539 = scalar_lea.vmem %s1451, 626 [#allocation2]
    %v1540 = vld [vmem:[%s1539] ss:$2 sm:$0xff]
    %s1541 = scalar_lea.vmem %s1451, 674 [#allocation2]
    %v1542 = vld [vmem:[%s1541] ss:$2 sm:$0xff]
    %s1543 = scalar_lea.vmem %s1451, 722 [#allocation2]
    %v1544 = vld [vmem:[%s1543] ss:$2 sm:$0xff]
    %s1545 = scalar_lea.vmem %s1451, 770 [#allocation2]
    %v1546 = vld [vmem:[%s1545] ss:$2 sm:$0xff]
    %s1547 = scalar_lea.vmem %s1451, 3 [#allocation2]
    %v1548 = vld [vmem:[%s1547] ss:$2 sm:$0xff]
    %s1549 = scalar_lea.vmem %s1451, 51 [#allocation2]
    %v1550 = vld [vmem:[%s1549] ss:$2 sm:$0xff]
    %s1551 = scalar_lea.vmem %s1451, 99 [#allocation2]
    %v1552 = vld [vmem:[%s1551] ss:$2 sm:$0xff]
    %s1553 = scalar_lea.vmem %s1451, 147 [#allocation2]
    %v1554 = vld [vmem:[%s1553] ss:$2 sm:$0xff]
    %s1555 = scalar_lea.vmem %s1451, 195 [#allocation2]
    %v1556 = vld [vmem:[%s1555] ss:$2 sm:$0xff]
    %s1557 = scalar_lea.vmem %s1451, 243 [#allocation2]
    %v1558 = vld [vmem:[%s1557] ss:$2 sm:$0xff]
    %s1559 = scalar_lea.vmem %s1451, 291 [#allocation2]
    %v1560 = vld [vmem:[%s1559] ss:$2 sm:$0xff]
    %s1561 = scalar_lea.vmem %s1451, 339 [#allocation2]
    %v1562 = vld [vmem:[%s1561] ss:$2 sm:$0xff]
    %s1563 = scalar_lea.vmem %s1451, 435 [#allocation2]
    %v1564 = vld [vmem:[%s1563] ss:$2 sm:$0xff]
    %s1565 = scalar_lea.vmem %s1451, 483 [#allocation2]
    %v1566 = vld [vmem:[%s1565] ss:$2 sm:$0xff]
    %s1567 = scalar_lea.vmem %s1451, 531 [#allocation2]
    %v1568 = vld [vmem:[%s1567] ss:$2 sm:$0xff]
    %s1569 = scalar_lea.vmem %s1451, 579 [#allocation2]
    %v1570 = vld [vmem:[%s1569] ss:$2 sm:$0xff]
    %s1571 = scalar_lea.vmem %s1451, 627 [#allocation2]
    %v1572 = vld [vmem:[%s1571] ss:$2 sm:$0xff]
    %s1573 = scalar_lea.vmem %s1451, 675 [#allocation2]
    %v1574 = vld [vmem:[%s1573] ss:$2 sm:$0xff]
    %s1575 = scalar_lea.vmem %s1451, 723 [#allocation2]
    %v1576 = vld [vmem:[%s1575] ss:$2 sm:$0xff]
    %s1577 = scalar_lea.vmem %s1451, 771 [#allocation2]
    %v1578 = vld [vmem:[%s1577] ss:$2 sm:$0xff]
    %1595 = vrot.lane.b32.xlu0 %v1101, 16
    %v1596 = vpop.permute.xlu0 %1595
    %1597 = vrot.lane.b32.xlu0 %v1103, 16
    %v1598 = vpop.permute.xlu0 %1597
    %1599 = vrot.lane.b32.xlu0 %v1105, 16
    %v1600 = vpop.permute.xlu0 %1599
    %1601 = vrot.lane.b32.xlu0 %v1107, 16
    %v1602 = vpop.permute.xlu0 %1601
    %1603 = vrot.lane.b32.xlu0 %v1109, 16
    %v1604 = vpop.permute.xlu0 %1603
    %1605 = vrot.lane.b32.xlu0 %v1111, 16
    %v1606 = vpop.permute.xlu0 %1605
    %1607 = vrot.lane.b32.xlu0 %v1113, 16
    %v1608 = vpop.permute.xlu0 %1607
    %1609 = vrot.lane.b32.xlu0 %v1115, 16
    %v1610 = vpop.permute.xlu0 %1609
    %1611 = vrot.lane.b32.xlu0 %v1117, 16
    %v1612 = vpop.permute.xlu0 %1611
    %1613 = vrot.lane.b32.xlu0 %v1119, 16
    %v1614 = vpop.permute.xlu0 %1613
    %1615 = vrot.lane.b32.xlu0 %v1121, 16
    %v1616 = vpop.permute.xlu0 %1615
    %1617 = vrot.lane.b32.xlu0 %v1123, 16
    %v1618 = vpop.permute.xlu0 %1617
    %1619 = vrot.lane.b32.xlu0 %v1125, 16
    %v1620 = vpop.permute.xlu0 %1619
    %1621 = vrot.lane.b32.xlu0 %v1127, 16
    %v1622 = vpop.permute.xlu0 %1621
    %1623 = vrot.lane.b32.xlu0 %v1129, 16
    %v1624 = vpop.permute.xlu0 %1623
    %1625 = vrot.lane.b32.xlu0 %v1131, 16
    %v1626 = vpop.permute.xlu0 %1625
    %1659 = vrot.lane.b32.xlu0 %v1133, 32
    %v1660 = vpop.permute.xlu0 %1659
    %1661 = vrot.lane.b32.xlu0 %v1135, 32
    %v1662 = vpop.permute.xlu0 %1661
    %1663 = vrot.lane.b32.xlu0 %v1137, 32
    %v1664 = vpop.permute.xlu0 %1663
    %1665 = vrot.lane.b32.xlu0 %v1139, 32
    %v1666 = vpop.permute.xlu0 %1665
    %1667 = vrot.lane.b32.xlu0 %v1141, 32
    %v1668 = vpop.permute.xlu0 %1667
    %1669 = vrot.lane.b32.xlu0 %v1143, 32
    %v1670 = vpop.permute.xlu0 %1669
    %1671 = vrot.lane.b32.xlu0 %v1145, 32
    %v1672 = vpop.permute.xlu0 %1671
    %1673 = vrot.lane.b32.xlu0 %v1147, 32
    %v1674 = vpop.permute.xlu0 %1673
    %1675 = vrot.lane.b32.xlu0 %v1149, 32
    %v1676 = vpop.permute.xlu0 %1675
    %1677 = vrot.lane.b32.xlu0 %v1151, 32
    %v1678 = vpop.permute.xlu0 %1677
    %1679 = vrot.lane.b32.xlu0 %v1153, 32
    %v1680 = vpop.permute.xlu0 %1679
    %1681 = vrot.lane.b32.xlu0 %v1155, 32
    %v1682 = vpop.permute.xlu0 %1681
    %1683 = vrot.lane.b32.xlu0 %v1157, 32
    %v1684 = vpop.permute.xlu0 %1683
    %1685 = vrot.lane.b32.xlu0 %v1159, 32
    %v1686 = vpop.permute.xlu0 %1685
    %1687 = vrot.lane.b32.xlu0 %v1161, 32
    %v1688 = vpop.permute.xlu0 %1687
    %1689 = vrot.lane.b32.xlu0 %v1163, 32
    %v1690 = vpop.permute.xlu0 %1689
    %1723 = vrot.lane.b32.xlu0 %v1165, 48
    %v1724 = vpop.permute.xlu0 %1723
    %1725 = vrot.lane.b32.xlu0 %v1167, 48
    %v1726 = vpop.permute.xlu0 %1725
    %1727 = vrot.lane.b32.xlu0 %v1169, 48
    %v1728 = vpop.permute.xlu0 %1727
    %1729 = vrot.lane.b32.xlu0 %v1171, 48
    %v1730 = vpop.permute.xlu0 %1729
    %1731 = vrot.lane.b32.xlu0 %v1173, 48
    %v1732 = vpop.permute.xlu0 %1731
    %1733 = vrot.lane.b32.xlu0 %v1175, 48
    %v1734 = vpop.permute.xlu0 %1733
    %1735 = vrot.lane.b32.xlu0 %v1177, 48
    %v1736 = vpop.permute.xlu0 %1735
    %1737 = vrot.lane.b32.xlu0 %v1179, 48
    %v1738 = vpop.permute.xlu0 %1737
    %1739 = vrot.lane.b32.xlu0 %v1181, 48
    %v1740 = vpop.permute.xlu0 %1739
    %1741 = vrot.lane.b32.xlu0 %v1183, 48
    %v1742 = vpop.permute.xlu0 %1741
    %1743 = vrot.lane.b32.xlu0 %v1185, 48
    %v1744 = vpop.permute.xlu0 %1743
    %1745 = vrot.lane.b32.xlu0 %v1187, 48
    %v1746 = vpop.permute.xlu0 %1745
    %1747 = vrot.lane.b32.xlu0 %v1189, 48
    %v1748 = vpop.permute.xlu0 %1747
    %1749 = vrot.lane.b32.xlu0 %v1191, 48
    %v1750 = vpop.permute.xlu0 %1749
    %1751 = vrot.lane.b32.xlu0 %v1193, 48
    %v1752 = vpop.permute.xlu0 %1751
    %1753 = vrot.lane.b32.xlu0 %v1195, 48
    %v1754 = vpop.permute.xlu0 %1753
    %1787 = vrot.lane.b32.xlu0 %v1196, 64
    %v1788 = vpop.permute.xlu0 %1787
    %1789 = vrot.lane.b32.xlu0 %v1198, 64
    %v1790 = vpop.permute.xlu0 %1789
    %1791 = vrot.lane.b32.xlu0 %v1200, 64
    %v1792 = vpop.permute.xlu0 %1791
    %1793 = vrot.lane.b32.xlu0 %v1202, 64
    %v1794 = vpop.permute.xlu0 %1793
    %1795 = vrot.lane.b32.xlu0 %v1204, 64
    %v1796 = vpop.permute.xlu0 %1795
    %1797 = vrot.lane.b32.xlu0 %v1206, 64
    %v1798 = vpop.permute.xlu0 %1797
    %1799 = vrot.lane.b32.xlu0 %v1208, 64
    %v1800 = vpop.permute.xlu0 %1799
    %1801 = vrot.lane.b32.xlu0 %v1210, 64
    %v1802 = vpop.permute.xlu0 %1801
    %1803 = vrot.lane.b32.xlu0 %v1212, 64
    %v1804 = vpop.permute.xlu0 %1803
    %1805 = vrot.lane.b32.xlu0 %v1214, 64
    %v1806 = vpop.permute.xlu0 %1805
    %1807 = vrot.lane.b32.xlu0 %v1216, 64
    %v1808 = vpop.permute.xlu0 %1807
    %1809 = vrot.lane.b32.xlu0 %v1218, 64
    %v1810 = vpop.permute.xlu0 %1809
    %1811 = vrot.lane.b32.xlu0 %v1220, 64
    %v1812 = vpop.permute.xlu0 %1811
    %1813 = vrot.lane.b32.xlu0 %v1222, 64
    %v1814 = vpop.permute.xlu0 %1813
    %1815 = vrot.lane.b32.xlu0 %v1224, 64
    %v1816 = vpop.permute.xlu0 %1815
    %1817 = vrot.lane.b32.xlu0 %v1226, 64
    %v1818 = vpop.permute.xlu0 %1817
    %1851 = vrot.lane.b32.xlu0 %v1228, 80
    %v1852 = vpop.permute.xlu0 %1851
    %1853 = vrot.lane.b32.xlu0 %v1230, 80
    %v1854 = vpop.permute.xlu0 %1853
    %1855 = vrot.lane.b32.xlu0 %v1232, 80
    %v1856 = vpop.permute.xlu0 %1855
    %1857 = vrot.lane.b32.xlu0 %v1234, 80
    %v1858 = vpop.permute.xlu0 %1857
    %1859 = vrot.lane.b32.xlu0 %v1236, 80
    %v1860 = vpop.permute.xlu0 %1859
    %1861 = vrot.lane.b32.xlu0 %v1238, 80
    %v1862 = vpop.permute.xlu0 %1861
    %1863 = vrot.lane.b32.xlu0 %v1240, 80
    %v1864 = vpop.permute.xlu0 %1863
    %1865 = vrot.lane.b32.xlu0 %v1242, 80
    %v1866 = vpop.permute.xlu0 %1865
    %1867 = vrot.lane.b32.xlu0 %v1244, 80
    %v1868 = vpop.permute.xlu0 %1867
    %1869 = vrot.lane.b32.xlu0 %v1246, 80
    %v1870 = vpop.permute.xlu0 %1869
    %1871 = vrot.lane.b32.xlu0 %v1248, 80
    %v1872 = vpop.permute.xlu0 %1871
    %1873 = vrot.lane.b32.xlu0 %v1250, 80
    %v1874 = vpop.permute.xlu0 %1873
    %1875 = vrot.lane.b32.xlu0 %v1252, 80
    %v1876 = vpop.permute.xlu0 %1875
    %1877 = vrot.lane.b32.xlu0 %v1254, 80
    %v1878 = vpop.permute.xlu0 %1877
    %1879 = vrot.lane.b32.xlu0 %v1256, 80
    %v1880 = vpop.permute.xlu0 %1879
    %1881 = vrot.lane.b32.xlu0 %v1258, 80
    %v1882 = vpop.permute.xlu0 %1881
    %1915 = vrot.lane.b32.xlu0 %v1260, 96
    %v1916 = vpop.permute.xlu0 %1915
    %1917 = vrot.lane.b32.xlu0 %v1262, 96
    %v1918 = vpop.permute.xlu0 %1917
    %1919 = vrot.lane.b32.xlu0 %v1264, 96
    %v1920 = vpop.permute.xlu0 %1919
    %1921 = vrot.lane.b32.xlu0 %v1266, 96
    %v1922 = vpop.permute.xlu0 %1921
    %1923 = vrot.lane.b32.xlu0 %v1268, 96
    %v1924 = vpop.permute.xlu0 %1923
    %1925 = vrot.lane.b32.xlu0 %v1270, 96
    %v1926 = vpop.permute.xlu0 %1925
    %1927 = vrot.lane.b32.xlu0 %v1272, 96
    %v1928 = vpop.permute.xlu0 %1927
    %1929 = vrot.lane.b32.xlu0 %v1274, 96
    %v1930 = vpop.permute.xlu0 %1929
    %1931 = vrot.lane.b32.xlu0 %v1276, 96
    %v1932 = vpop.permute.xlu0 %1931
    %1933 = vrot.lane.b32.xlu0 %v1278, 96
    %v1934 = vpop.permute.xlu0 %1933
    %1935 = vrot.lane.b32.xlu0 %v1280, 96
    %v1936 = vpop.permute.xlu0 %1935
    %1937 = vrot.lane.b32.xlu0 %v1282, 96
    %v1938 = vpop.permute.xlu0 %1937
    %1939 = vrot.lane.b32.xlu0 %v1284, 96
    %v1940 = vpop.permute.xlu0 %1939
    %1941 = vrot.lane.b32.xlu0 %v1286, 96
    %v1942 = vpop.permute.xlu0 %1941
    %1943 = vrot.lane.b32.xlu0 %v1288, 96
    %v1944 = vpop.permute.xlu0 %1943
    %1945 = vrot.lane.b32.xlu0 %v1290, 96
    %v1946 = vpop.permute.xlu0 %1945
    %1979 = vrot.lane.b32.xlu0 %v1292, 112
    %v1980 = vpop.permute.xlu0 %1979
    %1981 = vrot.lane.b32.xlu0 %v1294, 112
    %v1982 = vpop.permute.xlu0 %1981
    %1983 = vrot.lane.b32.xlu0 %v1296, 112
    %v1984 = vpop.permute.xlu0 %1983
    %1985 = vrot.lane.b32.xlu0 %v1298, 112
    %v1986 = vpop.permute.xlu0 %1985
    %1987 = vrot.lane.b32.xlu0 %v1300, 112
    %v1988 = vpop.permute.xlu0 %1987
    %1989 = vrot.lane.b32.xlu0 %v1302, 112
    %v1990 = vpop.permute.xlu0 %1989
    %1991 = vrot.lane.b32.xlu0 %v1304, 112
    %v1992 = vpop.permute.xlu0 %1991
    %1993 = vrot.lane.b32.xlu0 %v1306, 112
    %v1994 = vpop.permute.xlu0 %1993
    %1995 = vrot.lane.b32.xlu0 %v1308, 112
    %v1996 = vpop.permute.xlu0 %1995
    %1997 = vrot.lane.b32.xlu0 %v1310, 112
    %v1998 = vpop.permute.xlu0 %1997
    %1999 = vrot.lane.b32.xlu0 %v1312, 112
    %v2000 = vpop.permute.xlu0 %1999
    %2001 = vrot.lane.b32.xlu0 %v1314, 112
    %v2002 = vpop.permute.xlu0 %2001
    %2003 = vrot.lane.b32.xlu0 %v1316, 112
    %v2004 = vpop.permute.xlu0 %2003
    %2005 = vrot.lane.b32.xlu0 %v1318, 112
    %v2006 = vpop.permute.xlu0 %2005
    %2007 = vrot.lane.b32.xlu0 %v1320, 112
    %v2008 = vpop.permute.xlu0 %2007
    %2009 = vrot.lane.b32.xlu0 %v1322, 112
    %v2010 = vpop.permute.xlu0 %2009
    %2043 = vrot.lane.b32.xlu0 %v1356, 16
    %v2044 = vpop.permute.xlu0 %2043
    %2045 = vrot.lane.b32.xlu0 %v1358, 16
    %v2046 = vpop.permute.xlu0 %2045
    %2047 = vrot.lane.b32.xlu0 %v1360, 16
    %v2048 = vpop.permute.xlu0 %2047
    %2049 = vrot.lane.b32.xlu0 %v1362, 16
    %v2050 = vpop.permute.xlu0 %2049
    %2051 = vrot.lane.b32.xlu0 %v1364, 16
    %v2052 = vpop.permute.xlu0 %2051
    %2053 = vrot.lane.b32.xlu0 %v1366, 16
    %v2054 = vpop.permute.xlu0 %2053
    %2055 = vrot.lane.b32.xlu0 %v1368, 16
    %v2056 = vpop.permute.xlu0 %2055
    %2057 = vrot.lane.b32.xlu0 %v1370, 16
    %v2058 = vpop.permute.xlu0 %2057
    %2059 = vrot.lane.b32.xlu0 %v1372, 16
    %v2060 = vpop.permute.xlu0 %2059
    %2061 = vrot.lane.b32.xlu0 %v1374, 16
    %v2062 = vpop.permute.xlu0 %2061
    %2063 = vrot.lane.b32.xlu0 %v1376, 16
    %v2064 = vpop.permute.xlu0 %2063
    %2065 = vrot.lane.b32.xlu0 %v1378, 16
    %v2066 = vpop.permute.xlu0 %2065
    %2067 = vrot.lane.b32.xlu0 %v1380, 16
    %v2068 = vpop.permute.xlu0 %2067
    %2069 = vrot.lane.b32.xlu0 %v1382, 16
    %v2070 = vpop.permute.xlu0 %2069
    %2071 = vrot.lane.b32.xlu0 %v1384, 16
    %v2072 = vpop.permute.xlu0 %2071
    %2073 = vrot.lane.b32.xlu0 %v1386, 16
    %v2074 = vpop.permute.xlu0 %2073
    %2107 = vrot.lane.b32.xlu0 %v1388, 32
    %v2108 = vpop.permute.xlu0 %2107
    %2109 = vrot.lane.b32.xlu0 %v1390, 32
    %v2110 = vpop.permute.xlu0 %2109
    %2111 = vrot.lane.b32.xlu0 %v1392, 32
    %v2112 = vpop.permute.xlu0 %2111
    %2113 = vrot.lane.b32.xlu0 %v1394, 32
    %v2114 = vpop.permute.xlu0 %2113
    %2115 = vrot.lane.b32.xlu0 %v1396, 32
    %v2116 = vpop.permute.xlu0 %2115
    %2117 = vrot.lane.b32.xlu0 %v1398, 32
    %v2118 = vpop.permute.xlu0 %2117
    %2119 = vrot.lane.b32.xlu0 %v1400, 32
    %v2120 = vpop.permute.xlu0 %2119
    %2121 = vrot.lane.b32.xlu0 %v1402, 32
    %v2122 = vpop.permute.xlu0 %2121
    %2123 = vrot.lane.b32.xlu0 %v1404, 32
    %v2124 = vpop.permute.xlu0 %2123
    %2125 = vrot.lane.b32.xlu0 %v1406, 32
    %v2126 = vpop.permute.xlu0 %2125
    %2127 = vrot.lane.b32.xlu0 %v1408, 32
    %v2128 = vpop.permute.xlu0 %2127
    %2129 = vrot.lane.b32.xlu0 %v1410, 32
    %v2130 = vpop.permute.xlu0 %2129
    %2131 = vrot.lane.b32.xlu0 %v1412, 32
    %v2132 = vpop.permute.xlu0 %2131
    %2133 = vrot.lane.b32.xlu0 %v1414, 32
    %v2134 = vpop.permute.xlu0 %2133
    %2135 = vrot.lane.b32.xlu0 %v1416, 32
    %v2136 = vpop.permute.xlu0 %2135
    %2137 = vrot.lane.b32.xlu0 %v1418, 32
    %v2138 = vpop.permute.xlu0 %2137
    %2171 = vrot.lane.b32.xlu0 %v1420, 48
    %v2172 = vpop.permute.xlu0 %2171
    %2173 = vrot.lane.b32.xlu0 %v1422, 48
    %v2174 = vpop.permute.xlu0 %2173
    %2175 = vrot.lane.b32.xlu0 %v1424, 48
    %v2176 = vpop.permute.xlu0 %2175
    %2177 = vrot.lane.b32.xlu0 %v1426, 48
    %v2178 = vpop.permute.xlu0 %2177
    %2179 = vrot.lane.b32.xlu0 %v1428, 48
    %v2180 = vpop.permute.xlu0 %2179
    %2181 = vrot.lane.b32.xlu0 %v1430, 48
    %v2182 = vpop.permute.xlu0 %2181
    %2183 = vrot.lane.b32.xlu0 %v1432, 48
    %v2184 = vpop.permute.xlu0 %2183
    %2185 = vrot.lane.b32.xlu0 %v1434, 48
    %v2186 = vpop.permute.xlu0 %2185
    %2187 = vrot.lane.b32.xlu0 %v1436, 48
    %v2188 = vpop.permute.xlu0 %2187
    %2189 = vrot.lane.b32.xlu0 %v1438, 48
    %v2190 = vpop.permute.xlu0 %2189
    %2191 = vrot.lane.b32.xlu0 %v1440, 48
    %v2192 = vpop.permute.xlu0 %2191
    %2193 = vrot.lane.b32.xlu0 %v1442, 48
    %v2194 = vpop.permute.xlu0 %2193
    %2195 = vrot.lane.b32.xlu0 %v1444, 48
    %v2196 = vpop.permute.xlu0 %2195
    %2197 = vrot.lane.b32.xlu0 %v1446, 48
    %v2198 = vpop.permute.xlu0 %2197
    %2199 = vrot.lane.b32.xlu0 %v1448, 48
    %v2200 = vpop.permute.xlu0 %2199
    %2201 = vrot.lane.b32.xlu0 %v1450, 48
    %v2202 = vpop.permute.xlu0 %2201
    %2235 = vrot.lane.b32.xlu0 %v1452, 64
    %v2236 = vpop.permute.xlu0 %2235
    %2237 = vrot.lane.b32.xlu0 %v1454, 64
    %v2238 = vpop.permute.xlu0 %2237
    %2239 = vrot.lane.b32.xlu0 %v1456, 64
    %v2240 = vpop.permute.xlu0 %2239
    %2241 = vrot.lane.b32.xlu0 %v1458, 64
    %v2242 = vpop.permute.xlu0 %2241
    %2243 = vrot.lane.b32.xlu0 %v1460, 64
    %v2244 = vpop.permute.xlu0 %2243
    %2245 = vrot.lane.b32.xlu0 %v1462, 64
    %v2246 = vpop.permute.xlu0 %2245
    %2247 = vrot.lane.b32.xlu0 %v1464, 64
    %v2248 = vpop.permute.xlu0 %2247
    %2249 = vrot.lane.b32.xlu0 %v1466, 64
    %v2250 = vpop.permute.xlu0 %2249
    %2251 = vrot.lane.b32.xlu0 %v1468, 64
    %v2252 = vpop.permute.xlu0 %2251
    %2253 = vrot.lane.b32.xlu0 %v1470, 64
    %v2254 = vpop.permute.xlu0 %2253
    %2255 = vrot.lane.b32.xlu0 %v1472, 64
    %v2256 = vpop.permute.xlu0 %2255
    %2257 = vrot.lane.b32.xlu0 %v1474, 64
    %v2258 = vpop.permute.xlu0 %2257
    %2259 = vrot.lane.b32.xlu0 %v1476, 64
    %v2260 = vpop.permute.xlu0 %2259
    %2261 = vrot.lane.b32.xlu0 %v1478, 64
    %v2262 = vpop.permute.xlu0 %2261
    %2263 = vrot.lane.b32.xlu0 %v1480, 64
    %v2264 = vpop.permute.xlu0 %2263
    %2265 = vrot.lane.b32.xlu0 %v1482, 64
    %v2266 = vpop.permute.xlu0 %2265
    %2299 = vrot.lane.b32.xlu0 %v1484, 80
    %v2300 = vpop.permute.xlu0 %2299
    %2301 = vrot.lane.b32.xlu0 %v1486, 80
    %v2302 = vpop.permute.xlu0 %2301
    %2303 = vrot.lane.b32.xlu0 %v1488, 80
    %v2304 = vpop.permute.xlu0 %2303
    %2305 = vrot.lane.b32.xlu0 %v1490, 80
    %v2306 = vpop.permute.xlu0 %2305
    %2307 = vrot.lane.b32.xlu0 %v1492, 80
    %v2308 = vpop.permute.xlu0 %2307
    %2309 = vrot.lane.b32.xlu0 %v1494, 80
    %v2310 = vpop.permute.xlu0 %2309
    %2311 = vrot.lane.b32.xlu0 %v1496, 80
    %v2312 = vpop.permute.xlu0 %2311
    %2313 = vrot.lane.b32.xlu0 %v1498, 80
    %v2314 = vpop.permute.xlu0 %2313
    %2315 = vrot.lane.b32.xlu0 %v1500, 80
    %v2316 = vpop.permute.xlu0 %2315
    %2317 = vrot.lane.b32.xlu0 %v1502, 80
    %v2318 = vpop.permute.xlu0 %2317
    %2319 = vrot.lane.b32.xlu0 %v1504, 80
    %v2320 = vpop.permute.xlu0 %2319
    %2321 = vrot.lane.b32.xlu0 %v1506, 80
    %v2322 = vpop.permute.xlu0 %2321
    %2323 = vrot.lane.b32.xlu0 %v1508, 80
    %v2324 = vpop.permute.xlu0 %2323
    %2325 = vrot.lane.b32.xlu0 %v1510, 80
    %v2326 = vpop.permute.xlu0 %2325
    %2327 = vrot.lane.b32.xlu0 %v1512, 80
    %v2328 = vpop.permute.xlu0 %2327
    %2329 = vrot.lane.b32.xlu0 %v1514, 80
    %v2330 = vpop.permute.xlu0 %2329
    %2363 = vrot.lane.b32.xlu0 %v1516, 96
    %v2364 = vpop.permute.xlu0 %2363
    %2365 = vrot.lane.b32.xlu0 %v1518, 96
    %v2366 = vpop.permute.xlu0 %2365
    %2367 = vrot.lane.b32.xlu0 %v1520, 96
    %v2368 = vpop.permute.xlu0 %2367
    %2369 = vrot.lane.b32.xlu0 %v1522, 96
    %v2370 = vpop.permute.xlu0 %2369
    %2371 = vrot.lane.b32.xlu0 %v1524, 96
    %v2372 = vpop.permute.xlu0 %2371
    %2373 = vrot.lane.b32.xlu0 %v1526, 96
    %v2374 = vpop.permute.xlu0 %2373
    %2375 = vrot.lane.b32.xlu0 %v1528, 96
    %v2376 = vpop.permute.xlu0 %2375
    %2377 = vrot.lane.b32.xlu0 %v1530, 96
    %v2378 = vpop.permute.xlu0 %2377
    %2379 = vrot.lane.b32.xlu0 %v1532, 96
    %v2380 = vpop.permute.xlu0 %2379
    %2381 = vrot.lane.b32.xlu0 %v1534, 96
    %v2382 = vpop.permute.xlu0 %2381
    %2383 = vrot.lane.b32.xlu0 %v1536, 96
    %v2384 = vpop.permute.xlu0 %2383
    %2385 = vrot.lane.b32.xlu0 %v1538, 96
    %v2386 = vpop.permute.xlu0 %2385
    %2387 = vrot.lane.b32.xlu0 %v1540, 96
    %v2388 = vpop.permute.xlu0 %2387
    %2389 = vrot.lane.b32.xlu0 %v1542, 96
    %v2390 = vpop.permute.xlu0 %2389
    %2391 = vrot.lane.b32.xlu0 %v1544, 96
    %v2392 = vpop.permute.xlu0 %2391
    %2393 = vrot.lane.b32.xlu0 %v1546, 96
    %v2394 = vpop.permute.xlu0 %2393
    %2427 = vrot.lane.b32.xlu0 %v1548, 112
    %v2428 = vpop.permute.xlu0 %2427
    %2429 = vrot.lane.b32.xlu0 %v1550, 112
    %v2430 = vpop.permute.xlu0 %2429
    %2431 = vrot.lane.b32.xlu0 %v1552, 112
    %v2432 = vpop.permute.xlu0 %2431
    %2433 = vrot.lane.b32.xlu0 %v1554, 112
    %v2434 = vpop.permute.xlu0 %2433
    %2435 = vrot.lane.b32.xlu0 %v1556, 112
    %v2436 = vpop.permute.xlu0 %2435
    %2437 = vrot.lane.b32.xlu0 %v1558, 112
    %v2438 = vpop.permute.xlu0 %2437
    %2439 = vrot.lane.b32.xlu0 %v1560, 112
    %v2440 = vpop.permute.xlu0 %2439
    %2441 = vrot.lane.b32.xlu0 %v1562, 112
    %v2442 = vpop.permute.xlu0 %2441
    %2443 = vrot.lane.b32.xlu0 %v1564, 112
    %v2444 = vpop.permute.xlu0 %2443
    %2445 = vrot.lane.b32.xlu0 %v1566, 112
    %v2446 = vpop.permute.xlu0 %2445
    %2447 = vrot.lane.b32.xlu0 %v1568, 112
    %v2448 = vpop.permute.xlu0 %2447
    %2449 = vrot.lane.b32.xlu0 %v1570, 112
    %v2450 = vpop.permute.xlu0 %2449
    %2451 = vrot.lane.b32.xlu0 %v1572, 112
    %v2452 = vpop.permute.xlu0 %2451
    %2453 = vrot.lane.b32.xlu0 %v1574, 112
    %v2454 = vpop.permute.xlu0 %2453
    %2455 = vrot.lane.b32.xlu0 %v1576, 112
    %v2456 = vpop.permute.xlu0 %2455
    %2457 = vrot.lane.b32.xlu0 %v1578, 112
    %v2458 = vpop.permute.xlu0 %2457
    %v2475 = vsel %vm125, %v1069, %v1596
    %v2476 = vsel %vm125, %v1071, %v1598
    %v2477 = vsel %vm125, %v1073, %v1600
    %v2478 = vsel %vm125, %v1075, %v1602
    %v2479 = vsel %vm125, %v1077, %v1604
    %v2480 = vsel %vm125, %v1079, %v1606
    %v2481 = vsel %vm125, %v1081, %v1608
    %v2482 = vsel %vm125, %v1083, %v1610
    %v2483 = vsel %vm125, %v1085, %v1612
    %v2484 = vsel %vm125, %v1087, %v1614
    %v2485 = vsel %vm125, %v1089, %v1616
    %v2486 = vsel %vm125, %v1091, %v1618
    %v2487 = vsel %vm125, %v1093, %v1620
    %v2488 = vsel %vm125, %v1095, %v1622
    %v2489 = vsel %vm125, %v1097, %v1624
    %v2490 = vsel %vm125, %v1099, %v1626
    %vm2491 = vcmask 261120
    %v2492 = vsel %vm2491, %v2475, %v1660
    %v2493 = vsel %vm2491, %v2476, %v1662
    %v2494 = vsel %vm2491, %v2477, %v1664
    %v2495 = vsel %vm2491, %v2478, %v1666
    %v2496 = vsel %vm2491, %v2479, %v1668
    %v2497 = vsel %vm2491, %v2480, %v1670
    %v2498 = vsel %vm2491, %v2481, %v1672
    %v2499 = vsel %vm2491, %v2482, %v1674
    %v2500 = vsel %vm2491, %v2483, %v1676
    %v2501 = vsel %vm2491, %v2484, %v1678
    %v2502 = vsel %vm2491, %v2485, %v1680
    %v2503 = vsel %vm2491, %v2486, %v1682
    %v2504 = vsel %vm2491, %v2487, %v1684
    %v2505 = vsel %vm2491, %v2488, %v1686
    %v2506 = vsel %vm2491, %v2489, %v1688
    %v2507 = vsel %vm2491, %v2490, %v1690
    %vm2508 = vcmask 392192
    %v2509 = vsel %vm2508, %v2492, %v1724
    %v2510 = vsel %vm2508, %v2493, %v1726
    %v2511 = vsel %vm2508, %v2494, %v1728
    %v2512 = vsel %vm2508, %v2495, %v1730
    %v2513 = vsel %vm2508, %v2496, %v1732
    %v2514 = vsel %vm2508, %v2497, %v1734
    %v2515 = vsel %vm2508, %v2498, %v1736
    %v2516 = vsel %vm2508, %v2499, %v1738
    %v2517 = vsel %vm2508, %v2500, %v1740
    %v2518 = vsel %vm2508, %v2501, %v1742
    %v2519 = vsel %vm2508, %v2502, %v1744
    %v2520 = vsel %vm2508, %v2503, %v1746
    %v2521 = vsel %vm2508, %v2504, %v1748
    %v2522 = vsel %vm2508, %v2505, %v1750
    %v2523 = vsel %vm2508, %v2506, %v1752
    %v2524 = vsel %vm2508, %v2507, %v1754
    %vm2525 = vcmask 523264
    %v2526 = vsel %vm2525, %v2509, %v1788
    %v2527 = vsel %vm2525, %v2510, %v1790
    %v2528 = vsel %vm2525, %v2511, %v1792
    %v2529 = vsel %vm2525, %v2512, %v1794
    %v2530 = vsel %vm2525, %v2513, %v1796
    %v2531 = vsel %vm2525, %v2514, %v1798
    %v2532 = vsel %vm2525, %v2515, %v1800
    %v2533 = vsel %vm2525, %v2516, %v1802
    %v2534 = vsel %vm2525, %v2517, %v1804
    %v2535 = vsel %vm2525, %v2518, %v1806
    %v2536 = vsel %vm2525, %v2519, %v1808
    %v2537 = vsel %vm2525, %v2520, %v1810
    %v2538 = vsel %vm2525, %v2521, %v1812
    %v2539 = vsel %vm2525, %v2522, %v1814
    %v2540 = vsel %vm2525, %v2523, %v1816
    %v2541 = vsel %vm2525, %v2524, %v1818
    %vm2542 = vcmask 654336
    %v2543 = vsel %vm2542, %v2526, %v1852
    %v2544 = vsel %vm2542, %v2527, %v1854
    %v2545 = vsel %vm2542, %v2528, %v1856
    %v2546 = vsel %vm2542, %v2529, %v1858
    %v2547 = vsel %vm2542, %v2530, %v1860
    %v2548 = vsel %vm2542, %v2531, %v1862
    %v2549 = vsel %vm2542, %v2532, %v1864
    %v2550 = vsel %vm2542, %v2533, %v1866
    %v2551 = vsel %vm2542, %v2534, %v1868
    %v2552 = vsel %vm2542, %v2535, %v1870
    %v2553 = vsel %vm2542, %v2536, %v1872
    %v2554 = vsel %vm2542, %v2537, %v1874
    %v2555 = vsel %vm2542, %v2538, %v1876
    %v2556 = vsel %vm2542, %v2539, %v1878
    %v2557 = vsel %vm2542, %v2540, %v1880
    %v2558 = vsel %vm2542, %v2541, %v1882
    %vm2559 = vcmask 785408
    %v2560 = vsel %vm2559, %v2543, %v1916
    %v2561 = vsel %vm2559, %v2544, %v1918
    %v2562 = vsel %vm2559, %v2545, %v1920
    %v2563 = vsel %vm2559, %v2546, %v1922
    %v2564 = vsel %vm2559, %v2547, %v1924
    %v2565 = vsel %vm2559, %v2548, %v1926
    %v2566 = vsel %vm2559, %v2549, %v1928
    %v2567 = vsel %vm2559, %v2550, %v1930
    %v2568 = vsel %vm2559, %v2551, %v1932
    %v2569 = vsel %vm2559, %v2552, %v1934
    %v2570 = vsel %vm2559, %v2553, %v1936
    %v2571 = vsel %vm2559, %v2554, %v1938
    %v2572 = vsel %vm2559, %v2555, %v1940
    %v2573 = vsel %vm2559, %v2556, %v1942
    %v2574 = vsel %vm2559, %v2557, %v1944
    %v2575 = vsel %vm2559, %v2558, %v1946
    %vm2576 = vcmask 916480
    %v2577 = vsel %vm2576, %v2560, %v1980
    %v2578 = vsel %vm2576, %v2561, %v1982
    %v2579 = vsel %vm2576, %v2562, %v1984
    %v2580 = vsel %vm2576, %v2563, %v1986
    %v2581 = vsel %vm2576, %v2564, %v1988
    %v2582 = vsel %vm2576, %v2565, %v1990
    %v2583 = vsel %vm2576, %v2566, %v1992
    %v2584 = vsel %vm2576, %v2567, %v1994
    %v2585 = vsel %vm2576, %v2568, %v1996
    %v2586 = vsel %vm2576, %v2569, %v1998
    %v2587 = vsel %vm2576, %v2570, %v2000
    %v2588 = vsel %vm2576, %v2571, %v2002
    %v2589 = vsel %vm2576, %v2572, %v2004
    %v2590 = vsel %vm2576, %v2573, %v2006
    %v2591 = vsel %vm2576, %v2574, %v2008
    %v2592 = vsel %vm2576, %v2575, %v2010
    %v2593 = vsel %vm125, %v1324, %v2044
    %v2594 = vsel %vm125, %v1326, %v2046
    %v2595 = vsel %vm125, %v1328, %v2048
    %v2596 = vsel %vm125, %v1330, %v2050
    %v2597 = vsel %vm125, %v1332, %v2052
    %v2598 = vsel %vm125, %v1334, %v2054
    %v2599 = vsel %vm125, %v1336, %v2056
    %v2600 = vsel %vm125, %v1338, %v2058
    %v2601 = vsel %vm125, %v1340, %v2060
    %v2602 = vsel %vm125, %v1342, %v2062
    %v2603 = vsel %vm125, %v1344, %v2064
    %v2604 = vsel %vm125, %v1346, %v2066
    %v2605 = vsel %vm125, %v1348, %v2068
    %v2606 = vsel %vm125, %v1350, %v2070
    %v2607 = vsel %vm125, %v1352, %v2072
    %v2608 = vsel %vm125, %v1354, %v2074
    %v2609 = vsel %vm2491, %v2593, %v2108
    %v2610 = vsel %vm2491, %v2594, %v2110
    %v2611 = vsel %vm2491, %v2595, %v2112
    %v2612 = vsel %vm2491, %v2596, %v2114
    %v2613 = vsel %vm2491, %v2597, %v2116
    %v2614 = vsel %vm2491, %v2598, %v2118
    %v2615 = vsel %vm2491, %v2599, %v2120
    %v2616 = vsel %vm2491, %v2600, %v2122
    %v2617 = vsel %vm2491, %v2601, %v2124
    %v2618 = vsel %vm2491, %v2602, %v2126
    %v2619 = vsel %vm2491, %v2603, %v2128
    %v2620 = vsel %vm2491, %v2604, %v2130
    %v2621 = vsel %vm2491, %v2605, %v2132
    %v2622 = vsel %vm2491, %v2606, %v2134
    %v2623 = vsel %vm2491, %v2607, %v2136
    %v2624 = vsel %vm2491, %v2608, %v2138
    %v2625 = vsel %vm2508, %v2609, %v2172
    %v2626 = vsel %vm2508, %v2610, %v2174
    %v2627 = vsel %vm2508, %v2611, %v2176
    %v2628 = vsel %vm2508, %v2612, %v2178
    %v2629 = vsel %vm2508, %v2613, %v2180
    %v2630 = vsel %vm2508, %v2614, %v2182
    %v2631 = vsel %vm2508, %v2615, %v2184
    %v2632 = vsel %vm2508, %v2616, %v2186
    %v2633 = vsel %vm2508, %v2617, %v2188
    %v2634 = vsel %vm2508, %v2618, %v2190
    %v2635 = vsel %vm2508, %v2619, %v2192
    %v2636 = vsel %vm2508, %v2620, %v2194
    %v2637 = vsel %vm2508, %v2621, %v2196
    %v2638 = vsel %vm2508, %v2622, %v2198
    %v2639 = vsel %vm2508, %v2623, %v2200
    %v2640 = vsel %vm2508, %v2624, %v2202
    %v2641 = vsel %vm2525, %v2625, %v2236
    %v2642 = vsel %vm2525, %v2626, %v2238
    %v2643 = vsel %vm2525, %v2627, %v2240
    %v2644 = vsel %vm2525, %v2628, %v2242
    %v2645 = vsel %vm2525, %v2629, %v2244
    %v2646 = vsel %vm2525, %v2630, %v2246
    %v2647 = vsel %vm2525, %v2631, %v2248
    %v2648 = vsel %vm2525, %v2632, %v2250
    %v2649 = vsel %vm2525, %v2633, %v2252
    %v2650 = vsel %vm2525, %v2634, %v2254
    %v2651 = vsel %vm2525, %v2635, %v2256
    %v2652 = vsel %vm2525, %v2636, %v2258
    %v2653 = vsel %vm2525, %v2637, %v2260
    %v2654 = vsel %vm2525, %v2638, %v2262
    %v2655 = vsel %vm2525, %v2639, %v2264
    %v2656 = vsel %vm2525, %v2640, %v2266
    %v2657 = vsel %vm2542, %v2641, %v2300
    %v2658 = vsel %vm2542, %v2642, %v2302
    %v2659 = vsel %vm2542, %v2643, %v2304
    %v2660 = vsel %vm2542, %v2644, %v2306
    %v2661 = vsel %vm2542, %v2645, %v2308
    %v2662 = vsel %vm2542, %v2646, %v2310
    %v2663 = vsel %vm2542, %v2647, %v2312
    %v2664 = vsel %vm2542, %v2648, %v2314
    %v2665 = vsel %vm2542, %v2649, %v2316
    %v2666 = vsel %vm2542, %v2650, %v2318
    %v2667 = vsel %vm2542, %v2651, %v2320
    %v2668 = vsel %vm2542, %v2652, %v2322
    %v2669 = vsel %vm2542, %v2653, %v2324
    %v2670 = vsel %vm2542, %v2654, %v2326
    %v2671 = vsel %vm2542, %v2655, %v2328
    %v2672 = vsel %vm2542, %v2656, %v2330
    %v2673 = vsel %vm2559, %v2657, %v2364
    %v2674 = vsel %vm2559, %v2658, %v2366
    %v2675 = vsel %vm2559, %v2659, %v2368
    %v2676 = vsel %vm2559, %v2660, %v2370
    %v2677 = vsel %vm2559, %v2661, %v2372
    %v2678 = vsel %vm2559, %v2662, %v2374
    %v2679 = vsel %vm2559, %v2663, %v2376
    %v2680 = vsel %vm2559, %v2664, %v2378
    %v2681 = vsel %vm2559, %v2665, %v2380
    %v2682 = vsel %vm2559, %v2666, %v2382
    %v2683 = vsel %vm2559, %v2667, %v2384
    %v2684 = vsel %vm2559, %v2668, %v2386
    %v2685 = vsel %vm2559, %v2669, %v2388
    %v2686 = vsel %vm2559, %v2670, %v2390
    %v2687 = vsel %vm2559, %v2671, %v2392
    %v2688 = vsel %vm2559, %v2672, %v2394
    %v2689 = vsel %vm2576, %v2673, %v2428
    %v2690 = vsel %vm2576, %v2674, %v2430
    %v2691 = vsel %vm2576, %v2675, %v2432
    %v2692 = vsel %vm2576, %v2676, %v2434
    %v2693 = vsel %vm2576, %v2677, %v2436
    %v2694 = vsel %vm2576, %v2678, %v2438
    %v2695 = vsel %vm2576, %v2679, %v2440
    %v2696 = vsel %vm2576, %v2680, %v2442
    %v2697 = vsel %vm2576, %v2681, %v2444
    %v2698 = vsel %vm2576, %v2682, %v2446
    %v2699 = vsel %vm2576, %v2683, %v2448
    %v2700 = vsel %vm2576, %v2684, %v2450
    %v2701 = vsel %vm2576, %v2685, %v2452
    %v2702 = vsel %vm2576, %v2686, %v2454
    %v2703 = vsel %vm2576, %v2687, %v2456
    %v2704 = vsel %vm2576, %v2688, %v2458
    %v2705 = vld [vmem:[%s3] sm:$0xff]
    %v2706 = vld [vmem:[%s3 + $0x8] sm:$0xff]
    %v2707 = vld [vmem:[%s3 + $0x10] sm:$0xff]
    %v2708 = vld [vmem:[%s3 + $0x18] sm:$0xff]
    %v2709 = vld [vmem:[%s3 + $0x20] sm:$0xff]
    %v2710 = vld [vmem:[%s3 + $0x28] sm:$0xff]
    %v2711 = vld [vmem:[%s3 + $0x30] sm:$0xff]
    %v2712 = vld [vmem:[%s3 + $0x38] sm:$0xff]
    %v2713 = vld [vmem:[%s3 + $0x40] sm:$0xff]
    %v2714 = vld [vmem:[%s3 + $0x48] sm:$0xff]
    %v2715 = vld [vmem:[%s3 + $0x50] sm:$0xff]
    %v2716 = vld [vmem:[%s3 + $0x58] sm:$0xff]
    %v2717 = vld [vmem:[%s3 + $0x60] sm:$0xff]
    %v2718 = vld [vmem:[%s3 + $0x68] sm:$0xff]
    %v2719 = vld [vmem:[%s3 + $0x70] sm:$0xff]
    %v2720 = vld [vmem:[%s3 + $0x78] sm:$0xff]
    %v2721 = vld [vmem:[%s3 + $0x80] sm:$0xff]
    %v2722 = vld [vmem:[%s3 + $0x88] sm:$0xff]
    %v2723 = vld [vmem:[%s3 + $0x90] sm:$0xff]
    %v2724 = vld [vmem:[%s3 + $0x98] sm:$0xff]
    %v2725 = vld [vmem:[%s3 + $0xa0] sm:$0xff]
    %v2726 = vld [vmem:[%s3 + $0xa8] sm:$0xff]
    %v2727 = vld [vmem:[%s3 + $0xb0] sm:$0xff]
    %v2728 = vld [vmem:[%s3 + $0xb8] sm:$0xff]
    %v2729 = vld [vmem:[%s3 + $0xc0] sm:$0xff]
    %v2730 = vld [vmem:[%s3 + $0xc8] sm:$0xff]
    %v2731 = vld [vmem:[%s3 + $0xd0] sm:$0xff]
    %v2732 = vld [vmem:[%s3 + $0xd8] sm:$0xff]
    %v2733 = vld [vmem:[%s3 + $0xe0] sm:$0xff]
    %v2734 = vld [vmem:[%s3 + $0xe8] sm:$0xff]
    %v2735 = vld [vmem:[%s3 + $0xf0] sm:$0xff]
    %v2736 = vld [vmem:[%s3 + $0xf8] sm:$0xff]
    %v2737 = vld [vmem:[%s4] sm:$0x1]
    %v2739 = vlaneseq
    %v2740 = vshrl.u32 %v2739, 7
    %v2741 = vsub.s32 0, %v2740
    %v2742 = vrot.slane %v2737, %v2741
    %2744 = vmatprep.subr.mxu0 0.0
    %2745 = vmatpush1.msra.mxu0 %v2705
    %2746 = vmatprep.subr.mxu0 0.0
    %2747 = vmatpush1.msra.mxu0 %v2706
    %2748 = vmatprep.subr.mxu0 0.0
    %2749 = vmatpush1.msra.mxu0 %v2707
    %2750 = vmatprep.subr.mxu0 0.0
    %2751 = vmatpush1.msra.mxu0 %v2708
    %2752 = vmatprep.subr.mxu0 0.0
    %2753 = vmatpush1.msra.mxu0 %v2709
    %2754 = vmatprep.subr.mxu0 0.0
    %2755 = vmatpush1.msra.mxu0 %v2710
    %2756 = vmatprep.subr.mxu0 0.0
    %2757 = vmatpush1.msra.mxu0 %v2711
    %2758 = vmatprep.subr.mxu0 0.0
    %2759 = vmatpush1.msra.mxu0 %v2712
    %2760 = vmatprep.subr.mxu0 0.0
    %2761 = vmatpush1.msra.mxu0 %v2713
    %2762 = vmatprep.subr.mxu0 0.0
    %2763 = vmatpush1.msra.mxu0 %v2714
    %2764 = vmatprep.subr.mxu0 0.0
    %2765 = vmatpush1.msra.mxu0 %v2715
    %2766 = vmatprep.subr.mxu0 0.0
    %2767 = vmatpush1.msra.mxu0 %v2716
    %2768 = vmatprep.subr.mxu0 0.0
    %2769 = vmatpush1.msra.mxu0 %v2717
    %2770 = vmatprep.subr.mxu0 0.0
    %2771 = vmatpush1.msra.mxu0 %v2718
    %2772 = vmatprep.subr.mxu0 0.0
    %2773 = vmatpush1.msra.mxu0 %v2719
    %2774 = vmatprep.subr.mxu0 0.0
    %2775 = vmatpush1.msra.mxu0 %v2720
    %2776 = vmatprep.subr.mxu0 0.0
    %2777 = vmatpush1.msra.mxu0 %v2721
    %2778 = vmatprep.subr.mxu0 0.0
    %2779 = vmatpush1.msra.mxu0 %v2722
    %2780 = vmatprep.subr.mxu0 0.0
    %2781 = vmatpush1.msra.mxu0 %v2723
    %2782 = vmatprep.subr.mxu0 0.0
    %2783 = vmatpush1.msra.mxu0 %v2724
    %2784 = vmatprep.subr.mxu0 0.0
    %2785 = vmatpush1.msra.mxu0 %v2725
    %2786 = vmatprep.subr.mxu0 0.0
    %2787 = vmatpush1.msra.mxu0 %v2726
    %2788 = vmatprep.subr.mxu0 0.0
    %2789 = vmatpush1.msra.mxu0 %v2727
    %2790 = vmatprep.subr.mxu0 0.0
    %2791 = vmatpush1.msra.mxu0 %v2728
    %2792 = vmatprep.subr.mxu0 0.0
    %2793 = vmatpush1.msra.mxu0 %v2729
    %2794 = vmatprep.subr.mxu0 0.0
    %2795 = vmatpush1.msra.mxu0 %v2730
    %2796 = vmatprep.subr.mxu0 0.0
    %2797 = vmatpush1.msra.mxu0 %v2731
    %2798 = vmatprep.subr.mxu0 0.0
    %2799 = vmatpush1.msra.mxu0 %v2732
    %2800 = vmatprep.subr.mxu0 0.0
    %2801 = vmatpush1.msra.mxu0 %v2733
    %2802 = vmatprep.subr.mxu0 0.0
    %2803 = vmatpush1.msra.mxu0 %v2734
    %2804 = vmatprep.subr.mxu0 0.0
    %2805 = vmatpush1.msra.mxu0 %v2735
    %2806 = vmatprep.subr.mxu0 0.0
    %2807 = vmatpush1.msra.mxu0 %v2736
    %2808 = vmatprep.mubr.f32.mxu0 %v2689
    %2809 = vmatmul.mubr.f32.gmra.mrb[0].mxu0 %v2577
    %v2810 = vpop.f32.mrb[0].mxu0
    %v2811 = vadd.f32 %v2742, %v2810
    %v2812 = vpop.f32.mrb[0].mxu0
    %2813 = vmatprep.mubr.f32.mxu0 %v2690
    %2814 = vmatmul.mubr.f32.gmra.mrb[0].mxu0 %v2578
    %v2815 = vpop.f32.mrb[0].mxu0
    %v2816 = vadd.f32 %v2742, %v2815
    %v2817 = vpop.f32.mrb[0].mxu0
    %2818 = vmatprep.mubr.f32.mxu0 %v2691
    %2819 = vmatmul.mubr.f32.gmra.mrb[0].mxu0 %v2579
    %v2820 = vpop.f32.mrb[0].mxu0
    %v2821 = vadd.f32 %v2742, %v2820
    %v2822 = vpop.f32.mrb[0].mxu0
    %2823 = vmatprep.mubr.f32.mxu0 %v2692
    %2824 = vmatmul.mubr.f32.gmra.mrb[0].mxu0 %v2580
    %v2825 = vpop.f32.mrb[0].mxu0
    %v2826 = vadd.f32 %v2742, %v2825
    %v2827 = vpop.f32.mrb[0].mxu0
    %2828 = vmatprep.mubr.f32.mxu0 %v2693
    %2829 = vmatmul.mubr.f32.gmra.mrb[0].mxu0 %v2581
    %v2830 = vpop.f32.mrb[0].mxu0
    %v2831 = vadd.f32 %v2742, %v2830
    %v2832 = vpop.f32.mrb[0].mxu0
    %2833 = vmatprep.mubr.f32.mxu0 %v2694
    %2834 = vmatmul.mubr.f32.gmra.mrb[0].mxu0 %v2582
    %v2835 = vpop.f32.mrb[0].mxu0
    %v2836 = vadd.f32 %v2742, %v2835
    %v2837 = vpop.f32.mrb[0].mxu0
    %2838 = vmatprep.mubr.f32.mxu0 %v2695
    %2839 = vmatmul.mubr.f32.gmra.mrb[0].mxu0 %v2583
    %v2840 = vpop.f32.mrb[0].mxu0
    %v2841 = vadd.f32 %v2742, %v2840
    %v2842 = vpop.f32.mrb[0].mxu0
    %2843 = vmatprep.mubr.f32.mxu0 %v2696
    %2844 = vmatmul.mubr.f32.gmra.mrb[0].mxu0 %v2584
    %v2845 = vpop.f32.mrb[0].mxu0
    %v2846 = vadd.f32 %v2742, %v2845
    %v2847 = vpop.f32.mrb[0].mxu0
    %2848 = vmatprep.mubr.f32.mxu0 %v2697
    %2849 = vmatmul.mubr.f32.gmra.mrb[0].mxu0 %v2585
    %v2850 = vpop.f32.mrb[0].mxu0
    %v2851 = vadd.f32 %v2742, %v2850
    %v2852 = vpop.f32.mrb[0].mxu0
    %2853 = vmatprep.mubr.f32.mxu0 %v2698
    %2854 = vmatmul.mubr.f32.gmra.mrb[0].mxu0 %v2586
    %v2855 = vpop.f32.mrb[0].mxu0
    %v2856 = vadd.f32 %v2742, %v2855
    %v2857 = vpop.f32.mrb[0].mxu0
    %2858 = vmatprep.mubr.f32.mxu0 %v2699
    %2859 = vmatmul.mubr.f32.gmra.mrb[0].mxu0 %v2587
    %v2860 = vpop.f32.mrb[0].mxu0
    %v2861 = vadd.f32 %v2742, %v2860
    %v2862 = vpop.f32.mrb[0].mxu0
    %2863 = vmatprep.mubr.f32.mxu0 %v2700
    %2864 = vmatmul.mubr.f32.gmra.mrb[0].mxu0 %v2588
    %v2865 = vpop.f32.mrb[0].mxu0
    %v2866 = vadd.f32 %v2742, %v2865
    %v2867 = vpop.f32.mrb[0].mxu0
    %2868 = vmatprep.mubr.f32.mxu0 %v2701
    %2869 = vmatmul.mubr.f32.gmra.mrb[0].mxu0 %v2589
    %v2870 = vpop.f32.mrb[0].mxu0
    %v2871 = vadd.f32 %v2742, %v2870
    %v2872 = vpop.f32.mrb[0].mxu0
    %2873 = vmatprep.mubr.f32.mxu0 %v2702
    %2874 = vmatmul.mubr.f32.gmra.mrb[0].mxu0 %v2590
    %v2875 = vpop.f32.mrb[0].mxu0
    %v2876 = vadd.f32 %v2742, %v2875
    %v2877 = vpop.f32.mrb[0].mxu0
    %2878 = vmatprep.mubr.f32.mxu0 %v2703
    %2879 = vmatmul.mubr.f32.gmra.mrb[0].mxu0 %v2591
    %v2880 = vpop.f32.mrb[0].mxu0
    %v2881 = vadd.f32 %v2742, %v2880
    %v2882 = vpop.f32.mrb[0].mxu0
    %2883 = vmatprep.mubr.f32.mxu0 %v2704
    %2884 = vmatmul.mubr.f32.gmra.mrb[0].mxu0 %v2592
    %v2885 = vpop.f32.mrb[0].mxu0
    %v2886 = vadd.f32 %v2742, %v2885
    %v2887 = vpop.f32.mrb[0].mxu0
    %2888 = vdwg.mxu0
    %vm2889 = vcmp.gt.f32.partialorder %v2811, 0.0
    %vm2890 = vcmp.gt.f32.partialorder %v2816, 0.0
    %vm2891 = vcmp.gt.f32.partialorder %v2821, 0.0
    %vm2892 = vcmp.gt.f32.partialorder %v2826, 0.0
    %vm2893 = vcmp.gt.f32.partialorder %v2831, 0.0
    %vm2894 = vcmp.gt.f32.partialorder %v2836, 0.0
    %vm2895 = vcmp.gt.f32.partialorder %v2841, 0.0
    %vm2896 = vcmp.gt.f32.partialorder %v2846, 0.0
    %vm2897 = vcmp.gt.f32.partialorder %v2851, 0.0
    %vm2898 = vcmp.gt.f32.partialorder %v2856, 0.0
    %vm2899 = vcmp.gt.f32.partialorder %v2861, 0.0
    %vm2900 = vcmp.gt.f32.partialorder %v2866, 0.0
    %vm2901 = vcmp.gt.f32.partialorder %v2871, 0.0
    %vm2902 = vcmp.gt.f32.partialorder %v2876, 0.0
    %vm2903 = vcmp.gt.f32.partialorder %v2881, 0.0
    %vm2904 = vcmp.gt.f32.partialorder %v2886, 0.0
    %v2905 = vmul.f32 %v2811, 0.1
    %v2906 = vmul.f32 %v2816, 0.1
    %v2907 = vmul.f32 %v2821, 0.1
    %v2908 = vmul.f32 %v2826, 0.1
    %v2909 = vmul.f32 %v2831, 0.1
    %v2910 = vmul.f32 %v2836, 0.1
    %v2911 = vmul.f32 %v2841, 0.1
    %v2912 = vmul.f32 %v2846, 0.1
    %v2913 = vmul.f32 %v2851, 0.1
    %v2914 = vmul.f32 %v2856, 0.1
    %v2915 = vmul.f32 %v2861, 0.1
    %v2916 = vmul.f32 %v2866, 0.1
    %v2917 = vmul.f32 %v2871, 0.1
    %v2918 = vmul.f32 %v2876, 0.1
    %v2919 = vmul.f32 %v2881, 0.1
    %v2920 = vmul.f32 %v2886, 0.1
    %v2921 = vsel %vm2889, %v2811, %v2905
    %v2922 = vsel %vm2890, %v2816, %v2906
    %v2923 = vsel %vm2891, %v2821, %v2907
    %v2924 = vsel %vm2892, %v2826, %v2908
    %v2925 = vsel %vm2893, %v2831, %v2909
    %v2926 = vsel %vm2894, %v2836, %v2910
    %v2927 = vsel %vm2895, %v2841, %v2911
    %v2928 = vsel %vm2896, %v2846, %v2912
    %v2929 = vsel %vm2897, %v2851, %v2913
    %v2930 = vsel %vm2898, %v2856, %v2914
    %v2931 = vsel %vm2899, %v2861, %v2915
    %v2932 = vsel %vm2900, %v2866, %v2916
    %v2933 = vsel %vm2901, %v2871, %v2917
    %v2934 = vsel %vm2902, %v2876, %v2918
    %v2935 = vsel %vm2903, %v2881, %v2919
    %v2936 = vsel %vm2904, %v2886, %v2920
    %2937 = vst.msk [vmem:[#allocation3] sm:$0xff] %vm2491, 0.0
    %vm2938 = vcmask 254976
    %2939 = vst.msk [vmem:[#allocation3 + $0x8] sm:$0x3] %vm2938, 0.0
    %2940 = vst.msk [vmem:[#allocation3 + $0x10] sm:$0xff] %vm2491, 0.0
    %2941 = vst.msk [vmem:[#allocation3 + $0x18] sm:$0x3] %vm2938, 0.0
    %2942 = vst.msk [vmem:[#allocation3 + $0x20] sm:$0xff] %vm2491, 0.0
    %2943 = vst.msk [vmem:[#allocation3 + $0x28] sm:$0x3] %vm2938, 0.0
    %2944 = vst.msk [vmem:[#allocation3 + $0x30] sm:$0xff] %vm2491, 0.0
    %2945 = vst.msk [vmem:[#allocation3 + $0x38] sm:$0x3] %vm2938, 0.0
    %2946 = vst.msk [vmem:[#allocation3 + $0x40] sm:$0xff] %vm2491, 0.0
    %2947 = vst.msk [vmem:[#allocation3 + $0x48] sm:$0x3] %vm2938, 0.0
    %2948 = vst.msk [vmem:[#allocation3 + $0x50] sm:$0xff] %vm2491, 0.0
    %2949 = vst.msk [vmem:[#allocation3 + $0x58] sm:$0x3] %vm2938, 0.0
    %2950 = vst.msk [vmem:[#allocation3 + $0x60] sm:$0xff] %vm2491, 0.0
    %2951 = vst.msk [vmem:[#allocation3 + $0x68] sm:$0x3] %vm2938, 0.0
    %2952 = vst.msk [vmem:[#allocation3 + $0x70] sm:$0xff] %vm2491, 0.0
    %2953 = vst.msk [vmem:[#allocation3 + $0x78] sm:$0x3] %vm2938, 0.0
    %2954 = vst.msk [vmem:[#allocation3 + $0x80] sm:$0xff] %vm2491, 0.0
    %2955 = vst.msk [vmem:[#allocation3 + $0x88] sm:$0x3] %vm2938, 0.0
    %2956 = vst.msk [vmem:[#allocation3 + $0x90] sm:$0xff] %vm2491, 0.0
    %2957 = vst.msk [vmem:[#allocation3 + $0x98] sm:$0x3] %vm2938, 0.0
    %2958 = vst.msk [vmem:[#allocation3 + $0xa0] sm:$0xff] %vm2491, 0.0
    %2959 = vst.msk [vmem:[#allocation3 + $0xa8] sm:$0x3] %vm2938, 0.0
    %2960 = vst.msk [vmem:[#allocation3 + $0xb0] sm:$0xff] %vm2491, 0.0
    %2961 = vst.msk [vmem:[#allocation3 + $0xb8] sm:$0x3] %vm2938, 0.0
    %2962 = vst.msk [vmem:[#allocation3 + $0xc0] sm:$0xff] %vm2491, 0.0
    %2963 = vst.msk [vmem:[#allocation3 + $0xc8] sm:$0x3] %vm2938, 0.0
    %2964 = vst.msk [vmem:[#allocation3 + $0xd0] sm:$0xff] %vm2491, 0.0
    %2965 = vst.msk [vmem:[#allocation3 + $0xd8] sm:$0x3] %vm2938, 0.0
    %2966 = vst.msk [vmem:[#allocation3 + $0xe0] sm:$0xff] %vm2491, 0.0
    %2967 = vst.msk [vmem:[#allocation3 + $0xe8] sm:$0x3] %vm2938, 0.0
    %2968 = vst.msk [vmem:[#allocation3 + $0xf0] sm:$0xff] %vm2491, 0.0
    %2969 = vst.msk [vmem:[#allocation3 + $0xf8] sm:$0x3] %vm2938, 0.0
    %2970 = vst.msk [vmem:[#allocation3 + $0x100] sm:$0xff] %vm2491, 0.0
    %2971 = vst.msk [vmem:[#allocation3 + $0x108] sm:$0x3] %vm2938, 0.0
    %2972 = vst.msk [vmem:[#allocation3 + $0x110] sm:$0xff] %vm2491, 0.0
    %2973 = vst.msk [vmem:[#allocation3 + $0x118] sm:$0x3] %vm2938, 0.0
    %2974 = vst.msk [vmem:[#allocation3 + $0x120] sm:$0xff] %vm2491, 0.0
    %2975 = vst.msk [vmem:[#allocation3 + $0x128] sm:$0x3] %vm2938, 0.0
    %2976 = vst.msk [vmem:[#allocation3 + $0x130] sm:$0xff] %vm2491, 0.0
    %2977 = vst.msk [vmem:[#allocation3 + $0x138] sm:$0x3] %vm2938, 0.0
    %s2978 = scalar_lea.vmem [#allocation3], 16
    %2979 = vst.msk [vmem:[%s2978 + $0x1] sm:$0xff] %vm2491, %v2921
    %2980 = vst.msk [vmem:[%s2978 + $0x11] sm:$0xff] %vm2491, %v2922
    %2981 = vst.msk [vmem:[%s2978 + $0x21] sm:$0xff] %vm2491, %v2923
    %2982 = vst.msk [vmem:[%s2978 + $0x31] sm:$0xff] %vm2491, %v2924
    %2983 = vst.msk [vmem:[%s2978 + $0x41] sm:$0xff] %vm2491, %v2925
    %2984 = vst.msk [vmem:[%s2978 + $0x51] sm:$0xff] %vm2491, %v2926
    %2985 = vst.msk [vmem:[%s2978 + $0x61] sm:$0xff] %vm2491, %v2927
    %2986 = vst.msk [vmem:[%s2978 + $0x71] sm:$0xff] %vm2491, %v2928
    %2987 = vst.msk [vmem:[%s2978 + $0xa1] sm:$0xff] %vm2491, %v2929
    %2988 = vst.msk [vmem:[%s2978 + $0xb1] sm:$0xff] %vm2491, %v2930
    %2989 = vst.msk [vmem:[%s2978 + $0xc1] sm:$0xff] %vm2491, %v2931
    %2990 = vst.msk [vmem:[%s2978 + $0xd1] sm:$0xff] %vm2491, %v2932
    %2991 = vst.msk [vmem:[%s2978 + $0xe1] sm:$0xff] %vm2491, %v2933
    %2992 = vst.msk [vmem:[%s2978 + $0xf1] sm:$0xff] %vm2491, %v2934
    %2993 = vst.msk [vmem:[%s2978 + $0x101] sm:$0xff] %vm2491, %v2935
    %2994 = vst.msk [vmem:[%s2978 + $0x111] sm:$0xff] %vm2491, %v2936
    %v2995 = vld [vmem:[#allocation3] ss:$2 sm:$0xf]
    %s2996 = scalar_lea.vmem [#allocation3], 32
    %v2997 = vld [vmem:[%s2996] ss:$2 sm:$0xf]
    %s2998 = scalar_lea.vmem [#allocation3], 64
    %v2999 = vld [vmem:[%s2998] ss:$2 sm:$0xf]
    %s3000 = scalar_lea.vmem [#allocation3], 96
    %v3001 = vld [vmem:[%s3000] ss:$2 sm:$0xf]
    %s3002 = scalar_lea.vmem [#allocation3], 160
    %v3003 = vld [vmem:[%s3002] ss:$2 sm:$0xf]
    %s3004 = scalar_lea.vmem [#allocation3], 192
    %v3005 = vld [vmem:[%s3004] ss:$2 sm:$0xf]
    %s3006 = scalar_lea.vmem [#allocation3], 224
    %v3007 = vld [vmem:[%s3006] ss:$2 sm:$0xf]
    %s3008 = scalar_lea.vmem [#allocation3], 256
    %v3009 = vld [vmem:[%s3008] ss:$2 sm:$0xf]
    %s3010 = scalar_lea.vmem [#allocation3], 1
    %v3011 = vld [vmem:[%s3010] ss:$2 sm:$0xf]
    %s3012 = scalar_lea.vmem [#allocation3], 33
    %v3013 = vld [vmem:[%s3012] ss:$2 sm:$0xf]
    %s3014 = scalar_lea.vmem [#allocation3], 65
    %v3015 = vld [vmem:[%s3014] ss:$2 sm:$0xf]
    %s3016 = scalar_lea.vmem [#allocation3], 97
    %v3017 = vld [vmem:[%s3016] ss:$2 sm:$0xf]
    %s3018 = scalar_lea.vmem [#allocation3], 161
    %v3019 = vld [vmem:[%s3018] ss:$2 sm:$0xf]
    %s3020 = scalar_lea.vmem [#allocation3], 193
    %v3021 = vld [vmem:[%s3020] ss:$2 sm:$0xf]
    %s3022 = scalar_lea.vmem [#allocation3], 225
    %v3023 = vld [vmem:[%s3022] ss:$2 sm:$0xf]
    %s3024 = scalar_lea.vmem [#allocation3], 257
    %v3025 = vld [vmem:[%s3024] ss:$2 sm:$0xf]
    %s3026 = scalar_lea.vmem [#allocation3], 2
    %v3027 = vld [vmem:[%s3026] ss:$2 sm:$0xf]
    %s3028 = scalar_lea.vmem [#allocation3], 34
    %v3029 = vld [vmem:[%s3028] ss:$2 sm:$0xf]
    %s3030 = scalar_lea.vmem [#allocation3], 66
    %v3031 = vld [vmem:[%s3030] ss:$2 sm:$0xf]
    %s3032 = scalar_lea.vmem [#allocation3], 98
    %v3033 = vld [vmem:[%s3032] ss:$2 sm:$0xf]
    %s3034 = scalar_lea.vmem [#allocation3], 162
    %v3035 = vld [vmem:[%s3034] ss:$2 sm:$0xf]
    %s3036 = scalar_lea.vmem [#allocation3], 194
    %v3037 = vld [vmem:[%s3036] ss:$2 sm:$0xf]
    %s3038 = scalar_lea.vmem [#allocation3], 226
    %v3039 = vld [vmem:[%s3038] ss:$2 sm:$0xf]
    %s3040 = scalar_lea.vmem [#allocation3], 258
    %v3041 = vld [vmem:[%s3040] ss:$2 sm:$0xf]
    %s3042 = scalar_lea.vmem [#allocation3], 3
    %v3043 = vld [vmem:[%s3042] ss:$2 sm:$0xf]
    %s3044 = scalar_lea.vmem [#allocation3], 35
    %v3045 = vld [vmem:[%s3044] ss:$2 sm:$0xf]
    %s3046 = scalar_lea.vmem [#allocation3], 67
    %v3047 = vld [vmem:[%s3046] ss:$2 sm:$0xf]
    %s3048 = scalar_lea.vmem [#allocation3], 99
    %v3049 = vld [vmem:[%s3048] ss:$2 sm:$0xf]
    %s3050 = scalar_lea.vmem [#allocation3], 163
    %v3051 = vld [vmem:[%s3050] ss:$2 sm:$0xf]
    %s3052 = scalar_lea.vmem [#allocation3], 195
    %v3053 = vld [vmem:[%s3052] ss:$2 sm:$0xf]
    %s3054 = scalar_lea.vmem [#allocation3], 227
    %v3055 = vld [vmem:[%s3054] ss:$2 sm:$0xf]
    %s3056 = scalar_lea.vmem [#allocation3], 259
    %v3057 = vld [vmem:[%s3056] ss:$2 sm:$0xf]
    %v3058 = vld [vmem:[%s2978] ss:$2 sm:$0xf]
    %s3059 = scalar_lea.vmem %s2978, 32 [#allocation3]
    %v3060 = vld [vmem:[%s3059] ss:$2 sm:$0xf]
    %s3061 = scalar_lea.vmem %s2978, 64 [#allocation3]
    %v3062 = vld [vmem:[%s3061] ss:$2 sm:$0xf]
    %s3063 = scalar_lea.vmem %s2978, 96 [#allocation3]
    %v3064 = vld [vmem:[%s3063] ss:$2 sm:$0xf]
    %s3065 = scalar_lea.vmem %s2978, 160 [#allocation3]
    %v3066 = vld [vmem:[%s3065] ss:$2 sm:$0xf]
    %s3067 = scalar_lea.vmem %s2978, 192 [#allocation3]
    %v3068 = vld [vmem:[%s3067] ss:$2 sm:$0xf]
    %s3069 = scalar_lea.vmem %s2978, 224 [#allocation3]
    %v3070 = vld [vmem:[%s3069] ss:$2 sm:$0xf]
    %s3071 = scalar_lea.vmem %s2978, 256 [#allocation3]
    %v3072 = vld [vmem:[%s3071] ss:$2 sm:$0xf]
    %s3073 = scalar_lea.vmem %s2978, 1 [#allocation3]
    %v3074 = vld [vmem:[%s3073] ss:$2 sm:$0xf]
    %s3075 = scalar_lea.vmem %s2978, 33 [#allocation3]
    %v3076 = vld [vmem:[%s3075] ss:$2 sm:$0xf]
    %s3077 = scalar_lea.vmem %s2978, 65 [#allocation3]
    %v3078 = vld [vmem:[%s3077] ss:$2 sm:$0xf]
    %s3079 = scalar_lea.vmem %s2978, 97 [#allocation3]
    %v3080 = vld [vmem:[%s3079] ss:$2 sm:$0xf]
    %s3081 = scalar_lea.vmem %s2978, 161 [#allocation3]
    %v3082 = vld [vmem:[%s3081] ss:$2 sm:$0xf]
    %s3083 = scalar_lea.vmem %s2978, 193 [#allocation3]
    %v3084 = vld [vmem:[%s3083] ss:$2 sm:$0xf]
    %s3085 = scalar_lea.vmem %s2978, 225 [#allocation3]
    %v3086 = vld [vmem:[%s3085] ss:$2 sm:$0xf]
    %s3087 = scalar_lea.vmem %s2978, 257 [#allocation3]
    %v3088 = vld [vmem:[%s3087] ss:$2 sm:$0xf]
    %s3089 = scalar_lea.vmem %s2978, 2 [#allocation3]
    %v3090 = vld [vmem:[%s3089] ss:$2 sm:$0xf]
    %s3091 = scalar_lea.vmem %s2978, 34 [#allocation3]
    %v3092 = vld [vmem:[%s3091] ss:$2 sm:$0xf]
    %s3093 = scalar_lea.vmem %s2978, 66 [#allocation3]
    %v3094 = vld [vmem:[%s3093] ss:$2 sm:$0xf]
    %s3095 = scalar_lea.vmem %s2978, 98 [#allocation3]
    %v3096 = vld [vmem:[%s3095] ss:$2 sm:$0xf]
    %s3097 = scalar_lea.vmem %s2978, 162 [#allocation3]
    %v3098 = vld [vmem:[%s3097] ss:$2 sm:$0xf]
    %s3099 = scalar_lea.vmem %s2978, 194 [#allocation3]
    %v3100 = vld [vmem:[%s3099] ss:$2 sm:$0xf]
    %s3101 = scalar_lea.vmem %s2978, 226 [#allocation3]
    %v3102 = vld [vmem:[%s3101] ss:$2 sm:$0xf]
    %s3103 = scalar_lea.vmem %s2978, 258 [#allocation3]
    %v3104 = vld [vmem:[%s3103] ss:$2 sm:$0xf]
    %s3105 = scalar_lea.vmem %s2978, 3 [#allocation3]
    %v3106 = vld [vmem:[%s3105] ss:$2 sm:$0xf]
    %s3107 = scalar_lea.vmem %s2978, 35 [#allocation3]
    %v3108 = vld [vmem:[%s3107] ss:$2 sm:$0xf]
    %s3109 = scalar_lea.vmem %s2978, 67 [#allocation3]
    %v3110 = vld [vmem:[%s3109] ss:$2 sm:$0xf]
    %s3111 = scalar_lea.vmem %s2978, 99 [#allocation3]
    %v3112 = vld [vmem:[%s3111] ss:$2 sm:$0xf]
    %s3113 = scalar_lea.vmem %s2978, 163 [#allocation3]
    %v3114 = vld [vmem:[%s3113] ss:$2 sm:$0xf]
    %s3115 = scalar_lea.vmem %s2978, 195 [#allocation3]
    %v3116 = vld [vmem:[%s3115] ss:$2 sm:$0xf]
    %s3117 = scalar_lea.vmem %s2978, 227 [#allocation3]
    %v3118 = vld [vmem:[%s3117] ss:$2 sm:$0xf]
    %s3119 = scalar_lea.vmem %s2978, 259 [#allocation3]
    %v3120 = vld [vmem:[%s3119] ss:$2 sm:$0xf]
    %s3121 = scalar_lea.vmem [#allocation3], 32
    %v3122 = vld [vmem:[%s3121] ss:$2 sm:$0xf]
    %s3123 = scalar_lea.vmem %s3121, 32 [#allocation3]
    %v3124 = vld [vmem:[%s3123] ss:$2 sm:$0xf]
    %s3125 = scalar_lea.vmem %s3121, 64 [#allocation3]
    %v3126 = vld [vmem:[%s3125] ss:$2 sm:$0xf]
    %s3127 = scalar_lea.vmem %s3121, 96 [#allocation3]
    %v3128 = vld [vmem:[%s3127] ss:$2 sm:$0xf]
    %s3129 = scalar_lea.vmem %s3121, 160 [#allocation3]
    %v3130 = vld [vmem:[%s3129] ss:$2 sm:$0xf]
    %s3131 = scalar_lea.vmem %s3121, 192 [#allocation3]
    %v3132 = vld [vmem:[%s3131] ss:$2 sm:$0xf]
    %s3133 = scalar_lea.vmem %s3121, 224 [#allocation3]
    %v3134 = vld [vmem:[%s3133] ss:$2 sm:$0xf]
    %s3135 = scalar_lea.vmem %s3121, 256 [#allocation3]
    %v3136 = vld [vmem:[%s3135] ss:$2 sm:$0xf]
    %s3137 = scalar_lea.vmem %s3121, 1 [#allocation3]
    %v3138 = vld [vmem:[%s3137] ss:$2 sm:$0xf]
    %s3139 = scalar_lea.vmem %s3121, 33 [#allocation3]
    %v3140 = vld [vmem:[%s3139] ss:$2 sm:$0xf]
    %s3141 = scalar_lea.vmem %s3121, 65 [#allocation3]
    %v3142 = vld [vmem:[%s3141] ss:$2 sm:$0xf]
    %s3143 = scalar_lea.vmem %s3121, 97 [#allocation3]
    %v3144 = vld [vmem:[%s3143] ss:$2 sm:$0xf]
    %s3145 = scalar_lea.vmem %s3121, 161 [#allocation3]
    %v3146 = vld [vmem:[%s3145] ss:$2 sm:$0xf]
    %s3147 = scalar_lea.vmem %s3121, 193 [#allocation3]
    %v3148 = vld [vmem:[%s3147] ss:$2 sm:$0xf]
    %s3149 = scalar_lea.vmem %s3121, 225 [#allocation3]
    %v3150 = vld [vmem:[%s3149] ss:$2 sm:$0xf]
    %s3151 = scalar_lea.vmem %s3121, 257 [#allocation3]
    %v3152 = vld [vmem:[%s3151] ss:$2 sm:$0xf]
    %s3153 = scalar_lea.vmem %s3121, 2 [#allocation3]
    %v3154 = vld [vmem:[%s3153] ss:$2 sm:$0xf]
    %s3155 = scalar_lea.vmem %s3121, 34 [#allocation3]
    %v3156 = vld [vmem:[%s3155] ss:$2 sm:$0xf]
    %s3157 = scalar_lea.vmem %s3121, 66 [#allocation3]
    %v3158 = vld [vmem:[%s3157] ss:$2 sm:$0xf]
    %s3159 = scalar_lea.vmem %s3121, 98 [#allocation3]
    %v3160 = vld [vmem:[%s3159] ss:$2 sm:$0xf]
    %s3161 = scalar_lea.vmem %s3121, 162 [#allocation3]
    %v3162 = vld [vmem:[%s3161] ss:$2 sm:$0xf]
    %s3163 = scalar_lea.vmem %s3121, 194 [#allocation3]
    %v3164 = vld [vmem:[%s3163] ss:$2 sm:$0xf]
    %s3165 = scalar_lea.vmem %s3121, 226 [#allocation3]
    %v3166 = vld [vmem:[%s3165] ss:$2 sm:$0xf]
    %s3167 = scalar_lea.vmem %s3121, 258 [#allocation3]
    %v3168 = vld [vmem:[%s3167] ss:$2 sm:$0xf]
    %s3169 = scalar_lea.vmem %s3121, 3 [#allocation3]
    %v3170 = vld [vmem:[%s3169] ss:$2 sm:$0xf]
    %s3171 = scalar_lea.vmem %s3121, 35 [#allocation3]
    %v3172 = vld [vmem:[%s3171] ss:$2 sm:$0xf]
    %s3173 = scalar_lea.vmem %s3121, 67 [#allocation3]
    %v3174 = vld [vmem:[%s3173] ss:$2 sm:$0xf]
    %s3175 = scalar_lea.vmem %s3121, 99 [#allocation3]
    %v3176 = vld [vmem:[%s3175] ss:$2 sm:$0xf]
    %s3177 = scalar_lea.vmem %s3121, 163 [#allocation3]
    %v3178 = vld [vmem:[%s3177] ss:$2 sm:$0xf]
    %s3179 = scalar_lea.vmem %s3121, 195 [#allocation3]
    %v3180 = vld [vmem:[%s3179] ss:$2 sm:$0xf]
    %s3181 = scalar_lea.vmem %s3121, 227 [#allocation3]
    %v3182 = vld [vmem:[%s3181] ss:$2 sm:$0xf]
    %s3183 = scalar_lea.vmem %s3121, 259 [#allocation3]
    %v3184 = vld [vmem:[%s3183] ss:$2 sm:$0xf]
    %s3185 = scalar_lea.vmem [#allocation3], 48
    %v3186 = vld [vmem:[%s3185] ss:$2 sm:$0xf]
    %s3187 = scalar_lea.vmem %s3185, 32 [#allocation3]
    %v3188 = vld [vmem:[%s3187] ss:$2 sm:$0xf]
    %s3189 = scalar_lea.vmem %s3185, 64 [#allocation3]
    %v3190 = vld [vmem:[%s3189] ss:$2 sm:$0xf]
    %s3191 = scalar_lea.vmem %s3185, 96 [#allocation3]
    %v3192 = vld [vmem:[%s3191] ss:$2 sm:$0xf]
    %s3193 = scalar_lea.vmem %s3185, 160 [#allocation3]
    %v3194 = vld [vmem:[%s3193] ss:$2 sm:$0xf]
    %s3195 = scalar_lea.vmem %s3185, 192 [#allocation3]
    %v3196 = vld [vmem:[%s3195] ss:$2 sm:$0xf]
    %s3197 = scalar_lea.vmem %s3185, 224 [#allocation3]
    %v3198 = vld [vmem:[%s3197] ss:$2 sm:$0xf]
    %s3199 = scalar_lea.vmem %s3185, 256 [#allocation3]
    %v3200 = vld [vmem:[%s3199] ss:$2 sm:$0xf]
    %s3201 = scalar_lea.vmem %s3185, 1 [#allocation3]
    %v3202 = vld [vmem:[%s3201] ss:$2 sm:$0xf]
    %s3203 = scalar_lea.vmem %s3185, 33 [#allocation3]
    %v3204 = vld [vmem:[%s3203] ss:$2 sm:$0xf]
    %s3205 = scalar_lea.vmem %s3185, 65 [#allocation3]
    %v3206 = vld [vmem:[%s3205] ss:$2 sm:$0xf]
    %s3207 = scalar_lea.vmem %s3185, 97 [#allocation3]
    %v3208 = vld [vmem:[%s3207] ss:$2 sm:$0xf]
    %s3209 = scalar_lea.vmem %s3185, 161 [#allocation3]
    %v3210 = vld [vmem:[%s3209] ss:$2 sm:$0xf]
    %s3211 = scalar_lea.vmem %s3185, 193 [#allocation3]
    %v3212 = vld [vmem:[%s3211] ss:$2 sm:$0xf]
    %s3213 = scalar_lea.vmem %s3185, 225 [#allocation3]
    %v3214 = vld [vmem:[%s3213] ss:$2 sm:$0xf]
    %s3215 = scalar_lea.vmem %s3185, 257 [#allocation3]
    %v3216 = vld [vmem:[%s3215] ss:$2 sm:$0xf]
    %s3217 = scalar_lea.vmem %s3185, 2 [#allocation3]
    %v3218 = vld [vmem:[%s3217] ss:$2 sm:$0xf]
    %s3219 = scalar_lea.vmem %s3185, 34 [#allocation3]
    %v3220 = vld [vmem:[%s3219] ss:$2 sm:$0xf]
    %s3221 = scalar_lea.vmem %s3185, 66 [#allocation3]
    %v3222 = vld [vmem:[%s3221] ss:$2 sm:$0xf]
    %s3223 = scalar_lea.vmem %s3185, 98 [#allocation3]
    %v3224 = vld [vmem:[%s3223] ss:$2 sm:$0xf]
    %s3225 = scalar_lea.vmem %s3185, 162 [#allocation3]
    %v3226 = vld [vmem:[%s3225] ss:$2 sm:$0xf]
    %s3227 = scalar_lea.vmem %s3185, 194 [#allocation3]
    %v3228 = vld [vmem:[%s3227] ss:$2 sm:$0xf]
    %s3229 = scalar_lea.vmem %s3185, 226 [#allocation3]
    %v3230 = vld [vmem:[%s3229] ss:$2 sm:$0xf]
    %s3231 = scalar_lea.vmem %s3185, 258 [#allocation3]
    %v3232 = vld [vmem:[%s3231] ss:$2 sm:$0xf]
    %s3233 = scalar_lea.vmem %s3185, 3 [#allocation3]
    %v3234 = vld [vmem:[%s3233] ss:$2 sm:$0xf]
    %s3235 = scalar_lea.vmem %s3185, 35 [#allocation3]
    %v3236 = vld [vmem:[%s3235] ss:$2 sm:$0xf]
    %s3237 = scalar_lea.vmem %s3185, 67 [#allocation3]
    %v3238 = vld [vmem:[%s3237] ss:$2 sm:$0xf]
    %s3239 = scalar_lea.vmem %s3185, 99 [#allocation3]
    %v3240 = vld [vmem:[%s3239] ss:$2 sm:$0xf]
    %s3241 = scalar_lea.vmem %s3185, 163 [#allocation3]
    %v3242 = vld [vmem:[%s3241] ss:$2 sm:$0xf]
    %s3243 = scalar_lea.vmem %s3185, 195 [#allocation3]
    %v3244 = vld [vmem:[%s3243] ss:$2 sm:$0xf]
    %s3245 = scalar_lea.vmem %s3185, 227 [#allocation3]
    %v3246 = vld [vmem:[%s3245] ss:$2 sm:$0xf]
    %s3247 = scalar_lea.vmem %s3185, 259 [#allocation3]
    %v3248 = vld [vmem:[%s3247] ss:$2 sm:$0xf]
    %3257 = vrot.lane.b32.xlu0 %v3011, 32
    %v3258 = vpop.permute.xlu0 %3257
    %3259 = vrot.lane.b32.xlu0 %v3013, 32
    %v3260 = vpop.permute.xlu0 %3259
    %3261 = vrot.lane.b32.xlu0 %v3015, 32
    %v3262 = vpop.permute.xlu0 %3261
    %3263 = vrot.lane.b32.xlu0 %v3017, 32
    %v3264 = vpop.permute.xlu0 %3263
    %3265 = vrot.lane.b32.xlu0 %v3019, 32
    %v3266 = vpop.permute.xlu0 %3265
    %3267 = vrot.lane.b32.xlu0 %v3021, 32
    %v3268 = vpop.permute.xlu0 %3267
    %3269 = vrot.lane.b32.xlu0 %v3023, 32
    %v3270 = vpop.permute.xlu0 %3269
    %3271 = vrot.lane.b32.xlu0 %v3025, 32
    %v3272 = vpop.permute.xlu0 %3271
    %3289 = vrot.lane.b32.xlu0 %v3027, 64
    %v3290 = vpop.permute.xlu0 %3289
    %3291 = vrot.lane.b32.xlu0 %v3029, 64
    %v3292 = vpop.permute.xlu0 %3291
    %3293 = vrot.lane.b32.xlu0 %v3031, 64
    %v3294 = vpop.permute.xlu0 %3293
    %3295 = vrot.lane.b32.xlu0 %v3033, 64
    %v3296 = vpop.permute.xlu0 %3295
    %3297 = vrot.lane.b32.xlu0 %v3035, 64
    %v3298 = vpop.permute.xlu0 %3297
    %3299 = vrot.lane.b32.xlu0 %v3037, 64
    %v3300 = vpop.permute.xlu0 %3299
    %3301 = vrot.lane.b32.xlu0 %v3039, 64
    %v3302 = vpop.permute.xlu0 %3301
    %3303 = vrot.lane.b32.xlu0 %v3041, 64
    %v3304 = vpop.permute.xlu0 %3303
    %3321 = vrot.lane.b32.xlu0 %v3043, 96
    %v3322 = vpop.permute.xlu0 %3321
    %3323 = vrot.lane.b32.xlu0 %v3045, 96
    %v3324 = vpop.permute.xlu0 %3323
    %3325 = vrot.lane.b32.xlu0 %v3047, 96
    %v3326 = vpop.permute.xlu0 %3325
    %3327 = vrot.lane.b32.xlu0 %v3049, 96
    %v3328 = vpop.permute.xlu0 %3327
    %3329 = vrot.lane.b32.xlu0 %v3051, 96
    %v3330 = vpop.permute.xlu0 %3329
    %3331 = vrot.lane.b32.xlu0 %v3053, 96
    %v3332 = vpop.permute.xlu0 %3331
    %3333 = vrot.lane.b32.xlu0 %v3055, 96
    %v3334 = vpop.permute.xlu0 %3333
    %3335 = vrot.lane.b32.xlu0 %v3057, 96
    %v3336 = vpop.permute.xlu0 %3335
    %3353 = vrot.lane.b32.xlu0 %v3074, 32
    %v3354 = vpop.permute.xlu0 %3353
    %3355 = vrot.lane.b32.xlu0 %v3076, 32
    %v3356 = vpop.permute.xlu0 %3355
    %3357 = vrot.lane.b32.xlu0 %v3078, 32
    %v3358 = vpop.permute.xlu0 %3357
    %3359 = vrot.lane.b32.xlu0 %v3080, 32
    %v3360 = vpop.permute.xlu0 %3359
    %3361 = vrot.lane.b32.xlu0 %v3082, 32
    %v3362 = vpop.permute.xlu0 %3361
    %3363 = vrot.lane.b32.xlu0 %v3084, 32
    %v3364 = vpop.permute.xlu0 %3363
    %3365 = vrot.lane.b32.xlu0 %v3086, 32
    %v3366 = vpop.permute.xlu0 %3365
    %3367 = vrot.lane.b32.xlu0 %v3088, 32
    %v3368 = vpop.permute.xlu0 %3367
    %3385 = vrot.lane.b32.xlu0 %v3090, 64
    %v3386 = vpop.permute.xlu0 %3385
    %3387 = vrot.lane.b32.xlu0 %v3092, 64
    %v3388 = vpop.permute.xlu0 %3387
    %3389 = vrot.lane.b32.xlu0 %v3094, 64
    %v3390 = vpop.permute.xlu0 %3389
    %3391 = vrot.lane.b32.xlu0 %v3096, 64
    %v3392 = vpop.permute.xlu0 %3391
    %3393 = vrot.lane.b32.xlu0 %v3098, 64
    %v3394 = vpop.permute.xlu0 %3393
    %3395 = vrot.lane.b32.xlu0 %v3100, 64
    %v3396 = vpop.permute.xlu0 %3395
    %3397 = vrot.lane.b32.xlu0 %v3102, 64
    %v3398 = vpop.permute.xlu0 %3397
    %3399 = vrot.lane.b32.xlu0 %v3104, 64
    %v3400 = vpop.permute.xlu0 %3399
    %3417 = vrot.lane.b32.xlu0 %v3106, 96
    %v3418 = vpop.permute.xlu0 %3417
    %3419 = vrot.lane.b32.xlu0 %v3108, 96
    %v3420 = vpop.permute.xlu0 %3419
    %3421 = vrot.lane.b32.xlu0 %v3110, 96
    %v3422 = vpop.permute.xlu0 %3421
    %3423 = vrot.lane.b32.xlu0 %v3112, 96
    %v3424 = vpop.permute.xlu0 %3423
    %3425 = vrot.lane.b32.xlu0 %v3114, 96
    %v3426 = vpop.permute.xlu0 %3425
    %3427 = vrot.lane.b32.xlu0 %v3116, 96
    %v3428 = vpop.permute.xlu0 %3427
    %3429 = vrot.lane.b32.xlu0 %v3118, 96
    %v3430 = vpop.permute.xlu0 %3429
    %3431 = vrot.lane.b32.xlu0 %v3120, 96
    %v3432 = vpop.permute.xlu0 %3431
    %3449 = vrot.lane.b32.xlu0 %v3138, 32
    %v3450 = vpop.permute.xlu0 %3449
    %3451 = vrot.lane.b32.xlu0 %v3140, 32
    %v3452 = vpop.permute.xlu0 %3451
    %3453 = vrot.lane.b32.xlu0 %v3142, 32
    %v3454 = vpop.permute.xlu0 %3453
    %3455 = vrot.lane.b32.xlu0 %v3144, 32
    %v3456 = vpop.permute.xlu0 %3455
    %3457 = vrot.lane.b32.xlu0 %v3146, 32
    %v3458 = vpop.permute.xlu0 %3457
    %3459 = vrot.lane.b32.xlu0 %v3148, 32
    %v3460 = vpop.permute.xlu0 %3459
    %3461 = vrot.lane.b32.xlu0 %v3150, 32
    %v3462 = vpop.permute.xlu0 %3461
    %3463 = vrot.lane.b32.xlu0 %v3152, 32
    %v3464 = vpop.permute.xlu0 %3463
    %3481 = vrot.lane.b32.xlu0 %v3154, 64
    %v3482 = vpop.permute.xlu0 %3481
    %3483 = vrot.lane.b32.xlu0 %v3156, 64
    %v3484 = vpop.permute.xlu0 %3483
    %3485 = vrot.lane.b32.xlu0 %v3158, 64
    %v3486 = vpop.permute.xlu0 %3485
    %3487 = vrot.lane.b32.xlu0 %v3160, 64
    %v3488 = vpop.permute.xlu0 %3487
    %3489 = vrot.lane.b32.xlu0 %v3162, 64
    %v3490 = vpop.permute.xlu0 %3489
    %3491 = vrot.lane.b32.xlu0 %v3164, 64
    %v3492 = vpop.permute.xlu0 %3491
    %3493 = vrot.lane.b32.xlu0 %v3166, 64
    %v3494 = vpop.permute.xlu0 %3493
    %3495 = vrot.lane.b32.xlu0 %v3168, 64
    %v3496 = vpop.permute.xlu0 %3495
    %3513 = vrot.lane.b32.xlu0 %v3170, 96
    %v3514 = vpop.permute.xlu0 %3513
    %3515 = vrot.lane.b32.xlu0 %v3172, 96
    %v3516 = vpop.permute.xlu0 %3515
    %3517 = vrot.lane.b32.xlu0 %v3174, 96
    %v3518 = vpop.permute.xlu0 %3517
    %3519 = vrot.lane.b32.xlu0 %v3176, 96
    %v3520 = vpop.permute.xlu0 %3519
    %3521 = vrot.lane.b32.xlu0 %v3178, 96
    %v3522 = vpop.permute.xlu0 %3521
    %3523 = vrot.lane.b32.xlu0 %v3180, 96
    %v3524 = vpop.permute.xlu0 %3523
    %3525 = vrot.lane.b32.xlu0 %v3182, 96
    %v3526 = vpop.permute.xlu0 %3525
    %3527 = vrot.lane.b32.xlu0 %v3184, 96
    %v3528 = vpop.permute.xlu0 %3527
    %3545 = vrot.lane.b32.xlu0 %v3202, 32
    %v3546 = vpop.permute.xlu0 %3545
    %3547 = vrot.lane.b32.xlu0 %v3204, 32
    %v3548 = vpop.permute.xlu0 %3547
    %3549 = vrot.lane.b32.xlu0 %v3206, 32
    %v3550 = vpop.permute.xlu0 %3549
    %3551 = vrot.lane.b32.xlu0 %v3208, 32
    %v3552 = vpop.permute.xlu0 %3551
    %3553 = vrot.lane.b32.xlu0 %v3210, 32
    %v3554 = vpop.permute.xlu0 %3553
    %3555 = vrot.lane.b32.xlu0 %v3212, 32
    %v3556 = vpop.permute.xlu0 %3555
    %3557 = vrot.lane.b32.xlu0 %v3214, 32
    %v3558 = vpop.permute.xlu0 %3557
    %3559 = vrot.lane.b32.xlu0 %v3216, 32
    %v3560 = vpop.permute.xlu0 %3559
    %3577 = vrot.lane.b32.xlu0 %v3218, 64
    %v3578 = vpop.permute.xlu0 %3577
    %3579 = vrot.lane.b32.xlu0 %v3220, 64
    %v3580 = vpop.permute.xlu0 %3579
    %3581 = vrot.lane.b32.xlu0 %v3222, 64
    %v3582 = vpop.permute.xlu0 %3581
    %3583 = vrot.lane.b32.xlu0 %v3224, 64
    %v3584 = vpop.permute.xlu0 %3583
    %3585 = vrot.lane.b32.xlu0 %v3226, 64
    %v3586 = vpop.permute.xlu0 %3585
    %3587 = vrot.lane.b32.xlu0 %v3228, 64
    %v3588 = vpop.permute.xlu0 %3587
    %3589 = vrot.lane.b32.xlu0 %v3230, 64
    %v3590 = vpop.permute.xlu0 %3589
    %3591 = vrot.lane.b32.xlu0 %v3232, 64
    %v3592 = vpop.permute.xlu0 %3591
    %3609 = vrot.lane.b32.xlu0 %v3234, 96
    %v3610 = vpop.permute.xlu0 %3609
    %3611 = vrot.lane.b32.xlu0 %v3236, 96
    %v3612 = vpop.permute.xlu0 %3611
    %3613 = vrot.lane.b32.xlu0 %v3238, 96
    %v3614 = vpop.permute.xlu0 %3613
    %3615 = vrot.lane.b32.xlu0 %v3240, 96
    %v3616 = vpop.permute.xlu0 %3615
    %3617 = vrot.lane.b32.xlu0 %v3242, 96
    %v3618 = vpop.permute.xlu0 %3617
    %3619 = vrot.lane.b32.xlu0 %v3244, 96
    %v3620 = vpop.permute.xlu0 %3619
    %3621 = vrot.lane.b32.xlu0 %v3246, 96
    %v3622 = vpop.permute.xlu0 %3621
    %3623 = vrot.lane.b32.xlu0 %v3248, 96
    %v3624 = vpop.permute.xlu0 %3623
    %v3633 = vsel %vm2491, %v2995, %v3258
    %v3634 = vsel %vm2491, %v2997, %v3260
    %v3635 = vsel %vm2491, %v2999, %v3262
    %v3636 = vsel %vm2491, %v3001, %v3264
    %v3637 = vsel %vm2491, %v3003, %v3266
    %v3638 = vsel %vm2491, %v3005, %v3268
    %v3639 = vsel %vm2491, %v3007, %v3270
    %v3640 = vsel %vm2491, %v3009, %v3272
    %v3641 = vsel %vm2525, %v3633, %v3290
    %v3642 = vsel %vm2525, %v3634, %v3292
    %v3643 = vsel %vm2525, %v3635, %v3294
    %v3644 = vsel %vm2525, %v3636, %v3296
    %v3645 = vsel %vm2525, %v3637, %v3298
    %v3646 = vsel %vm2525, %v3638, %v3300
    %v3647 = vsel %vm2525, %v3639, %v3302
    %v3648 = vsel %vm2525, %v3640, %v3304
    %v3649 = vsel %vm2559, %v3641, %v3322
    %v3650 = vsel %vm2559, %v3642, %v3324
    %v3651 = vsel %vm2559, %v3643, %v3326
    %v3652 = vsel %vm2559, %v3644, %v3328
    %v3653 = vsel %vm2559, %v3645, %v3330
    %v3654 = vsel %vm2559, %v3646, %v3332
    %v3655 = vsel %vm2559, %v3647, %v3334
    %v3656 = vsel %vm2559, %v3648, %v3336
    %v3657 = vsel %vm2491, %v3058, %v3354
    %v3658 = vsel %vm2491, %v3060, %v3356
    %v3659 = vsel %vm2491, %v3062, %v3358
    %v3660 = vsel %vm2491, %v3064, %v3360
    %v3661 = vsel %vm2491, %v3066, %v3362
    %v3662 = vsel %vm2491, %v3068, %v3364
    %v3663 = vsel %vm2491, %v3070, %v3366
    %v3664 = vsel %vm2491, %v3072, %v3368
    %v3665 = vsel %vm2525, %v3657, %v3386
    %v3666 = vsel %vm2525, %v3658, %v3388
    %v3667 = vsel %vm2525, %v3659, %v3390
    %v3668 = vsel %vm2525, %v3660, %v3392
    %v3669 = vsel %vm2525, %v3661, %v3394
    %v3670 = vsel %vm2525, %v3662, %v3396
    %v3671 = vsel %vm2525, %v3663, %v3398
    %v3672 = vsel %vm2525, %v3664, %v3400
    %v3673 = vsel %vm2559, %v3665, %v3418
    %v3674 = vsel %vm2559, %v3666, %v3420
    %v3675 = vsel %vm2559, %v3667, %v3422
    %v3676 = vsel %vm2559, %v3668, %v3424
    %v3677 = vsel %vm2559, %v3669, %v3426
    %v3678 = vsel %vm2559, %v3670, %v3428
    %v3679 = vsel %vm2559, %v3671, %v3430
    %v3680 = vsel %vm2559, %v3672, %v3432
    %v3681 = vsel %vm2491, %v3122, %v3450
    %v3682 = vsel %vm2491, %v3124, %v3452
    %v3683 = vsel %vm2491, %v3126, %v3454
    %v3684 = vsel %vm2491, %v3128, %v3456
    %v3685 = vsel %vm2491, %v3130, %v3458
    %v3686 = vsel %vm2491, %v3132, %v3460
    %v3687 = vsel %vm2491, %v3134, %v3462
    %v3688 = vsel %vm2491, %v3136, %v3464
    %v3689 = vsel %vm2525, %v3681, %v3482
    %v3690 = vsel %vm2525, %v3682, %v3484
    %v3691 = vsel %vm2525, %v3683, %v3486
    %v3692 = vsel %vm2525, %v3684, %v3488
    %v3693 = vsel %vm2525, %v3685, %v3490
    %v3694 = vsel %vm2525, %v3686, %v3492
    %v3695 = vsel %vm2525, %v3687, %v3494
    %v3696 = vsel %vm2525, %v3688, %v3496
    %v3697 = vsel %vm2559, %v3689, %v3514
    %v3698 = vsel %vm2559, %v3690, %v3516
    %v3699 = vsel %vm2559, %v3691, %v3518
    %v3700 = vsel %vm2559, %v3692, %v3520
    %v3701 = vsel %vm2559, %v3693, %v3522
    %v3702 = vsel %vm2559, %v3694, %v3524
    %v3703 = vsel %vm2559, %v3695, %v3526
    %v3704 = vsel %vm2559, %v3696, %v3528
    %v3705 = vsel %vm2491, %v3186, %v3546
    %v3706 = vsel %vm2491, %v3188, %v3548
    %v3707 = vsel %vm2491, %v3190, %v3550
    %v3708 = vsel %vm2491, %v3192, %v3552
    %v3709 = vsel %vm2491, %v3194, %v3554
    %v3710 = vsel %vm2491, %v3196, %v3556
    %v3711 = vsel %vm2491, %v3198, %v3558
    %v3712 = vsel %vm2491, %v3200, %v3560
    %v3713 = vsel %vm2525, %v3705, %v3578
    %v3714 = vsel %vm2525, %v3706, %v3580
    %v3715 = vsel %vm2525, %v3707, %v3582
    %v3716 = vsel %vm2525, %v3708, %v3584
    %v3717 = vsel %vm2525, %v3709, %v3586
    %v3718 = vsel %vm2525, %v3710, %v3588
    %v3719 = vsel %vm2525, %v3711, %v3590
    %v3720 = vsel %vm2525, %v3712, %v3592
    %v3721 = vsel %vm2559, %v3713, %v3610
    %v3722 = vsel %vm2559, %v3714, %v3612
    %v3723 = vsel %vm2559, %v3715, %v3614
    %v3724 = vsel %vm2559, %v3716, %v3616
    %v3725 = vsel %vm2559, %v3717, %v3618
    %v3726 = vsel %vm2559, %v3718, %v3620
    %v3727 = vsel %vm2559, %v3719, %v3622
    %v3728 = vsel %vm2559, %v3720, %v3624
    %v3761 = vcombine.low %v3649, %v3673
    %v3762 = vcombine.low %v3697, %v3721
    %v3763 = vcombine.low %v3650, %v3674
    %v3764 = vcombine.low %v3698, %v3722
    %v3765 = vcombine.low %v3651, %v3675
    %v3766 = vcombine.low %v3699, %v3723
    %v3767 = vcombine.low %v3652, %v3676
    %v3768 = vcombine.low %v3700, %v3724
    %v3769 = vcombine.low %v3653, %v3677
    %v3770 = vcombine.low %v3701, %v3725
    %v3771 = vcombine.low %v3654, %v3678
    %v3772 = vcombine.low %v3702, %v3726
    %v3773 = vcombine.low %v3655, %v3679
    %v3774 = vcombine.low %v3703, %v3727
    %v3775 = vcombine.low %v3656, %v3680
    %v3776 = vcombine.low %v3704, %v3728
    %v3777 = vld [vmem:[%s5] sm:$0xff]
    %v3778 = vld [vmem:[%s5 + $0x8] sm:$0xff]
    %v3779 = vld [vmem:[%s5 + $0x10] sm:$0xff]
    %v3780 = vld [vmem:[%s5 + $0x18] sm:$0xff]
    %v3781 = vld [vmem:[%s5 + $0x20] sm:$0xff]
    %v3782 = vld [vmem:[%s5 + $0x28] sm:$0xff]
    %v3783 = vld [vmem:[%s5 + $0x30] sm:$0xff]
    %v3784 = vld [vmem:[%s5 + $0x38] sm:$0xff]
    %v3785 = vld [vmem:[%s5 + $0x40] sm:$0xff]
    %v3786 = vld [vmem:[%s5 + $0x48] sm:$0xff]
    %v3787 = vld [vmem:[%s5 + $0x50] sm:$0xff]
    %v3788 = vld [vmem:[%s5 + $0x58] sm:$0xff]
    %v3789 = vld [vmem:[%s5 + $0x60] sm:$0xff]
    %v3790 = vld [vmem:[%s5 + $0x68] sm:$0xff]
    %v3791 = vld [vmem:[%s5 + $0x70] sm:$0xff]
    %v3792 = vld [vmem:[%s5 + $0x78] sm:$0xff]
    %v3793 = vld [vmem:[%s5 + $0x80] sm:$0xff]
    %v3794 = vld [vmem:[%s5 + $0x88] sm:$0xff]
    %v3795 = vld [vmem:[%s5 + $0x90] sm:$0xff]
    %v3796 = vld [vmem:[%s5 + $0x98] sm:$0xff]
    %v3797 = vld [vmem:[%s5 + $0xa0] sm:$0xff]
    %v3798 = vld [vmem:[%s5 + $0xa8] sm:$0xff]
    %v3799 = vld [vmem:[%s5 + $0xb0] sm:$0xff]
    %v3800 = vld [vmem:[%s5 + $0xb8] sm:$0xff]
    %v3801 = vld [vmem:[%s5 + $0xc0] sm:$0xff]
    %v3802 = vld [vmem:[%s5 + $0xc8] sm:$0xff]
    %v3803 = vld [vmem:[%s5 + $0xd0] sm:$0xff]
    %v3804 = vld [vmem:[%s5 + $0xd8] sm:$0xff]
    %v3805 = vld [vmem:[%s5 + $0xe0] sm:$0xff]
    %v3806 = vld [vmem:[%s5 + $0xe8] sm:$0xff]
    %v3807 = vld [vmem:[%s5 + $0xf0] sm:$0xff]
    %v3808 = vld [vmem:[%s5 + $0xf8] sm:$0xff]
    %v3809 = vld [vmem:[%s5 + $0x100] sm:$0xff]
    %v3810 = vld [vmem:[%s5 + $0x108] sm:$0xff]
    %v3811 = vld [vmem:[%s5 + $0x110] sm:$0xff]
    %v3812 = vld [vmem:[%s5 + $0x118] sm:$0xff]
    %v3813 = vld [vmem:[%s5 + $0x120] sm:$0xff]
    %v3814 = vld [vmem:[%s5 + $0x128] sm:$0xff]
    %v3815 = vld [vmem:[%s5 + $0x130] sm:$0xff]
    %v3816 = vld [vmem:[%s5 + $0x138] sm:$0xff]
    %v3817 = vld [vmem:[%s5 + $0x140] sm:$0xff]
    %v3818 = vld [vmem:[%s5 + $0x148] sm:$0xff]
    %v3819 = vld [vmem:[%s5 + $0x150] sm:$0xff]
    %v3820 = vld [vmem:[%s5 + $0x158] sm:$0xff]
    %v3821 = vld [vmem:[%s5 + $0x160] sm:$0xff]
    %v3822 = vld [vmem:[%s5 + $0x168] sm:$0xff]
    %v3823 = vld [vmem:[%s5 + $0x170] sm:$0xff]
    %v3824 = vld [vmem:[%s5 + $0x178] sm:$0xff]
    %v3825 = vld [vmem:[%s5 + $0x180] sm:$0xff]
    %v3826 = vld [vmem:[%s5 + $0x188] sm:$0xff]
    %v3827 = vld [vmem:[%s5 + $0x190] sm:$0xff]
    %v3828 = vld [vmem:[%s5 + $0x198] sm:$0xff]
    %v3829 = vld [vmem:[%s5 + $0x1a0] sm:$0xff]
    %v3830 = vld [vmem:[%s5 + $0x1a8] sm:$0xff]
    %v3831 = vld [vmem:[%s5 + $0x1b0] sm:$0xff]
    %v3832 = vld [vmem:[%s5 + $0x1b8] sm:$0xff]
    %v3833 = vld [vmem:[%s5 + $0x1c0] sm:$0xff]
    %v3834 = vld [vmem:[%s5 + $0x1c8] sm:$0xff]
    %v3835 = vld [vmem:[%s5 + $0x1d0] sm:$0xff]
    %v3836 = vld [vmem:[%s5 + $0x1d8] sm:$0xff]
    %v3837 = vld [vmem:[%s5 + $0x1e0] sm:$0xff]
    %v3838 = vld [vmem:[%s5 + $0x1e8] sm:$0xff]
    %v3839 = vld [vmem:[%s5 + $0x1f0] sm:$0xff]
    %v3840 = vld [vmem:[%s5 + $0x1f8] sm:$0xff]
    %v3841 = vld [vmem:[%s6] sm:$0x1]
    %v3843 = vlaneseq
    %v3844 = vshrl.u32 %v3843, 7
    %v3845 = vsub.s32 0, %v3844
    %v3846 = vrot.slane %v3841, %v3845
    %v3848 = vcombine.low %v3761, %v3763
    %v3849 = vcombine.high %v3761, %v3763
    %v3850 = vcombine.low %v3762, %v3764
    %v3851 = vcombine.high %v3762, %v3764
    %v3852 = vcombine.low %v3765, %v3767
    %v3853 = vcombine.high %v3765, %v3767
    %v3854 = vcombine.low %v3766, %v3768
    %v3855 = vcombine.high %v3766, %v3768
    %v3856 = vcombine.low %v3769, %v3771
    %v3857 = vcombine.high %v3769, %v3771
    %v3858 = vcombine.low %v3770, %v3772
    %v3859 = vcombine.high %v3770, %v3772
    %v3860 = vcombine.low %v3773, %v3775
    %v3861 = vcombine.high %v3773, %v3775
    %v3862 = vcombine.low %v3774, %v3776
    %v3863 = vcombine.high %v3774, %v3776
    %3880 = vmatprep.subr.mxu0 0.0
    %3881 = vmatpush1.msra.mxu0 %v3777
    %3882 = vmatprep.subr.mxu0 0.0
    %3883 = vmatpush1.msra.mxu0 %v3778
    %3884 = vmatprep.subr.mxu0 0.0
    %3885 = vmatpush1.msra.mxu0 %v3779
    %3886 = vmatprep.subr.mxu0 0.0
    %3887 = vmatpush1.msra.mxu0 %v3780
    %3888 = vmatprep.subr.mxu0 0.0
    %3889 = vmatpush1.msra.mxu0 %v3781
    %3890 = vmatprep.subr.mxu0 0.0
    %3891 = vmatpush1.msra.mxu0 %v3782
    %3892 = vmatprep.subr.mxu0 0.0
    %3893 = vmatpush1.msra.mxu0 %v3783
    %3894 = vmatprep.subr.mxu0 0.0
    %3895 = vmatpush1.msra.mxu0 %v3784
    %3896 = vmatprep.subr.mxu0 0.0
    %3897 = vmatpush1.msra.mxu0 %v3785
    %3898 = vmatprep.subr.mxu0 0.0
    %3899 = vmatpush1.msra.mxu0 %v3786
    %3900 = vmatprep.subr.mxu0 0.0
    %3901 = vmatpush1.msra.mxu0 %v3787
    %3902 = vmatprep.subr.mxu0 0.0
    %3903 = vmatpush1.msra.mxu0 %v3788
    %3904 = vmatprep.subr.mxu0 0.0
    %3905 = vmatpush1.msra.mxu0 %v3789
    %3906 = vmatprep.subr.mxu0 0.0
    %3907 = vmatpush1.msra.mxu0 %v3790
    %3908 = vmatprep.subr.mxu0 0.0
    %3909 = vmatpush1.msra.mxu0 %v3791
    %3910 = vmatprep.subr.mxu0 0.0
    %3911 = vmatpush1.msra.mxu0 %v3792
    %3912 = vmatprep.subr.mxu0 0.0
    %3913 = vmatpush1.msra.mxu0 %v3793
    %3914 = vmatprep.subr.mxu0 0.0
    %3915 = vmatpush1.msra.mxu0 %v3794
    %3916 = vmatprep.subr.mxu0 0.0
    %3917 = vmatpush1.msra.mxu0 %v3795
    %3918 = vmatprep.subr.mxu0 0.0
    %3919 = vmatpush1.msra.mxu0 %v3796
    %3920 = vmatprep.subr.mxu0 0.0
    %3921 = vmatpush1.msra.mxu0 %v3797
    %3922 = vmatprep.subr.mxu0 0.0
    %3923 = vmatpush1.msra.mxu0 %v3798
    %3924 = vmatprep.subr.mxu0 0.0
    %3925 = vmatpush1.msra.mxu0 %v3799
    %3926 = vmatprep.subr.mxu0 0.0
    %3927 = vmatpush1.msra.mxu0 %v3800
    %3928 = vmatprep.subr.mxu0 0.0
    %3929 = vmatpush1.msra.mxu0 %v3801
    %3930 = vmatprep.subr.mxu0 0.0
    %3931 = vmatpush1.msra.mxu0 %v3802
    %3932 = vmatprep.subr.mxu0 0.0
    %3933 = vmatpush1.msra.mxu0 %v3803
    %3934 = vmatprep.subr.mxu0 0.0
    %3935 = vmatpush1.msra.mxu0 %v3804
    %3936 = vmatprep.subr.mxu0 0.0
    %3937 = vmatpush1.msra.mxu0 %v3805
    %3938 = vmatprep.subr.mxu0 0.0
    %3939 = vmatpush1.msra.mxu0 %v3806
    %3940 = vmatprep.subr.mxu0 0.0
    %3941 = vmatpush1.msra.mxu0 %v3807
    %3942 = vmatprep.subr.mxu0 0.0
    %3943 = vmatpush1.msra.mxu0 %v3808
    %3944 = vmatprep.mubr.f32.mxu0 %v3849
    %3945 = vmatmul.mubr.f32.gmra.mrb[0].mxu0 %v3848
    %v3946 = vpop.f32.mrb[0].mxu0
    %v3947 = vadd.f32 %v3846, %v3946
    %v3948 = vpop.f32.mrb[0].mxu0
    %3949 = vmatprep.mubr.f32.mxu0 %v3853
    %3950 = vmatmul.mubr.f32.gmra.mrb[0].mxu0 %v3852
    %v3951 = vpop.f32.mrb[0].mxu0
    %v3952 = vadd.f32 %v3846, %v3951
    %v3953 = vpop.f32.mrb[0].mxu0
    %3954 = vmatprep.mubr.f32.mxu0 %v3857
    %3955 = vmatmul.mubr.f32.gmra.mrb[0].mxu0 %v3856
    %v3956 = vpop.f32.mrb[0].mxu0
    %v3957 = vadd.f32 %v3846, %v3956
    %v3958 = vpop.f32.mrb[0].mxu0
    %3959 = vmatprep.mubr.f32.mxu0 %v3861
    %3960 = vmatmul.mubr.f32.gmra.mrb[0].mxu0 %v3860
    %v3961 = vpop.f32.mrb[0].mxu0
    %v3962 = vadd.f32 %v3846, %v3961
    %v3963 = vpop.f32.mrb[0].mxu0
    %3964 = vdwg.mxu0
    %3965 = vmatprep.subr.mxu0 0.0
    %3966 = vmatpush1.msra.mxu0 %v3809
    %3967 = vmatprep.subr.mxu0 0.0
    %3968 = vmatpush1.msra.mxu0 %v3810
    %3969 = vmatprep.subr.mxu0 0.0
    %3970 = vmatpush1.msra.mxu0 %v3811
    %3971 = vmatprep.subr.mxu0 0.0
    %3972 = vmatpush1.msra.mxu0 %v3812
    %3973 = vmatprep.subr.mxu0 0.0
    %3974 = vmatpush1.msra.mxu0 %v3813
    %3975 = vmatprep.subr.mxu0 0.0
    %3976 = vmatpush1.msra.mxu0 %v3814
    %3977 = vmatprep.subr.mxu0 0.0
    %3978 = vmatpush1.msra.mxu0 %v3815
    %3979 = vmatprep.subr.mxu0 0.0
    %3980 = vmatpush1.msra.mxu0 %v3816
    %3981 = vmatprep.subr.mxu0 0.0
    %3982 = vmatpush1.msra.mxu0 %v3817
    %3983 = vmatprep.subr.mxu0 0.0
    %3984 = vmatpush1.msra.mxu0 %v3818
    %3985 = vmatprep.subr.mxu0 0.0
    %3986 = vmatpush1.msra.mxu0 %v3819
    %3987 = vmatprep.subr.mxu0 0.0
    %3988 = vmatpush1.msra.mxu0 %v3820
    %3989 = vmatprep.subr.mxu0 0.0
    %3990 = vmatpush1.msra.mxu0 %v3821
    %3991 = vmatprep.subr.mxu0 0.0
    %3992 = vmatpush1.msra.mxu0 %v3822
    %3993 = vmatprep.subr.mxu0 0.0
    %3994 = vmatpush1.msra.mxu0 %v3823
    %3995 = vmatprep.subr.mxu0 0.0
    %3996 = vmatpush1.msra.mxu0 %v3824
    %3997 = vmatprep.subr.mxu0 0.0
    %3998 = vmatpush1.msra.mxu0 %v3825
    %3999 = vmatprep.subr.mxu0 0.0
    %4000 = vmatpush1.msra.mxu0 %v3826
    %4001 = vmatprep.subr.mxu0 0.0
    %4002 = vmatpush1.msra.mxu0 %v3827
    %4003 = vmatprep.subr.mxu0 0.0
    %4004 = vmatpush1.msra.mxu0 %v3828
    %4005 = vmatprep.subr.mxu0 0.0
    %4006 = vmatpush1.msra.mxu0 %v3829
    %4007 = vmatprep.subr.mxu0 0.0
    %4008 = vmatpush1.msra.mxu0 %v3830
    %4009 = vmatprep.subr.mxu0 0.0
    %4010 = vmatpush1.msra.mxu0 %v3831
    %4011 = vmatprep.subr.mxu0 0.0
    %4012 = vmatpush1.msra.mxu0 %v3832
    %4013 = vmatprep.subr.mxu0 0.0
    %4014 = vmatpush1.msra.mxu0 %v3833
    %4015 = vmatprep.subr.mxu0 0.0
    %4016 = vmatpush1.msra.mxu0 %v3834
    %4017 = vmatprep.subr.mxu0 0.0
    %4018 = vmatpush1.msra.mxu0 %v3835
    %4019 = vmatprep.subr.mxu0 0.0
    %4020 = vmatpush1.msra.mxu0 %v3836
    %4021 = vmatprep.subr.mxu0 0.0
    %4022 = vmatpush1.msra.mxu0 %v3837
    %4023 = vmatprep.subr.mxu0 0.0
    %4024 = vmatpush1.msra.mxu0 %v3838
    %4025 = vmatprep.subr.mxu0 0.0
    %4026 = vmatpush1.msra.mxu0 %v3839
    %4027 = vmatprep.subr.mxu0 0.0
    %4028 = vmatpush1.msra.mxu0 %v3840
    %4029 = vmatprep.mubr.f32.mxu0 %v3851
    %4030 = vmatmul.mubr.f32.gmra.mrb[0].mxu0 %v3850
    %v4031 = vpop.f32.mrb[0].mxu0
    %v4032 = vadd.f32 %v3947, %v4031
    %v4033 = vpop.f32.mrb[0].mxu0
    %4034 = vmatprep.mubr.f32.mxu0 %v3855
    %4035 = vmatmul.mubr.f32.gmra.mrb[0].mxu0 %v3854
    %v4036 = vpop.f32.mrb[0].mxu0
    %v4037 = vadd.f32 %v3952, %v4036
    %v4038 = vpop.f32.mrb[0].mxu0
    %4039 = vmatprep.mubr.f32.mxu0 %v3859
    %4040 = vmatmul.mubr.f32.gmra.mrb[0].mxu0 %v3858
    %v4041 = vpop.f32.mrb[0].mxu0
    %v4042 = vadd.f32 %v3957, %v4041
    %v4043 = vpop.f32.mrb[0].mxu0
    %4044 = vmatprep.mubr.f32.mxu0 %v3863
    %4045 = vmatmul.mubr.f32.gmra.mrb[0].mxu0 %v3862
    %v4046 = vpop.f32.mrb[0].mxu0
    %v4047 = vadd.f32 %v3962, %v4046
    %v4048 = vpop.f32.mrb[0].mxu0
    %4049 = vdwg.mxu0
    %vm4050 = vcmp.gt.f32.partialorder %v4032, 0.0
    %vm4051 = vcmp.gt.f32.partialorder %v4037, 0.0
    %vm4052 = vcmp.gt.f32.partialorder %v4042, 0.0
    %vm4053 = vcmp.gt.f32.partialorder %v4047, 0.0
    %v4054 = vmul.f32 %v4032, 0.1
    %v4055 = vmul.f32 %v4037, 0.1
    %v4056 = vmul.f32 %v4042, 0.1
    %v4057 = vmul.f32 %v4047, 0.1
    %v4058 = vsel %vm4050, %v4032, %v4054
    %v4059 = vsel %vm4051, %v4037, %v4055
    %v4060 = vsel %vm4052, %v4042, %v4056
    %v4061 = vsel %vm4053, %v4047, %v4057
    %vm4062 = vcmask 521216
    %4063 = vst.msk [vmem:[#allocation4] sm:$0x3f] %vm4062, 0.0
    %4064 = vst.msk [vmem:[#allocation4 + $0x8] sm:$0x3f] %vm4062, 0.0
    %4065 = vst.msk [vmem:[#allocation4 + $0x10] sm:$0x3f] %vm4062, 0.0
    %4066 = vst.msk [vmem:[#allocation4 + $0x18] sm:$0x3f] %vm4062, 0.0
    %4067 = vst.msk [vmem:[#allocation4 + $0x20] sm:$0x3f] %vm4062, 0.0
    %4068 = vst.msk [vmem:[#allocation4 + $0x28] sm:$0x3f] %vm4062, 0.0
    %4069 = vst.msk [vmem:[#allocation4 + $0x30] sm:$0x3f] %vm4062, 0.0
    %4070 = vst.msk [vmem:[#allocation4 + $0x38] sm:$0x3f] %vm4062, 0.0
    %4071 = vst.msk [vmem:[#allocation4 + $0x40] sm:$0x3f] %vm4062, 0.0
    %4072 = vst.msk [vmem:[#allocation4 + $0x48] sm:$0x3f] %vm4062, 0.0
    %4073 = vst.msk [vmem:[#allocation4 + $0x50] sm:$0x3f] %vm4062, 0.0
    %4074 = vst.msk [vmem:[#allocation4 + $0x58] sm:$0x3f] %vm4062, 0.0
    %v4079 = vcombine.high %v4058, %v4058
    %v4080 = vcombine.high %v4059, %v4059
    %v4081 = vcombine.high %v4060, %v4060
    %v4082 = vcombine.high %v4061, %v4061
    %s4087 = scalar_lea.vmem [#allocation4], 8
    %vm4088 = vcmask 519168
    %4089 = vst.msk [vmem:[%s4087 + $0x1] sm:$0xf] %vm4088, %v4058
    %4090 = vst.msk [vmem:[%s4087 + $0x9] sm:$0xf] %vm4088, %v4079
    %4091 = vst.msk [vmem:[%s4087 + $0x11] sm:$0xf] %vm4088, %v4059
    %4092 = vst.msk [vmem:[%s4087 + $0x19] sm:$0xf] %vm4088, %v4080
    %4093 = vst.msk [vmem:[%s4087 + $0x31] sm:$0xf] %vm4088, %v4060
    %4094 = vst.msk [vmem:[%s4087 + $0x39] sm:$0xf] %vm4088, %v4081
    %4095 = vst.msk [vmem:[%s4087 + $0x41] sm:$0xf] %vm4088, %v4061
    %4096 = vst.msk [vmem:[%s4087 + $0x49] sm:$0xf] %vm4088, %v4082
    %v4097 = vld [vmem:[#allocation4] ss:$2 sm:$0x3]
    %s4098 = scalar_lea.vmem [#allocation4], 16
    %v4099 = vld [vmem:[%s4098] ss:$2 sm:$0x3]
    %s4100 = scalar_lea.vmem [#allocation4], 48
    %v4101 = vld [vmem:[%s4100] ss:$2 sm:$0x3]
    %s4102 = scalar_lea.vmem [#allocation4], 64
    %v4103 = vld [vmem:[%s4102] ss:$2 sm:$0x3]
    %s4104 = scalar_lea.vmem [#allocation4], 1
    %v4105 = vld [vmem:[%s4104] ss:$2 sm:$0x3]
    %s4106 = scalar_lea.vmem [#allocation4], 17
    %v4107 = vld [vmem:[%s4106] ss:$2 sm:$0x3]
    %s4108 = scalar_lea.vmem [#allocation4], 49
    %v4109 = vld [vmem:[%s4108] ss:$2 sm:$0x3]
    %s4110 = scalar_lea.vmem [#allocation4], 65
    %v4111 = vld [vmem:[%s4110] ss:$2 sm:$0x3]
    %s4112 = scalar_lea.vmem [#allocation4], 2
    %v4113 = vld [vmem:[%s4112] ss:$2 sm:$0x3]
    %s4114 = scalar_lea.vmem [#allocation4], 18
    %v4115 = vld [vmem:[%s4114] ss:$2 sm:$0x3]
    %s4116 = scalar_lea.vmem [#allocation4], 50
    %v4117 = vld [vmem:[%s4116] ss:$2 sm:$0x3]
    %s4118 = scalar_lea.vmem [#allocation4], 66
    %v4119 = vld [vmem:[%s4118] ss:$2 sm:$0x3]
    %s4120 = scalar_lea.vmem [#allocation4], 3
    %v4121 = vld [vmem:[%s4120] ss:$2 sm:$0x3]
    %s4122 = scalar_lea.vmem [#allocation4], 19
    %v4123 = vld [vmem:[%s4122] ss:$2 sm:$0x3]
    %s4124 = scalar_lea.vmem [#allocation4], 51
    %v4125 = vld [vmem:[%s4124] ss:$2 sm:$0x3]
    %s4126 = scalar_lea.vmem [#allocation4], 67
    %v4127 = vld [vmem:[%s4126] ss:$2 sm:$0x3]
    %v4128 = vld [vmem:[%s4087] ss:$2 sm:$0x3]
    %s4129 = scalar_lea.vmem %s4087, 16 [#allocation4]
    %v4130 = vld [vmem:[%s4129] ss:$2 sm:$0x3]
    %s4131 = scalar_lea.vmem %s4087, 48 [#allocation4]
    %v4132 = vld [vmem:[%s4131] ss:$2 sm:$0x3]
    %s4133 = scalar_lea.vmem %s4087, 64 [#allocation4]
    %v4134 = vld [vmem:[%s4133] ss:$2 sm:$0x3]
    %s4135 = scalar_lea.vmem %s4087, 1 [#allocation4]
    %v4136 = vld [vmem:[%s4135] ss:$2 sm:$0x3]
    %s4137 = scalar_lea.vmem %s4087, 17 [#allocation4]
    %v4138 = vld [vmem:[%s4137] ss:$2 sm:$0x3]
    %s4139 = scalar_lea.vmem %s4087, 49 [#allocation4]
    %v4140 = vld [vmem:[%s4139] ss:$2 sm:$0x3]
    %s4141 = scalar_lea.vmem %s4087, 65 [#allocation4]
    %v4142 = vld [vmem:[%s4141] ss:$2 sm:$0x3]
    %s4143 = scalar_lea.vmem %s4087, 2 [#allocation4]
    %v4144 = vld [vmem:[%s4143] ss:$2 sm:$0x3]
    %s4145 = scalar_lea.vmem %s4087, 18 [#allocation4]
    %v4146 = vld [vmem:[%s4145] ss:$2 sm:$0x3]
    %s4147 = scalar_lea.vmem %s4087, 50 [#allocation4]
    %v4148 = vld [vmem:[%s4147] ss:$2 sm:$0x3]
    %s4149 = scalar_lea.vmem %s4087, 66 [#allocation4]
    %v4150 = vld [vmem:[%s4149] ss:$2 sm:$0x3]
    %s4151 = scalar_lea.vmem %s4087, 3 [#allocation4]
    %v4152 = vld [vmem:[%s4151] ss:$2 sm:$0x3]
    %s4153 = scalar_lea.vmem %s4087, 19 [#allocation4]
    %v4154 = vld [vmem:[%s4153] ss:$2 sm:$0x3]
    %s4155 = scalar_lea.vmem %s4087, 51 [#allocation4]
    %v4156 = vld [vmem:[%s4155] ss:$2 sm:$0x3]
    %s4157 = scalar_lea.vmem %s4087, 67 [#allocation4]
    %v4158 = vld [vmem:[%s4157] ss:$2 sm:$0x3]
    %s4159 = scalar_lea.vmem [#allocation4], 16
    %v4160 = vld [vmem:[%s4159] ss:$2 sm:$0x3]
    %s4161 = scalar_lea.vmem %s4159, 16 [#allocation4]
    %v4162 = vld [vmem:[%s4161] ss:$2 sm:$0x3]
    %s4163 = scalar_lea.vmem %s4159, 48 [#allocation4]
    %v4164 = vld [vmem:[%s4163] ss:$2 sm:$0x3]
    %s4165 = scalar_lea.vmem %s4159, 64 [#allocation4]
    %v4166 = vld [vmem:[%s4165] ss:$2 sm:$0x3]
    %s4167 = scalar_lea.vmem %s4159, 1 [#allocation4]
    %v4168 = vld [vmem:[%s4167] ss:$2 sm:$0x3]
    %s4169 = scalar_lea.vmem %s4159, 17 [#allocation4]
    %v4170 = vld [vmem:[%s4169] ss:$2 sm:$0x3]
    %s4171 = scalar_lea.vmem %s4159, 49 [#allocation4]
    %v4172 = vld [vmem:[%s4171] ss:$2 sm:$0x3]
    %s4173 = scalar_lea.vmem %s4159, 65 [#allocation4]
    %v4174 = vld [vmem:[%s4173] ss:$2 sm:$0x3]
    %s4175 = scalar_lea.vmem %s4159, 2 [#allocation4]
    %v4176 = vld [vmem:[%s4175] ss:$2 sm:$0x3]
    %s4177 = scalar_lea.vmem %s4159, 18 [#allocation4]
    %v4178 = vld [vmem:[%s4177] ss:$2 sm:$0x3]
    %s4179 = scalar_lea.vmem %s4159, 50 [#allocation4]
    %v4180 = vld [vmem:[%s4179] ss:$2 sm:$0x3]
    %s4181 = scalar_lea.vmem %s4159, 66 [#allocation4]
    %v4182 = vld [vmem:[%s4181] ss:$2 sm:$0x3]
    %s4183 = scalar_lea.vmem %s4159, 3 [#allocation4]
    %v4184 = vld [vmem:[%s4183] ss:$2 sm:$0x3]
    %s4185 = scalar_lea.vmem %s4159, 19 [#allocation4]
    %v4186 = vld [vmem:[%s4185] ss:$2 sm:$0x3]
    %s4187 = scalar_lea.vmem %s4159, 51 [#allocation4]
    %v4188 = vld [vmem:[%s4187] ss:$2 sm:$0x3]
    %s4189 = scalar_lea.vmem %s4159, 67 [#allocation4]
    %v4190 = vld [vmem:[%s4189] ss:$2 sm:$0x3]
    %s4191 = scalar_lea.vmem [#allocation4], 24
    %v4192 = vld [vmem:[%s4191] ss:$2 sm:$0x3]
    %s4193 = scalar_lea.vmem %s4191, 16 [#allocation4]
    %v4194 = vld [vmem:[%s4193] ss:$2 sm:$0x3]
    %s4195 = scalar_lea.vmem %s4191, 48 [#allocation4]
    %v4196 = vld [vmem:[%s4195] ss:$2 sm:$0x3]
    %s4197 = scalar_lea.vmem %s4191, 64 [#allocation4]
    %v4198 = vld [vmem:[%s4197] ss:$2 sm:$0x3]
    %s4199 = scalar_lea.vmem %s4191, 1 [#allocation4]
    %v4200 = vld [vmem:[%s4199] ss:$2 sm:$0x3]
    %s4201 = scalar_lea.vmem %s4191, 17 [#allocation4]
    %v4202 = vld [vmem:[%s4201] ss:$2 sm:$0x3]
    %s4203 = scalar_lea.vmem %s4191, 49 [#allocation4]
    %v4204 = vld [vmem:[%s4203] ss:$2 sm:$0x3]
    %s4205 = scalar_lea.vmem %s4191, 65 [#allocation4]
    %v4206 = vld [vmem:[%s4205] ss:$2 sm:$0x3]
    %s4207 = scalar_lea.vmem %s4191, 2 [#allocation4]
    %v4208 = vld [vmem:[%s4207] ss:$2 sm:$0x3]
    %s4209 = scalar_lea.vmem %s4191, 18 [#allocation4]
    %v4210 = vld [vmem:[%s4209] ss:$2 sm:$0x3]
    %s4211 = scalar_lea.vmem %s4191, 50 [#allocation4]
    %v4212 = vld [vmem:[%s4211] ss:$2 sm:$0x3]
    %s4213 = scalar_lea.vmem %s4191, 66 [#allocation4]
    %v4214 = vld [vmem:[%s4213] ss:$2 sm:$0x3]
    %s4215 = scalar_lea.vmem %s4191, 3 [#allocation4]
    %v4216 = vld [vmem:[%s4215] ss:$2 sm:$0x3]
    %s4217 = scalar_lea.vmem %s4191, 19 [#allocation4]
    %v4218 = vld [vmem:[%s4217] ss:$2 sm:$0x3]
    %s4219 = scalar_lea.vmem %s4191, 51 [#allocation4]
    %v4220 = vld [vmem:[%s4219] ss:$2 sm:$0x3]
    %s4221 = scalar_lea.vmem %s4191, 67 [#allocation4]
    %v4222 = vld [vmem:[%s4221] ss:$2 sm:$0x3]
    %4227 = vrot.lane.b32.xlu0 %v4105, 64
    %v4228 = vpop.permute.xlu0 %4227
    %4229 = vrot.lane.b32.xlu0 %v4107, 64
    %v4230 = vpop.permute.xlu0 %4229
    %4231 = vrot.lane.b32.xlu0 %v4109, 64
    %v4232 = vpop.permute.xlu0 %4231
    %4233 = vrot.lane.b32.xlu0 %v4111, 64
    %v4234 = vpop.permute.xlu0 %4233
    %4243 = vrot.lane.b32.xlu0 %v4121, 64
    %v4244 = vpop.permute.xlu0 %4243
    %4245 = vrot.lane.b32.xlu0 %v4123, 64
    %v4246 = vpop.permute.xlu0 %4245
    %4247 = vrot.lane.b32.xlu0 %v4125, 64
    %v4248 = vpop.permute.xlu0 %4247
    %4249 = vrot.lane.b32.xlu0 %v4127, 64
    %v4250 = vpop.permute.xlu0 %4249
    %4259 = vrot.lane.b32.xlu0 %v4136, 64
    %v4260 = vpop.permute.xlu0 %4259
    %4261 = vrot.lane.b32.xlu0 %v4138, 64
    %v4262 = vpop.permute.xlu0 %4261
    %4263 = vrot.lane.b32.xlu0 %v4140, 64
    %v4264 = vpop.permute.xlu0 %4263
    %4265 = vrot.lane.b32.xlu0 %v4142, 64
    %v4266 = vpop.permute.xlu0 %4265
    %4275 = vrot.lane.b32.xlu0 %v4152, 64
    %v4276 = vpop.permute.xlu0 %4275
    %4277 = vrot.lane.b32.xlu0 %v4154, 64
    %v4278 = vpop.permute.xlu0 %4277
    %4279 = vrot.lane.b32.xlu0 %v4156, 64
    %v4280 = vpop.permute.xlu0 %4279
    %4281 = vrot.lane.b32.xlu0 %v4158, 64
    %v4282 = vpop.permute.xlu0 %4281
    %4291 = vrot.lane.b32.xlu0 %v4168, 64
    %v4292 = vpop.permute.xlu0 %4291
    %4293 = vrot.lane.b32.xlu0 %v4170, 64
    %v4294 = vpop.permute.xlu0 %4293
    %4295 = vrot.lane.b32.xlu0 %v4172, 64
    %v4296 = vpop.permute.xlu0 %4295
    %4297 = vrot.lane.b32.xlu0 %v4174, 64
    %v4298 = vpop.permute.xlu0 %4297
    %4307 = vrot.lane.b32.xlu0 %v4184, 64
    %v4308 = vpop.permute.xlu0 %4307
    %4309 = vrot.lane.b32.xlu0 %v4186, 64
    %v4310 = vpop.permute.xlu0 %4309
    %4311 = vrot.lane.b32.xlu0 %v4188, 64
    %v4312 = vpop.permute.xlu0 %4311
    %4313 = vrot.lane.b32.xlu0 %v4190, 64
    %v4314 = vpop.permute.xlu0 %4313
    %4323 = vrot.lane.b32.xlu0 %v4200, 64
    %v4324 = vpop.permute.xlu0 %4323
    %4325 = vrot.lane.b32.xlu0 %v4202, 64
    %v4326 = vpop.permute.xlu0 %4325
    %4327 = vrot.lane.b32.xlu0 %v4204, 64
    %v4328 = vpop.permute.xlu0 %4327
    %4329 = vrot.lane.b32.xlu0 %v4206, 64
    %v4330 = vpop.permute.xlu0 %4329
    %4339 = vrot.lane.b32.xlu0 %v4216, 64
    %v4340 = vpop.permute.xlu0 %4339
    %4341 = vrot.lane.b32.xlu0 %v4218, 64
    %v4342 = vpop.permute.xlu0 %4341
    %4343 = vrot.lane.b32.xlu0 %v4220, 64
    %v4344 = vpop.permute.xlu0 %4343
    %4345 = vrot.lane.b32.xlu0 %v4222, 64
    %v4346 = vpop.permute.xlu0 %4345
    %v4351 = vsel %vm2525, %v4097, %v4228
    %v4352 = vsel %vm2525, %v4099, %v4230
    %v4353 = vsel %vm2525, %v4101, %v4232
    %v4354 = vsel %vm2525, %v4103, %v4234
    %v4355 = vsel %vm2525, %v4113, %v4244
    %v4356 = vsel %vm2525, %v4115, %v4246
    %v4357 = vsel %vm2525, %v4117, %v4248
    %v4358 = vsel %vm2525, %v4119, %v4250
    %v4359 = vsel %vm2525, %v4128, %v4260
    %v4360 = vsel %vm2525, %v4130, %v4262
    %v4361 = vsel %vm2525, %v4132, %v4264
    %v4362 = vsel %vm2525, %v4134, %v4266
    %v4363 = vsel %vm2525, %v4144, %v4276
    %v4364 = vsel %vm2525, %v4146, %v4278
    %v4365 = vsel %vm2525, %v4148, %v4280
    %v4366 = vsel %vm2525, %v4150, %v4282
    %v4367 = vsel %vm2525, %v4160, %v4292
    %v4368 = vsel %vm2525, %v4162, %v4294
    %v4369 = vsel %vm2525, %v4164, %v4296
    %v4370 = vsel %vm2525, %v4166, %v4298
    %v4371 = vsel %vm2525, %v4176, %v4308
    %v4372 = vsel %vm2525, %v4178, %v4310
    %v4373 = vsel %vm2525, %v4180, %v4312
    %v4374 = vsel %vm2525, %v4182, %v4314
    %v4375 = vsel %vm2525, %v4192, %v4324
    %v4376 = vsel %vm2525, %v4194, %v4326
    %v4377 = vsel %vm2525, %v4196, %v4328
    %v4378 = vsel %vm2525, %v4198, %v4330
    %v4379 = vsel %vm2525, %v4208, %v4340
    %v4380 = vsel %vm2525, %v4210, %v4342
    %v4381 = vsel %vm2525, %v4212, %v4344
    %v4382 = vsel %vm2525, %v4214, %v4346
    %v4415 = vcombine.low %v4351, %v4355
    %v4416 = vcombine.low %v4359, %v4363
    %v4418 = vunpack.c.l.s4 1983009808
    %v4419 = vunpack.c.0.s8 %v4418
    %v4420 = vlaneseq
    %v4421 = vshrl.u32 %v4420, 7
    %v4422 = vsub.s32 %v4419, %v4421
    %v4423 = vrot.slane %v4415, %v4422
    %v4425 = vunpack.c.l.s4 1983009808
    %v4426 = vunpack.c.0.s8 %v4425
    %v4427 = vlaneseq
    %v4428 = vshrl.u32 %v4427, 7
    %v4429 = vsub.s32 %v4426, %v4428
    %v4430 = vrot.slane %v4416, %v4429
    %v4431 = vcombine.low %v4423, %v4430
    %v4432 = vcombine.low %v4367, %v4371
    %v4433 = vcombine.low %v4375, %v4379
    %v4435 = vunpack.c.l.s4 1983009808
    %v4436 = vunpack.c.0.s8 %v4435
    %v4437 = vlaneseq
    %v4438 = vshrl.u32 %v4437, 7
    %v4439 = vsub.s32 %v4436, %v4438
    %v4440 = vrot.slane %v4432, %v4439
    %v4442 = vunpack.c.l.s4 1983009808
    %v4443 = vunpack.c.0.s8 %v4442
    %v4444 = vlaneseq
    %v4445 = vshrl.u32 %v4444, 7
    %v4446 = vsub.s32 %v4443, %v4445
    %v4447 = vrot.slane %v4433, %v4446
    %v4448 = vcombine.low %v4440, %v4447
    %v4449 = vcombine.low %v4352, %v4356
    %v4450 = vcombine.low %v4360, %v4364
    %v4452 = vunpack.c.l.s4 1983009808
    %v4453 = vunpack.c.0.s8 %v4452
    %v4454 = vlaneseq
    %v4455 = vshrl.u32 %v4454, 7
    %v4456 = vsub.s32 %v4453, %v4455
    %v4457 = vrot.slane %v4449, %v4456
    %v4459 = vunpack.c.l.s4 1983009808
    %v4460 = vunpack.c.0.s8 %v4459
    %v4461 = vlaneseq
    %v4462 = vshrl.u32 %v4461, 7
    %v4463 = vsub.s32 %v4460, %v4462
    %v4464 = vrot.slane %v4450, %v4463
    %v4465 = vcombine.low %v4457, %v4464
    %v4466 = vcombine.low %v4368, %v4372
    %v4467 = vcombine.low %v4376, %v4380
    %v4469 = vunpack.c.l.s4 1983009808
    %v4470 = vunpack.c.0.s8 %v4469
    %v4471 = vlaneseq
    %v4472 = vshrl.u32 %v4471, 7
    %v4473 = vsub.s32 %v4470, %v4472
    %v4474 = vrot.slane %v4466, %v4473
    %v4476 = vunpack.c.l.s4 1983009808
    %v4477 = vunpack.c.0.s8 %v4476
    %v4478 = vlaneseq
    %v4479 = vshrl.u32 %v4478, 7
    %v4480 = vsub.s32 %v4477, %v4479
    %v4481 = vrot.slane %v4467, %v4480
    %v4482 = vcombine.low %v4474, %v4481
    %v4483 = vcombine.low %v4353, %v4357
    %v4484 = vcombine.low %v4361, %v4365
    %v4486 = vunpack.c.l.s4 1983009808
    %v4487 = vunpack.c.0.s8 %v4486
    %v4488 = vlaneseq
    %v4489 = vshrl.u32 %v4488, 7
    %v4490 = vsub.s32 %v4487, %v4489
    %v4491 = vrot.slane %v4483, %v4490
    %v4493 = vunpack.c.l.s4 1983009808
    %v4494 = vunpack.c.0.s8 %v4493
    %v4495 = vlaneseq
    %v4496 = vshrl.u32 %v4495, 7
    %v4497 = vsub.s32 %v4494, %v4496
    %v4498 = vrot.slane %v4484, %v4497
    %v4499 = vcombine.low %v4491, %v4498
    %v4500 = vcombine.low %v4369, %v4373
    %v4501 = vcombine.low %v4377, %v4381
    %v4503 = vunpack.c.l.s4 1983009808
    %v4504 = vunpack.c.0.s8 %v4503
    %v4505 = vlaneseq
    %v4506 = vshrl.u32 %v4505, 7
    %v4507 = vsub.s32 %v4504, %v4506
    %v4508 = vrot.slane %v4500, %v4507
    %v4510 = vunpack.c.l.s4 1983009808
    %v4511 = vunpack.c.0.s8 %v4510
    %v4512 = vlaneseq
    %v4513 = vshrl.u32 %v4512, 7
    %v4514 = vsub.s32 %v4511, %v4513
    %v4515 = vrot.slane %v4501, %v4514
    %v4516 = vcombine.low %v4508, %v4515
    %v4517 = vcombine.low %v4354, %v4358
    %v4518 = vcombine.low %v4362, %v4366
    %v4520 = vunpack.c.l.s4 1983009808
    %v4521 = vunpack.c.0.s8 %v4520
    %v4522 = vlaneseq
    %v4523 = vshrl.u32 %v4522, 7
    %v4524 = vsub.s32 %v4521, %v4523
    %v4525 = vrot.slane %v4517, %v4524
    %v4527 = vunpack.c.l.s4 1983009808
    %v4528 = vunpack.c.0.s8 %v4527
    %v4529 = vlaneseq
    %v4530 = vshrl.u32 %v4529, 7
    %v4531 = vsub.s32 %v4528, %v4530
    %v4532 = vrot.slane %v4518, %v4531
    %v4533 = vcombine.low %v4525, %v4532
    %v4534 = vcombine.low %v4370, %v4374
    %v4535 = vcombine.low %v4378, %v4382
    %v4537 = vunpack.c.l.s4 1983009808
    %v4538 = vunpack.c.0.s8 %v4537
    %v4539 = vlaneseq
    %v4540 = vshrl.u32 %v4539, 7
    %v4541 = vsub.s32 %v4538, %v4540
    %v4542 = vrot.slane %v4534, %v4541
    %v4544 = vunpack.c.l.s4 1983009808
    %v4545 = vunpack.c.0.s8 %v4544
    %v4546 = vlaneseq
    %v4547 = vshrl.u32 %v4546, 7
    %v4548 = vsub.s32 %v4545, %v4547
    %v4549 = vrot.slane %v4535, %v4548
    %v4550 = vcombine.low %v4542, %v4549
    %v4551 = vld [vmem:[#allocation6] sm:$0xff]
    %v4552 = vld [vmem:[#allocation6 + $0x8] sm:$0xff]
    %v4553 = vld [vmem:[#allocation6 + $0x10] sm:$0xff]
    %v4554 = vld [vmem:[#allocation6 + $0x18] sm:$0xff]
    %v4555 = vld [vmem:[#allocation6 + $0x20] sm:$0xff]
    %v4556 = vld [vmem:[#allocation6 + $0x28] sm:$0xff]
    %v4557 = vld [vmem:[#allocation6 + $0x30] sm:$0xff]
    %v4558 = vld [vmem:[#allocation6 + $0x38] sm:$0xff]
    %v4559 = vld [vmem:[#allocation6 + $0x40] sm:$0xff]
    %v4560 = vld [vmem:[#allocation6 + $0x48] sm:$0xff]
    %v4561 = vld [vmem:[#allocation6 + $0x50] sm:$0xff]
    %v4562 = vld [vmem:[#allocation6 + $0x58] sm:$0xff]
    %v4563 = vld [vmem:[#allocation6 + $0x60] sm:$0xff]
    %v4564 = vld [vmem:[#allocation6 + $0x68] sm:$0xff]
    %v4565 = vld [vmem:[#allocation6 + $0x70] sm:$0xff]
    %v4566 = vld [vmem:[#allocation6 + $0x78] sm:$0xff]
    %v4567 = vld [vmem:[#allocation6 + $0x80] sm:$0xff]
    %v4568 = vld [vmem:[#allocation6 + $0x88] sm:$0xff]
    %v4569 = vld [vmem:[#allocation6 + $0x90] sm:$0xff]
    %v4570 = vld [vmem:[#allocation6 + $0x98] sm:$0xff]
    %v4571 = vld [vmem:[#allocation6 + $0xa0] sm:$0xff]
    %v4572 = vld [vmem:[#allocation6 + $0xa8] sm:$0xff]
    %v4573 = vld [vmem:[#allocation6 + $0xb0] sm:$0xff]
    %v4574 = vld [vmem:[#allocation6 + $0xb8] sm:$0xff]
    %v4575 = vld [vmem:[#allocation6 + $0xc0] sm:$0xff]
    %v4576 = vld [vmem:[#allocation6 + $0xc8] sm:$0xff]
    %v4577 = vld [vmem:[#allocation6 + $0xd0] sm:$0xff]
    %v4578 = vld [vmem:[#allocation6 + $0xd8] sm:$0xff]
    %v4579 = vld [vmem:[#allocation6 + $0xe0] sm:$0xff]
    %v4580 = vld [vmem:[#allocation6 + $0xe8] sm:$0xff]
    %v4581 = vld [vmem:[#allocation6 + $0xf0] sm:$0xff]
    %v4582 = vld [vmem:[#allocation6 + $0xf8] sm:$0xff]
    %v4583 = vld [vmem:[#allocation6 + $0x100] sm:$0xff]
    %v4584 = vld [vmem:[#allocation6 + $0x108] sm:$0xff]
    %v4585 = vld [vmem:[#allocation6 + $0x110] sm:$0xff]
    %v4586 = vld [vmem:[#allocation6 + $0x118] sm:$0xff]
    %v4587 = vld [vmem:[#allocation6 + $0x120] sm:$0xff]
    %v4588 = vld [vmem:[#allocation6 + $0x128] sm:$0xff]
    %v4589 = vld [vmem:[#allocation6 + $0x130] sm:$0xff]
    %v4590 = vld [vmem:[#allocation6 + $0x138] sm:$0xff]
    %v4591 = vld [vmem:[#allocation6 + $0x140] sm:$0xff]
    %v4592 = vld [vmem:[#allocation6 + $0x148] sm:$0xff]
    %v4593 = vld [vmem:[#allocation6 + $0x150] sm:$0xff]
    %v4594 = vld [vmem:[#allocation6 + $0x158] sm:$0xff]
    %v4595 = vld [vmem:[#allocation6 + $0x160] sm:$0xff]
    %v4596 = vld [vmem:[#allocation6 + $0x168] sm:$0xff]
    %v4597 = vld [vmem:[#allocation6 + $0x170] sm:$0xff]
    %v4598 = vld [vmem:[#allocation6 + $0x178] sm:$0xff]
    %v4599 = vld [vmem:[#allocation6 + $0x180] sm:$0xff]
    %v4600 = vld [vmem:[#allocation6 + $0x188] sm:$0xff]
    %v4601 = vld [vmem:[#allocation6 + $0x190] sm:$0xff]
    %v4602 = vld [vmem:[#allocation6 + $0x198] sm:$0xff]
    %v4603 = vld [vmem:[#allocation6 + $0x1a0] sm:$0xff]
    %v4604 = vld [vmem:[#allocation6 + $0x1a8] sm:$0xff]
    %v4605 = vld [vmem:[#allocation6 + $0x1b0] sm:$0xff]
    %v4606 = vld [vmem:[#allocation6 + $0x1b8] sm:$0xff]
    %v4607 = vld [vmem:[#allocation6 + $0x1c0] sm:$0xff]
    %v4608 = vld [vmem:[#allocation6 + $0x1c8] sm:$0xff]
    %v4609 = vld [vmem:[#allocation6 + $0x1d0] sm:$0xff]
    %v4610 = vld [vmem:[#allocation6 + $0x1d8] sm:$0xff]
    %v4611 = vld [vmem:[#allocation6 + $0x1e0] sm:$0xff]
    %v4612 = vld [vmem:[#allocation6 + $0x1e8] sm:$0xff]
    %v4613 = vld [vmem:[#allocation6 + $0x1f0] sm:$0xff]
    %v4614 = vld [vmem:[#allocation6 + $0x1f8] sm:$0xff]
    %v4615 = vld [vmem:[#allocation6 + $0x200] sm:$0xff]
    %v4616 = vld [vmem:[#allocation6 + $0x208] sm:$0xff]
    %v4617 = vld [vmem:[#allocation6 + $0x210] sm:$0xff]
    %v4618 = vld [vmem:[#allocation6 + $0x218] sm:$0xff]
    %v4619 = vld [vmem:[#allocation6 + $0x220] sm:$0xff]
    %v4620 = vld [vmem:[#allocation6 + $0x228] sm:$0xff]
    %v4621 = vld [vmem:[#allocation6 + $0x230] sm:$0xff]
    %v4622 = vld [vmem:[#allocation6 + $0x238] sm:$0xff]
    %v4623 = vld [vmem:[#allocation6 + $0x240] sm:$0xff]
    %v4624 = vld [vmem:[#allocation6 + $0x248] sm:$0xff]
    %v4625 = vld [vmem:[#allocation6 + $0x250] sm:$0xff]
    %v4626 = vld [vmem:[#allocation6 + $0x258] sm:$0xff]
    %v4627 = vld [vmem:[#allocation6 + $0x260] sm:$0xff]
    %v4628 = vld [vmem:[#allocation6 + $0x268] sm:$0xff]
    %v4629 = vld [vmem:[#allocation6 + $0x270] sm:$0xff]
    %v4630 = vld [vmem:[#allocation6 + $0x278] sm:$0xff]
    %v4631 = vld [vmem:[#allocation6 + $0x280] sm:$0xff]
    %v4632 = vld [vmem:[#allocation6 + $0x288] sm:$0xff]
    %v4633 = vld [vmem:[#allocation6 + $0x290] sm:$0xff]
    %v4634 = vld [vmem:[#allocation6 + $0x298] sm:$0xff]
    %v4635 = vld [vmem:[#allocation6 + $0x2a0] sm:$0xff]
    %v4636 = vld [vmem:[#allocation6 + $0x2a8] sm:$0xff]
    %v4637 = vld [vmem:[#allocation6 + $0x2b0] sm:$0xff]
    %v4638 = vld [vmem:[#allocation6 + $0x2b8] sm:$0xff]
    %v4639 = vld [vmem:[#allocation6 + $0x2c0] sm:$0xff]
    %v4640 = vld [vmem:[#allocation6 + $0x2c8] sm:$0xff]
    %v4641 = vld [vmem:[#allocation6 + $0x2d0] sm:$0xff]
    %v4642 = vld [vmem:[#allocation6 + $0x2d8] sm:$0xff]
    %v4643 = vld [vmem:[#allocation6 + $0x2e0] sm:$0xff]
    %v4644 = vld [vmem:[#allocation6 + $0x2e8] sm:$0xff]
    %v4645 = vld [vmem:[#allocation6 + $0x2f0] sm:$0xff]
    %v4646 = vld [vmem:[#allocation6 + $0x2f8] sm:$0xff]
    %v4647 = vld [vmem:[#allocation6 + $0x300] sm:$0xff]
    %v4648 = vld [vmem:[#allocation6 + $0x308] sm:$0xff]
    %v4649 = vld [vmem:[#allocation6 + $0x310] sm:$0xff]
    %v4650 = vld [vmem:[#allocation6 + $0x318] sm:$0xff]
    %v4651 = vld [vmem:[#allocation6 + $0x320] sm:$0xff]
    %v4652 = vld [vmem:[#allocation6 + $0x328] sm:$0xff]
    %v4653 = vld [vmem:[#allocation6 + $0x330] sm:$0xff]
    %v4654 = vld [vmem:[#allocation6 + $0x338] sm:$0xff]
    %v4655 = vld [vmem:[#allocation6 + $0x340] sm:$0xff]
    %v4656 = vld [vmem:[#allocation6 + $0x348] sm:$0xff]
    %v4657 = vld [vmem:[#allocation6 + $0x350] sm:$0xff]
    %v4658 = vld [vmem:[#allocation6 + $0x358] sm:$0xff]
    %v4659 = vld [vmem:[#allocation6 + $0x360] sm:$0xff]
    %v4660 = vld [vmem:[#allocation6 + $0x368] sm:$0xff]
    %v4661 = vld [vmem:[#allocation6 + $0x370] sm:$0xff]
    %v4662 = vld [vmem:[#allocation6 + $0x378] sm:$0xff]
    %v4663 = vld [vmem:[#allocation6 + $0x380] sm:$0xff]
    %v4664 = vld [vmem:[#allocation6 + $0x388] sm:$0xff]
    %v4665 = vld [vmem:[#allocation6 + $0x390] sm:$0xff]
    %v4666 = vld [vmem:[#allocation6 + $0x398] sm:$0xff]
    %v4667 = vld [vmem:[#allocation6 + $0x3a0] sm:$0xff]
    %v4668 = vld [vmem:[#allocation6 + $0x3a8] sm:$0xff]
    %v4669 = vld [vmem:[#allocation6 + $0x3b0] sm:$0xff]
    %v4670 = vld [vmem:[#allocation6 + $0x3b8] sm:$0xff]
    %v4671 = vld [vmem:[#allocation6 + $0x3c0] sm:$0xff]
    %v4672 = vld [vmem:[#allocation6 + $0x3c8] sm:$0xff]
    %v4673 = vld [vmem:[#allocation6 + $0x3d0] sm:$0xff]
    %v4674 = vld [vmem:[#allocation6 + $0x3d8] sm:$0xff]
    %v4675 = vld [vmem:[#allocation6 + $0x3e0] sm:$0xff]
    %v4676 = vld [vmem:[#allocation6 + $0x3e8] sm:$0xff]
    %v4677 = vld [vmem:[#allocation6 + $0x3f0] sm:$0xff]
    %v4678 = vld [vmem:[#allocation6 + $0x3f8] sm:$0xff]
    %v4679 = vld [vmem:[%s8] sm:$0x1]
    %v4681 = vlaneseq
    %v4682 = vshrl.u32 %v4681, 7
    %v4683 = vsub.s32 0, %v4682
    %v4684 = vrot.slane %v4679, %v4683
    %v4686 = vcombine.low %v4431, %v4465
    %v4687 = vcombine.high %v4431, %v4465
    %v4688 = vcombine.low %v4499, %v4533
    %v4689 = vcombine.high %v4499, %v4533
    %v4691 = vunpack.c.l.s4 1983009808
    %v4692 = vunpack.c.0.s8 %v4691
    %v4693 = vlaneseq
    %v4694 = vshrl.u32 %v4693, 7
    %v4695 = vsub.s32 %v4692, %v4694
    %v4696 = vrot.slane %v4686, %v4695
    %v4698 = vunpack.c.l.s4 1983009808
    %v4699 = vunpack.c.0.s8 %v4698
    %v4700 = vlaneseq
    %v4701 = vshrl.u32 %v4700, 7
    %v4702 = vsub.s32 %v4699, %v4701
    %v4703 = vrot.slane %v4687, %v4702
    %v4705 = vunpack.c.l.s4 1983009808
    %v4706 = vunpack.c.0.s8 %v4705
    %v4707 = vlaneseq
    %v4708 = vshrl.u32 %v4707, 7
    %v4709 = vsub.s32 %v4706, %v4708
    %v4710 = vrot.slane %v4688, %v4709
    %v4712 = vunpack.c.l.s4 1983009808
    %v4713 = vunpack.c.0.s8 %v4712
    %v4714 = vlaneseq
    %v4715 = vshrl.u32 %v4714, 7
    %v4716 = vsub.s32 %v4713, %v4715
    %v4717 = vrot.slane %v4689, %v4716
    %v4718 = vcombine.low %v4696, %v4710
    %v4719 = vcombine.high %v4696, %v4710
    %v4720 = vcombine.low %v4703, %v4717
    %v4721 = vcombine.high %v4703, %v4717
    %v4722 = vcombine.low %v4448, %v4482
    %v4723 = vcombine.high %v4448, %v4482
    %v4724 = vcombine.low %v4516, %v4550
    %v4725 = vcombine.high %v4516, %v4550
    %v4727 = vunpack.c.l.s4 1983009808
    %v4728 = vunpack.c.0.s8 %v4727
    %v4729 = vlaneseq
    %v4730 = vshrl.u32 %v4729, 7
    %v4731 = vsub.s32 %v4728, %v4730
    %v4732 = vrot.slane %v4722, %v4731
    %v4734 = vunpack.c.l.s4 1983009808
    %v4735 = vunpack.c.0.s8 %v4734
    %v4736 = vlaneseq
    %v4737 = vshrl.u32 %v4736, 7
    %v4738 = vsub.s32 %v4735, %v4737
    %v4739 = vrot.slane %v4723, %v4738
    %v4741 = vunpack.c.l.s4 1983009808
    %v4742 = vunpack.c.0.s8 %v4741
    %v4743 = vlaneseq
    %v4744 = vshrl.u32 %v4743, 7
    %v4745 = vsub.s32 %v4742, %v4744
    %v4746 = vrot.slane %v4724, %v4745
    %v4748 = vunpack.c.l.s4 1983009808
    %v4749 = vunpack.c.0.s8 %v4748
    %v4750 = vlaneseq
    %v4751 = vshrl.u32 %v4750, 7
    %v4752 = vsub.s32 %v4749, %v4751
    %v4753 = vrot.slane %v4725, %v4752
    %v4754 = vcombine.low %v4732, %v4746
    %v4755 = vcombine.high %v4732, %v4746
    %v4756 = vcombine.low %v4739, %v4753
    %v4757 = vcombine.high %v4739, %v4753
    %4766 = vmatprep.subr.mxu0 0.0
    %4767 = vmatpush1.msra.mxu0 %v4551
    %4768 = vmatprep.subr.mxu0 0.0
    %4769 = vmatpush1.msra.mxu0 %v4552
    %4770 = vmatprep.subr.mxu0 0.0
    %4771 = vmatpush1.msra.mxu0 %v4553
    %4772 = vmatprep.subr.mxu0 0.0
    %4773 = vmatpush1.msra.mxu0 %v4554
    %4774 = vmatprep.subr.mxu0 0.0
    %4775 = vmatpush1.msra.mxu0 %v4555
    %4776 = vmatprep.subr.mxu0 0.0
    %4777 = vmatpush1.msra.mxu0 %v4556
    %4778 = vmatprep.subr.mxu0 0.0
    %4779 = vmatpush1.msra.mxu0 %v4557
    %4780 = vmatprep.subr.mxu0 0.0
    %4781 = vmatpush1.msra.mxu0 %v4558
    %4782 = vmatprep.subr.mxu0 0.0
    %4783 = vmatpush1.msra.mxu0 %v4559
    %4784 = vmatprep.subr.mxu0 0.0
    %4785 = vmatpush1.msra.mxu0 %v4560
    %4786 = vmatprep.subr.mxu0 0.0
    %4787 = vmatpush1.msra.mxu0 %v4561
    %4788 = vmatprep.subr.mxu0 0.0
    %4789 = vmatpush1.msra.mxu0 %v4562
    %4790 = vmatprep.subr.mxu0 0.0
    %4791 = vmatpush1.msra.mxu0 %v4563
    %4792 = vmatprep.subr.mxu0 0.0
    %4793 = vmatpush1.msra.mxu0 %v4564
    %4794 = vmatprep.subr.mxu0 0.0
    %4795 = vmatpush1.msra.mxu0 %v4565
    %4796 = vmatprep.subr.mxu0 0.0
    %4797 = vmatpush1.msra.mxu0 %v4566
    %4798 = vmatprep.subr.mxu0 0.0
    %4799 = vmatpush1.msra.mxu0 %v4567
    %4800 = vmatprep.subr.mxu0 0.0
    %4801 = vmatpush1.msra.mxu0 %v4568
    %4802 = vmatprep.subr.mxu0 0.0
    %4803 = vmatpush1.msra.mxu0 %v4569
    %4804 = vmatprep.subr.mxu0 0.0
    %4805 = vmatpush1.msra.mxu0 %v4570
    %4806 = vmatprep.subr.mxu0 0.0
    %4807 = vmatpush1.msra.mxu0 %v4571
    %4808 = vmatprep.subr.mxu0 0.0
    %4809 = vmatpush1.msra.mxu0 %v4572
    %4810 = vmatprep.subr.mxu0 0.0
    %4811 = vmatpush1.msra.mxu0 %v4573
    %4812 = vmatprep.subr.mxu0 0.0
    %4813 = vmatpush1.msra.mxu0 %v4574
    %4814 = vmatprep.subr.mxu0 0.0
    %4815 = vmatpush1.msra.mxu0 %v4575
    %4816 = vmatprep.subr.mxu0 0.0
    %4817 = vmatpush1.msra.mxu0 %v4576
    %4818 = vmatprep.subr.mxu0 0.0
    %4819 = vmatpush1.msra.mxu0 %v4577
    %4820 = vmatprep.subr.mxu0 0.0
    %4821 = vmatpush1.msra.mxu0 %v4578
    %4822 = vmatprep.subr.mxu0 0.0
    %4823 = vmatpush1.msra.mxu0 %v4579
    %4824 = vmatprep.subr.mxu0 0.0
    %4825 = vmatpush1.msra.mxu0 %v4580
    %4826 = vmatprep.subr.mxu0 0.0
    %4827 = vmatpush1.msra.mxu0 %v4581
    %4828 = vmatprep.subr.mxu0 0.0
    %4829 = vmatpush1.msra.mxu0 %v4582
    %4830 = vmatprep.mubr.f32.mxu0 %v4719
    %4831 = vmatmul.mubr.f32.gmra.mrb[0].mxu0 %v4718
    %v4832 = vpop.f32.mrb[0].mxu0
    %v4833 = vadd.f32 %v4684, %v4832
    %v4834 = vpop.f32.mrb[0].mxu0
    %4835 = vdwg.mxu0
    %4836 = vmatprep.subr.mxu0 0.0
    %4837 = vmatpush1.msra.mxu0 %v4583
    %4838 = vmatprep.subr.mxu0 0.0
    %4839 = vmatpush1.msra.mxu0 %v4584
    %4840 = vmatprep.subr.mxu0 0.0
    %4841 = vmatpush1.msra.mxu0 %v4585
    %4842 = vmatprep.subr.mxu0 0.0
    %4843 = vmatpush1.msra.mxu0 %v4586
    %4844 = vmatprep.subr.mxu0 0.0
    %4845 = vmatpush1.msra.mxu0 %v4587
    %4846 = vmatprep.subr.mxu0 0.0
    %4847 = vmatpush1.msra.mxu0 %v4588
    %4848 = vmatprep.subr.mxu0 0.0
    %4849 = vmatpush1.msra.mxu0 %v4589
    %4850 = vmatprep.subr.mxu0 0.0
    %4851 = vmatpush1.msra.mxu0 %v4590
    %4852 = vmatprep.subr.mxu0 0.0
    %4853 = vmatpush1.msra.mxu0 %v4591
    %4854 = vmatprep.subr.mxu0 0.0
    %4855 = vmatpush1.msra.mxu0 %v4592
    %4856 = vmatprep.subr.mxu0 0.0
    %4857 = vmatpush1.msra.mxu0 %v4593
    %4858 = vmatprep.subr.mxu0 0.0
    %4859 = vmatpush1.msra.mxu0 %v4594
    %4860 = vmatprep.subr.mxu0 0.0
    %4861 = vmatpush1.msra.mxu0 %v4595
    %4862 = vmatprep.subr.mxu0 0.0
    %4863 = vmatpush1.msra.mxu0 %v4596
    %4864 = vmatprep.subr.mxu0 0.0
    %4865 = vmatpush1.msra.mxu0 %v4597
    %4866 = vmatprep.subr.mxu0 0.0
    %4867 = vmatpush1.msra.mxu0 %v4598
    %4868 = vmatprep.subr.mxu0 0.0
    %4869 = vmatpush1.msra.mxu0 %v4599
    %4870 = vmatprep.subr.mxu0 0.0
    %4871 = vmatpush1.msra.mxu0 %v4600
    %4872 = vmatprep.subr.mxu0 0.0
    %4873 = vmatpush1.msra.mxu0 %v4601
    %4874 = vmatprep.subr.mxu0 0.0
    %4875 = vmatpush1.msra.mxu0 %v4602
    %4876 = vmatprep.subr.mxu0 0.0
    %4877 = vmatpush1.msra.mxu0 %v4603
    %4878 = vmatprep.subr.mxu0 0.0
    %4879 = vmatpush1.msra.mxu0 %v4604
    %4880 = vmatprep.subr.mxu0 0.0
    %4881 = vmatpush1.msra.mxu0 %v4605
    %4882 = vmatprep.subr.mxu0 0.0
    %4883 = vmatpush1.msra.mxu0 %v4606
    %4884 = vmatprep.subr.mxu0 0.0
    %4885 = vmatpush1.msra.mxu0 %v4607
    %4886 = vmatprep.subr.mxu0 0.0
    %4887 = vmatpush1.msra.mxu0 %v4608
    %4888 = vmatprep.subr.mxu0 0.0
    %4889 = vmatpush1.msra.mxu0 %v4609
    %4890 = vmatprep.subr.mxu0 0.0
    %4891 = vmatpush1.msra.mxu0 %v4610
    %4892 = vmatprep.subr.mxu0 0.0
    %4893 = vmatpush1.msra.mxu0 %v4611
    %4894 = vmatprep.subr.mxu0 0.0
    %4895 = vmatpush1.msra.mxu0 %v4612
    %4896 = vmatprep.subr.mxu0 0.0
    %4897 = vmatpush1.msra.mxu0 %v4613
    %4898 = vmatprep.subr.mxu0 0.0
    %4899 = vmatpush1.msra.mxu0 %v4614
    %4900 = vmatprep.mubr.f32.mxu0 %v4721
    %4901 = vmatmul.mubr.f32.gmra.mrb[0].mxu0 %v4720
    %v4902 = vpop.f32.mrb[0].mxu0
    %v4903 = vadd.f32 %v4833, %v4902
    %v4904 = vpop.f32.mrb[0].mxu0
    %4905 = vdwg.mxu0
    %4906 = vmatprep.subr.mxu0 0.0
    %4907 = vmatpush1.msra.mxu0 %v4615
    %4908 = vmatprep.subr.mxu0 0.0
    %4909 = vmatpush1.msra.mxu0 %v4616
    %4910 = vmatprep.subr.mxu0 0.0
    %4911 = vmatpush1.msra.mxu0 %v4617
    %4912 = vmatprep.subr.mxu0 0.0
    %4913 = vmatpush1.msra.mxu0 %v4618
    %4914 = vmatprep.subr.mxu0 0.0
    %4915 = vmatpush1.msra.mxu0 %v4619
    %4916 = vmatprep.subr.mxu0 0.0
    %4917 = vmatpush1.msra.mxu0 %v4620
    %4918 = vmatprep.subr.mxu0 0.0
    %4919 = vmatpush1.msra.mxu0 %v4621
    %4920 = vmatprep.subr.mxu0 0.0
    %4921 = vmatpush1.msra.mxu0 %v4622
    %4922 = vmatprep.subr.mxu0 0.0
    %4923 = vmatpush1.msra.mxu0 %v4623
    %4924 = vmatprep.subr.mxu0 0.0
    %4925 = vmatpush1.msra.mxu0 %v4624
    %4926 = vmatprep.subr.mxu0 0.0
    %4927 = vmatpush1.msra.mxu0 %v4625
    %4928 = vmatprep.subr.mxu0 0.0
    %4929 = vmatpush1.msra.mxu0 %v4626
    %4930 = vmatprep.subr.mxu0 0.0
    %4931 = vmatpush1.msra.mxu0 %v4627
    %4932 = vmatprep.subr.mxu0 0.0
    %4933 = vmatpush1.msra.mxu0 %v4628
    %4934 = vmatprep.subr.mxu0 0.0
    %4935 = vmatpush1.msra.mxu0 %v4629
    %4936 = vmatprep.subr.mxu0 0.0
    %4937 = vmatpush1.msra.mxu0 %v4630
    %4938 = vmatprep.subr.mxu0 0.0
    %4939 = vmatpush1.msra.mxu0 %v4631
    %4940 = vmatprep.subr.mxu0 0.0
    %4941 = vmatpush1.msra.mxu0 %v4632
    %4942 = vmatprep.subr.mxu0 0.0
    %4943 = vmatpush1.msra.mxu0 %v4633
    %4944 = vmatprep.subr.mxu0 0.0
    %4945 = vmatpush1.msra.mxu0 %v4634
    %4946 = vmatprep.subr.mxu0 0.0
    %4947 = vmatpush1.msra.mxu0 %v4635
    %4948 = vmatprep.subr.mxu0 0.0
    %4949 = vmatpush1.msra.mxu0 %v4636
    %4950 = vmatprep.subr.mxu0 0.0
    %4951 = vmatpush1.msra.mxu0 %v4637
    %4952 = vmatprep.subr.mxu0 0.0
    %4953 = vmatpush1.msra.mxu0 %v4638
    %4954 = vmatprep.subr.mxu0 0.0
    %4955 = vmatpush1.msra.mxu0 %v4639
    %4956 = vmatprep.subr.mxu0 0.0
    %4957 = vmatpush1.msra.mxu0 %v4640
    %4958 = vmatprep.subr.mxu0 0.0
    %4959 = vmatpush1.msra.mxu0 %v4641
    %4960 = vmatprep.subr.mxu0 0.0
    %4961 = vmatpush1.msra.mxu0 %v4642
    %4962 = vmatprep.subr.mxu0 0.0
    %4963 = vmatpush1.msra.mxu0 %v4643
    %4964 = vmatprep.subr.mxu0 0.0
    %4965 = vmatpush1.msra.mxu0 %v4644
    %4966 = vmatprep.subr.mxu0 0.0
    %4967 = vmatpush1.msra.mxu0 %v4645
    %4968 = vmatprep.subr.mxu0 0.0
    %4969 = vmatpush1.msra.mxu0 %v4646
    %4970 = vmatprep.mubr.f32.mxu0 %v4755
    %4971 = vmatmul.mubr.f32.gmra.mrb[0].mxu0 %v4754
    %v4972 = vpop.f32.mrb[0].mxu0
    %v4973 = vadd.f32 %v4903, %v4972
    %v4974 = vpop.f32.mrb[0].mxu0
    %4975 = vdwg.mxu0
    %4976 = vmatprep.subr.mxu0 0.0
    %4977 = vmatpush1.msra.mxu0 %v4647
    %4978 = vmatprep.subr.mxu0 0.0
    %4979 = vmatpush1.msra.mxu0 %v4648
    %4980 = vmatprep.subr.mxu0 0.0
    %4981 = vmatpush1.msra.mxu0 %v4649
    %4982 = vmatprep.subr.mxu0 0.0
    %4983 = vmatpush1.msra.mxu0 %v4650
    %4984 = vmatprep.subr.mxu0 0.0
    %4985 = vmatpush1.msra.mxu0 %v4651
    %4986 = vmatprep.subr.mxu0 0.0
    %4987 = vmatpush1.msra.mxu0 %v4652
    %4988 = vmatprep.subr.mxu0 0.0
    %4989 = vmatpush1.msra.mxu0 %v4653
    %4990 = vmatprep.subr.mxu0 0.0
    %4991 = vmatpush1.msra.mxu0 %v4654
    %4992 = vmatprep.subr.mxu0 0.0
    %4993 = vmatpush1.msra.mxu0 %v4655
    %4994 = vmatprep.subr.mxu0 0.0
    %4995 = vmatpush1.msra.mxu0 %v4656
    %4996 = vmatprep.subr.mxu0 0.0
    %4997 = vmatpush1.msra.mxu0 %v4657
    %4998 = vmatprep.subr.mxu0 0.0
    %4999 = vmatpush1.msra.mxu0 %v4658
    %5000 = vmatprep.subr.mxu0 0.0
    %5001 = vmatpush1.msra.mxu0 %v4659
    %5002 = vmatprep.subr.mxu0 0.0
    %5003 = vmatpush1.msra.mxu0 %v4660
    %5004 = vmatprep.subr.mxu0 0.0
    %5005 = vmatpush1.msra.mxu0 %v4661
    %5006 = vmatprep.subr.mxu0 0.0
    %5007 = vmatpush1.msra.mxu0 %v4662
    %5008 = vmatprep.subr.mxu0 0.0
    %5009 = vmatpush1.msra.mxu0 %v4663
    %5010 = vmatprep.subr.mxu0 0.0
    %5011 = vmatpush1.msra.mxu0 %v4664
    %5012 = vmatprep.subr.mxu0 0.0
    %5013 = vmatpush1.msra.mxu0 %v4665
    %5014 = vmatprep.subr.mxu0 0.0
    %5015 = vmatpush1.msra.mxu0 %v4666
    %5016 = vmatprep.subr.mxu0 0.0
    %5017 = vmatpush1.msra.mxu0 %v4667
    %5018 = vmatprep.subr.mxu0 0.0
    %5019 = vmatpush1.msra.mxu0 %v4668
    %5020 = vmatprep.subr.mxu0 0.0
    %5021 = vmatpush1.msra.mxu0 %v4669
    %5022 = vmatprep.subr.mxu0 0.0
    %5023 = vmatpush1.msra.mxu0 %v4670
    %5024 = vmatprep.subr.mxu0 0.0
    %5025 = vmatpush1.msra.mxu0 %v4671
    %5026 = vmatprep.subr.mxu0 0.0
    %5027 = vmatpush1.msra.mxu0 %v4672
    %5028 = vmatprep.subr.mxu0 0.0
    %5029 = vmatpush1.msra.mxu0 %v4673
    %5030 = vmatprep.subr.mxu0 0.0
    %5031 = vmatpush1.msra.mxu0 %v4674
    %5032 = vmatprep.subr.mxu0 0.0
    %5033 = vmatpush1.msra.mxu0 %v4675
    %5034 = vmatprep.subr.mxu0 0.0
    %5035 = vmatpush1.msra.mxu0 %v4676
    %5036 = vmatprep.subr.mxu0 0.0
    %5037 = vmatpush1.msra.mxu0 %v4677
    %5038 = vmatprep.subr.mxu0 0.0
    %5039 = vmatpush1.msra.mxu0 %v4678
    %5040 = vmatprep.mubr.f32.mxu0 %v4757
    %5041 = vmatmul.mubr.f32.gmra.mrb[0].mxu0 %v4756
    %v5042 = vpop.f32.mrb[0].mxu0
    %v5043 = vadd.f32 %v4973, %v5042
    %v5044 = vpop.f32.mrb[0].mxu0
    %5045 = vdwg.mxu0
    %vm5046 = vcmp.gt.f32.partialorder %v5043, 0.0
    %v5047 = vmul.f32 %v5043, 0.1
    %v5048 = vsel %vm5046, %v5043, %v5047
    %5049 = vst [vmem:[#allocation5] sm:$0xf] 0.0
    %5050 = vst [vmem:[#allocation5 + $0x4] sm:$0xf] 0.0
    %5051 = vst [vmem:[#allocation5 + $0x8] sm:$0xf] 0.0
    %5052 = vst [vmem:[#allocation5 + $0xc] sm:$0xf] 0.0
    %5053 = vst [vmem:[#allocation5 + $0x10] sm:$0xf] 0.0
    %5054 = vst [vmem:[#allocation5 + $0x14] sm:$0xf] 0.0
    %5055 = vst [vmem:[#allocation5 + $0x18] sm:$0xf] 0.0
    %5056 = vst [vmem:[#allocation5 + $0x1c] sm:$0xf] 0.0
    %v5058 = vcombine.high %v5048, %v5048
    %v5060 = vunpack.c.l.s4 1983009808
    %v5061 = vunpack.c.0.s8 %v5060
    %v5062 = vlaneseq
    %v5063 = vshrl.u32 %v5062, 7
    %v5064 = vsub.s32 %v5061, %v5063
    %v5065 = vrot.slane %v5048, %v5064
    %v5067 = vunpack.c.l.s4 1983009808
    %v5068 = vunpack.c.0.s8 %v5067
    %v5069 = vlaneseq
    %v5070 = vshrl.u32 %v5069, 7
    %v5071 = vsub.s32 %v5068, %v5070
    %v5072 = vrot.slane %v5058, %v5071
    %v5073 = vcombine.high %v5065, %v5065
    %v5074 = vcombine.high %v5072, %v5072
    %s5079 = scalar_lea.vmem [#allocation5], 4
    %5080 = vst [vmem:[%s5079 + $0x1] sm:$0x3] %v5065
    %5081 = vst [vmem:[%s5079 + $0x5] sm:$0x3] %v5073
    %5082 = vst [vmem:[%s5079 + $0x11] sm:$0x3] %v5072
    %5083 = vst [vmem:[%s5079 + $0x15] sm:$0x3] %v5074
    %v5084 = vld [vmem:[#allocation5] ss:$2 sm:$0x1]
    %s5085 = scalar_lea.vmem [#allocation5], 16
    %v5086 = vld [vmem:[%s5085] ss:$2 sm:$0x1]
    %s5087 = scalar_lea.vmem [#allocation5], 1
    %v5088 = vld [vmem:[%s5087] ss:$2 sm:$0x1]
    %s5089 = scalar_lea.vmem [#allocation5], 17
    %v5090 = vld [vmem:[%s5089] ss:$2 sm:$0x1]
    %s5091 = scalar_lea.vmem [#allocation5], 2
    %v5092 = vld [vmem:[%s5091] ss:$2 sm:$0x1]
    %s5093 = scalar_lea.vmem [#allocation5], 18
    %v5094 = vld [vmem:[%s5093] ss:$2 sm:$0x1]
    %s5095 = scalar_lea.vmem [#allocation5], 3
    %v5096 = vld [vmem:[%s5095] ss:$2 sm:$0x1]
    %s5097 = scalar_lea.vmem [#allocation5], 19
    %v5098 = vld [vmem:[%s5097] ss:$2 sm:$0x1]
    %v5099 = vld [vmem:[%s5079] ss:$2 sm:$0x1]
    %s5100 = scalar_lea.vmem %s5079, 16 [#allocation5]
    %v5101 = vld [vmem:[%s5100] ss:$2 sm:$0x1]
    %s5102 = scalar_lea.vmem %s5079, 1 [#allocation5]
    %v5103 = vld [vmem:[%s5102] ss:$2 sm:$0x1]
    %s5104 = scalar_lea.vmem %s5079, 17 [#allocation5]
    %v5105 = vld [vmem:[%s5104] ss:$2 sm:$0x1]
    %s5106 = scalar_lea.vmem %s5079, 2 [#allocation5]
    %v5107 = vld [vmem:[%s5106] ss:$2 sm:$0x1]
    %s5108 = scalar_lea.vmem %s5079, 18 [#allocation5]
    %v5109 = vld [vmem:[%s5108] ss:$2 sm:$0x1]
    %s5110 = scalar_lea.vmem %s5079, 3 [#allocation5]
    %v5111 = vld [vmem:[%s5110] ss:$2 sm:$0x1]
    %s5112 = scalar_lea.vmem %s5079, 19 [#allocation5]
    %v5113 = vld [vmem:[%s5112] ss:$2 sm:$0x1]
    %s5114 = scalar_lea.vmem [#allocation5], 8
    %v5115 = vld [vmem:[%s5114] ss:$2 sm:$0x1]
    %s5116 = scalar_lea.vmem %s5114, 16 [#allocation5]
    %v5117 = vld [vmem:[%s5116] ss:$2 sm:$0x1]
    %s5118 = scalar_lea.vmem %s5114, 1 [#allocation5]
    %v5119 = vld [vmem:[%s5118] ss:$2 sm:$0x1]
    %s5120 = scalar_lea.vmem %s5114, 17 [#allocation5]
    %v5121 = vld [vmem:[%s5120] ss:$2 sm:$0x1]
    %s5122 = scalar_lea.vmem %s5114, 2 [#allocation5]
    %v5123 = vld [vmem:[%s5122] ss:$2 sm:$0x1]
    %s5124 = scalar_lea.vmem %s5114, 18 [#allocation5]
    %v5125 = vld [vmem:[%s5124] ss:$2 sm:$0x1]
    %s5126 = scalar_lea.vmem %s5114, 3 [#allocation5]
    %v5127 = vld [vmem:[%s5126] ss:$2 sm:$0x1]
    %s5128 = scalar_lea.vmem %s5114, 19 [#allocation5]
    %v5129 = vld [vmem:[%s5128] ss:$2 sm:$0x1]
    %s5130 = scalar_lea.vmem [#allocation5], 12
    %v5131 = vld [vmem:[%s5130] ss:$2 sm:$0x1]
    %s5132 = scalar_lea.vmem %s5130, 16 [#allocation5]
    %v5133 = vld [vmem:[%s5132] ss:$2 sm:$0x1]
    %s5134 = scalar_lea.vmem %s5130, 1 [#allocation5]
    %v5135 = vld [vmem:[%s5134] ss:$2 sm:$0x1]
    %s5136 = scalar_lea.vmem %s5130, 17 [#allocation5]
    %v5137 = vld [vmem:[%s5136] ss:$2 sm:$0x1]
    %s5138 = scalar_lea.vmem %s5130, 2 [#allocation5]
    %v5139 = vld [vmem:[%s5138] ss:$2 sm:$0x1]
    %s5140 = scalar_lea.vmem %s5130, 18 [#allocation5]
    %v5141 = vld [vmem:[%s5140] ss:$2 sm:$0x1]
    %s5142 = scalar_lea.vmem %s5130, 3 [#allocation5]
    %v5143 = vld [vmem:[%s5142] ss:$2 sm:$0x1]
    %s5144 = scalar_lea.vmem %s5130, 19 [#allocation5]
    %v5145 = vld [vmem:[%s5144] ss:$2 sm:$0x1]
    %v5146 = vld [vmem:[%s9] sm:$0xff]
    %v5147 = vld [vmem:[%s9 + $0x8] sm:$0xff]
    %v5148 = vld [vmem:[%s9 + $0x10] sm:$0xff]
    %v5149 = vld [vmem:[%s9 + $0x18] sm:$0xff]
    %v5150 = vld [vmem:[%s9 + $0x20] sm:$0xff]
    %v5151 = vld [vmem:[%s9 + $0x28] sm:$0xff]
    %v5152 = vld [vmem:[%s9 + $0x30] sm:$0xff]
    %v5153 = vld [vmem:[%s9 + $0x38] sm:$0xff]
    %v5154 = vld [vmem:[%s9 + $0x40] sm:$0xff]
    %v5155 = vld [vmem:[%s9 + $0x48] sm:$0xff]
    %v5156 = vld [vmem:[%s9 + $0x50] sm:$0xff]
    %v5157 = vld [vmem:[%s9 + $0x58] sm:$0xff]
    %v5158 = vld [vmem:[%s9 + $0x60] sm:$0xff]
    %v5159 = vld [vmem:[%s9 + $0x68] sm:$0xff]
    %v5160 = vld [vmem:[%s9 + $0x70] sm:$0xff]
    %v5161 = vld [vmem:[%s9 + $0x78] sm:$0xff]
    %v5162 = vld [vmem:[%s9 + $0x80] sm:$0xff]
    %v5163 = vld [vmem:[%s9 + $0x88] sm:$0xff]
    %v5164 = vld [vmem:[%s9 + $0x90] sm:$0xff]
    %v5165 = vld [vmem:[%s9 + $0x98] sm:$0xff]
    %v5166 = vld [vmem:[%s9 + $0xa0] sm:$0xff]
    %v5167 = vld [vmem:[%s9 + $0xa8] sm:$0xff]
    %v5168 = vld [vmem:[%s9 + $0xb0] sm:$0xff]
    %v5169 = vld [vmem:[%s9 + $0xb8] sm:$0xff]
    %v5170 = vld [vmem:[%s9 + $0xc0] sm:$0xff]
    %v5171 = vld [vmem:[%s9 + $0xc8] sm:$0xff]
    %v5172 = vld [vmem:[%s9 + $0xd0] sm:$0xff]
    %v5173 = vld [vmem:[%s9 + $0xd8] sm:$0xff]
    %v5174 = vld [vmem:[%s9 + $0xe0] sm:$0xff]
    %v5175 = vld [vmem:[%s9 + $0xe8] sm:$0xff]
    %v5176 = vld [vmem:[%s9 + $0xf0] sm:$0xff]
    %v5177 = vld [vmem:[%s9 + $0xf8] sm:$0xff]
    %v5178 = vld [vmem:[%s9 + $0x100] sm:$0xff]
    %v5179 = vld [vmem:[%s9 + $0x108] sm:$0xff]
    %v5180 = vld [vmem:[%s9 + $0x110] sm:$0xff]
    %v5181 = vld [vmem:[%s9 + $0x118] sm:$0xff]
    %v5182 = vld [vmem:[%s9 + $0x120] sm:$0xff]
    %v5183 = vld [vmem:[%s9 + $0x128] sm:$0xff]
    %v5184 = vld [vmem:[%s9 + $0x130] sm:$0xff]
    %v5185 = vld [vmem:[%s9 + $0x138] sm:$0xff]
    %v5186 = vld [vmem:[%s9 + $0x140] sm:$0xff]
    %v5187 = vld [vmem:[%s9 + $0x148] sm:$0xff]
    %v5188 = vld [vmem:[%s9 + $0x150] sm:$0xff]
    %v5189 = vld [vmem:[%s9 + $0x158] sm:$0xff]
    %v5190 = vld [vmem:[%s9 + $0x160] sm:$0xff]
    %v5191 = vld [vmem:[%s9 + $0x168] sm:$0xff]
    %v5192 = vld [vmem:[%s9 + $0x170] sm:$0xff]
    %v5193 = vld [vmem:[%s9 + $0x178] sm:$0xff]
    %v5194 = vld [vmem:[%s9 + $0x180] sm:$0xff]
    %v5195 = vld [vmem:[%s9 + $0x188] sm:$0xff]
    %v5196 = vld [vmem:[%s9 + $0x190] sm:$0xff]
    %v5197 = vld [vmem:[%s9 + $0x198] sm:$0xff]
    %v5198 = vld [vmem:[%s9 + $0x1a0] sm:$0xff]
    %v5199 = vld [vmem:[%s9 + $0x1a8] sm:$0xff]
    %v5200 = vld [vmem:[%s9 + $0x1b0] sm:$0xff]
    %v5201 = vld [vmem:[%s9 + $0x1b8] sm:$0xff]
    %v5202 = vld [vmem:[%s9 + $0x1c0] sm:$0xff]
    %v5203 = vld [vmem:[%s9 + $0x1c8] sm:$0xff]
    %v5204 = vld [vmem:[%s9 + $0x1d0] sm:$0xff]
    %v5205 = vld [vmem:[%s9 + $0x1d8] sm:$0xff]
    %v5206 = vld [vmem:[%s9 + $0x1e0] sm:$0xff]
    %v5207 = vld [vmem:[%s9 + $0x1e8] sm:$0xff]
    %v5208 = vld [vmem:[%s9 + $0x1f0] sm:$0xff]
    %v5209 = vld [vmem:[%s9 + $0x1f8] sm:$0xff]
    %v5210 = vld [vmem:[%s9 + $0x200] sm:$0xff]
    %v5211 = vld [vmem:[%s9 + $0x208] sm:$0xff]
    %v5212 = vld [vmem:[%s9 + $0x210] sm:$0xff]
    %v5213 = vld [vmem:[%s9 + $0x218] sm:$0xff]
    %v5214 = vld [vmem:[%s9 + $0x220] sm:$0xff]
    %v5215 = vld [vmem:[%s9 + $0x228] sm:$0xff]
    %v5216 = vld [vmem:[%s9 + $0x230] sm:$0xff]
    %v5217 = vld [vmem:[%s9 + $0x238] sm:$0xff]
    %v5218 = vld [vmem:[%s9 + $0x240] sm:$0xff]
    %v5219 = vld [vmem:[%s9 + $0x248] sm:$0xff]
    %v5220 = vld [vmem:[%s9 + $0x250] sm:$0xff]
    %v5221 = vld [vmem:[%s9 + $0x258] sm:$0xff]
    %v5222 = vld [vmem:[%s9 + $0x260] sm:$0xff]
    %v5223 = vld [vmem:[%s9 + $0x268] sm:$0xff]
    %v5224 = vld [vmem:[%s9 + $0x270] sm:$0xff]
    %v5225 = vld [vmem:[%s9 + $0x278] sm:$0xff]
    %v5226 = vld [vmem:[%s9 + $0x280] sm:$0xff]
    %v5227 = vld [vmem:[%s9 + $0x288] sm:$0xff]
    %v5228 = vld [vmem:[%s9 + $0x290] sm:$0xff]
    %v5229 = vld [vmem:[%s9 + $0x298] sm:$0xff]
    %v5230 = vld [vmem:[%s9 + $0x2a0] sm:$0xff]
    %v5231 = vld [vmem:[%s9 + $0x2a8] sm:$0xff]
    %v5232 = vld [vmem:[%s9 + $0x2b0] sm:$0xff]
    %v5233 = vld [vmem:[%s9 + $0x2b8] sm:$0xff]
    %v5234 = vld [vmem:[%s9 + $0x2c0] sm:$0xff]
    %v5235 = vld [vmem:[%s9 + $0x2c8] sm:$0xff]
    %v5236 = vld [vmem:[%s9 + $0x2d0] sm:$0xff]
    %v5237 = vld [vmem:[%s9 + $0x2d8] sm:$0xff]
    %v5238 = vld [vmem:[%s9 + $0x2e0] sm:$0xff]
    %v5239 = vld [vmem:[%s9 + $0x2e8] sm:$0xff]
    %v5240 = vld [vmem:[%s9 + $0x2f0] sm:$0xff]
    %v5241 = vld [vmem:[%s9 + $0x2f8] sm:$0xff]
    %v5242 = vld [vmem:[%s9 + $0x300] sm:$0xff]
    %v5243 = vld [vmem:[%s9 + $0x308] sm:$0xff]
    %v5244 = vld [vmem:[%s9 + $0x310] sm:$0xff]
    %v5245 = vld [vmem:[%s9 + $0x318] sm:$0xff]
    %v5246 = vld [vmem:[%s9 + $0x320] sm:$0xff]
    %v5247 = vld [vmem:[%s9 + $0x328] sm:$0xff]
    %v5248 = vld [vmem:[%s9 + $0x330] sm:$0xff]
    %v5249 = vld [vmem:[%s9 + $0x338] sm:$0xff]
    %v5250 = vld [vmem:[%s9 + $0x340] sm:$0xff]
    %v5251 = vld [vmem:[%s9 + $0x348] sm:$0xff]
    %v5252 = vld [vmem:[%s9 + $0x350] sm:$0xff]
    %v5253 = vld [vmem:[%s9 + $0x358] sm:$0xff]
    %v5254 = vld [vmem:[%s9 + $0x360] sm:$0xff]
    %v5255 = vld [vmem:[%s9 + $0x368] sm:$0xff]
    %v5256 = vld [vmem:[%s9 + $0x370] sm:$0xff]
    %v5257 = vld [vmem:[%s9 + $0x378] sm:$0xff]
    %v5258 = vld [vmem:[%s9 + $0x380] sm:$0xff]
    %v5259 = vld [vmem:[%s9 + $0x388] sm:$0xff]
    %v5260 = vld [vmem:[%s9 + $0x390] sm:$0xff]
    %v5261 = vld [vmem:[%s9 + $0x398] sm:$0xff]
    %v5262 = vld [vmem:[%s9 + $0x3a0] sm:$0xff]
    %v5263 = vld [vmem:[%s9 + $0x3a8] sm:$0xff]
    %v5264 = vld [vmem:[%s9 + $0x3b0] sm:$0xff]
    %v5265 = vld [vmem:[%s9 + $0x3b8] sm:$0xff]
    %v5266 = vld [vmem:[%s9 + $0x3c0] sm:$0xff]
    %v5267 = vld [vmem:[%s9 + $0x3c8] sm:$0xff]
    %v5268 = vld [vmem:[%s9 + $0x3d0] sm:$0xff]
    %v5269 = vld [vmem:[%s9 + $0x3d8] sm:$0xff]
    %v5270 = vld [vmem:[%s9 + $0x3e0] sm:$0xff]
    %v5271 = vld [vmem:[%s9 + $0x3e8] sm:$0xff]
    %v5272 = vld [vmem:[%s9 + $0x3f0] sm:$0xff]
    %v5273 = vld [vmem:[%s9 + $0x3f8] sm:$0xff]
    %v5274 = vld [vmem:[%s9 + $0x400] sm:$0xff]
    %v5275 = vld [vmem:[%s9 + $0x408] sm:$0xff]
    %v5276 = vld [vmem:[%s9 + $0x410] sm:$0xff]
    %v5277 = vld [vmem:[%s9 + $0x418] sm:$0xff]
    %v5278 = vld [vmem:[%s9 + $0x420] sm:$0xff]
    %v5279 = vld [vmem:[%s9 + $0x428] sm:$0xff]
    %v5280 = vld [vmem:[%s9 + $0x430] sm:$0xff]
    %v5281 = vld [vmem:[%s9 + $0x438] sm:$0xff]
    %v5282 = vld [vmem:[%s9 + $0x440] sm:$0xff]
    %v5283 = vld [vmem:[%s9 + $0x448] sm:$0xff]
    %v5284 = vld [vmem:[%s9 + $0x450] sm:$0xff]
    %v5285 = vld [vmem:[%s9 + $0x458] sm:$0xff]
    %v5286 = vld [vmem:[%s9 + $0x460] sm:$0xff]
    %v5287 = vld [vmem:[%s9 + $0x468] sm:$0xff]
    %v5288 = vld [vmem:[%s9 + $0x470] sm:$0xff]
    %v5289 = vld [vmem:[%s9 + $0x478] sm:$0xff]
    %v5290 = vld [vmem:[%s9 + $0x480] sm:$0xff]
    %v5291 = vld [vmem:[%s9 + $0x488] sm:$0xff]
    %v5292 = vld [vmem:[%s9 + $0x490] sm:$0xff]
    %v5293 = vld [vmem:[%s9 + $0x498] sm:$0xff]
    %v5294 = vld [vmem:[%s9 + $0x4a0] sm:$0xff]
    %v5295 = vld [vmem:[%s9 + $0x4a8] sm:$0xff]
    %v5296 = vld [vmem:[%s9 + $0x4b0] sm:$0xff]
    %v5297 = vld [vmem:[%s9 + $0x4b8] sm:$0xff]
    %v5298 = vld [vmem:[%s9 + $0x4c0] sm:$0xff]
    %v5299 = vld [vmem:[%s9 + $0x4c8] sm:$0xff]
    %v5300 = vld [vmem:[%s9 + $0x4d0] sm:$0xff]
    %v5301 = vld [vmem:[%s9 + $0x4d8] sm:$0xff]
    %v5302 = vld [vmem:[%s9 + $0x4e0] sm:$0xff]
    %v5303 = vld [vmem:[%s9 + $0x4e8] sm:$0xff]
    %v5304 = vld [vmem:[%s9 + $0x4f0] sm:$0xff]
    %v5305 = vld [vmem:[%s9 + $0x4f8] sm:$0xff]
    %v5306 = vld [vmem:[%s9 + $0x500] sm:$0xff]
    %v5307 = vld [vmem:[%s9 + $0x508] sm:$0xff]
    %v5308 = vld [vmem:[%s9 + $0x510] sm:$0xff]
    %v5309 = vld [vmem:[%s9 + $0x518] sm:$0xff]
    %v5310 = vld [vmem:[%s9 + $0x520] sm:$0xff]
    %v5311 = vld [vmem:[%s9 + $0x528] sm:$0xff]
    %v5312 = vld [vmem:[%s9 + $0x530] sm:$0xff]
    %v5313 = vld [vmem:[%s9 + $0x538] sm:$0xff]
    %v5314 = vld [vmem:[%s9 + $0x540] sm:$0xff]
    %v5315 = vld [vmem:[%s9 + $0x548] sm:$0xff]
    %v5316 = vld [vmem:[%s9 + $0x550] sm:$0xff]
    %v5317 = vld [vmem:[%s9 + $0x558] sm:$0xff]
    %v5318 = vld [vmem:[%s9 + $0x560] sm:$0xff]
    %v5319 = vld [vmem:[%s9 + $0x568] sm:$0xff]
    %v5320 = vld [vmem:[%s9 + $0x570] sm:$0xff]
    %v5321 = vld [vmem:[%s9 + $0x578] sm:$0xff]
    %v5322 = vld [vmem:[%s9 + $0x580] sm:$0xff]
    %v5323 = vld [vmem:[%s9 + $0x588] sm:$0xff]
    %v5324 = vld [vmem:[%s9 + $0x590] sm:$0xff]
    %v5325 = vld [vmem:[%s9 + $0x598] sm:$0xff]
    %v5326 = vld [vmem:[%s9 + $0x5a0] sm:$0xff]
    %v5327 = vld [vmem:[%s9 + $0x5a8] sm:$0xff]
    %v5328 = vld [vmem:[%s9 + $0x5b0] sm:$0xff]
    %v5329 = vld [vmem:[%s9 + $0x5b8] sm:$0xff]
    %v5330 = vld [vmem:[%s9 + $0x5c0] sm:$0xff]
    %v5331 = vld [vmem:[%s9 + $0x5c8] sm:$0xff]
    %v5332 = vld [vmem:[%s9 + $0x5d0] sm:$0xff]
    %v5333 = vld [vmem:[%s9 + $0x5d8] sm:$0xff]
    %v5334 = vld [vmem:[%s9 + $0x5e0] sm:$0xff]
    %v5335 = vld [vmem:[%s9 + $0x5e8] sm:$0xff]
    %v5336 = vld [vmem:[%s9 + $0x5f0] sm:$0xff]
    %v5337 = vld [vmem:[%s9 + $0x5f8] sm:$0xff]
    %v5338 = vld [vmem:[%s9 + $0x600] sm:$0xff]
    %v5339 = vld [vmem:[%s9 + $0x608] sm:$0xff]
    %v5340 = vld [vmem:[%s9 + $0x610] sm:$0xff]
    %v5341 = vld [vmem:[%s9 + $0x618] sm:$0xff]
    %v5342 = vld [vmem:[%s9 + $0x620] sm:$0xff]
    %v5343 = vld [vmem:[%s9 + $0x628] sm:$0xff]
    %v5344 = vld [vmem:[%s9 + $0x630] sm:$0xff]
    %v5345 = vld [vmem:[%s9 + $0x638] sm:$0xff]
    %v5346 = vld [vmem:[%s9 + $0x640] sm:$0xff]
    %v5347 = vld [vmem:[%s9 + $0x648] sm:$0xff]
    %v5348 = vld [vmem:[%s9 + $0x650] sm:$0xff]
    %v5349 = vld [vmem:[%s9 + $0x658] sm:$0xff]
    %v5350 = vld [vmem:[%s9 + $0x660] sm:$0xff]
    %v5351 = vld [vmem:[%s9 + $0x668] sm:$0xff]
    %v5352 = vld [vmem:[%s9 + $0x670] sm:$0xff]
    %v5353 = vld [vmem:[%s9 + $0x678] sm:$0xff]
    %v5354 = vld [vmem:[%s9 + $0x680] sm:$0xff]
    %v5355 = vld [vmem:[%s9 + $0x688] sm:$0xff]
    %v5356 = vld [vmem:[%s9 + $0x690] sm:$0xff]
    %v5357 = vld [vmem:[%s9 + $0x698] sm:$0xff]
    %v5358 = vld [vmem:[%s9 + $0x6a0] sm:$0xff]
    %v5359 = vld [vmem:[%s9 + $0x6a8] sm:$0xff]
    %v5360 = vld [vmem:[%s9 + $0x6b0] sm:$0xff]
    %v5361 = vld [vmem:[%s9 + $0x6b8] sm:$0xff]
    %v5362 = vld [vmem:[%s9 + $0x6c0] sm:$0xff]
    %v5363 = vld [vmem:[%s9 + $0x6c8] sm:$0xff]
    %v5364 = vld [vmem:[%s9 + $0x6d0] sm:$0xff]
    %v5365 = vld [vmem:[%s9 + $0x6d8] sm:$0xff]
    %v5366 = vld [vmem:[%s9 + $0x6e0] sm:$0xff]
    %v5367 = vld [vmem:[%s9 + $0x6e8] sm:$0xff]
    %v5368 = vld [vmem:[%s9 + $0x6f0] sm:$0xff]
    %v5369 = vld [vmem:[%s9 + $0x6f8] sm:$0xff]
    %v5370 = vld [vmem:[%s9 + $0x700] sm:$0xff]
    %v5371 = vld [vmem:[%s9 + $0x708] sm:$0xff]
    %v5372 = vld [vmem:[%s9 + $0x710] sm:$0xff]
    %v5373 = vld [vmem:[%s9 + $0x718] sm:$0xff]
    %v5374 = vld [vmem:[%s9 + $0x720] sm:$0xff]
    %v5375 = vld [vmem:[%s9 + $0x728] sm:$0xff]
    %v5376 = vld [vmem:[%s9 + $0x730] sm:$0xff]
    %v5377 = vld [vmem:[%s9 + $0x738] sm:$0xff]
    %v5378 = vld [vmem:[%s9 + $0x740] sm:$0xff]
    %v5379 = vld [vmem:[%s9 + $0x748] sm:$0xff]
    %v5380 = vld [vmem:[%s9 + $0x750] sm:$0xff]
    %v5381 = vld [vmem:[%s9 + $0x758] sm:$0xff]
    %v5382 = vld [vmem:[%s9 + $0x760] sm:$0xff]
    %v5383 = vld [vmem:[%s9 + $0x768] sm:$0xff]
    %v5384 = vld [vmem:[%s9 + $0x770] sm:$0xff]
    %v5385 = vld [vmem:[%s9 + $0x778] sm:$0xff]
    %v5386 = vld [vmem:[%s9 + $0x780] sm:$0xff]
    %v5387 = vld [vmem:[%s9 + $0x788] sm:$0xff]
    %v5388 = vld [vmem:[%s9 + $0x790] sm:$0xff]
    %v5389 = vld [vmem:[%s9 + $0x798] sm:$0xff]
    %v5390 = vld [vmem:[%s9 + $0x7a0] sm:$0xff]
    %v5391 = vld [vmem:[%s9 + $0x7a8] sm:$0xff]
    %v5392 = vld [vmem:[%s9 + $0x7b0] sm:$0xff]
    %v5393 = vld [vmem:[%s9 + $0x7b8] sm:$0xff]
    %v5394 = vld [vmem:[%s9 + $0x7c0] sm:$0xff]
    %v5395 = vld [vmem:[%s9 + $0x7c8] sm:$0xff]
    %v5396 = vld [vmem:[%s9 + $0x7d0] sm:$0xff]
    %v5397 = vld [vmem:[%s9 + $0x7d8] sm:$0xff]
    %v5398 = vld [vmem:[%s9 + $0x7e0] sm:$0xff]
    %v5399 = vld [vmem:[%s9 + $0x7e8] sm:$0xff]
    %v5400 = vld [vmem:[%s9 + $0x7f0] sm:$0xff]
    %v5401 = vld [vmem:[%s9 + $0x7f8] sm:$0xff]
    %v5402 = vld [vmem:[%s9 + $0x800] sm:$0xff]
    %v5403 = vld [vmem:[%s9 + $0x808] sm:$0xff]
    %v5404 = vld [vmem:[%s9 + $0x810] sm:$0xff]
    %v5405 = vld [vmem:[%s9 + $0x818] sm:$0xff]
    %v5406 = vld [vmem:[%s9 + $0x820] sm:$0xff]
    %v5407 = vld [vmem:[%s9 + $0x828] sm:$0xff]
    %v5408 = vld [vmem:[%s9 + $0x830] sm:$0xff]
    %v5409 = vld [vmem:[%s9 + $0x838] sm:$0xff]
    %v5410 = vld [vmem:[%s9 + $0x840] sm:$0xff]
    %v5411 = vld [vmem:[%s9 + $0x848] sm:$0xff]
    %v5412 = vld [vmem:[%s9 + $0x850] sm:$0xff]
    %v5413 = vld [vmem:[%s9 + $0x858] sm:$0xff]
    %v5414 = vld [vmem:[%s9 + $0x860] sm:$0xff]
    %v5415 = vld [vmem:[%s9 + $0x868] sm:$0xff]
    %v5416 = vld [vmem:[%s9 + $0x870] sm:$0xff]
    %v5417 = vld [vmem:[%s9 + $0x878] sm:$0xff]
    %v5418 = vld [vmem:[%s9 + $0x880] sm:$0xff]
    %v5419 = vld [vmem:[%s9 + $0x888] sm:$0xff]
    %v5420 = vld [vmem:[%s9 + $0x890] sm:$0xff]
    %v5421 = vld [vmem:[%s9 + $0x898] sm:$0xff]
    %v5422 = vld [vmem:[%s9 + $0x8a0] sm:$0xff]
    %v5423 = vld [vmem:[%s9 + $0x8a8] sm:$0xff]
    %v5424 = vld [vmem:[%s9 + $0x8b0] sm:$0xff]
    %v5425 = vld [vmem:[%s9 + $0x8b8] sm:$0xff]
    %v5426 = vld [vmem:[%s9 + $0x8c0] sm:$0xff]
    %v5427 = vld [vmem:[%s9 + $0x8c8] sm:$0xff]
    %v5428 = vld [vmem:[%s9 + $0x8d0] sm:$0xff]
    %v5429 = vld [vmem:[%s9 + $0x8d8] sm:$0xff]
    %v5430 = vld [vmem:[%s9 + $0x8e0] sm:$0xff]
    %v5431 = vld [vmem:[%s9 + $0x8e8] sm:$0xff]
    %v5432 = vld [vmem:[%s9 + $0x8f0] sm:$0xff]
    %v5433 = vld [vmem:[%s9 + $0x8f8] sm:$0xff]
    %v5434 = vld [vmem:[%s9 + $0x900] sm:$0xff]
    %v5435 = vld [vmem:[%s9 + $0x908] sm:$0xff]
    %v5436 = vld [vmem:[%s9 + $0x910] sm:$0xff]
    %v5437 = vld [vmem:[%s9 + $0x918] sm:$0xff]
    %v5438 = vld [vmem:[%s9 + $0x920] sm:$0xff]
    %v5439 = vld [vmem:[%s9 + $0x928] sm:$0xff]
    %v5440 = vld [vmem:[%s9 + $0x930] sm:$0xff]
    %v5441 = vld [vmem:[%s9 + $0x938] sm:$0xff]
    %v5442 = vld [vmem:[%s9 + $0x940] sm:$0xff]
    %v5443 = vld [vmem:[%s9 + $0x948] sm:$0xff]
    %v5444 = vld [vmem:[%s9 + $0x950] sm:$0xff]
    %v5445 = vld [vmem:[%s9 + $0x958] sm:$0xff]
    %v5446 = vld [vmem:[%s9 + $0x960] sm:$0xff]
    %v5447 = vld [vmem:[%s9 + $0x968] sm:$0xff]
    %v5448 = vld [vmem:[%s9 + $0x970] sm:$0xff]
    %v5449 = vld [vmem:[%s9 + $0x978] sm:$0xff]
    %v5450 = vld [vmem:[%s9 + $0x980] sm:$0xff]
    %v5451 = vld [vmem:[%s9 + $0x988] sm:$0xff]
    %v5452 = vld [vmem:[%s9 + $0x990] sm:$0xff]
    %v5453 = vld [vmem:[%s9 + $0x998] sm:$0xff]
    %v5454 = vld [vmem:[%s9 + $0x9a0] sm:$0xff]
    %v5455 = vld [vmem:[%s9 + $0x9a8] sm:$0xff]
    %v5456 = vld [vmem:[%s9 + $0x9b0] sm:$0xff]
    %v5457 = vld [vmem:[%s9 + $0x9b8] sm:$0xff]
    %v5458 = vld [vmem:[%s9 + $0x9c0] sm:$0xff]
    %v5459 = vld [vmem:[%s9 + $0x9c8] sm:$0xff]
    %v5460 = vld [vmem:[%s9 + $0x9d0] sm:$0xff]
    %v5461 = vld [vmem:[%s9 + $0x9d8] sm:$0xff]
    %v5462 = vld [vmem:[%s9 + $0x9e0] sm:$0xff]
    %v5463 = vld [vmem:[%s9 + $0x9e8] sm:$0xff]
    %v5464 = vld [vmem:[%s9 + $0x9f0] sm:$0xff]
    %v5465 = vld [vmem:[%s9 + $0x9f8] sm:$0xff]
    %v5466 = vld [vmem:[%s9 + $0xa00] sm:$0xff]
    %v5467 = vld [vmem:[%s9 + $0xa08] sm:$0xff]
    %v5468 = vld [vmem:[%s9 + $0xa10] sm:$0xff]
    %v5469 = vld [vmem:[%s9 + $0xa18] sm:$0xff]
    %v5470 = vld [vmem:[%s9 + $0xa20] sm:$0xff]
    %v5471 = vld [vmem:[%s9 + $0xa28] sm:$0xff]
    %v5472 = vld [vmem:[%s9 + $0xa30] sm:$0xff]
    %v5473 = vld [vmem:[%s9 + $0xa38] sm:$0xff]
    %v5474 = vld [vmem:[%s9 + $0xa40] sm:$0xff]
    %v5475 = vld [vmem:[%s9 + $0xa48] sm:$0xff]
    %v5476 = vld [vmem:[%s9 + $0xa50] sm:$0xff]
    %v5477 = vld [vmem:[%s9 + $0xa58] sm:$0xff]
    %v5478 = vld [vmem:[%s9 + $0xa60] sm:$0xff]
    %v5479 = vld [vmem:[%s9 + $0xa68] sm:$0xff]
    %v5480 = vld [vmem:[%s9 + $0xa70] sm:$0xff]
    %v5481 = vld [vmem:[%s9 + $0xa78] sm:$0xff]
    %v5482 = vld [vmem:[%s9 + $0xa80] sm:$0xff]
    %v5483 = vld [vmem:[%s9 + $0xa88] sm:$0xff]
    %v5484 = vld [vmem:[%s9 + $0xa90] sm:$0xff]
    %v5485 = vld [vmem:[%s9 + $0xa98] sm:$0xff]
    %v5486 = vld [vmem:[%s9 + $0xaa0] sm:$0xff]
    %v5487 = vld [vmem:[%s9 + $0xaa8] sm:$0xff]
    %v5488 = vld [vmem:[%s9 + $0xab0] sm:$0xff]
    %v5489 = vld [vmem:[%s9 + $0xab8] sm:$0xff]
    %v5490 = vld [vmem:[%s9 + $0xac0] sm:$0xff]
    %v5491 = vld [vmem:[%s9 + $0xac8] sm:$0xff]
    %v5492 = vld [vmem:[%s9 + $0xad0] sm:$0xff]
    %v5493 = vld [vmem:[%s9 + $0xad8] sm:$0xff]
    %v5494 = vld [vmem:[%s9 + $0xae0] sm:$0xff]
    %v5495 = vld [vmem:[%s9 + $0xae8] sm:$0xff]
    %v5496 = vld [vmem:[%s9 + $0xaf0] sm:$0xff]
    %v5497 = vld [vmem:[%s9 + $0xaf8] sm:$0xff]
    %v5498 = vld [vmem:[%s9 + $0xb00] sm:$0xff]
    %v5499 = vld [vmem:[%s9 + $0xb08] sm:$0xff]
    %v5500 = vld [vmem:[%s9 + $0xb10] sm:$0xff]
    %v5501 = vld [vmem:[%s9 + $0xb18] sm:$0xff]
    %v5502 = vld [vmem:[%s9 + $0xb20] sm:$0xff]
    %v5503 = vld [vmem:[%s9 + $0xb28] sm:$0xff]
    %v5504 = vld [vmem:[%s9 + $0xb30] sm:$0xff]
    %v5505 = vld [vmem:[%s9 + $0xb38] sm:$0xff]
    %v5506 = vld [vmem:[%s9 + $0xb40] sm:$0xff]
    %v5507 = vld [vmem:[%s9 + $0xb48] sm:$0xff]
    %v5508 = vld [vmem:[%s9 + $0xb50] sm:$0xff]
    %v5509 = vld [vmem:[%s9 + $0xb58] sm:$0xff]
    %v5510 = vld [vmem:[%s9 + $0xb60] sm:$0xff]
    %v5511 = vld [vmem:[%s9 + $0xb68] sm:$0xff]
    %v5512 = vld [vmem:[%s9 + $0xb70] sm:$0xff]
    %v5513 = vld [vmem:[%s9 + $0xb78] sm:$0xff]
    %v5514 = vld [vmem:[%s9 + $0xb80] sm:$0xff]
    %v5515 = vld [vmem:[%s9 + $0xb88] sm:$0xff]
    %v5516 = vld [vmem:[%s9 + $0xb90] sm:$0xff]
    %v5517 = vld [vmem:[%s9 + $0xb98] sm:$0xff]
    %v5518 = vld [vmem:[%s9 + $0xba0] sm:$0xff]
    %v5519 = vld [vmem:[%s9 + $0xba8] sm:$0xff]
    %v5520 = vld [vmem:[%s9 + $0xbb0] sm:$0xff]
    %v5521 = vld [vmem:[%s9 + $0xbb8] sm:$0xff]
    %v5522 = vld [vmem:[%s9 + $0xbc0] sm:$0xff]
    %v5523 = vld [vmem:[%s9 + $0xbc8] sm:$0xff]
    %v5524 = vld [vmem:[%s9 + $0xbd0] sm:$0xff]
    %v5525 = vld [vmem:[%s9 + $0xbd8] sm:$0xff]
    %v5526 = vld [vmem:[%s9 + $0xbe0] sm:$0xff]
    %v5527 = vld [vmem:[%s9 + $0xbe8] sm:$0xff]
    %v5528 = vld [vmem:[%s9 + $0xbf0] sm:$0xff]
    %v5529 = vld [vmem:[%s9 + $0xbf8] sm:$0xff]
    %v5530 = vld [vmem:[%s9 + $0xc00] sm:$0xff]
    %v5531 = vld [vmem:[%s9 + $0xc08] sm:$0xff]
    %v5532 = vld [vmem:[%s9 + $0xc10] sm:$0xff]
    %v5533 = vld [vmem:[%s9 + $0xc18] sm:$0xff]
    %v5534 = vld [vmem:[%s9 + $0xc20] sm:$0xff]
    %v5535 = vld [vmem:[%s9 + $0xc28] sm:$0xff]
    %v5536 = vld [vmem:[%s9 + $0xc30] sm:$0xff]
    %v5537 = vld [vmem:[%s9 + $0xc38] sm:$0xff]
    %v5538 = vld [vmem:[%s9 + $0xc40] sm:$0xff]
    %v5539 = vld [vmem:[%s9 + $0xc48] sm:$0xff]
    %v5540 = vld [vmem:[%s9 + $0xc50] sm:$0xff]
    %v5541 = vld [vmem:[%s9 + $0xc58] sm:$0xff]
    %v5542 = vld [vmem:[%s9 + $0xc60] sm:$0xff]
    %v5543 = vld [vmem:[%s9 + $0xc68] sm:$0xff]
    %v5544 = vld [vmem:[%s9 + $0xc70] sm:$0xff]
    %v5545 = vld [vmem:[%s9 + $0xc78] sm:$0xff]
    %v5546 = vld [vmem:[%s9 + $0xc80] sm:$0xff]
    %v5547 = vld [vmem:[%s9 + $0xc88] sm:$0xff]
    %v5548 = vld [vmem:[%s9 + $0xc90] sm:$0xff]
    %v5549 = vld [vmem:[%s9 + $0xc98] sm:$0xff]
    %v5550 = vld [vmem:[%s9 + $0xca0] sm:$0xff]
    %v5551 = vld [vmem:[%s9 + $0xca8] sm:$0xff]
    %v5552 = vld [vmem:[%s9 + $0xcb0] sm:$0xff]
    %v5553 = vld [vmem:[%s9 + $0xcb8] sm:$0xff]
    %v5554 = vld [vmem:[%s9 + $0xcc0] sm:$0xff]
    %v5555 = vld [vmem:[%s9 + $0xcc8] sm:$0xff]
    %v5556 = vld [vmem:[%s9 + $0xcd0] sm:$0xff]
    %v5557 = vld [vmem:[%s9 + $0xcd8] sm:$0xff]
    %v5558 = vld [vmem:[%s9 + $0xce0] sm:$0xff]
    %v5559 = vld [vmem:[%s9 + $0xce8] sm:$0xff]
    %v5560 = vld [vmem:[%s9 + $0xcf0] sm:$0xff]
    %v5561 = vld [vmem:[%s9 + $0xcf8] sm:$0xff]
    %v5562 = vld [vmem:[%s9 + $0xd00] sm:$0xff]
    %v5563 = vld [vmem:[%s9 + $0xd08] sm:$0xff]
    %v5564 = vld [vmem:[%s9 + $0xd10] sm:$0xff]
    %v5565 = vld [vmem:[%s9 + $0xd18] sm:$0xff]
    %v5566 = vld [vmem:[%s9 + $0xd20] sm:$0xff]
    %v5567 = vld [vmem:[%s9 + $0xd28] sm:$0xff]
    %v5568 = vld [vmem:[%s9 + $0xd30] sm:$0xff]
    %v5569 = vld [vmem:[%s9 + $0xd38] sm:$0xff]
    %v5570 = vld [vmem:[%s9 + $0xd40] sm:$0xff]
    %v5571 = vld [vmem:[%s9 + $0xd48] sm:$0xff]
    %v5572 = vld [vmem:[%s9 + $0xd50] sm:$0xff]
    %v5573 = vld [vmem:[%s9 + $0xd58] sm:$0xff]
    %v5574 = vld [vmem:[%s9 + $0xd60] sm:$0xff]
    %v5575 = vld [vmem:[%s9 + $0xd68] sm:$0xff]
    %v5576 = vld [vmem:[%s9 + $0xd70] sm:$0xff]
    %v5577 = vld [vmem:[%s9 + $0xd78] sm:$0xff]
    %v5578 = vld [vmem:[%s9 + $0xd80] sm:$0xff]
    %v5579 = vld [vmem:[%s9 + $0xd88] sm:$0xff]
    %v5580 = vld [vmem:[%s9 + $0xd90] sm:$0xff]
    %v5581 = vld [vmem:[%s9 + $0xd98] sm:$0xff]
    %v5582 = vld [vmem:[%s9 + $0xda0] sm:$0xff]
    %v5583 = vld [vmem:[%s9 + $0xda8] sm:$0xff]
    %v5584 = vld [vmem:[%s9 + $0xdb0] sm:$0xff]
    %v5585 = vld [vmem:[%s9 + $0xdb8] sm:$0xff]
    %v5586 = vld [vmem:[%s9 + $0xdc0] sm:$0xff]
    %v5587 = vld [vmem:[%s9 + $0xdc8] sm:$0xff]
    %v5588 = vld [vmem:[%s9 + $0xdd0] sm:$0xff]
    %v5589 = vld [vmem:[%s9 + $0xdd8] sm:$0xff]
    %v5590 = vld [vmem:[%s9 + $0xde0] sm:$0xff]
    %v5591 = vld [vmem:[%s9 + $0xde8] sm:$0xff]
    %v5592 = vld [vmem:[%s9 + $0xdf0] sm:$0xff]
    %v5593 = vld [vmem:[%s9 + $0xdf8] sm:$0xff]
    %v5594 = vld [vmem:[%s9 + $0xe00] sm:$0xff]
    %v5595 = vld [vmem:[%s9 + $0xe08] sm:$0xff]
    %v5596 = vld [vmem:[%s9 + $0xe10] sm:$0xff]
    %v5597 = vld [vmem:[%s9 + $0xe18] sm:$0xff]
    %v5598 = vld [vmem:[%s9 + $0xe20] sm:$0xff]
    %v5599 = vld [vmem:[%s9 + $0xe28] sm:$0xff]
    %v5600 = vld [vmem:[%s9 + $0xe30] sm:$0xff]
    %v5601 = vld [vmem:[%s9 + $0xe38] sm:$0xff]
    %v5602 = vld [vmem:[%s9 + $0xe40] sm:$0xff]
    %v5603 = vld [vmem:[%s9 + $0xe48] sm:$0xff]
    %v5604 = vld [vmem:[%s9 + $0xe50] sm:$0xff]
    %v5605 = vld [vmem:[%s9 + $0xe58] sm:$0xff]
    %v5606 = vld [vmem:[%s9 + $0xe60] sm:$0xff]
    %v5607 = vld [vmem:[%s9 + $0xe68] sm:$0xff]
    %v5608 = vld [vmem:[%s9 + $0xe70] sm:$0xff]
    %v5609 = vld [vmem:[%s9 + $0xe78] sm:$0xff]
    %v5610 = vld [vmem:[%s9 + $0xe80] sm:$0xff]
    %v5611 = vld [vmem:[%s9 + $0xe88] sm:$0xff]
    %v5612 = vld [vmem:[%s9 + $0xe90] sm:$0xff]
    %v5613 = vld [vmem:[%s9 + $0xe98] sm:$0xff]
    %v5614 = vld [vmem:[%s9 + $0xea0] sm:$0xff]
    %v5615 = vld [vmem:[%s9 + $0xea8] sm:$0xff]
    %v5616 = vld [vmem:[%s9 + $0xeb0] sm:$0xff]
    %v5617 = vld [vmem:[%s9 + $0xeb8] sm:$0xff]
    %v5618 = vld [vmem:[%s9 + $0xec0] sm:$0xff]
    %v5619 = vld [vmem:[%s9 + $0xec8] sm:$0xff]
    %v5620 = vld [vmem:[%s9 + $0xed0] sm:$0xff]
    %v5621 = vld [vmem:[%s9 + $0xed8] sm:$0xff]
    %v5622 = vld [vmem:[%s9 + $0xee0] sm:$0xff]
    %v5623 = vld [vmem:[%s9 + $0xee8] sm:$0xff]
    %v5624 = vld [vmem:[%s9 + $0xef0] sm:$0xff]
    %v5625 = vld [vmem:[%s9 + $0xef8] sm:$0xff]
    %v5626 = vld [vmem:[%s9 + $0xf00] sm:$0xff]
    %v5627 = vld [vmem:[%s9 + $0xf08] sm:$0xff]
    %v5628 = vld [vmem:[%s9 + $0xf10] sm:$0xff]
    %v5629 = vld [vmem:[%s9 + $0xf18] sm:$0xff]
    %v5630 = vld [vmem:[%s9 + $0xf20] sm:$0xff]
    %v5631 = vld [vmem:[%s9 + $0xf28] sm:$0xff]
    %v5632 = vld [vmem:[%s9 + $0xf30] sm:$0xff]
    %v5633 = vld [vmem:[%s9 + $0xf38] sm:$0xff]
    %v5634 = vld [vmem:[%s9 + $0xf40] sm:$0xff]
    %v5635 = vld [vmem:[%s9 + $0xf48] sm:$0xff]
    %v5636 = vld [vmem:[%s9 + $0xf50] sm:$0xff]
    %v5637 = vld [vmem:[%s9 + $0xf58] sm:$0xff]
    %v5638 = vld [vmem:[%s9 + $0xf60] sm:$0xff]
    %v5639 = vld [vmem:[%s9 + $0xf68] sm:$0xff]
    %v5640 = vld [vmem:[%s9 + $0xf70] sm:$0xff]
    %v5641 = vld [vmem:[%s9 + $0xf78] sm:$0xff]
    %v5642 = vld [vmem:[%s9 + $0xf80] sm:$0xff]
    %v5643 = vld [vmem:[%s9 + $0xf88] sm:$0xff]
    %v5644 = vld [vmem:[%s9 + $0xf90] sm:$0xff]
    %v5645 = vld [vmem:[%s9 + $0xf98] sm:$0xff]
    %v5646 = vld [vmem:[%s9 + $0xfa0] sm:$0xff]
    %v5647 = vld [vmem:[%s9 + $0xfa8] sm:$0xff]
    %v5648 = vld [vmem:[%s9 + $0xfb0] sm:$0xff]
    %v5649 = vld [vmem:[%s9 + $0xfb8] sm:$0xff]
    %v5650 = vld [vmem:[%s9 + $0xfc0] sm:$0xff]
    %v5651 = vld [vmem:[%s9 + $0xfc8] sm:$0xff]
    %v5652 = vld [vmem:[%s9 + $0xfd0] sm:$0xff]
    %v5653 = vld [vmem:[%s9 + $0xfd8] sm:$0xff]
    %v5654 = vld [vmem:[%s9 + $0xfe0] sm:$0xff]
    %v5655 = vld [vmem:[%s9 + $0xfe8] sm:$0xff]
    %v5656 = vld [vmem:[%s9 + $0xff0] sm:$0xff]
    %v5657 = vld [vmem:[%s9 + $0xff8] sm:$0xff]
    %v5658 = vld [vmem:[%s10] sm:$0x3]
    %v5660 = vlaneseq
    %v5661 = vshrl.u32 %v5660, 7
    %v5662 = vsub.s32 0, %v5661
    %v5663 = vrot.slane %v5658, %v5662
    %v5664 = vlaneseq
    %v5665 = vshrl.u32 %v5664, 7
    %v5666 = vsub.s32 1, %v5665
    %v5667 = vrot.slane %v5658, %v5666
    %v5702 = vrot.slane %v5086, 7
    %vm5703 = vcmask 1041409
    %v5704 = vsel %vm5703, %v5702, %v5084
    %v5705 = vrot.slane %v5090, 7
    %v5706 = vsel %vm5703, %v5705, %v5088
    %v5707 = vrot.slane %v5094, 7
    %v5708 = vsel %vm5703, %v5707, %v5092
    %v5709 = vrot.slane %v5098, 7
    %v5710 = vsel %vm5703, %v5709, %v5096
    %v5711 = vrot.slane %v5101, 7
    %v5712 = vsel %vm5703, %v5711, %v5099
    %v5713 = vrot.slane %v5105, 7
    %v5714 = vsel %vm5703, %v5713, %v5103
    %v5715 = vrot.slane %v5109, 7
    %v5716 = vsel %vm5703, %v5715, %v5107
    %v5717 = vrot.slane %v5113, 7
    %v5718 = vsel %vm5703, %v5717, %v5111
    %v5719 = vrot.slane %v5117, 7
    %v5720 = vsel %vm5703, %v5719, %v5115
    %v5721 = vrot.slane %v5121, 7
    %v5722 = vsel %vm5703, %v5721, %v5119
    %v5723 = vrot.slane %v5125, 7
    %v5724 = vsel %vm5703, %v5723, %v5123
    %v5725 = vrot.slane %v5129, 7
    %v5726 = vsel %vm5703, %v5725, %v5127
    %v5727 = vrot.slane %v5133, 7
    %v5728 = vsel %vm5703, %v5727, %v5131
    %v5729 = vrot.slane %v5137, 7
    %v5730 = vsel %vm5703, %v5729, %v5135
    %v5731 = vrot.slane %v5141, 7
    %v5732 = vsel %vm5703, %v5731, %v5139
    %v5733 = vrot.slane %v5145, 7
    %v5734 = vsel %vm5703, %v5733, %v5143
    %5751 = vmatprep.subr.mxu0 %v5147
    %5752 = vmatpush1.msra.mxu0 %v5146
    %5753 = vmatprep.subr.mxu0 %v5149
    %5754 = vmatpush1.msra.mxu0 %v5148
    %5755 = vmatprep.subr.mxu0 %v5151
    %5756 = vmatpush1.msra.mxu0 %v5150
    %5757 = vmatprep.subr.mxu0 %v5153
    %5758 = vmatpush1.msra.mxu0 %v5152
    %5759 = vmatprep.subr.mxu0 %v5155
    %5760 = vmatpush1.msra.mxu0 %v5154
    %5761 = vmatprep.subr.mxu0 %v5157
    %5762 = vmatpush1.msra.mxu0 %v5156
    %5763 = vmatprep.subr.mxu0 %v5159
    %5764 = vmatpush1.msra.mxu0 %v5158
    %5765 = vmatprep.subr.mxu0 %v5161
    %5766 = vmatpush1.msra.mxu0 %v5160
    %5767 = vmatprep.subr.mxu0 %v5163
    %5768 = vmatpush1.msra.mxu0 %v5162
    %5769 = vmatprep.subr.mxu0 %v5165
    %5770 = vmatpush1.msra.mxu0 %v5164
    %5771 = vmatprep.subr.mxu0 %v5167
    %5772 = vmatpush1.msra.mxu0 %v5166
    %5773 = vmatprep.subr.mxu0 %v5169
    %5774 = vmatpush1.msra.mxu0 %v5168
    %5775 = vmatprep.subr.mxu0 %v5171
    %5776 = vmatpush1.msra.mxu0 %v5170
    %5777 = vmatprep.subr.mxu0 %v5173
    %5778 = vmatpush1.msra.mxu0 %v5172
    %5779 = vmatprep.subr.mxu0 %v5175
    %5780 = vmatpush1.msra.mxu0 %v5174
    %5781 = vmatprep.subr.mxu0 %v5177
    %5782 = vmatpush1.msra.mxu0 %v5176
    %5783 = vmatprep.subr.mxu0 %v5179
    %5784 = vmatpush1.msra.mxu0 %v5178
    %5785 = vmatprep.subr.mxu0 %v5181
    %5786 = vmatpush1.msra.mxu0 %v5180
    %5787 = vmatprep.subr.mxu0 %v5183
    %5788 = vmatpush1.msra.mxu0 %v5182
    %5789 = vmatprep.subr.mxu0 %v5185
    %5790 = vmatpush1.msra.mxu0 %v5184
    %5791 = vmatprep.subr.mxu0 %v5187
    %5792 = vmatpush1.msra.mxu0 %v5186
    %5793 = vmatprep.subr.mxu0 %v5189
    %5794 = vmatpush1.msra.mxu0 %v5188
    %5795 = vmatprep.subr.mxu0 %v5191
    %5796 = vmatpush1.msra.mxu0 %v5190
    %5797 = vmatprep.subr.mxu0 %v5193
    %5798 = vmatpush1.msra.mxu0 %v5192
    %5799 = vmatprep.subr.mxu0 %v5195
    %5800 = vmatpush1.msra.mxu0 %v5194
    %5801 = vmatprep.subr.mxu0 %v5197
    %5802 = vmatpush1.msra.mxu0 %v5196
    %5803 = vmatprep.subr.mxu0 %v5199
    %5804 = vmatpush1.msra.mxu0 %v5198
    %5805 = vmatprep.subr.mxu0 %v5201
    %5806 = vmatpush1.msra.mxu0 %v5200
    %5807 = vmatprep.subr.mxu0 %v5203
    %5808 = vmatpush1.msra.mxu0 %v5202
    %5809 = vmatprep.subr.mxu0 %v5205
    %5810 = vmatpush1.msra.mxu0 %v5204
    %5811 = vmatprep.subr.mxu0 %v5207
    %5812 = vmatpush1.msra.mxu0 %v5206
    %5813 = vmatprep.subr.mxu0 %v5209
    %5814 = vmatpush1.msra.mxu0 %v5208
    %5815 = vmatprep.mubr.f32.mxu0 %v5706
    %5816 = vmatmul.mubr.f32.gmra.mrb[0].mxu0 %v5704
    %v5817 = vpop.f32.mrb[0].mxu0
    %v5818 = vadd.f32 %v5663, %v5817
    %v5819 = vpop.f32.mrb[0].mxu0
    %v5820 = vadd.f32 %v5667, %v5819
    %5821 = vdwg.mxu0
    %5822 = vmatprep.subr.mxu0 %v5211
    %5823 = vmatpush1.msra.mxu0 %v5210
    %5824 = vmatprep.subr.mxu0 %v5213
    %5825 = vmatpush1.msra.mxu0 %v5212
    %5826 = vmatprep.subr.mxu0 %v5215
    %5827 = vmatpush1.msra.mxu0 %v5214
    %5828 = vmatprep.subr.mxu0 %v5217
    %5829 = vmatpush1.msra.mxu0 %v5216
    %5830 = vmatprep.subr.mxu0 %v5219
    %5831 = vmatpush1.msra.mxu0 %v5218
    %5832 = vmatprep.subr.mxu0 %v5221
    %5833 = vmatpush1.msra.mxu0 %v5220
    %5834 = vmatprep.subr.mxu0 %v5223
    %5835 = vmatpush1.msra.mxu0 %v5222
    %5836 = vmatprep.subr.mxu0 %v5225
    %5837 = vmatpush1.msra.mxu0 %v5224
    %5838 = vmatprep.subr.mxu0 %v5227
    %5839 = vmatpush1.msra.mxu0 %v5226
    %5840 = vmatprep.subr.mxu0 %v5229
    %5841 = vmatpush1.msra.mxu0 %v5228
    %5842 = vmatprep.subr.mxu0 %v5231
    %5843 = vmatpush1.msra.mxu0 %v5230
    %5844 = vmatprep.subr.mxu0 %v5233
    %5845 = vmatpush1.msra.mxu0 %v5232
    %5846 = vmatprep.subr.mxu0 %v5235
    %5847 = vmatpush1.msra.mxu0 %v5234
    %5848 = vmatprep.subr.mxu0 %v5237
    %5849 = vmatpush1.msra.mxu0 %v5236
    %5850 = vmatprep.subr.mxu0 %v5239
    %5851 = vmatpush1.msra.mxu0 %v5238
    %5852 = vmatprep.subr.mxu0 %v5241
    %5853 = vmatpush1.msra.mxu0 %v5240
    %5854 = vmatprep.subr.mxu0 %v5243
    %5855 = vmatpush1.msra.mxu0 %v5242
    %5856 = vmatprep.subr.mxu0 %v5245
    %5857 = vmatpush1.msra.mxu0 %v5244
    %5858 = vmatprep.subr.mxu0 %v5247
    %5859 = vmatpush1.msra.mxu0 %v5246
    %5860 = vmatprep.subr.mxu0 %v5249
    %5861 = vmatpush1.msra.mxu0 %v5248
    %5862 = vmatprep.subr.mxu0 %v5251
    %5863 = vmatpush1.msra.mxu0 %v5250
    %5864 = vmatprep.subr.mxu0 %v5253
    %5865 = vmatpush1.msra.mxu0 %v5252
    %5866 = vmatprep.subr.mxu0 %v5255
    %5867 = vmatpush1.msra.mxu0 %v5254
    %5868 = vmatprep.subr.mxu0 %v5257
    %5869 = vmatpush1.msra.mxu0 %v5256
    %5870 = vmatprep.subr.mxu0 %v5259
    %5871 = vmatpush1.msra.mxu0 %v5258
    %5872 = vmatprep.subr.mxu0 %v5261
    %5873 = vmatpush1.msra.mxu0 %v5260
    %5874 = vmatprep.subr.mxu0 %v5263
    %5875 = vmatpush1.msra.mxu0 %v5262
    %5876 = vmatprep.subr.mxu0 %v5265
    %5877 = vmatpush1.msra.mxu0 %v5264
    %5878 = vmatprep.subr.mxu0 %v5267
    %5879 = vmatpush1.msra.mxu0 %v5266
    %5880 = vmatprep.subr.mxu0 %v5269
    %5881 = vmatpush1.msra.mxu0 %v5268
    %5882 = vmatprep.subr.mxu0 %v5271
    %5883 = vmatpush1.msra.mxu0 %v5270
    %5884 = vmatprep.subr.mxu0 %v5273
    %5885 = vmatpush1.msra.mxu0 %v5272
    %5886 = vmatprep.mubr.f32.mxu0 %v5710
    %5887 = vmatmul.mubr.f32.gmra.mrb[0].mxu0 %v5708
    %v5888 = vpop.f32.mrb[0].mxu0
    %v5889 = vadd.f32 %v5818, %v5888
    %v5890 = vpop.f32.mrb[0].mxu0
    %v5891 = vadd.f32 %v5820, %v5890
    %5892 = vdwg.mxu0
    %5893 = vmatprep.subr.mxu0 %v5275
    %5894 = vmatpush1.msra.mxu0 %v5274
    %5895 = vmatprep.subr.mxu0 %v5277
    %5896 = vmatpush1.msra.mxu0 %v5276
    %5897 = vmatprep.subr.mxu0 %v5279
    %5898 = vmatpush1.msra.mxu0 %v5278
    %5899 = vmatprep.subr.mxu0 %v5281
    %5900 = vmatpush1.msra.mxu0 %v5280
    %5901 = vmatprep.subr.mxu0 %v5283
    %5902 = vmatpush1.msra.mxu0 %v5282
    %5903 = vmatprep.subr.mxu0 %v5285
    %5904 = vmatpush1.msra.mxu0 %v5284
    %5905 = vmatprep.subr.mxu0 %v5287
    %5906 = vmatpush1.msra.mxu0 %v5286
    %5907 = vmatprep.subr.mxu0 %v5289
    %5908 = vmatpush1.msra.mxu0 %v5288
    %5909 = vmatprep.subr.mxu0 %v5291
    %5910 = vmatpush1.msra.mxu0 %v5290
    %5911 = vmatprep.subr.mxu0 %v5293
    %5912 = vmatpush1.msra.mxu0 %v5292
    %5913 = vmatprep.subr.mxu0 %v5295
    %5914 = vmatpush1.msra.mxu0 %v5294
    %5915 = vmatprep.subr.mxu0 %v5297
    %5916 = vmatpush1.msra.mxu0 %v5296
    %5917 = vmatprep.subr.mxu0 %v5299
    %5918 = vmatpush1.msra.mxu0 %v5298
    %5919 = vmatprep.subr.mxu0 %v5301
    %5920 = vmatpush1.msra.mxu0 %v5300
    %5921 = vmatprep.subr.mxu0 %v5303
    %5922 = vmatpush1.msra.mxu0 %v5302
    %5923 = vmatprep.subr.mxu0 %v5305
    %5924 = vmatpush1.msra.mxu0 %v5304
    %5925 = vmatprep.subr.mxu0 %v5307
    %5926 = vmatpush1.msra.mxu0 %v5306
    %5927 = vmatprep.subr.mxu0 %v5309
    %5928 = vmatpush1.msra.mxu0 %v5308
    %5929 = vmatprep.subr.mxu0 %v5311
    %5930 = vmatpush1.msra.mxu0 %v5310
    %5931 = vmatprep.subr.mxu0 %v5313
    %5932 = vmatpush1.msra.mxu0 %v5312
    %5933 = vmatprep.subr.mxu0 %v5315
    %5934 = vmatpush1.msra.mxu0 %v5314
    %5935 = vmatprep.subr.mxu0 %v5317
    %5936 = vmatpush1.msra.mxu0 %v5316
    %5937 = vmatprep.subr.mxu0 %v5319
    %5938 = vmatpush1.msra.mxu0 %v5318
    %5939 = vmatprep.subr.mxu0 %v5321
    %5940 = vmatpush1.msra.mxu0 %v5320
    %5941 = vmatprep.subr.mxu0 %v5323
    %5942 = vmatpush1.msra.mxu0 %v5322
    %5943 = vmatprep.subr.mxu0 %v5325
    %5944 = vmatpush1.msra.mxu0 %v5324
    %5945 = vmatprep.subr.mxu0 %v5327
    %5946 = vmatpush1.msra.mxu0 %v5326
    %5947 = vmatprep.subr.mxu0 %v5329
    %5948 = vmatpush1.msra.mxu0 %v5328
    %5949 = vmatprep.subr.mxu0 %v5331
    %5950 = vmatpush1.msra.mxu0 %v5330
    %5951 = vmatprep.subr.mxu0 %v5333
    %5952 = vmatpush1.msra.mxu0 %v5332
    %5953 = vmatprep.subr.mxu0 %v5335
    %5954 = vmatpush1.msra.mxu0 %v5334
    %5955 = vmatprep.subr.mxu0 %v5337
    %5956 = vmatpush1.msra.mxu0 %v5336
    %5957 = vmatprep.mubr.f32.mxu0 %v5714
    %5958 = vmatmul.mubr.f32.gmra.mrb[0].mxu0 %v5712
    %v5959 = vpop.f32.mrb[0].mxu0
    %v5960 = vadd.f32 %v5889, %v5959
    %v5961 = vpop.f32.mrb[0].mxu0
    %v5962 = vadd.f32 %v5891, %v5961
    %5963 = vdwg.mxu0
    %5964 = vmatprep.subr.mxu0 %v5339
    %5965 = vmatpush1.msra.mxu0 %v5338
    %5966 = vmatprep.subr.mxu0 %v5341
    %5967 = vmatpush1.msra.mxu0 %v5340
    %5968 = vmatprep.subr.mxu0 %v5343
    %5969 = vmatpush1.msra.mxu0 %v5342
    %5970 = vmatprep.subr.mxu0 %v5345
    %5971 = vmatpush1.msra.mxu0 %v5344
    %5972 = vmatprep.subr.mxu0 %v5347
    %5973 = vmatpush1.msra.mxu0 %v5346
    %5974 = vmatprep.subr.mxu0 %v5349
    %5975 = vmatpush1.msra.mxu0 %v5348
    %5976 = vmatprep.subr.mxu0 %v5351
    %5977 = vmatpush1.msra.mxu0 %v5350
    %5978 = vmatprep.subr.mxu0 %v5353
    %5979 = vmatpush1.msra.mxu0 %v5352
    %5980 = vmatprep.subr.mxu0 %v5355
    %5981 = vmatpush1.msra.mxu0 %v5354
    %5982 = vmatprep.subr.mxu0 %v5357
    %5983 = vmatpush1.msra.mxu0 %v5356
    %5984 = vmatprep.subr.mxu0 %v5359
    %5985 = vmatpush1.msra.mxu0 %v5358
    %5986 = vmatprep.subr.mxu0 %v5361
    %5987 = vmatpush1.msra.mxu0 %v5360
    %5988 = vmatprep.subr.mxu0 %v5363
    %5989 = vmatpush1.msra.mxu0 %v5362
    %5990 = vmatprep.subr.mxu0 %v5365
    %5991 = vmatpush1.msra.mxu0 %v5364
    %5992 = vmatprep.subr.mxu0 %v5367
    %5993 = vmatpush1.msra.mxu0 %v5366
    %5994 = vmatprep.subr.mxu0 %v5369
    %5995 = vmatpush1.msra.mxu0 %v5368
    %5996 = vmatprep.subr.mxu0 %v5371
    %5997 = vmatpush1.msra.mxu0 %v5370
    %5998 = vmatprep.subr.mxu0 %v5373
    %5999 = vmatpush1.msra.mxu0 %v5372
    %6000 = vmatprep.subr.mxu0 %v5375
    %6001 = vmatpush1.msra.mxu0 %v5374
    %6002 = vmatprep.subr.mxu0 %v5377
    %6003 = vmatpush1.msra.mxu0 %v5376
    %6004 = vmatprep.subr.mxu0 %v5379
    %6005 = vmatpush1.msra.mxu0 %v5378
    %6006 = vmatprep.subr.mxu0 %v5381
    %6007 = vmatpush1.msra.mxu0 %v5380
    %6008 = vmatprep.subr.mxu0 %v5383
    %6009 = vmatpush1.msra.mxu0 %v5382
    %6010 = vmatprep.subr.mxu0 %v5385
    %6011 = vmatpush1.msra.mxu0 %v5384
    %6012 = vmatprep.subr.mxu0 %v5387
    %6013 = vmatpush1.msra.mxu0 %v5386
    %6014 = vmatprep.subr.mxu0 %v5389
    %6015 = vmatpush1.msra.mxu0 %v5388
    %6016 = vmatprep.subr.mxu0 %v5391
    %6017 = vmatpush1.msra.mxu0 %v5390
    %6018 = vmatprep.subr.mxu0 %v5393
    %6019 = vmatpush1.msra.mxu0 %v5392
    %6020 = vmatprep.subr.mxu0 %v5395
    %6021 = vmatpush1.msra.mxu0 %v5394
    %6022 = vmatprep.subr.mxu0 %v5397
    %6023 = vmatpush1.msra.mxu0 %v5396
    %6024 = vmatprep.subr.mxu0 %v5399
    %6025 = vmatpush1.msra.mxu0 %v5398
    %6026 = vmatprep.subr.mxu0 %v5401
    %6027 = vmatpush1.msra.mxu0 %v5400
    %6028 = vmatprep.mubr.f32.mxu0 %v5718
    %6029 = vmatmul.mubr.f32.gmra.mrb[0].mxu0 %v5716
    %v6030 = vpop.f32.mrb[0].mxu0
    %v6031 = vadd.f32 %v5960, %v6030
    %v6032 = vpop.f32.mrb[0].mxu0
    %v6033 = vadd.f32 %v5962, %v6032
    %6034 = vdwg.mxu0
    %6035 = vmatprep.subr.mxu0 %v5403
    %6036 = vmatpush1.msra.mxu0 %v5402
    %6037 = vmatprep.subr.mxu0 %v5405
    %6038 = vmatpush1.msra.mxu0 %v5404
    %6039 = vmatprep.subr.mxu0 %v5407
    %6040 = vmatpush1.msra.mxu0 %v5406
    %6041 = vmatprep.subr.mxu0 %v5409
    %6042 = vmatpush1.msra.mxu0 %v5408
    %6043 = vmatprep.subr.mxu0 %v5411
    %6044 = vmatpush1.msra.mxu0 %v5410
    %6045 = vmatprep.subr.mxu0 %v5413
    %6046 = vmatpush1.msra.mxu0 %v5412
    %6047 = vmatprep.subr.mxu0 %v5415
    %6048 = vmatpush1.msra.mxu0 %v5414
    %6049 = vmatprep.subr.mxu0 %v5417
    %6050 = vmatpush1.msra.mxu0 %v5416
    %6051 = vmatprep.subr.mxu0 %v5419
    %6052 = vmatpush1.msra.mxu0 %v5418
    %6053 = vmatprep.subr.mxu0 %v5421
    %6054 = vmatpush1.msra.mxu0 %v5420
    %6055 = vmatprep.subr.mxu0 %v5423
    %6056 = vmatpush1.msra.mxu0 %v5422
    %6057 = vmatprep.subr.mxu0 %v5425
    %6058 = vmatpush1.msra.mxu0 %v5424
    %6059 = vmatprep.subr.mxu0 %v5427
    %6060 = vmatpush1.msra.mxu0 %v5426
    %6061 = vmatprep.subr.mxu0 %v5429
    %6062 = vmatpush1.msra.mxu0 %v5428
    %6063 = vmatprep.subr.mxu0 %v5431
    %6064 = vmatpush1.msra.mxu0 %v5430
    %6065 = vmatprep.subr.mxu0 %v5433
    %6066 = vmatpush1.msra.mxu0 %v5432
    %6067 = vmatprep.subr.mxu0 %v5435
    %6068 = vmatpush1.msra.mxu0 %v5434
    %6069 = vmatprep.subr.mxu0 %v5437
    %6070 = vmatpush1.msra.mxu0 %v5436
    %6071 = vmatprep.subr.mxu0 %v5439
    %6072 = vmatpush1.msra.mxu0 %v5438
    %6073 = vmatprep.subr.mxu0 %v5441
    %6074 = vmatpush1.msra.mxu0 %v5440
    %6075 = vmatprep.subr.mxu0 %v5443
    %6076 = vmatpush1.msra.mxu0 %v5442
    %6077 = vmatprep.subr.mxu0 %v5445
    %6078 = vmatpush1.msra.mxu0 %v5444
    %6079 = vmatprep.subr.mxu0 %v5447
    %6080 = vmatpush1.msra.mxu0 %v5446
    %6081 = vmatprep.subr.mxu0 %v5449
    %6082 = vmatpush1.msra.mxu0 %v5448
    %6083 = vmatprep.subr.mxu0 %v5451
    %6084 = vmatpush1.msra.mxu0 %v5450
    %6085 = vmatprep.subr.mxu0 %v5453
    %6086 = vmatpush1.msra.mxu0 %v5452
    %6087 = vmatprep.subr.mxu0 %v5455
    %6088 = vmatpush1.msra.mxu0 %v5454
    %6089 = vmatprep.subr.mxu0 %v5457
    %6090 = vmatpush1.msra.mxu0 %v5456
    %6091 = vmatprep.subr.mxu0 %v5459
    %6092 = vmatpush1.msra.mxu0 %v5458
    %6093 = vmatprep.subr.mxu0 %v5461
    %6094 = vmatpush1.msra.mxu0 %v5460
    %6095 = vmatprep.subr.mxu0 %v5463
    %6096 = vmatpush1.msra.mxu0 %v5462
    %6097 = vmatprep.subr.mxu0 %v5465
    %6098 = vmatpush1.msra.mxu0 %v5464
    %6099 = vmatprep.mubr.f32.mxu0 %v5722
    %6100 = vmatmul.mubr.f32.gmra.mrb[0].mxu0 %v5720
    %v6101 = vpop.f32.mrb[0].mxu0
    %v6102 = vadd.f32 %v6031, %v6101
    %v6103 = vpop.f32.mrb[0].mxu0
    %v6104 = vadd.f32 %v6033, %v6103
    %6105 = vdwg.mxu0
    %6106 = vmatprep.subr.mxu0 %v5467
    %6107 = vmatpush1.msra.mxu0 %v5466
    %6108 = vmatprep.subr.mxu0 %v5469
    %6109 = vmatpush1.msra.mxu0 %v5468
    %6110 = vmatprep.subr.mxu0 %v5471
    %6111 = vmatpush1.msra.mxu0 %v5470
    %6112 = vmatprep.subr.mxu0 %v5473
    %6113 = vmatpush1.msra.mxu0 %v5472
    %6114 = vmatprep.subr.mxu0 %v5475
    %6115 = vmatpush1.msra.mxu0 %v5474
    %6116 = vmatprep.subr.mxu0 %v5477
    %6117 = vmatpush1.msra.mxu0 %v5476
    %6118 = vmatprep.subr.mxu0 %v5479
    %6119 = vmatpush1.msra.mxu0 %v5478
    %6120 = vmatprep.subr.mxu0 %v5481
    %6121 = vmatpush1.msra.mxu0 %v5480
    %6122 = vmatprep.subr.mxu0 %v5483
    %6123 = vmatpush1.msra.mxu0 %v5482
    %6124 = vmatprep.subr.mxu0 %v5485
    %6125 = vmatpush1.msra.mxu0 %v5484
    %6126 = vmatprep.subr.mxu0 %v5487
    %6127 = vmatpush1.msra.mxu0 %v5486
    %6128 = vmatprep.subr.mxu0 %v5489
    %6129 = vmatpush1.msra.mxu0 %v5488
    %6130 = vmatprep.subr.mxu0 %v5491
    %6131 = vmatpush1.msra.mxu0 %v5490
    %6132 = vmatprep.subr.mxu0 %v5493
    %6133 = vmatpush1.msra.mxu0 %v5492
    %6134 = vmatprep.subr.mxu0 %v5495
    %6135 = vmatpush1.msra.mxu0 %v5494
    %6136 = vmatprep.subr.mxu0 %v5497
    %6137 = vmatpush1.msra.mxu0 %v5496
    %6138 = vmatprep.subr.mxu0 %v5499
    %6139 = vmatpush1.msra.mxu0 %v5498
    %6140 = vmatprep.subr.mxu0 %v5501
    %6141 = vmatpush1.msra.mxu0 %v5500
    %6142 = vmatprep.subr.mxu0 %v5503
    %6143 = vmatpush1.msra.mxu0 %v5502
    %6144 = vmatprep.subr.mxu0 %v5505
    %6145 = vmatpush1.msra.mxu0 %v5504
    %6146 = vmatprep.subr.mxu0 %v5507
    %6147 = vmatpush1.msra.mxu0 %v5506
    %6148 = vmatprep.subr.mxu0 %v5509
    %6149 = vmatpush1.msra.mxu0 %v5508
    %6150 = vmatprep.subr.mxu0 %v5511
    %6151 = vmatpush1.msra.mxu0 %v5510
    %6152 = vmatprep.subr.mxu0 %v5513
    %6153 = vmatpush1.msra.mxu0 %v5512
    %6154 = vmatprep.subr.mxu0 %v5515
    %6155 = vmatpush1.msra.mxu0 %v5514
    %6156 = vmatprep.subr.mxu0 %v5517
    %6157 = vmatpush1.msra.mxu0 %v5516
    %6158 = vmatprep.subr.mxu0 %v5519
    %6159 = vmatpush1.msra.mxu0 %v5518
    %6160 = vmatprep.subr.mxu0 %v5521
    %6161 = vmatpush1.msra.mxu0 %v5520
    %6162 = vmatprep.subr.mxu0 %v5523
    %6163 = vmatpush1.msra.mxu0 %v5522
    %6164 = vmatprep.subr.mxu0 %v5525
    %6165 = vmatpush1.msra.mxu0 %v5524
    %6166 = vmatprep.subr.mxu0 %v5527
    %6167 = vmatpush1.msra.mxu0 %v5526
    %6168 = vmatprep.subr.mxu0 %v5529
    %6169 = vmatpush1.msra.mxu0 %v5528
    %6170 = vmatprep.mubr.f32.mxu0 %v5726
    %6171 = vmatmul.mubr.f32.gmra.mrb[0].mxu0 %v5724
    %v6172 = vpop.f32.mrb[0].mxu0
    %v6173 = vadd.f32 %v6102, %v6172
    %v6174 = vpop.f32.mrb[0].mxu0
    %v6175 = vadd.f32 %v6104, %v6174
    %6176 = vdwg.mxu0
    %6177 = vmatprep.subr.mxu0 %v5531
    %6178 = vmatpush1.msra.mxu0 %v5530
    %6179 = vmatprep.subr.mxu0 %v5533
    %6180 = vmatpush1.msra.mxu0 %v5532
    %6181 = vmatprep.subr.mxu0 %v5535
    %6182 = vmatpush1.msra.mxu0 %v5534
    %6183 = vmatprep.subr.mxu0 %v5537
    %6184 = vmatpush1.msra.mxu0 %v5536
    %6185 = vmatprep.subr.mxu0 %v5539
    %6186 = vmatpush1.msra.mxu0 %v5538
    %6187 = vmatprep.subr.mxu0 %v5541
    %6188 = vmatpush1.msra.mxu0 %v5540
    %6189 = vmatprep.subr.mxu0 %v5543
    %6190 = vmatpush1.msra.mxu0 %v5542
    %6191 = vmatprep.subr.mxu0 %v5545
    %6192 = vmatpush1.msra.mxu0 %v5544
    %6193 = vmatprep.subr.mxu0 %v5547
    %6194 = vmatpush1.msra.mxu0 %v5546
    %6195 = vmatprep.subr.mxu0 %v5549
    %6196 = vmatpush1.msra.mxu0 %v5548
    %6197 = vmatprep.subr.mxu0 %v5551
    %6198 = vmatpush1.msra.mxu0 %v5550
    %6199 = vmatprep.subr.mxu0 %v5553
    %6200 = vmatpush1.msra.mxu0 %v5552
    %6201 = vmatprep.subr.mxu0 %v5555
    %6202 = vmatpush1.msra.mxu0 %v5554
    %6203 = vmatprep.subr.mxu0 %v5557
    %6204 = vmatpush1.msra.mxu0 %v5556
    %6205 = vmatprep.subr.mxu0 %v5559
    %6206 = vmatpush1.msra.mxu0 %v5558
    %6207 = vmatprep.subr.mxu0 %v5561
    %6208 = vmatpush1.msra.mxu0 %v5560
    %6209 = vmatprep.subr.mxu0 %v5563
    %6210 = vmatpush1.msra.mxu0 %v5562
    %6211 = vmatprep.subr.mxu0 %v5565
    %6212 = vmatpush1.msra.mxu0 %v5564
    %6213 = vmatprep.subr.mxu0 %v5567
    %6214 = vmatpush1.msra.mxu0 %v5566
    %6215 = vmatprep.subr.mxu0 %v5569
    %6216 = vmatpush1.msra.mxu0 %v5568
    %6217 = vmatprep.subr.mxu0 %v5571
    %6218 = vmatpush1.msra.mxu0 %v5570
    %6219 = vmatprep.subr.mxu0 %v5573
    %6220 = vmatpush1.msra.mxu0 %v5572
    %6221 = vmatprep.subr.mxu0 %v5575
    %6222 = vmatpush1.msra.mxu0 %v5574
    %6223 = vmatprep.subr.mxu0 %v5577
    %6224 = vmatpush1.msra.mxu0 %v5576
    %6225 = vmatprep.subr.mxu0 %v5579
    %6226 = vmatpush1.msra.mxu0 %v5578
    %6227 = vmatprep.subr.mxu0 %v5581
    %6228 = vmatpush1.msra.mxu0 %v5580
    %6229 = vmatprep.subr.mxu0 %v5583
    %6230 = vmatpush1.msra.mxu0 %v5582
    %6231 = vmatprep.subr.mxu0 %v5585
    %6232 = vmatpush1.msra.mxu0 %v5584
    %6233 = vmatprep.subr.mxu0 %v5587
    %6234 = vmatpush1.msra.mxu0 %v5586
    %6235 = vmatprep.subr.mxu0 %v5589
    %6236 = vmatpush1.msra.mxu0 %v5588
    %6237 = vmatprep.subr.mxu0 %v5591
    %6238 = vmatpush1.msra.mxu0 %v5590
    %6239 = vmatprep.subr.mxu0 %v5593
    %6240 = vmatpush1.msra.mxu0 %v5592
    %6241 = vmatprep.mubr.f32.mxu0 %v5730
    %6242 = vmatmul.mubr.f32.gmra.mrb[0].mxu0 %v5728
    %v6243 = vpop.f32.mrb[0].mxu0
    %v6244 = vadd.f32 %v6173, %v6243
    %v6245 = vpop.f32.mrb[0].mxu0
    %v6246 = vadd.f32 %v6175, %v6245
    %6247 = vdwg.mxu0
    %6248 = vmatprep.subr.mxu0 %v5595
    %6249 = vmatpush1.msra.mxu0 %v5594
    %6250 = vmatprep.subr.mxu0 %v5597
    %6251 = vmatpush1.msra.mxu0 %v5596
    %6252 = vmatprep.subr.mxu0 %v5599
    %6253 = vmatpush1.msra.mxu0 %v5598
    %6254 = vmatprep.subr.mxu0 %v5601
    %6255 = vmatpush1.msra.mxu0 %v5600
    %6256 = vmatprep.subr.mxu0 %v5603
    %6257 = vmatpush1.msra.mxu0 %v5602
    %6258 = vmatprep.subr.mxu0 %v5605
    %6259 = vmatpush1.msra.mxu0 %v5604
    %6260 = vmatprep.subr.mxu0 %v5607
    %6261 = vmatpush1.msra.mxu0 %v5606
    %6262 = vmatprep.subr.mxu0 %v5609
    %6263 = vmatpush1.msra.mxu0 %v5608
    %6264 = vmatprep.subr.mxu0 %v5611
    %6265 = vmatpush1.msra.mxu0 %v5610
    %6266 = vmatprep.subr.mxu0 %v5613
    %6267 = vmatpush1.msra.mxu0 %v5612
    %6268 = vmatprep.subr.mxu0 %v5615
    %6269 = vmatpush1.msra.mxu0 %v5614
    %6270 = vmatprep.subr.mxu0 %v5617
    %6271 = vmatpush1.msra.mxu0 %v5616
    %6272 = vmatprep.subr.mxu0 %v5619
    %6273 = vmatpush1.msra.mxu0 %v5618
    %6274 = vmatprep.subr.mxu0 %v5621
    %6275 = vmatpush1.msra.mxu0 %v5620
    %6276 = vmatprep.subr.mxu0 %v5623
    %6277 = vmatpush1.msra.mxu0 %v5622
    %6278 = vmatprep.subr.mxu0 %v5625
    %6279 = vmatpush1.msra.mxu0 %v5624
    %6280 = vmatprep.subr.mxu0 %v5627
    %6281 = vmatpush1.msra.mxu0 %v5626
    %6282 = vmatprep.subr.mxu0 %v5629
    %6283 = vmatpush1.msra.mxu0 %v5628
    %6284 = vmatprep.subr.mxu0 %v5631
    %6285 = vmatpush1.msra.mxu0 %v5630
    %6286 = vmatprep.subr.mxu0 %v5633
    %6287 = vmatpush1.msra.mxu0 %v5632
    %6288 = vmatprep.subr.mxu0 %v5635
    %6289 = vmatpush1.msra.mxu0 %v5634
    %6290 = vmatprep.subr.mxu0 %v5637
    %6291 = vmatpush1.msra.mxu0 %v5636
    %6292 = vmatprep.subr.mxu0 %v5639
    %6293 = vmatpush1.msra.mxu0 %v5638
    %6294 = vmatprep.subr.mxu0 %v5641
    %6295 = vmatpush1.msra.mxu0 %v5640
    %6296 = vmatprep.subr.mxu0 %v5643
    %6297 = vmatpush1.msra.mxu0 %v5642
    %6298 = vmatprep.subr.mxu0 %v5645
    %6299 = vmatpush1.msra.mxu0 %v5644
    %6300 = vmatprep.subr.mxu0 %v5647
    %6301 = vmatpush1.msra.mxu0 %v5646
    %6302 = vmatprep.subr.mxu0 %v5649
    %6303 = vmatpush1.msra.mxu0 %v5648
    %6304 = vmatprep.subr.mxu0 %v5651
    %6305 = vmatpush1.msra.mxu0 %v5650
    %6306 = vmatprep.subr.mxu0 %v5653
    %6307 = vmatpush1.msra.mxu0 %v5652
    %6308 = vmatprep.subr.mxu0 %v5655
    %6309 = vmatpush1.msra.mxu0 %v5654
    %6310 = vmatprep.subr.mxu0 %v5657
    %6311 = vmatpush1.msra.mxu0 %v5656
    %6312 = vmatprep.mubr.f32.mxu0 %v5734
    %6313 = vmatmul.mubr.f32.gmra.mrb[0].mxu0 %v5732
    %v6314 = vpop.f32.mrb[0].mxu0
    %v6315 = vadd.f32 %v6244, %v6314
    %v6316 = vpop.f32.mrb[0].mxu0
    %v6317 = vadd.f32 %v6246, %v6316
    %6318 = vdwg.mxu0
    %vm6319 = vcmp.gt.f32.partialorder %v6315, 0.0
    %vm6320 = vcmp.gt.f32.partialorder %v6317, 0.0
    %v6321 = vmul.f32 %v6315, 0.1
    %v6322 = vmul.f32 %v6317, 0.1
    %v6323 = vsel %vm6319, %v6315, %v6321
    %v6324 = vsel %vm6320, %v6317, %v6322
    %v6327 = vcombine.low %v6323, %v6324
    %v6329 = vunpack.c.l.s4 1983009808
    %v6330 = vunpack.c.0.s8 %v6329
    %v6331 = vlaneseq
    %v6332 = vshrl.u32 %v6331, 7
    %v6333 = vsub.s32 %v6330, %v6332
    %v6334 = vrot.slane %v6327, %v6333
    %6336 = vst [vmem:[%s11] sm:$0xf] %v6334
    // Predicated region
    $region50: #{depth_encoder_forward_fused.1} parent=1 // pred_check
      _
    $region51: #{depth_encoder_forward_fused.1} parent=1 // pred_check_branch
      %6338 = sbr.rel (0) target = $region53
    $region52: #{depth_encoder_forward_fused.1} parent=1 // pred_region
      _
    $region53: #{depth_encoder_forward_fused.1} parent=1 // pred_fallthru
      _
    // Predicated region
    $region54: #{depth_encoder_forward_fused.1} parent=1 // pred_check
      _
    $region55: #{depth_encoder_forward_fused.1} parent=1 // pred_check_branch
      %6340 = sbr.rel (0) target = $region57
    $region56: #{depth_encoder_forward_fused.1} parent=1 // pred_region
      _
    $region57: #{depth_encoder_forward_fused.1} parent=1 // pred_fallthru
      _
    %6341 = vsyncpa [#allocation7], 1

// kernel: depth_encoder_forward_layered.5
$region0: #{depth_encoder_forward_layered.5}
  #allocation0 [shape = 'u32[]', space=smem, size = 0x4, offset = 0x4, fixed_abs, tag = 'smem constant byte address 0x4 - core index']
  #allocation1 [shape = 'u32[144,128]{1,0:T(1,128)}', space=vmem, size = 0x12000, scoped, tag = 'internal scratch']
  %s0 = inlined_call_operand.vmem [shape: f32[512,16], index: 0, kind: input, shape index: {}]
  %s1 = inlined_call_operand.hbm [shape: f32[16,16], index: 1, kind: input, shape index: {}]
  %s2 = inlined_call_operand.hbm [shape: f32[1,16], index: 2, kind: input, shape index: {}]
  %s3 = inlined_call_operand.vmem [shape: f32[512,16], index: 3, kind: output, shape index: {}]
  %s4 = sld [smem:[#allocation0]]
  $region53: #{depth_encoder_forward_layered.5} parent=0
    _
  %s6 = ssub.s32 1, %s4
  %s7 = scalar_select 0, %s6, %s4
  $region1: #{depth_encoder_forward_layered.5} parent=0
    #allocation2 [shape = 'u8[8192]{0}', space=vmem, size = 0x2000, scoped, tag = 'input window, operand 1, single buffered']
    #allocation3 [shape = 's32[2]{0}', space=sflag, size = 0x8, scoped, tag = 'scoped memory for depth_encoder_forward_layered.5']
    #allocation4 [shape = 'u8[512]{0}', space=vmem, size = 0x400, scoped, tag = 'input window, operand 2, single buffered']
    #allocation5 [shape = 's32[1]{0}', space=sflag, size = 0x4, scoped, tag = 'scoped memory for depth_encoder_forward_layered.5']
    %8 = vsyncpa [#allocation3], 0
    %9 = vsyncpa [#allocation5], 0
    loop: start=0, step=1, limit=4
    $region2: #{depth_encoder_forward_layered.5} parent=1 // loop_pre_header
      _
    $region3: #{depth_encoder_forward_layered.5} parent=1 // loop_header
      %s11 = sphi 0, %s15
      %p12 = scmp.ge.s32.totalorder %s11, 4
      %s21 = sphi 0, %s23
      %s24 = sphi 0, %s21
      %s25 = sphi 0, %s24
      %s41 = sphi 0, %s25
      %s45 = sphi 0, %s45
      %s47 = sphi 0, %s45
      %s48 = sphi 0, %s47
      %s62 = sphi 0, %s48
      %s66 = sphi 0, %s66
      %s68 = sphi 0, %s66
      %s69 = sphi 0, %s68
      %s83 = sphi 0, %s69
      %s89 = sphi 0, %s91
      %s92 = sphi 0, %s89
      %s93 = sphi 0, %s92
      %s109 = sphi 0, %s93
    $region4: #{depth_encoder_forward_layered.5} parent=1 // loop_header_branch
      %14 = sbr.rel (%p12) target = $region8
    $region5: #{depth_encoder_forward_layered.5} parent=1 // loop_body
      %s16 = ssub.s32 %s11, 1
      %s17 = ssub.s32 %s11, 2
      %s18 = sadd.s32 %s11, 1
      %s19 = ssub.s32 %s11, %s18
      %p20 = scmp.eq.s32.totalorder %s19, 0
      %s22 = sadd.s32 %s21, 1
      %s23 = scalar_select %p20, %s21, %s22
      %p26 = pneg %p20
      %p27 = scmp.eq.s32.totalorder %s11, 1
      %p28 = por %p26, %p27
      %p29 = scmp.ne.s32.totalorder %s21, %s24
      %p30 = scmp.eq.s32.totalorder %s11, 0
      %p31 = por %p29, %p30
      %p32 = scmp.ne.s32.totalorder %s21, %s24
      %p33 = scmp.eq.s32.totalorder %s16, 1
      %p34 = por %p32, %p33
      %p35 = scmp.ne.s32.totalorder %s24, %s25
      %p36 = scmp.eq.s32.totalorder %s16, 0
      %p37 = por %p35, %p36
      %p38 = scmp.ne.s32.totalorder %s24, %s25
      %p39 = scmp.eq.s32.totalorder %s17, 1
      %p40 = por %p38, %p39
      %p42 = scmp.ne.s32.totalorder %s25, %s41
      %p43 = scmp.eq.s32.totalorder %s17, 0
      %p44 = por %p42, %p43
      %s46 = sadd.s32 %s45, 1
      %p49 = scmp.eq.s32.totalorder %s11, 1
      %p50 = scmp.ne.s32.totalorder %s45, %s47
      %p51 = scmp.eq.s32.totalorder %s11, 0
      %p52 = por %p50, %p51
      %p53 = scmp.ne.s32.totalorder %s45, %s47
      %p54 = scmp.eq.s32.totalorder %s16, 1
      %p55 = por %p53, %p54
      %p56 = scmp.ne.s32.totalorder %s47, %s48
      %p57 = scmp.eq.s32.totalorder %s16, 0
      %p58 = por %p56, %p57
      %p59 = scmp.ne.s32.totalorder %s47, %s48
      %p60 = scmp.eq.s32.totalorder %s17, 1
      %p61 = por %p59, %p60
      %p63 = scmp.ne.s32.totalorder %s48, %s62
      %p64 = scmp.eq.s32.totalorder %s17, 0
      %p65 = por %p63, %p64
      %s67 = sadd.s32 %s66, 1
      %p70 = scmp.eq.s32.totalorder %s11, 1
      %p71 = scmp.ne.s32.totalorder %s66, %s68
      %p72 = scmp.eq.s32.totalorder %s11, 0
      %p73 = por %p71, %p72
      %p74 = scmp.ne.s32.totalorder %s66, %s68
      %p75 = scmp.eq.s32.totalorder %s16, 1
      %p76 = por %p74, %p75
      %p77 = scmp.ne.s32.totalorder %s68, %s69
      %p78 = scmp.eq.s32.totalorder %s16, 0
      %p79 = por %p77, %p78
      %p80 = scmp.ne.s32.totalorder %s68, %s69
      %p81 = scmp.eq.s32.totalorder %s17, 1
      %p82 = por %p80, %p81
      %p84 = scmp.ne.s32.totalorder %s69, %s83
      %p85 = scmp.eq.s32.totalorder %s17, 0
      %p86 = por %p84, %p85
      %s87 = ssub.s32 %s11, %s18
      %p88 = scmp.eq.s32.totalorder %s87, 0
      %s90 = sadd.s32 %s89, 1
      %s91 = scalar_select %p88, %s89, %s90
      %p94 = pneg %p88
      %p95 = scmp.eq.s32.totalorder %s11, 1
      %p96 = por %p94, %p95
      %p97 = scmp.ne.s32.totalorder %s89, %s92
      %p98 = scmp.eq.s32.totalorder %s11, 0
      %p99 = por %p97, %p98
      %p100 = scmp.ne.s32.totalorder %s89, %s92
      %p101 = scmp.eq.s32.totalorder %s16, 1
      %p102 = por %p100, %p101
      %p103 = scmp.ne.s32.totalorder %s92, %s93
      %p104 = scmp.eq.s32.totalorder %s16, 0
      %p105 = por %p103, %p104
      %p106 = scmp.ne.s32.totalorder %s92, %s93
      %p107 = scmp.eq.s32.totalorder %s17, 1
      %p108 = por %p106, %p107
      %p110 = scmp.ne.s32.totalorder %s93, %s109
      %p111 = scmp.eq.s32.totalorder %s17, 0
      %p112 = por %p110, %p111
      %p113 = scmp.le.s32.totalorder 1, %s11
      %p114 = scmp.lt.s32.totalorder %s11, 3
      %p115 = pnand %p113, %p114
      %p116 = pneg %p115
      // Predicated region
      $region9: #{depth_encoder_forward_layered.5} parent=5 // pred_check
        _
      $region10: #{depth_encoder_forward_layered.5} parent=5 // pred_check_branch
        %118 = sbr.rel (%p115) target = $region12
      $region11: #{depth_encoder_forward_layered.5} parent=5 // pred_region
        %s119 = ssub.s32 %s11, 1
        // Predicated region
        $region13: #{depth_encoder_forward_layered.5} parent=11 // pred_check
          %p120 = pneg %p58
        $region14: #{depth_encoder_forward_layered.5} parent=11 // pred_check_branch
          %122 = sbr.rel (%p120) target = $region16
        $region15: #{depth_encoder_forward_layered.5} parent=11 // pred_region
          %s124 = ssub.s32 256, 256
          %125 = vsyncadd [#allocation3], %s124
          %s126 = sshll.u32 [#allocation2], 4
          %s127 = int_to_ptr.vmem [resolvable:$true] %s126
          %132 = dma.hbm_to_vmem [thread:$0]  %s1, 256, %s127, [#allocation3], 128, 128, 8
        $region16: #{depth_encoder_forward_layered.5} parent=11 // pred_fallthru
          _
        // Predicated region
        $region17: #{depth_encoder_forward_layered.5} parent=11 // pred_check
          %p133 = pneg %p79
        $region18: #{depth_encoder_forward_layered.5} parent=11 // pred_check_branch
          %135 = sbr.rel (%p133) target = $region20
        $region19: #{depth_encoder_forward_layered.5} parent=11 // pred_region
          %s137 = ssub.s32 16, 16
          %138 = vsyncadd [#allocation5], %s137
          %s140 = sshll.u32 [#allocation4], 4
          %s141 = int_to_ptr.vmem [resolvable:$true] %s140
          %143 = dma.hbm_to_vmem [thread:$0]  %s2, 16, %s141, [#allocation5]
        $region20: #{depth_encoder_forward_layered.5} parent=11 // pred_fallthru
          _
      $region12: #{depth_encoder_forward_layered.5} parent=5 // pred_fallthru
        _
      %p144 = scmp.lt.s32.totalorder %s11, 2
      // Predicated region
      $region21: #{depth_encoder_forward_layered.5} parent=5 // pred_check
        %p145 = pneg %p144
      $region22: #{depth_encoder_forward_layered.5} parent=5 // pred_check_branch
        %147 = sbr.rel (%p145) target = $region24
      $region23: #{depth_encoder_forward_layered.5} parent=5 // pred_region
        // Predicated region
        $region25: #{depth_encoder_forward_layered.5} parent=23 // pred_check
          %p148 = pneg %p31
        $region26: #{depth_encoder_forward_layered.5} parent=23 // pred_check_branch
          %150 = sbr.rel (%p148) target = $region28
        $region27: #{depth_encoder_forward_layered.5} parent=23 // pred_region
          %s151 = smul.u32 32, %s11
          %p152 = scmp.lt.s32.totalorder %s151, 63
          %s153 = scalar_select %p152, %s151, 63
          %s154 = smul.addr %s153, 8
          %s155 = scalar_lea.vmem %s0, %s154
          %s156 = smul.u32 32, %s11
        $region28: #{depth_encoder_forward_layered.5} parent=23 // pred_fallthru
          _
      $region24: #{depth_encoder_forward_layered.5} parent=5 // pred_fallthru
        _
      %p157 = scmp.le.s32.totalorder 1, %s11
      %p158 = scmp.lt.s32.totalorder %s11, 3
      %p159 = pnand %p157, %p158
      %p160 = pneg %p159
      // Predicated region
      $region29: #{depth_encoder_forward_layered.5} parent=5 // pred_check
        _
      $region30: #{depth_encoder_forward_layered.5} parent=5 // pred_check_branch
        %162 = sbr.rel (%p159) target = $region32
      $region31: #{depth_encoder_forward_layered.5} parent=5 // pred_region
        %s163 = ssub.s32 %s11, 1
        // Predicated region
        $region33: #{depth_encoder_forward_layered.5} parent=31 // pred_check
          %p164 = pneg %p58
        $region34: #{depth_encoder_forward_layered.5} parent=31 // pred_check_branch
          %166 = sbr.rel (%p164) target = $region36
        $region35: #{depth_encoder_forward_layered.5} parent=31 // pred_region
          %167 = dma.done [#allocation3], 256
        $region36: #{depth_encoder_forward_layered.5} parent=31 // pred_fallthru
          _
        // Predicated region
        $region37: #{depth_encoder_forward_layered.5} parent=31 // pred_check
          %p168 = pneg %p79
        $region38: #{depth_encoder_forward_layered.5} parent=31 // pred_check_branch
          %170 = sbr.rel (%p168) target = $region40
        $region39: #{depth_encoder_forward_layered.5} parent=31 // pred_region
          %171 = dma.done [#allocation5], 16
        $region40: #{depth_encoder_forward_layered.5} parent=31 // pred_fallthru
          _
        %s172 = smul.u32 32, %s16
        %p173 = scmp.lt.s32.totalorder %s172, 63
        %s174 = scalar_select %p173, %s172, 63
        %s175 = smul.addr %s174, 8
        %s176 = scalar_lea.vmem %s0, %s175
        %p177 = pneg %p37
        %p178 = pneg %p34
        %p179 = pneg %p58
        %p180 = pneg %p55
        %p181 = pneg %p79
        %p182 = pneg %p76
        %p183 = pneg %p105
        %p184 = pneg %p102
        %s185 = smul.u32 32, %s16
        %p186 = scmp.lt.s32.totalorder %s185, 63
        %s187 = scalar_select %p186, %s185, 63
        %s188 = smul.addr %s187, 8
        %s189 = scalar_lea.vmem %s3, %s188
        %s190 = smul.u32 32, %s16
        %p191 = scmp.lt.s32.totalorder %s190, 63
        %s192 = scalar_select %p191, %s190, 63
        %s193 = smul.addr %s192, 8
        %s194 = scalar_lea.vmem %s0, %s193
        %s195 = smul.u32 32, %s16
        %s196 = smul.u32 32, %s16
        %p197 = scmp.lt.s32.totalorder %s196, 63
        %s198 = scalar_select %p197, %s196, 63
        %s199 = smul.addr %s198, 8
        %s200 = scalar_lea.vmem %s3, %s199
        %s201 = smul.u32 32, %s16
        %v202 = vld [vmem:[%s194] sm:$0xff]
        %v203 = vld [vmem:[%s194 + $0x8] sm:$0xff]
        %v204 = vld [vmem:[%s194 + $0x10] sm:$0xff]
        %v205 = vld [vmem:[%s194 + $0x18] sm:$0xff]
        %v206 = vld [vmem:[%s194 + $0x20] sm:$0xff]
        %v207 = vld [vmem:[%s194 + $0x28] sm:$0xff]
        %v208 = vld [vmem:[%s194 + $0x30] sm:$0xff]
        %v209 = vld [vmem:[%s194 + $0x38] sm:$0xff]
        %v210 = vld [vmem:[%s194 + $0x40] sm:$0xff]
        %v211 = vld [vmem:[%s194 + $0x48] sm:$0xff]
        %v212 = vld [vmem:[%s194 + $0x50] sm:$0xff]
        %v213 = vld [vmem:[%s194 + $0x58] sm:$0xff]
        %v214 = vld [vmem:[%s194 + $0x60] sm:$0xff]
        %v215 = vld [vmem:[%s194 + $0x68] sm:$0xff]
        %v216 = vld [vmem:[%s194 + $0x70] sm:$0xff]
        %v217 = vld [vmem:[%s194 + $0x78] sm:$0xff]
        %v218 = vld [vmem:[%s194 + $0x80] sm:$0xff]
        %v219 = vld [vmem:[%s194 + $0x88] sm:$0xff]
        %v220 = vld [vmem:[%s194 + $0x90] sm:$0xff]
        %v221 = vld [vmem:[%s194 + $0x98] sm:$0xff]
        %v222 = vld [vmem:[%s194 + $0xa0] sm:$0xff]
        %v223 = vld [vmem:[%s194 + $0xa8] sm:$0xff]
        %v224 = vld [vmem:[%s194 + $0xb0] sm:$0xff]
        %v225 = vld [vmem:[%s194 + $0xb8] sm:$0xff]
        %v226 = vld [vmem:[%s194 + $0xc0] sm:$0xff]
        %v227 = vld [vmem:[%s194 + $0xc8] sm:$0xff]
        %v228 = vld [vmem:[%s194 + $0xd0] sm:$0xff]
        %v229 = vld [vmem:[%s194 + $0xd8] sm:$0xff]
        %v230 = vld [vmem:[%s194 + $0xe0] sm:$0xff]
        %v231 = vld [vmem:[%s194 + $0xe8] sm:$0xff]
        %v232 = vld [vmem:[%s194 + $0xf0] sm:$0xff]
        %v233 = vld [vmem:[%s194 + $0xf8] sm:$0xff]
        %v234 = vld [vmem:[#allocation2] sm:$0xff]
        %v235 = vld [vmem:[#allocation2 + $0x8] sm:$0xff]
        %v236 = vld [vmem:[#allocation4] sm:$0x1]
        %v238 = vlaneseq
        %v239 = vshrl.u32 %v238, 7
        %v240 = vsub.s32 0, %v239
        %v241 = vrot.slane %v236, %v240
        %vm243 = vcmask 130048
        %v245 = vsel %vm243, %v202, 0
        %v248 = vsel %vm243, %v203, 0
        %v251 = vsel %vm243, %v204, 0
        %v254 = vsel %vm243, %v205, 0
        %v257 = vsel %vm243, %v206, 0
        %v260 = vsel %vm243, %v207, 0
        %v263 = vsel %vm243, %v208, 0
        %v266 = vsel %vm243, %v209, 0
        %v269 = vsel %vm243, %v210, 0
        %v272 = vsel %vm243, %v211, 0
        %v275 = vsel %vm243, %v212, 0
        %v278 = vsel %vm243, %v213, 0
        %v281 = vsel %vm243, %v214, 0
        %v284 = vsel %vm243, %v215, 0
        %v287 = vsel %vm243, %v216, 0
        %v290 = vsel %vm243, %v217, 0
        %v293 = vsel %vm243, %v218, 0
        %v296 = vsel %vm243, %v219, 0
        %v299 = vsel %vm243, %v220, 0
        %v302 = vsel %vm243, %v221, 0
        %v305 = vsel %vm243, %v222, 0
        %v308 = vsel %vm243, %v223, 0
        %v311 = vsel %vm243, %v224, 0
        %v314 = vsel %vm243, %v225, 0
        %v317 = vsel %vm243, %v226, 0
        %v320 = vsel %vm243, %v227, 0
        %v323 = vsel %vm243, %v228, 0
        %v326 = vsel %vm243, %v229, 0
        %v329 = vsel %vm243, %v230, 0
        %v332 = vsel %vm243, %v231, 0
        %v335 = vsel %vm243, %v232, 0
        %v338 = vsel %vm243, %v233, 0
        %340 = vmatprep.subr.mxu0 0.0
        %341 = vmatpush1.msra.mxu0 %v234
        %342 = vmatprep.subr.mxu0 0.0
        %343 = vmatpush1.msra.mxu0 %v235
        %344 = vmatprep.subr.mxu0 0.0
        %345 = vmatpush1.msra.mxu0 0.0
        %346 = vmatprep.subr.mxu0 0.0
        %347 = vmatpush1.msra.mxu0 0.0
        %348 = vmatprep.subr.mxu0 0.0
        %349 = vmatpush1.msra.mxu0 0.0
        %350 = vmatprep.subr.mxu0 0.0
        %351 = vmatpush1.msra.mxu0 0.0
        %352 = vmatprep.subr.mxu0 0.0
        %353 = vmatpush1.msra.mxu0 0.0
        %354 = vmatprep.subr.mxu0 0.0
        %355 = vmatpush1.msra.mxu0 0.0
        %356 = vmatprep.subr.mxu0 0.0
        %357 = vmatpush1.msra.mxu0 0.0
        %358 = vmatprep.subr.mxu0 0.0
        %359 = vmatpush1.msra.mxu0 0.0
        %360 = vmatprep.subr.mxu0 0.0
        %361 = vmatpush1.msra.mxu0 0.0
        %362 = vmatprep.subr.mxu0 0.0
        %363 = vmatpush1.msra.mxu0 0.0
        %364 = vmatprep.subr.mxu0 0.0
        %365 = vmatpush1.msra.mxu0 0.0
        %366 = vmatprep.subr.mxu0 0.0
        %367 = vmatpush1.msra.mxu0 0.0
        %368 = vmatprep.subr.mxu0 0.0
        %369 = vmatpush1.msra.mxu0 0.0
        %370 = vmatprep.subr.mxu0 0.0
        %371 = vmatpush1.msra.mxu0 0.0
        %372 = vmatprep.subr.mxu0 0.0
        %373 = vmatpush1.msra.mxu0 0.0
        %374 = vmatprep.subr.mxu0 0.0
        %375 = vmatpush1.msra.mxu0 0.0
        %376 = vmatprep.subr.mxu0 0.0
        %377 = vmatpush1.msra.mxu0 0.0
        %378 = vmatprep.subr.mxu0 0.0
        %379 = vmatpush1.msra.mxu0 0.0
        %380 = vmatprep.subr.mxu0 0.0
        %381 = vmatpush1.msra.mxu0 0.0
        %382 = vmatprep.subr.mxu0 0.0
        %383 = vmatpush1.msra.mxu0 0.0
        %384 = vmatprep.subr.mxu0 0.0
        %385 = vmatpush1.msra.mxu0 0.0
        %386 = vmatprep.subr.mxu0 0.0
        %387 = vmatpush1.msra.mxu0 0.0
        %388 = vmatprep.subr.mxu0 0.0
        %389 = vmatpush1.msra.mxu0 0.0
        %390 = vmatprep.subr.mxu0 0.0
        %391 = vmatpush1.msra.mxu0 0.0
        %392 = vmatprep.subr.mxu0 0.0
        %393 = vmatpush1.msra.mxu0 0.0
        %394 = vmatprep.subr.mxu0 0.0
        %395 = vmatpush1.msra.mxu0 0.0
        %396 = vmatprep.subr.mxu0 0.0
        %397 = vmatpush1.msra.mxu0 0.0
        %398 = vmatprep.subr.mxu0 0.0
        %399 = vmatpush1.msra.mxu0 0.0
        %400 = vmatprep.subr.mxu0 0.0
        %401 = vmatpush1.msra.mxu0 0.0
        %402 = vmatprep.subr.mxu0 0.0
        %403 = vmatpush1.msra.mxu0 0.0
        %404 = vmatprep.mubr.f32.mxu0 0.0
        %405 = vmatmul.mubr.f32.gmra.mrb[0].mxu0 %v245
        %v406 = vpop.f32.mrb[0].mxu0
        %v407 = vadd.f32 %v241, %v406
        %v408 = vpop.f32.mrb[0].mxu0
        %409 = vmatprep.mubr.f32.mxu0 0.0
        %410 = vmatmul.mubr.f32.gmra.mrb[0].mxu0 %v248
        %v411 = vpop.f32.mrb[0].mxu0
        %v412 = vadd.f32 %v241, %v411
        %v413 = vpop.f32.mrb[0].mxu0
        %414 = vmatprep.mubr.f32.mxu0 0.0
        %415 = vmatmul.mubr.f32.gmra.mrb[0].mxu0 %v251
        %v416 = vpop.f32.mrb[0].mxu0
        %v417 = vadd.f32 %v241, %v416
        %v418 = vpop.f32.mrb[0].mxu0
        %419 = vmatprep.mubr.f32.mxu0 0.0
        %420 = vmatmul.mubr.f32.gmra.mrb[0].mxu0 %v254
        %v421 = vpop.f32.mrb[0].mxu0
        %v422 = vadd.f32 %v241, %v421
        %v423 = vpop.f32.mrb[0].mxu0
        %424 = vmatprep.mubr.f32.mxu0 0.0
        %425 = vmatmul.mubr.f32.gmra.mrb[0].mxu0 %v257
        %v426 = vpop.f32.mrb[0].mxu0
        %v427 = vadd.f32 %v241, %v426
        %v428 = vpop.f32.mrb[0].mxu0
        %429 = vmatprep.mubr.f32.mxu0 0.0
        %430 = vmatmul.mubr.f32.gmra.mrb[0].mxu0 %v260
        %v431 = vpop.f32.mrb[0].mxu0
        %v432 = vadd.f32 %v241, %v431
        %v433 = vpop.f32.mrb[0].mxu0
        %434 = vmatprep.mubr.f32.mxu0 0.0
        %435 = vmatmul.mubr.f32.gmra.mrb[0].mxu0 %v263
        %v436 = vpop.f32.mrb[0].mxu0
        %v437 = vadd.f32 %v241, %v436
        %v438 = vpop.f32.mrb[0].mxu0
        %439 = vmatprep.mubr.f32.mxu0 0.0
        %440 = vmatmul.mubr.f32.gmra.mrb[0].mxu0 %v266
        %v441 = vpop.f32.mrb[0].mxu0
        %v442 = vadd.f32 %v241, %v441
        %v443 = vpop.f32.mrb[0].mxu0
        %444 = vmatprep.mubr.f32.mxu0 0.0
        %445 = vmatmul.mubr.f32.gmra.mrb[0].mxu0 %v269
        %v446 = vpop.f32.mrb[0].mxu0
        %v447 = vadd.f32 %v241, %v446
        %v448 = vpop.f32.mrb[0].mxu0
        %449 = vmatprep.mubr.f32.mxu0 0.0
        %450 = vmatmul.mubr.f32.gmra.mrb[0].mxu0 %v272
        %v451 = vpop.f32.mrb[0].mxu0
        %v452 = vadd.f32 %v241, %v451
        %v453 = vpop.f32.mrb[0].mxu0
        %454 = vmatprep.mubr.f32.mxu0 0.0
        %455 = vmatmul.mubr.f32.gmra.mrb[0].mxu0 %v275
        %v456 = vpop.f32.mrb[0].mxu0
        %v457 = vadd.f32 %v241, %v456
        %v458 = vpop.f32.mrb[0].mxu0
        %459 = vmatprep.mubr.f32.mxu0 0.0
        %460 = vmatmul.mubr.f32.gmra.mrb[0].mxu0 %v278
        %v461 = vpop.f32.mrb[0].mxu0
        %v462 = vadd.f32 %v241, %v461
        %v463 = vpop.f32.mrb[0].mxu0
        %464 = vmatprep.mubr.f32.mxu0 0.0
        %465 = vmatmul.mubr.f32.gmra.mrb[0].mxu0 %v281
        %v466 = vpop.f32.mrb[0].mxu0
        %v467 = vadd.f32 %v241, %v466
        %v468 = vpop.f32.mrb[0].mxu0
        %469 = vmatprep.mubr.f32.mxu0 0.0
        %470 = vmatmul.mubr.f32.gmra.mrb[0].mxu0 %v284
        %v471 = vpop.f32.mrb[0].mxu0
        %v472 = vadd.f32 %v241, %v471
        %v473 = vpop.f32.mrb[0].mxu0
        %474 = vmatprep.mubr.f32.mxu0 0.0
        %475 = vmatmul.mubr.f32.gmra.mrb[0].mxu0 %v287
        %v476 = vpop.f32.mrb[0].mxu0
        %v477 = vadd.f32 %v241, %v476
        %v478 = vpop.f32.mrb[0].mxu0
        %479 = vmatprep.mubr.f32.mxu0 0.0
        %480 = vmatmul.mubr.f32.gmra.mrb[0].mxu0 %v290
        %v481 = vpop.f32.mrb[0].mxu0
        %v482 = vadd.f32 %v241, %v481
        %v483 = vpop.f32.mrb[0].mxu0
        %484 = vmatprep.mubr.f32.mxu0 0.0
        %485 = vmatmul.mubr.f32.gmra.mrb[0].mxu0 %v293
        %v486 = vpop.f32.mrb[0].mxu0
        %v487 = vadd.f32 %v241, %v486
        %v488 = vpop.f32.mrb[0].mxu0
        %489 = vmatprep.mubr.f32.mxu0 0.0
        %490 = vmatmul.mubr.f32.gmra.mrb[0].mxu0 %v296
        %v491 = vpop.f32.mrb[0].mxu0
        %v492 = vadd.f32 %v241, %v491
        %v493 = vpop.f32.mrb[0].mxu0
        %494 = vmatprep.mubr.f32.mxu0 0.0
        %495 = vmatmul.mubr.f32.gmra.mrb[0].mxu0 %v299
        %v496 = vpop.f32.mrb[0].mxu0
        %v497 = vadd.f32 %v241, %v496
        %v498 = vpop.f32.mrb[0].mxu0
        %499 = vmatprep.mubr.f32.mxu0 0.0
        %500 = vmatmul.mubr.f32.gmra.mrb[0].mxu0 %v302
        %v501 = vpop.f32.mrb[0].mxu0
        %v502 = vadd.f32 %v241, %v501
        %v503 = vpop.f32.mrb[0].mxu0
        %504 = vmatprep.mubr.f32.mxu0 0.0
        %505 = vmatmul.mubr.f32.gmra.mrb[0].mxu0 %v305
        %v506 = vpop.f32.mrb[0].mxu0
        %v507 = vadd.f32 %v241, %v506
        %v508 = vpop.f32.mrb[0].mxu0
        %509 = vmatprep.mubr.f32.mxu0 0.0
        %510 = vmatmul.mubr.f32.gmra.mrb[0].mxu0 %v308
        %v511 = vpop.f32.mrb[0].mxu0
        %v512 = vadd.f32 %v241, %v511
        %v513 = vpop.f32.mrb[0].mxu0
        %514 = vmatprep.mubr.f32.mxu0 0.0
        %515 = vmatmul.mubr.f32.gmra.mrb[0].mxu0 %v311
        %v516 = vpop.f32.mrb[0].mxu0
        %v517 = vadd.f32 %v241, %v516
        %v518 = vpop.f32.mrb[0].mxu0
        %519 = vmatprep.mubr.f32.mxu0 0.0
        %520 = vmatmul.mubr.f32.gmra.mrb[0].mxu0 %v314
        %v521 = vpop.f32.mrb[0].mxu0
        %v522 = vadd.f32 %v241, %v521
        %v523 = vpop.f32.mrb[0].mxu0
        %524 = vmatprep.mubr.f32.mxu0 0.0
        %525 = vmatmul.mubr.f32.gmra.mrb[0].mxu0 %v317
        %v526 = vpop.f32.mrb[0].mxu0
        %v527 = vadd.f32 %v241, %v526
        %v528 = vpop.f32.mrb[0].mxu0
        %529 = vmatprep.mubr.f32.mxu0 0.0
        %530 = vmatmul.mubr.f32.gmra.mrb[0].mxu0 %v320
        %v531 = vpop.f32.mrb[0].mxu0
        %v532 = vadd.f32 %v241, %v531
        %v533 = vpop.f32.mrb[0].mxu0
        %534 = vmatprep.mubr.f32.mxu0 0.0
        %535 = vmatmul.mubr.f32.gmra.mrb[0].mxu0 %v323
        %v536 = vpop.f32.mrb[0].mxu0
        %v537 = vadd.f32 %v241, %v536
        %v538 = vpop.f32.mrb[0].mxu0
        %539 = vmatprep.mubr.f32.mxu0 0.0
        %540 = vmatmul.mubr.f32.gmra.mrb[0].mxu0 %v326
        %v541 = vpop.f32.mrb[0].mxu0
        %v542 = vadd.f32 %v241, %v541
        %v543 = vpop.f32.mrb[0].mxu0
        %544 = vmatprep.mubr.f32.mxu0 0.0
        %545 = vmatmul.mubr.f32.gmra.mrb[0].mxu0 %v329
        %v546 = vpop.f32.mrb[0].mxu0
        %v547 = vadd.f32 %v241, %v546
        %v548 = vpop.f32.mrb[0].mxu0
        %549 = vmatprep.mubr.f32.mxu0 0.0
        %550 = vmatmul.mubr.f32.gmra.mrb[0].mxu0 %v332
        %v551 = vpop.f32.mrb[0].mxu0
        %v552 = vadd.f32 %v241, %v551
        %v553 = vpop.f32.mrb[0].mxu0
        %554 = vmatprep.mubr.f32.mxu0 0.0
        %555 = vmatmul.mubr.f32.gmra.mrb[0].mxu0 %v335
        %v556 = vpop.f32.mrb[0].mxu0
        %v557 = vadd.f32 %v241, %v556
        %v558 = vpop.f32.mrb[0].mxu0
        %559 = vmatprep.mubr.f32.mxu0 0.0
        %560 = vmatmul.mubr.f32.gmra.mrb[0].mxu0 %v338
        %v561 = vpop.f32.mrb[0].mxu0
        %v562 = vadd.f32 %v241, %v561
        %v563 = vpop.f32.mrb[0].mxu0
        %564 = vdwg.mxu0
        %vm565 = vcmp.gt.f32.partialorder %v407, 0.0
        %vm566 = vcmp.gt.f32.partialorder %v412, 0.0
        %vm567 = vcmp.gt.f32.partialorder %v417, 0.0
        %vm568 = vcmp.gt.f32.partialorder %v422, 0.0
        %vm569 = vcmp.gt.f32.partialorder %v427, 0.0
        %vm570 = vcmp.gt.f32.partialorder %v432, 0.0
        %vm571 = vcmp.gt.f32.partialorder %v437, 0.0
        %vm572 = vcmp.gt.f32.partialorder %v442, 0.0
        %vm573 = vcmp.gt.f32.partialorder %v447, 0.0
        %vm574 = vcmp.gt.f32.partialorder %v452, 0.0
        %vm575 = vcmp.gt.f32.partialorder %v457, 0.0
        %vm576 = vcmp.gt.f32.partialorder %v462, 0.0
        %vm577 = vcmp.gt.f32.partialorder %v467, 0.0
        %vm578 = vcmp.gt.f32.partialorder %v472, 0.0
        %vm579 = vcmp.gt.f32.partialorder %v477, 0.0
        %vm580 = vcmp.gt.f32.partialorder %v482, 0.0
        %vm581 = vcmp.gt.f32.partialorder %v487, 0.0
        %vm582 = vcmp.gt.f32.partialorder %v492, 0.0
        %vm583 = vcmp.gt.f32.partialorder %v497, 0.0
        %vm584 = vcmp.gt.f32.partialorder %v502, 0.0
        %vm585 = vcmp.gt.f32.partialorder %v507, 0.0
        %vm586 = vcmp.gt.f32.partialorder %v512, 0.0
        %vm587 = vcmp.gt.f32.partialorder %v517, 0.0
        %vm588 = vcmp.gt.f32.partialorder %v522, 0.0
        %vm589 = vcmp.gt.f32.partialorder %v527, 0.0
        %vm590 = vcmp.gt.f32.partialorder %v532, 0.0
        %vm591 = vcmp.gt.f32.partialorder %v537, 0.0
        %vm592 = vcmp.gt.f32.partialorder %v542, 0.0
        %vm593 = vcmp.gt.f32.partialorder %v547, 0.0
        %vm594 = vcmp.gt.f32.partialorder %v552, 0.0
        %vm595 = vcmp.gt.f32.partialorder %v557, 0.0
        %vm596 = vcmp.gt.f32.partialorder %v562, 0.0
        %v597 = vmul.f32 %v407, 0.1
        %v598 = vmul.f32 %v412, 0.1
        %v599 = vmul.f32 %v417, 0.1
        %v600 = vmul.f32 %v422, 0.1
        %v601 = vmul.f32 %v427, 0.1
        %v602 = vmul.f32 %v432, 0.1
        %v603 = vmul.f32 %v437, 0.1
        %v604 = vmul.f32 %v442, 0.1
        %v605 = vmul.f32 %v447, 0.1
        %v606 = vmul.f32 %v452, 0.1
        %v607 = vmul.f32 %v457, 0.1
        %v608 = vmul.f32 %v462, 0.1
        %v609 = vmul.f32 %v467, 0.1
        %v610 = vmul.f32 %v472, 0.1
        %v611 = vmul.f32 %v477, 0.1
        %v612 = vmul.f32 %v482, 0.1
        %v613 = vmul.f32 %v487, 0.1
        %v614 = vmul.f32 %v492, 0.1
        %v615 = vmul.f32 %v497, 0.1
        %v616 = vmul.f32 %v502, 0.1
        %v617 = vmul.f32 %v507, 0.1
        %v618 = vmul.f32 %v512, 0.1
        %v619 = vmul.f32 %v517, 0.1
        %v620 = vmul.f32 %v522, 0.1
        %v621 = vmul.f32 %v527, 0.1
        %v622 = vmul.f32 %v532, 0.1
        %v623 = vmul.f32 %v537, 0.1
        %v624 = vmul.f32 %v542, 0.1
        %v625 = vmul.f32 %v547, 0.1
        %v626 = vmul.f32 %v552, 0.1
        %v627 = vmul.f32 %v557, 0.1
        %v628 = vmul.f32 %v562, 0.1
        %v629 = vsel %vm565, %v407, %v597
        %v630 = vsel %vm566, %v412, %v598
        %v631 = vsel %vm567, %v417, %v599
        %v632 = vsel %vm568, %v422, %v600
        %v633 = vsel %vm569, %v427, %v601
        %v634 = vsel %vm570, %v432, %v602
        %v635 = vsel %vm571, %v437, %v603
        %v636 = vsel %vm572, %v442, %v604
        %v637 = vsel %vm573, %v447, %v605
        %v638 = vsel %vm574, %v452, %v606
        %v639 = vsel %vm575, %v457, %v607
        %v640 = vsel %vm576, %v462, %v608
        %v641 = vsel %vm577, %v467, %v609
        %v642 = vsel %vm578, %v472, %v610
        %v643 = vsel %vm579, %v477, %v611
        %v644 = vsel %vm580, %v482, %v612
        %v645 = vsel %vm581, %v487, %v613
        %v646 = vsel %vm582, %v492, %v614
        %v647 = vsel %vm583, %v497, %v615
        %v648 = vsel %vm584, %v502, %v616
        %v649 = vsel %vm585, %v507, %v617
        %v650 = vsel %vm586, %v512, %v618
        %v651 = vsel %vm587, %v517, %v619
        %v652 = vsel %vm588, %v522, %v620
        %v653 = vsel %vm589, %v527, %v621
        %v654 = vsel %vm590, %v532, %v622
        %v655 = vsel %vm591, %v537, %v623
        %v656 = vsel %vm592, %v542, %v624
        %v657 = vsel %vm593, %v547, %v625
        %v658 = vsel %vm594, %v552, %v626
        %v659 = vsel %vm595, %v557, %v627
        %v660 = vsel %vm596, %v562, %v628
        %661 = vst.msk [vmem:[%s200] sm:$0xff] %vm243, %v629
        %662 = vst.msk [vmem:[%s200 + $0x8] sm:$0xff] %vm243, %v630
        %663 = vst.msk [vmem:[%s200 + $0x10] sm:$0xff] %vm243, %v631
        %664 = vst.msk [vmem:[%s200 + $0x18] sm:$0xff] %vm243, %v632
        %665 = vst.msk [vmem:[%s200 + $0x20] sm:$0xff] %vm243, %v633
        %666 = vst.msk [vmem:[%s200 + $0x28] sm:$0xff] %vm243, %v634
        %667 = vst.msk [vmem:[%s200 + $0x30] sm:$0xff] %vm243, %v635
        %668 = vst.msk [vmem:[%s200 + $0x38] sm:$0xff] %vm243, %v636
        %669 = vst.msk [vmem:[%s200 + $0x40] sm:$0xff] %vm243, %v637
        %670 = vst.msk [vmem:[%s200 + $0x48] sm:$0xff] %vm243, %v638
        %671 = vst.msk [vmem:[%s200 + $0x50] sm:$0xff] %vm243, %v639
        %672 = vst.msk [vmem:[%s200 + $0x58] sm:$0xff] %vm243, %v640
        %673 = vst.msk [vmem:[%s200 + $0x60] sm:$0xff] %vm243, %v641
        %674 = vst.msk [vmem:[%s200 + $0x68] sm:$0xff] %vm243, %v642
        %675 = vst.msk [vmem:[%s200 + $0x70] sm:$0xff] %vm243, %v643
        %676 = vst.msk [vmem:[%s200 + $0x78] sm:$0xff] %vm243, %v644
        %677 = vst.msk [vmem:[%s200 + $0x80] sm:$0xff] %vm243, %v645
        %678 = vst.msk [vmem:[%s200 + $0x88] sm:$0xff] %vm243, %v646
        %679 = vst.msk [vmem:[%s200 + $0x90] sm:$0xff] %vm243, %v647
        %680 = vst.msk [vmem:[%s200 + $0x98] sm:$0xff] %vm243, %v648
        %681 = vst.msk [vmem:[%s200 + $0xa0] sm:$0xff] %vm243, %v649
        %682 = vst.msk [vmem:[%s200 + $0xa8] sm:$0xff] %vm243, %v650
        %683 = vst.msk [vmem:[%s200 + $0xb0] sm:$0xff] %vm243, %v651
        %684 = vst.msk [vmem:[%s200 + $0xb8] sm:$0xff] %vm243, %v652
        %685 = vst.msk [vmem:[%s200 + $0xc0] sm:$0xff] %vm243, %v653
        %686 = vst.msk [vmem:[%s200 + $0xc8] sm:$0xff] %vm243, %v654
        %687 = vst.msk [vmem:[%s200 + $0xd0] sm:$0xff] %vm243, %v655
        %688 = vst.msk [vmem:[%s200 + $0xd8] sm:$0xff] %vm243, %v656
        %689 = vst.msk [vmem:[%s200 + $0xe0] sm:$0xff] %vm243, %v657
        %690 = vst.msk [vmem:[%s200 + $0xe8] sm:$0xff] %vm243, %v658
        %691 = vst.msk [vmem:[%s200 + $0xf0] sm:$0xff] %vm243, %v659
        %692 = vst.msk [vmem:[%s200 + $0xf8] sm:$0xff] %vm243, %v660
        %s693 = smul.u32 32, %s16
        %p694 = scmp.lt.s32.totalorder %s693, 63
        %s695 = scalar_select %p694, %s693, 63
        %s696 = smul.addr %s695, 8
        %s697 = scalar_lea.vmem %s3, %s696
        // Predicated region
        $region41: #{depth_encoder_forward_layered.5} parent=31 // pred_check
          %p698 = pneg %p102
        $region42: #{depth_encoder_forward_layered.5} parent=31 // pred_check_branch
          %700 = sbr.rel (%p698) target = $region44
        $region43: #{depth_encoder_forward_layered.5} parent=31 // pred_region
          %s701 = smul.u32 32, %s16
        $region44: #{depth_encoder_forward_layered.5} parent=31 // pred_fallthru
          _
      $region32: #{depth_encoder_forward_layered.5} parent=5 // pred_fallthru
        _
      %p702 = scmp.le.s32.totalorder 2, %s11
      // Predicated region
      $region45: #{depth_encoder_forward_layered.5} parent=5 // pred_check
        %p703 = pneg %p702
      $region46: #{depth_encoder_forward_layered.5} parent=5 // pred_check_branch
        %705 = sbr.rel (%p703) target = $region48
      $region47: #{depth_encoder_forward_layered.5} parent=5 // pred_region
        %s706 = ssub.s32 %s11, 2
        // Predicated region
        $region49: #{depth_encoder_forward_layered.5} parent=47 // pred_check
          %p707 = pneg %p108
        $region50: #{depth_encoder_forward_layered.5} parent=47 // pred_check_branch
          %709 = sbr.rel (%p707) target = $region52
        $region51: #{depth_encoder_forward_layered.5} parent=47 // pred_region
          %s710 = smul.u32 32, %s17
          %p711 = scmp.lt.s32.totalorder %s710, 63
          %s712 = scalar_select %p711, %s710, 63
          %s713 = smul.addr %s712, 8
          %s714 = scalar_lea.vmem %s3, %s713
        $region52: #{depth_encoder_forward_layered.5} parent=47 // pred_fallthru
          _
      $region48: #{depth_encoder_forward_layered.5} parent=5 // pred_fallthru
        _
    $region6: #{depth_encoder_forward_layered.5} parent=1 // loop_footer
      %s15 = sadd.s32 1, %s11
    $region7: #{depth_encoder_forward_layered.5} parent=1 // loop_footer_branch
      %10 = sbr.rel target = $region3
    $region8: #{depth_encoder_forward_layered.5} parent=1 // loop_exit
      _
    %715 = vsyncpa [#allocation3], 1
    %s716 = scalar_lea.sflag [#allocation3], 1
    %717 = vsyncpa %s716, 1
    %718 = vsyncpa [#allocation5], 1

// kernel: depth_encoder_forward_layered.6
$region0: #{depth_encoder_forward_layered.6}
  #allocation0 [shape = 'u32[]', space=smem, size = 0x4, offset = 0x4, fixed_abs, tag = 'smem constant byte address 0x4 - core index']
  #allocation1 [shape = 'u32[144,128]{1,0:T(1,128)}', space=vmem, size = 0x12000, scoped, tag = 'internal scratch']
  %s0 = inlined_call_operand.vmem [shape: f32[128,256], index: 0, kind: input, shape index: {}]
  %s1 = inlined_call_operand.vmem [shape: f32[256,32], index: 1, kind: input, shape index: {}]
  %s2 = inlined_call_operand.vmem [shape: f32[1,32], index: 2, kind: input, shape index: {}]
  %s3 = inlined_call_operand.vmem [shape: f32[128,32], index: 3, kind: output, shape index: {}]
  %s4 = sld [smem:[#allocation0]]
  $region22: #{depth_encoder_forward_layered.6} parent=0
    _
  %s6 = ssub.s32 1, %s4
  %s7 = scalar_select 0, %s6, %s4
  // Predicated region
  $region2: #{depth_encoder_forward_layered.6} parent=0 // pred_check
    _
  $region3: #{depth_encoder_forward_layered.6} parent=0 // pred_check_branch
    %9 = sbr.rel (0) target = $region5
  $region4: #{depth_encoder_forward_layered.6} parent=0 // pred_region
    _
  $region5: #{depth_encoder_forward_layered.6} parent=0 // pred_fallthru
    _
  // Predicated region
  $region6: #{depth_encoder_forward_layered.6} parent=0 // pred_check
    _
  $region7: #{depth_encoder_forward_layered.6} parent=0 // pred_check_branch
    %11 = sbr.rel (0) target = $region9
  $region8: #{depth_encoder_forward_layered.6} parent=0 // pred_region
    _
  $region9: #{depth_encoder_forward_layered.6} parent=0 // pred_fallthru
    _
  // Predicated region
  $region10: #{depth_encoder_forward_layered.6} parent=0 // pred_check
    _
  $region11: #{depth_encoder_forward_layered.6} parent=0 // pred_check_branch
    %13 = sbr.rel (0) target = $region13
  $region12: #{depth_encoder_forward_layered.6} parent=0 // pred_region
    _
  $region13: #{depth_encoder_forward_layered.6} parent=0 // pred_fallthru
    _
  %v14 = vld [vmem:[%s0] sm:$0xff]
  %v15 = vld [vmem:[%s0 + $0x8] sm:$0xff]
  %v16 = vld [vmem:[%s0 + $0x10] sm:$0xff]
  %v17 = vld [vmem:[%s0 + $0x18] sm:$0xff]
  %v18 = vld [vmem:[%s0 + $0x20] sm:$0xff]
  %v19 = vld [vmem:[%s0 + $0x28] sm:$0xff]
  %v20 = vld [vmem:[%s0 + $0x30] sm:$0xff]
  %v21 = vld [vmem:[%s0 + $0x38] sm:$0xff]
  %v22 = vld [vmem:[%s0 + $0x40] sm:$0xff]
  %v23 = vld [vmem:[%s0 + $0x48] sm:$0xff]
  %v24 = vld [vmem:[%s0 + $0x50] sm:$0xff]
  %v25 = vld [vmem:[%s0 + $0x58] sm:$0xff]
  %v26 = vld [vmem:[%s0 + $0x60] sm:$0xff]
  %v27 = vld [vmem:[%s0 + $0x68] sm:$0xff]
  %v28 = vld [vmem:[%s0 + $0x70] sm:$0xff]
  %v29 = vld [vmem:[%s0 + $0x78] sm:$0xff]
  %v30 = vld [vmem:[%s0 + $0x80] sm:$0xff]
  %v31 = vld [vmem:[%s0 + $0x88] sm:$0xff]
  %v32 = vld [vmem:[%s0 + $0x90] sm:$0xff]
  %v33 = vld [vmem:[%s0 + $0x98] sm:$0xff]
  %v34 = vld [vmem:[%s0 + $0xa0] sm:$0xff]
  %v35 = vld [vmem:[%s0 + $0xa8] sm:$0xff]
  %v36 = vld [vmem:[%s0 + $0xb0] sm:$0xff]
  %v37 = vld [vmem:[%s0 + $0xb8] sm:$0xff]
  %v38 = vld [vmem:[%s0 + $0xc0] sm:$0xff]
  %v39 = vld [vmem:[%s0 + $0xc8] sm:$0xff]
  %v40 = vld [vmem:[%s0 + $0xd0] sm:$0xff]
  %v41 = vld [vmem:[%s0 + $0xd8] sm:$0xff]
  %v42 = vld [vmem:[%s0 + $0xe0] sm:$0xff]
  %v43 = vld [vmem:[%s0 + $0xe8] sm:$0xff]
  %v44 = vld [vmem:[%s0 + $0xf0] sm:$0xff]
  %v45 = vld [vmem:[%s0 + $0xf8] sm:$0xff]
  %v46 = vld [vmem:[%s1] sm:$0xff]
  %v47 = vld [vmem:[%s1 + $0x8] sm:$0xff]
  %v48 = vld [vmem:[%s1 + $0x10] sm:$0xff]
  %v49 = vld [vmem:[%s1 + $0x18] sm:$0xff]
  %v50 = vld [vmem:[%s1 + $0x20] sm:$0xff]
  %v51 = vld [vmem:[%s1 + $0x28] sm:$0xff]
  %v52 = vld [vmem:[%s1 + $0x30] sm:$0xff]
  %v53 = vld [vmem:[%s1 + $0x38] sm:$0xff]
  %v54 = vld [vmem:[%s1 + $0x40] sm:$0xff]
  %v55 = vld [vmem:[%s1 + $0x48] sm:$0xff]
  %v56 = vld [vmem:[%s1 + $0x50] sm:$0xff]
  %v57 = vld [vmem:[%s1 + $0x58] sm:$0xff]
  %v58 = vld [vmem:[%s1 + $0x60] sm:$0xff]
  %v59 = vld [vmem:[%s1 + $0x68] sm:$0xff]
  %v60 = vld [vmem:[%s1 + $0x70] sm:$0xff]
  %v61 = vld [vmem:[%s1 + $0x78] sm:$0xff]
  %v62 = vld [vmem:[%s1 + $0x80] sm:$0xff]
  %v63 = vld [vmem:[%s1 + $0x88] sm:$0xff]
  %v64 = vld [vmem:[%s1 + $0x90] sm:$0xff]
  %v65 = vld [vmem:[%s1 + $0x98] sm:$0xff]
  %v66 = vld [vmem:[%s1 + $0xa0] sm:$0xff]
  %v67 = vld [vmem:[%s1 + $0xa8] sm:$0xff]
  %v68 = vld [vmem:[%s1 + $0xb0] sm:$0xff]
  %v69 = vld [vmem:[%s1 + $0xb8] sm:$0xff]
  %v70 = vld [vmem:[%s1 + $0xc0] sm:$0xff]
  %v71 = vld [vmem:[%s1 + $0xc8] sm:$0xff]
  %v72 = vld [vmem:[%s1 + $0xd0] sm:$0xff]
  %v73 = vld [vmem:[%s1 + $0xd8] sm:$0xff]
  %v74 = vld [vmem:[%s1 + $0xe0] sm:$0xff]
  %v75 = vld [vmem:[%s1 + $0xe8] sm:$0xff]
  %v76 = vld [vmem:[%s1 + $0xf0] sm:$0xff]
  %v77 = vld [vmem:[%s1 + $0xf8] sm:$0xff]
  %v78 = vld [vmem:[%s2] sm:$0x1]
  %v80 = vlaneseq
  %v81 = vshrl.u32 %v80, 7
  %v82 = vsub.s32 0, %v81
  %v83 = vrot.slane %v78, %v82
  %85 = vmatprep.subr.mxu0 0.0
  %86 = vmatpush1.msra.mxu0 %v46
  %87 = vmatprep.subr.mxu0 0.0
  %88 = vmatpush1.msra.mxu0 %v47
  %89 = vmatprep.subr.mxu0 0.0
  %90 = vmatpush1.msra.mxu0 %v48
  %91 = vmatprep.subr.mxu0 0.0
  %92 = vmatpush1.msra.mxu0 %v49
  %93 = vmatprep.subr.mxu0 0.0
  %94 = vmatpush1.msra.mxu0 %v50
  %95 = vmatprep.subr.mxu0 0.0
  %96 = vmatpush1.msra.mxu0 %v51
  %97 = vmatprep.subr.mxu0 0.0
  %98 = vmatpush1.msra.mxu0 %v52
  %99 = vmatprep.subr.mxu0 0.0
  %100 = vmatpush1.msra.mxu0 %v53
  %101 = vmatprep.subr.mxu0 0.0
  %102 = vmatpush1.msra.mxu0 %v54
  %103 = vmatprep.subr.mxu0 0.0
  %104 = vmatpush1.msra.mxu0 %v55
  %105 = vmatprep.subr.mxu0 0.0
  %106 = vmatpush1.msra.mxu0 %v56
  %107 = vmatprep.subr.mxu0 0.0
  %108 = vmatpush1.msra.mxu0 %v57
  %109 = vmatprep.subr.mxu0 0.0
  %110 = vmatpush1.msra.mxu0 %v58
  %111 = vmatprep.subr.mxu0 0.0
  %112 = vmatpush1.msra.mxu0 %v59
  %113 = vmatprep.subr.mxu0 0.0
  %114 = vmatpush1.msra.mxu0 %v60
  %115 = vmatprep.subr.mxu0 0.0
  %116 = vmatpush1.msra.mxu0 %v61
  %117 = vmatprep.subr.mxu0 0.0
  %118 = vmatpush1.msra.mxu0 %v62
  %119 = vmatprep.subr.mxu0 0.0
  %120 = vmatpush1.msra.mxu0 %v63
  %121 = vmatprep.subr.mxu0 0.0
  %122 = vmatpush1.msra.mxu0 %v64
  %123 = vmatprep.subr.mxu0 0.0
  %124 = vmatpush1.msra.mxu0 %v65
  %125 = vmatprep.subr.mxu0 0.0
  %126 = vmatpush1.msra.mxu0 %v66
  %127 = vmatprep.subr.mxu0 0.0
  %128 = vmatpush1.msra.mxu0 %v67
  %129 = vmatprep.subr.mxu0 0.0
  %130 = vmatpush1.msra.mxu0 %v68
  %131 = vmatprep.subr.mxu0 0.0
  %132 = vmatpush1.msra.mxu0 %v69
  %133 = vmatprep.subr.mxu0 0.0
  %134 = vmatpush1.msra.mxu0 %v70
  %135 = vmatprep.subr.mxu0 0.0
  %136 = vmatpush1.msra.mxu0 %v71
  %137 = vmatprep.subr.mxu0 0.0
  %138 = vmatpush1.msra.mxu0 %v72
  %139 = vmatprep.subr.mxu0 0.0
  %140 = vmatpush1.msra.mxu0 %v73
  %141 = vmatprep.subr.mxu0 0.0
  %142 = vmatpush1.msra.mxu0 %v74
  %143 = vmatprep.subr.mxu0 0.0
  %144 = vmatpush1.msra.mxu0 %v75
  %145 = vmatprep.subr.mxu0 0.0
  %146 = vmatpush1.msra.mxu0 %v76
  %147 = vmatprep.subr.mxu0 0.0
  %148 = vmatpush1.msra.mxu0 %v77
  %149 = vmatprep.mubr.f32.mxu0 %v15
  %150 = vmatmul.mubr.f32.gmra.mrb[0].mxu0 %v14
  %v151 = vpop.f32.mrb[0].mxu0
  %v152 = vadd.f32 %v83, %v151
  %v153 = vpop.f32.mrb[0].mxu0
  %154 = vmatprep.mubr.f32.mxu0 %v17
  %155 = vmatmul.mubr.f32.gmra.mrb[0].mxu0 %v16
  %v156 = vpop.f32.mrb[0].mxu0
  %v157 = vadd.f32 %v83, %v156
  %v158 = vpop.f32.mrb[0].mxu0
  %159 = vmatprep.mubr.f32.mxu0 %v19
  %160 = vmatmul.mubr.f32.gmra.mrb[0].mxu0 %v18
  %v161 = vpop.f32.mrb[0].mxu0
  %v162 = vadd.f32 %v83, %v161
  %v163 = vpop.f32.mrb[0].mxu0
  %164 = vmatprep.mubr.f32.mxu0 %v21
  %165 = vmatmul.mubr.f32.gmra.mrb[0].mxu0 %v20
  %v166 = vpop.f32.mrb[0].mxu0
  %v167 = vadd.f32 %v83, %v166
  %v168 = vpop.f32.mrb[0].mxu0
  %169 = vmatprep.mubr.f32.mxu0 %v23
  %170 = vmatmul.mubr.f32.gmra.mrb[0].mxu0 %v22
  %v171 = vpop.f32.mrb[0].mxu0
  %v172 = vadd.f32 %v83, %v171
  %v173 = vpop.f32.mrb[0].mxu0
  %174 = vmatprep.mubr.f32.mxu0 %v25
  %175 = vmatmul.mubr.f32.gmra.mrb[0].mxu0 %v24
  %v176 = vpop.f32.mrb[0].mxu0
  %v177 = vadd.f32 %v83, %v176
  %v178 = vpop.f32.mrb[0].mxu0
  %179 = vmatprep.mubr.f32.mxu0 %v27
  %180 = vmatmul.mubr.f32.gmra.mrb[0].mxu0 %v26
  %v181 = vpop.f32.mrb[0].mxu0
  %v182 = vadd.f32 %v83, %v181
  %v183 = vpop.f32.mrb[0].mxu0
  %184 = vmatprep.mubr.f32.mxu0 %v29
  %185 = vmatmul.mubr.f32.gmra.mrb[0].mxu0 %v28
  %v186 = vpop.f32.mrb[0].mxu0
  %v187 = vadd.f32 %v83, %v186
  %v188 = vpop.f32.mrb[0].mxu0
  %189 = vmatprep.mubr.f32.mxu0 %v31
  %190 = vmatmul.mubr.f32.gmra.mrb[0].mxu0 %v30
  %v191 = vpop.f32.mrb[0].mxu0
  %v192 = vadd.f32 %v83, %v191
  %v193 = vpop.f32.mrb[0].mxu0
  %194 = vmatprep.mubr.f32.mxu0 %v33
  %195 = vmatmul.mubr.f32.gmra.mrb[0].mxu0 %v32
  %v196 = vpop.f32.mrb[0].mxu0
  %v197 = vadd.f32 %v83, %v196
  %v198 = vpop.f32.mrb[0].mxu0
  %199 = vmatprep.mubr.f32.mxu0 %v35
  %200 = vmatmul.mubr.f32.gmra.mrb[0].mxu0 %v34
  %v201 = vpop.f32.mrb[0].mxu0
  %v202 = vadd.f32 %v83, %v201
  %v203 = vpop.f32.mrb[0].mxu0
  %204 = vmatprep.mubr.f32.mxu0 %v37
  %205 = vmatmul.mubr.f32.gmra.mrb[0].mxu0 %v36
  %v206 = vpop.f32.mrb[0].mxu0
  %v207 = vadd.f32 %v83, %v206
  %v208 = vpop.f32.mrb[0].mxu0
  %209 = vmatprep.mubr.f32.mxu0 %v39
  %210 = vmatmul.mubr.f32.gmra.mrb[0].mxu0 %v38
  %v211 = vpop.f32.mrb[0].mxu0
  %v212 = vadd.f32 %v83, %v211
  %v213 = vpop.f32.mrb[0].mxu0
  %214 = vmatprep.mubr.f32.mxu0 %v41
  %215 = vmatmul.mubr.f32.gmra.mrb[0].mxu0 %v40
  %v216 = vpop.f32.mrb[0].mxu0
  %v217 = vadd.f32 %v83, %v216
  %v218 = vpop.f32.mrb[0].mxu0
  %219 = vmatprep.mubr.f32.mxu0 %v43
  %220 = vmatmul.mubr.f32.gmra.mrb[0].mxu0 %v42
  %v221 = vpop.f32.mrb[0].mxu0
  %v222 = vadd.f32 %v83, %v221
  %v223 = vpop.f32.mrb[0].mxu0
  %224 = vmatprep.mubr.f32.mxu0 %v45
  %225 = vmatmul.mubr.f32.gmra.mrb[0].mxu0 %v44
  %v226 = vpop.f32.mrb[0].mxu0
  %v227 = vadd.f32 %v83, %v226
  %v228 = vpop.f32.mrb[0].mxu0
  %229 = vdwg.mxu0
  %vm230 = vcmp.gt.f32.partialorder %v152, 0.0
  %vm231 = vcmp.gt.f32.partialorder %v157, 0.0
  %vm232 = vcmp.gt.f32.partialorder %v162, 0.0
  %vm233 = vcmp.gt.f32.partialorder %v167, 0.0
  %vm234 = vcmp.gt.f32.partialorder %v172, 0.0
  %vm235 = vcmp.gt.f32.partialorder %v177, 0.0
  %vm236 = vcmp.gt.f32.partialorder %v182, 0.0
  %vm237 = vcmp.gt.f32.partialorder %v187, 0.0
  %vm238 = vcmp.gt.f32.partialorder %v192, 0.0
  %vm239 = vcmp.gt.f32.partialorder %v197, 0.0
  %vm240 = vcmp.gt.f32.partialorder %v202, 0.0
  %vm241 = vcmp.gt.f32.partialorder %v207, 0.0
  %vm242 = vcmp.gt.f32.partialorder %v212, 0.0
  %vm243 = vcmp.gt.f32.partialorder %v217, 0.0
  %vm244 = vcmp.gt.f32.partialorder %v222, 0.0
  %vm245 = vcmp.gt.f32.partialorder %v227, 0.0
  %v246 = vmul.f32 %v152, 0.1
  %v247 = vmul.f32 %v157, 0.1
  %v248 = vmul.f32 %v162, 0.1
  %v249 = vmul.f32 %v167, 0.1
  %v250 = vmul.f32 %v172, 0.1
  %v251 = vmul.f32 %v177, 0.1
  %v252 = vmul.f32 %v182, 0.1
  %v253 = vmul.f32 %v187, 0.1
  %v254 = vmul.f32 %v192, 0.1
  %v255 = vmul.f32 %v197, 0.1
  %v256 = vmul.f32 %v202, 0.1
  %v257 = vmul.f32 %v207, 0.1
  %v258 = vmul.f32 %v212, 0.1
  %v259 = vmul.f32 %v217, 0.1
  %v260 = vmul.f32 %v222, 0.1
  %v261 = vmul.f32 %v227, 0.1
  %v262 = vsel %vm230, %v152, %v246
  %v263 = vsel %vm231, %v157, %v247
  %v264 = vsel %vm232, %v162, %v248
  %v265 = vsel %vm233, %v167, %v249
  %v266 = vsel %vm234, %v172, %v250
  %v267 = vsel %vm235, %v177, %v251
  %v268 = vsel %vm236, %v182, %v252
  %v269 = vsel %vm237, %v187, %v253
  %v270 = vsel %vm238, %v192, %v254
  %v271 = vsel %vm239, %v197, %v255
  %v272 = vsel %vm240, %v202, %v256
  %v273 = vsel %vm241, %v207, %v257
  %v274 = vsel %vm242, %v212, %v258
  %v275 = vsel %vm243, %v217, %v259
  %v276 = vsel %vm244, %v222, %v260
  %v277 = vsel %vm245, %v227, %v261
  %vm278 = vcmask 261120
  %279 = vst.msk [vmem:[%s3] sm:$0xff] %vm278, %v262
  %280 = vst.msk [vmem:[%s3 + $0x8] sm:$0xff] %vm278, %v263
  %281 = vst.msk [vmem:[%s3 + $0x10] sm:$0xff] %vm278, %v264
  %282 = vst.msk [vmem:[%s3 + $0x18] sm:$0xff] %vm278, %v265
  %283 = vst.msk [vmem:[%s3 + $0x20] sm:$0xff] %vm278, %v266
  %284 = vst.msk [vmem:[%s3 + $0x28] sm:$0xff] %vm278, %v267
  %285 = vst.msk [vmem:[%s3 + $0x30] sm:$0xff] %vm278, %v268
  %286 = vst.msk [vmem:[%s3 + $0x38] sm:$0xff] %vm278, %v269
  %287 = vst.msk [vmem:[%s3 + $0x40] sm:$0xff] %vm278, %v270
  %288 = vst.msk [vmem:[%s3 + $0x48] sm:$0xff] %vm278, %v271
  %289 = vst.msk [vmem:[%s3 + $0x50] sm:$0xff] %vm278, %v272
  %290 = vst.msk [vmem:[%s3 + $0x58] sm:$0xff] %vm278, %v273
  %291 = vst.msk [vmem:[%s3 + $0x60] sm:$0xff] %vm278, %v274
  %292 = vst.msk [vmem:[%s3 + $0x68] sm:$0xff] %vm278, %v275
  %293 = vst.msk [vmem:[%s3 + $0x70] sm:$0xff] %vm278, %v276
  %294 = vst.msk [vmem:[%s3 + $0x78] sm:$0xff] %vm278, %v277
  // Predicated region
  $region14: #{depth_encoder_forward_layered.6} parent=0 // pred_check
    _
  $region15: #{depth_encoder_forward_layered.6} parent=0 // pred_check_branch
    %296 = sbr.rel (0) target = $region17
  $region16: #{depth_encoder_forward_layered.6} parent=0 // pred_region
    _
  $region17: #{depth_encoder_forward_layered.6} parent=0 // pred_fallthru
    _
  // Predicated region
  $region18: #{depth_encoder_forward_layered.6} parent=0 // pred_check
    _
  $region19: #{depth_encoder_forward_layered.6} parent=0 // pred_check_branch
    %298 = sbr.rel (0) target = $region21
  $region20: #{depth_encoder_forward_layered.6} parent=0 // pred_region
    _
  $region21: #{depth_encoder_forward_layered.6} parent=0 // pred_fallthru
    _

// kernel: depth_encoder_forward_layered.7
$region0: #{depth_encoder_forward_layered.7}
  #allocation0 [shape = 'u32[]', space=smem, size = 0x4, offset = 0x4, fixed_abs, tag = 'smem constant byte address 0x4 - core index']
  #allocation1 [shape = 'u32[144,128]{1,0:T(1,128)}', space=vmem, size = 0x12000, scoped, tag = 'internal scratch']
  %s0 = inlined_call_operand.vmem [shape: f32[32,512], index: 0, kind: input, shape index: {}]
  %s1 = inlined_call_operand.vmem [shape: f32[512,64], index: 1, kind: input, shape index: {}]
  %s2 = inlined_call_operand.vmem [shape: f32[1,64], index: 2, kind: input, shape index: {}]
  %s3 = inlined_call_operand.vmem [shape: f32[32,64], index: 3, kind: output, shape index: {}]
  %s4 = sld [smem:[#allocation0]]
  $region22: #{depth_encoder_forward_layered.7} parent=0
    _
  %s6 = ssub.s32 1, %s4
  %s7 = scalar_select 0, %s6, %s4
  // Predicated region
  $region2: #{depth_encoder_forward_layered.7} parent=0 // pred_check
    _
  $region3: #{depth_encoder_forward_layered.7} parent=0 // pred_check_branch
    %9 = sbr.rel (0) target = $region5
  $region4: #{depth_encoder_forward_layered.7} parent=0 // pred_region
    _
  $region5: #{depth_encoder_forward_layered.7} parent=0 // pred_fallthru
    _
  // Predicated region
  $region6: #{depth_encoder_forward_layered.7} parent=0 // pred_check
    _
  $region7: #{depth_encoder_forward_layered.7} parent=0 // pred_check_branch
    %11 = sbr.rel (0) target = $region9
  $region8: #{depth_encoder_forward_layered.7} parent=0 // pred_region
    _
  $region9: #{depth_encoder_forward_layered.7} parent=0 // pred_fallthru
    _
  // Predicated region
  $region10: #{depth_encoder_forward_layered.7} parent=0 // pred_check
    _
  $region11: #{depth_encoder_forward_layered.7} parent=0 // pred_check_branch
    %13 = sbr.rel (0) target = $region13
  $region12: #{depth_encoder_forward_layered.7} parent=0 // pred_region
    _
  $region13: #{depth_encoder_forward_layered.7} parent=0 // pred_fallthru
    _
  %v14 = vld [vmem:[%s0] sm:$0xff]
  %v15 = vld [vmem:[%s0 + $0x8] sm:$0xff]
  %v16 = vld [vmem:[%s0 + $0x10] sm:$0xff]
  %v17 = vld [vmem:[%s0 + $0x18] sm:$0xff]
  %v18 = vld [vmem:[%s0 + $0x20] sm:$0xff]
  %v19 = vld [vmem:[%s0 + $0x28] sm:$0xff]
  %v20 = vld [vmem:[%s0 + $0x30] sm:$0xff]
  %v21 = vld [vmem:[%s0 + $0x38] sm:$0xff]
  %v22 = vld [vmem:[%s0 + $0x40] sm:$0xff]
  %v23 = vld [vmem:[%s0 + $0x48] sm:$0xff]
  %v24 = vld [vmem:[%s0 + $0x50] sm:$0xff]
  %v25 = vld [vmem:[%s0 + $0x58] sm:$0xff]
  %v26 = vld [vmem:[%s0 + $0x60] sm:$0xff]
  %v27 = vld [vmem:[%s0 + $0x68] sm:$0xff]
  %v28 = vld [vmem:[%s0 + $0x70] sm:$0xff]
  %v29 = vld [vmem:[%s0 + $0x78] sm:$0xff]
  %v30 = vld [vmem:[%s1] sm:$0xff]
  %v31 = vld [vmem:[%s1 + $0x8] sm:$0xff]
  %v32 = vld [vmem:[%s1 + $0x10] sm:$0xff]
  %v33 = vld [vmem:[%s1 + $0x18] sm:$0xff]
  %v34 = vld [vmem:[%s1 + $0x20] sm:$0xff]
  %v35 = vld [vmem:[%s1 + $0x28] sm:$0xff]
  %v36 = vld [vmem:[%s1 + $0x30] sm:$0xff]
  %v37 = vld [vmem:[%s1 + $0x38] sm:$0xff]
  %v38 = vld [vmem:[%s1 + $0x40] sm:$0xff]
  %v39 = vld [vmem:[%s1 + $0x48] sm:$0xff]
  %v40 = vld [vmem:[%s1 + $0x50] sm:$0xff]
  %v41 = vld [vmem:[%s1 + $0x58] sm:$0xff]
  %v42 = vld [vmem:[%s1 + $0x60] sm:$0xff]
  %v43 = vld [vmem:[%s1 + $0x68] sm:$0xff]
  %v44 = vld [vmem:[%s1 + $0x70] sm:$0xff]
  %v45 = vld [vmem:[%s1 + $0x78] sm:$0xff]
  %v46 = vld [vmem:[%s1 + $0x80] sm:$0xff]
  %v47 = vld [vmem:[%s1 + $0x88] sm:$0xff]
  %v48 = vld [vmem:[%s1 + $0x90] sm:$0xff]
  %v49 = vld [vmem:[%s1 + $0x98] sm:$0xff]
  %v50 = vld [vmem:[%s1 + $0xa0] sm:$0xff]
  %v51 = vld [vmem:[%s1 + $0xa8] sm:$0xff]
  %v52 = vld [vmem:[%s1 + $0xb0] sm:$0xff]
  %v53 = vld [vmem:[%s1 + $0xb8] sm:$0xff]
  %v54 = vld [vmem:[%s1 + $0xc0] sm:$0xff]
  %v55 = vld [vmem:[%s1 + $0xc8] sm:$0xff]
  %v56 = vld [vmem:[%s1 + $0xd0] sm:$0xff]
  %v57 = vld [vmem:[%s1 + $0xd8] sm:$0xff]
  %v58 = vld [vmem:[%s1 + $0xe0] sm:$0xff]
  %v59 = vld [vmem:[%s1 + $0xe8] sm:$0xff]
  %v60 = vld [vmem:[%s1 + $0xf0] sm:$0xff]
  %v61 = vld [vmem:[%s1 + $0xf8] sm:$0xff]
  %v62 = vld [vmem:[%s1 + $0x100] sm:$0xff]
  %v63 = vld [vmem:[%s1 + $0x108] sm:$0xff]
  %v64 = vld [vmem:[%s1 + $0x110] sm:$0xff]
  %v65 = vld [vmem:[%s1 + $0x118] sm:$0xff]
  %v66 = vld [vmem:[%s1 + $0x120] sm:$0xff]
  %v67 = vld [vmem:[%s1 + $0x128] sm:$0xff]
  %v68 = vld [vmem:[%s1 + $0x130] sm:$0xff]
  %v69 = vld [vmem:[%s1 + $0x138] sm:$0xff]
  %v70 = vld [vmem:[%s1 + $0x140] sm:$0xff]
  %v71 = vld [vmem:[%s1 + $0x148] sm:$0xff]
  %v72 = vld [vmem:[%s1 + $0x150] sm:$0xff]
  %v73 = vld [vmem:[%s1 + $0x158] sm:$0xff]
  %v74 = vld [vmem:[%s1 + $0x160] sm:$0xff]
  %v75 = vld [vmem:[%s1 + $0x168] sm:$0xff]
  %v76 = vld [vmem:[%s1 + $0x170] sm:$0xff]
  %v77 = vld [vmem:[%s1 + $0x178] sm:$0xff]
  %v78 = vld [vmem:[%s1 + $0x180] sm:$0xff]
  %v79 = vld [vmem:[%s1 + $0x188] sm:$0xff]
  %v80 = vld [vmem:[%s1 + $0x190] sm:$0xff]
  %v81 = vld [vmem:[%s1 + $0x198] sm:$0xff]
  %v82 = vld [vmem:[%s1 + $0x1a0] sm:$0xff]
  %v83 = vld [vmem:[%s1 + $0x1a8] sm:$0xff]
  %v84 = vld [vmem:[%s1 + $0x1b0] sm:$0xff]
  %v85 = vld [vmem:[%s1 + $0x1b8] sm:$0xff]
  %v86 = vld [vmem:[%s1 + $0x1c0] sm:$0xff]
  %v87 = vld [vmem:[%s1 + $0x1c8] sm:$0xff]
  %v88 = vld [vmem:[%s1 + $0x1d0] sm:$0xff]
  %v89 = vld [vmem:[%s1 + $0x1d8] sm:$0xff]
  %v90 = vld [vmem:[%s1 + $0x1e0] sm:$0xff]
  %v91 = vld [vmem:[%s1 + $0x1e8] sm:$0xff]
  %v92 = vld [vmem:[%s1 + $0x1f0] sm:$0xff]
  %v93 = vld [vmem:[%s1 + $0x1f8] sm:$0xff]
  %v94 = vld [vmem:[%s2] sm:$0x1]
  %v96 = vlaneseq
  %v97 = vshrl.u32 %v96, 7
  %v98 = vsub.s32 0, %v97
  %v99 = vrot.slane %v94, %v98
  %101 = vmatprep.subr.mxu0 0.0
  %102 = vmatpush1.msra.mxu0 %v30
  %103 = vmatprep.subr.mxu0 0.0
  %104 = vmatpush1.msra.mxu0 %v31
  %105 = vmatprep.subr.mxu0 0.0
  %106 = vmatpush1.msra.mxu0 %v32
  %107 = vmatprep.subr.mxu0 0.0
  %108 = vmatpush1.msra.mxu0 %v33
  %109 = vmatprep.subr.mxu0 0.0
  %110 = vmatpush1.msra.mxu0 %v34
  %111 = vmatprep.subr.mxu0 0.0
  %112 = vmatpush1.msra.mxu0 %v35
  %113 = vmatprep.subr.mxu0 0.0
  %114 = vmatpush1.msra.mxu0 %v36
  %115 = vmatprep.subr.mxu0 0.0
  %116 = vmatpush1.msra.mxu0 %v37
  %117 = vmatprep.subr.mxu0 0.0
  %118 = vmatpush1.msra.mxu0 %v38
  %119 = vmatprep.subr.mxu0 0.0
  %120 = vmatpush1.msra.mxu0 %v39
  %121 = vmatprep.subr.mxu0 0.0
  %122 = vmatpush1.msra.mxu0 %v40
  %123 = vmatprep.subr.mxu0 0.0
  %124 = vmatpush1.msra.mxu0 %v41
  %125 = vmatprep.subr.mxu0 0.0
  %126 = vmatpush1.msra.mxu0 %v42
  %127 = vmatprep.subr.mxu0 0.0
  %128 = vmatpush1.msra.mxu0 %v43
  %129 = vmatprep.subr.mxu0 0.0
  %130 = vmatpush1.msra.mxu0 %v44
  %131 = vmatprep.subr.mxu0 0.0
  %132 = vmatpush1.msra.mxu0 %v45
  %133 = vmatprep.subr.mxu0 0.0
  %134 = vmatpush1.msra.mxu0 %v46
  %135 = vmatprep.subr.mxu0 0.0
  %136 = vmatpush1.msra.mxu0 %v47
  %137 = vmatprep.subr.mxu0 0.0
  %138 = vmatpush1.msra.mxu0 %v48
  %139 = vmatprep.subr.mxu0 0.0
  %140 = vmatpush1.msra.mxu0 %v49
  %141 = vmatprep.subr.mxu0 0.0
  %142 = vmatpush1.msra.mxu0 %v50
  %143 = vmatprep.subr.mxu0 0.0
  %144 = vmatpush1.msra.mxu0 %v51
  %145 = vmatprep.subr.mxu0 0.0
  %146 = vmatpush1.msra.mxu0 %v52
  %147 = vmatprep.subr.mxu0 0.0
  %148 = vmatpush1.msra.mxu0 %v53
  %149 = vmatprep.subr.mxu0 0.0
  %150 = vmatpush1.msra.mxu0 %v54
  %151 = vmatprep.subr.mxu0 0.0
  %152 = vmatpush1.msra.mxu0 %v55
  %153 = vmatprep.subr.mxu0 0.0
  %154 = vmatpush1.msra.mxu0 %v56
  %155 = vmatprep.subr.mxu0 0.0
  %156 = vmatpush1.msra.mxu0 %v57
  %157 = vmatprep.subr.mxu0 0.0
  %158 = vmatpush1.msra.mxu0 %v58
  %159 = vmatprep.subr.mxu0 0.0
  %160 = vmatpush1.msra.mxu0 %v59
  %161 = vmatprep.subr.mxu0 0.0
  %162 = vmatpush1.msra.mxu0 %v60
  %163 = vmatprep.subr.mxu0 0.0
  %164 = vmatpush1.msra.mxu0 %v61
  %165 = vmatprep.mubr.f32.mxu0 %v15
  %166 = vmatmul.mubr.f32.gmra.mrb[0].mxu0 %v14
  %v167 = vpop.f32.mrb[0].mxu0
  %v168 = vadd.f32 %v99, %v167
  %v169 = vpop.f32.mrb[0].mxu0
  %170 = vmatprep.mubr.f32.mxu0 %v19
  %171 = vmatmul.mubr.f32.gmra.mrb[0].mxu0 %v18
  %v172 = vpop.f32.mrb[0].mxu0
  %v173 = vadd.f32 %v99, %v172
  %v174 = vpop.f32.mrb[0].mxu0
  %175 = vmatprep.mubr.f32.mxu0 %v23
  %176 = vmatmul.mubr.f32.gmra.mrb[0].mxu0 %v22
  %v177 = vpop.f32.mrb[0].mxu0
  %v178 = vadd.f32 %v99, %v177
  %v179 = vpop.f32.mrb[0].mxu0
  %180 = vmatprep.mubr.f32.mxu0 %v27
  %181 = vmatmul.mubr.f32.gmra.mrb[0].mxu0 %v26
  %v182 = vpop.f32.mrb[0].mxu0
  %v183 = vadd.f32 %v99, %v182
  %v184 = vpop.f32.mrb[0].mxu0
  %185 = vdwg.mxu0
  %186 = vmatprep.subr.mxu0 0.0
  %187 = vmatpush1.msra.mxu0 %v62
  %188 = vmatprep.subr.mxu0 0.0
  %189 = vmatpush1.msra.mxu0 %v63
  %190 = vmatprep.subr.mxu0 0.0
  %191 = vmatpush1.msra.mxu0 %v64
  %192 = vmatprep.subr.mxu0 0.0
  %193 = vmatpush1.msra.mxu0 %v65
  %194 = vmatprep.subr.mxu0 0.0
  %195 = vmatpush1.msra.mxu0 %v66
  %196 = vmatprep.subr.mxu0 0.0
  %197 = vmatpush1.msra.mxu0 %v67
  %198 = vmatprep.subr.mxu0 0.0
  %199 = vmatpush1.msra.mxu0 %v68
  %200 = vmatprep.subr.mxu0 0.0
  %201 = vmatpush1.msra.mxu0 %v69
  %202 = vmatprep.subr.mxu0 0.0
  %203 = vmatpush1.msra.mxu0 %v70
  %204 = vmatprep.subr.mxu0 0.0
  %205 = vmatpush1.msra.mxu0 %v71
  %206 = vmatprep.subr.mxu0 0.0
  %207 = vmatpush1.msra.mxu0 %v72
  %208 = vmatprep.subr.mxu0 0.0
  %209 = vmatpush1.msra.mxu0 %v73
  %210 = vmatprep.subr.mxu0 0.0
  %211 = vmatpush1.msra.mxu0 %v74
  %212 = vmatprep.subr.mxu0 0.0
  %213 = vmatpush1.msra.mxu0 %v75
  %214 = vmatprep.subr.mxu0 0.0
  %215 = vmatpush1.msra.mxu0 %v76
  %216 = vmatprep.subr.mxu0 0.0
  %217 = vmatpush1.msra.mxu0 %v77
  %218 = vmatprep.subr.mxu0 0.0
  %219 = vmatpush1.msra.mxu0 %v78
  %220 = vmatprep.subr.mxu0 0.0
  %221 = vmatpush1.msra.mxu0 %v79
  %222 = vmatprep.subr.mxu0 0.0
  %223 = vmatpush1.msra.mxu0 %v80
  %224 = vmatprep.subr.mxu0 0.0
  %225 = vmatpush1.msra.mxu0 %v81
  %226 = vmatprep.subr.mxu0 0.0
  %227 = vmatpush1.msra.mxu0 %v82
  %228 = vmatprep.subr.mxu0 0.0
  %229 = vmatpush1.msra.mxu0 %v83
  %230 = vmatprep.subr.mxu0 0.0
  %231 = vmatpush1.msra.mxu0 %v84
  %232 = vmatprep.subr.mxu0 0.0
  %233 = vmatpush1.msra.mxu0 %v85
  %234 = vmatprep.subr.mxu0 0.0
  %235 = vmatpush1.msra.mxu0 %v86
  %236 = vmatprep.subr.mxu0 0.0
  %237 = vmatpush1.msra.mxu0 %v87
  %238 = vmatprep.subr.mxu0 0.0
  %239 = vmatpush1.msra.mxu0 %v88
  %240 = vmatprep.subr.mxu0 0.0
  %241 = vmatpush1.msra.mxu0 %v89
  %242 = vmatprep.subr.mxu0 0.0
  %243 = vmatpush1.msra.mxu0 %v90
  %244 = vmatprep.subr.mxu0 0.0
  %245 = vmatpush1.msra.mxu0 %v91
  %246 = vmatprep.subr.mxu0 0.0
  %247 = vmatpush1.msra.mxu0 %v92
  %248 = vmatprep.subr.mxu0 0.0
  %249 = vmatpush1.msra.mxu0 %v93
  %250 = vmatprep.mubr.f32.mxu0 %v17
  %251 = vmatmul.mubr.f32.gmra.mrb[0].mxu0 %v16
  %v252 = vpop.f32.mrb[0].mxu0
  %v253 = vadd.f32 %v168, %v252
  %v254 = vpop.f32.mrb[0].mxu0
  %255 = vmatprep.mubr.f32.mxu0 %v21
  %256 = vmatmul.mubr.f32.gmra.mrb[0].mxu0 %v20
  %v257 = vpop.f32.mrb[0].mxu0
  %v258 = vadd.f32 %v173, %v257
  %v259 = vpop.f32.mrb[0].mxu0
  %260 = vmatprep.mubr.f32.mxu0 %v25
  %261 = vmatmul.mubr.f32.gmra.mrb[0].mxu0 %v24
  %v262 = vpop.f32.mrb[0].mxu0
  %v263 = vadd.f32 %v178, %v262
  %v264 = vpop.f32.mrb[0].mxu0
  %265 = vmatprep.mubr.f32.mxu0 %v29
  %266 = vmatmul.mubr.f32.gmra.mrb[0].mxu0 %v28
  %v267 = vpop.f32.mrb[0].mxu0
  %v268 = vadd.f32 %v183, %v267
  %v269 = vpop.f32.mrb[0].mxu0
  %270 = vdwg.mxu0
  %vm271 = vcmp.gt.f32.partialorder %v253, 0.0
  %vm272 = vcmp.gt.f32.partialorder %v258, 0.0
  %vm273 = vcmp.gt.f32.partialorder %v263, 0.0
  %vm274 = vcmp.gt.f32.partialorder %v268, 0.0
  %v275 = vmul.f32 %v253, 0.1
  %v276 = vmul.f32 %v258, 0.1
  %v277 = vmul.f32 %v263, 0.1
  %v278 = vmul.f32 %v268, 0.1
  %v279 = vsel %vm271, %v253, %v275
  %v280 = vsel %vm272, %v258, %v276
  %v281 = vsel %vm273, %v263, %v277
  %v282 = vsel %vm274, %v268, %v278
  %vm283 = vcmask 523264
  %284 = vst.msk [vmem:[%s3] sm:$0xff] %vm283, %v279
  %285 = vst.msk [vmem:[%s3 + $0x8] sm:$0xff] %vm283, %v280
  %286 = vst.msk [vmem:[%s3 + $0x10] sm:$0xff] %vm283, %v281
  %287 = vst.msk [vmem:[%s3 + $0x18] sm:$0xff] %vm283, %v282
  // Predicated region
  $region14: #{depth_encoder_forward_layered.7} parent=0 // pred_check
    _
  $region15: #{depth_encoder_forward_layered.7} parent=0 // pred_check_branch
    %289 = sbr.rel (0) target = $region17
  $region16: #{depth_encoder_forward_layered.7} parent=0 // pred_region
    _
  $region17: #{depth_encoder_forward_layered.7} parent=0 // pred_fallthru
    _
  // Predicated region
  $region18: #{depth_encoder_forward_layered.7} parent=0 // pred_check
    _
  $region19: #{depth_encoder_forward_layered.7} parent=0 // pred_check_branch
    %291 = sbr.rel (0) target = $region21
  $region20: #{depth_encoder_forward_layered.7} parent=0 // pred_region
    _
  $region21: #{depth_encoder_forward_layered.7} parent=0 // pred_fallthru
    _

// kernel: depth_encoder_forward_layered.8
$region0: #{depth_encoder_forward_layered.8}
  #allocation0 [shape = 'u32[]', space=smem, size = 0x4, offset = 0x4, fixed_abs, tag = 'smem constant byte address 0x4 - core index']
  #allocation1 [shape = 'u32[144,128]{1,0:T(1,128)}', space=vmem, size = 0x12000, scoped, tag = 'internal scratch']
  %s0 = inlined_call_operand.vmem [shape: f32[8,1024], index: 0, kind: input, shape index: {}]
  %s1 = inlined_call_operand.vmem [shape: f32[1024,128], index: 1, kind: input, shape index: {}]
  %s2 = inlined_call_operand.vmem [shape: f32[1,128], index: 2, kind: input, shape index: {}]
  %s3 = inlined_call_operand.vmem [shape: f32[8,128], index: 3, kind: output, shape index: {}]
  %s4 = sld [smem:[#allocation0]]
  $region22: #{depth_encoder_forward_layered.8} parent=0
    _
  %s6 = ssub.s32 1, %s4
  %s7 = scalar_select 0, %s6, %s4
  // Predicated region
  $region2: #{depth_encoder_forward_layered.8} parent=0 // pred_check
    _
  $region3: #{depth_encoder_forward_layered.8} parent=0 // pred_check_branch
    %9 = sbr.rel (0) target = $region5
  $region4: #{depth_encoder_forward_layered.8} parent=0 // pred_region
    _
  $region5: #{depth_encoder_forward_layered.8} parent=0 // pred_fallthru
    _
  // Predicated region
  $region6: #{depth_encoder_forward_layered.8} parent=0 // pred_check
    _
  $region7: #{depth_encoder_forward_layered.8} parent=0 // pred_check_branch
    %11 = sbr.rel (0) target = $region9
  $region8: #{depth_encoder_forward_layered.8} parent=0 // pred_region
    _
  $region9: #{depth_encoder_forward_layered.8} parent=0 // pred_fallthru
    _
  // Predicated region
  $region10: #{depth_encoder_forward_layered.8} parent=0 // pred_check
    _
  $region11: #{depth_encoder_forward_layered.8} parent=0 // pred_check_branch
    %13 = sbr.rel (0) target = $region13
  $region12: #{depth_encoder_forward_layered.8} parent=0 // pred_region
    _
  $region13: #{depth_encoder_forward_layered.8} parent=0 // pred_fallthru
    _
  %v14 = vld [vmem:[%s0] sm:$0xff]
  %v15 = vld [vmem:[%s0 + $0x8] sm:$0xff]
  %v16 = vld [vmem:[%s0 + $0x10] sm:$0xff]
  %v17 = vld [vmem:[%s0 + $0x18] sm:$0xff]
  %v18 = vld [vmem:[%s0 + $0x20] sm:$0xff]
  %v19 = vld [vmem:[%s0 + $0x28] sm:$0xff]
  %v20 = vld [vmem:[%s0 + $0x30] sm:$0xff]
  %v21 = vld [vmem:[%s0 + $0x38] sm:$0xff]
  %v22 = vld [vmem:[%s1] sm:$0xff]
  %v23 = vld [vmem:[%s1 + $0x8] sm:$0xff]
  %v24 = vld [vmem:[%s1 + $0x10] sm:$0xff]
  %v25 = vld [vmem:[%s1 + $0x18] sm:$0xff]
  %v26 = vld [vmem:[%s1 + $0x20] sm:$0xff]
  %v27 = vld [vmem:[%s1 + $0x28] sm:$0xff]
  %v28 = vld [vmem:[%s1 + $0x30] sm:$0xff]
  %v29 = vld [vmem:[%s1 + $0x38] sm:$0xff]
  %v30 = vld [vmem:[%s1 + $0x40] sm:$0xff]
  %v31 = vld [vmem:[%s1 + $0x48] sm:$0xff]
  %v32 = vld [vmem:[%s1 + $0x50] sm:$0xff]
  %v33 = vld [vmem:[%s1 + $0x58] sm:$0xff]
  %v34 = vld [vmem:[%s1 + $0x60] sm:$0xff]
  %v35 = vld [vmem:[%s1 + $0x68] sm:$0xff]
  %v36 = vld [vmem:[%s1 + $0x70] sm:$0xff]
  %v37 = vld [vmem:[%s1 + $0x78] sm:$0xff]
  %v38 = vld [vmem:[%s1 + $0x80] sm:$0xff]
  %v39 = vld [vmem:[%s1 + $0x88] sm:$0xff]
  %v40 = vld [vmem:[%s1 + $0x90] sm:$0xff]
  %v41 = vld [vmem:[%s1 + $0x98] sm:$0xff]
  %v42 = vld [vmem:[%s1 + $0xa0] sm:$0xff]
  %v43 = vld [vmem:[%s1 + $0xa8] sm:$0xff]
  %v44 = vld [vmem:[%s1 + $0xb0] sm:$0xff]
  %v45 = vld [vmem:[%s1 + $0xb8] sm:$0xff]
  %v46 = vld [vmem:[%s1 + $0xc0] sm:$0xff]
  %v47 = vld [vmem:[%s1 + $0xc8] sm:$0xff]
  %v48 = vld [vmem:[%s1 + $0xd0] sm:$0xff]
  %v49 = vld [vmem:[%s1 + $0xd8] sm:$0xff]
  %v50 = vld [vmem:[%s1 + $0xe0] sm:$0xff]
  %v51 = vld [vmem:[%s1 + $0xe8] sm:$0xff]
  %v52 = vld [vmem:[%s1 + $0xf0] sm:$0xff]
  %v53 = vld [vmem:[%s1 + $0xf8] sm:$0xff]
  %v54 = vld [vmem:[%s1 + $0x100] sm:$0xff]
  %v55 = vld [vmem:[%s1 + $0x108] sm:$0xff]
  %v56 = vld [vmem:[%s1 + $0x110] sm:$0xff]
  %v57 = vld [vmem:[%s1 + $0x118] sm:$0xff]
  %v58 = vld [vmem:[%s1 + $0x120] sm:$0xff]
  %v59 = vld [vmem:[%s1 + $0x128] sm:$0xff]
  %v60 = vld [vmem:[%s1 + $0x130] sm:$0xff]
  %v61 = vld [vmem:[%s1 + $0x138] sm:$0xff]
  %v62 = vld [vmem:[%s1 + $0x140] sm:$0xff]
  %v63 = vld [vmem:[%s1 + $0x148] sm:$0xff]
  %v64 = vld [vmem:[%s1 + $0x150] sm:$0xff]
  %v65 = vld [vmem:[%s1 + $0x158] sm:$0xff]
  %v66 = vld [vmem:[%s1 + $0x160] sm:$0xff]
  %v67 = vld [vmem:[%s1 + $0x168] sm:$0xff]
  %v68 = vld [vmem:[%s1 + $0x170] sm:$0xff]
  %v69 = vld [vmem:[%s1 + $0x178] sm:$0xff]
  %v70 = vld [vmem:[%s1 + $0x180] sm:$0xff]
  %v71 = vld [vmem:[%s1 + $0x188] sm:$0xff]
  %v72 = vld [vmem:[%s1 + $0x190] sm:$0xff]
  %v73 = vld [vmem:[%s1 + $0x198] sm:$0xff]
  %v74 = vld [vmem:[%s1 + $0x1a0] sm:$0xff]
  %v75 = vld [vmem:[%s1 + $0x1a8] sm:$0xff]
  %v76 = vld [vmem:[%s1 + $0x1b0] sm:$0xff]
  %v77 = vld [vmem:[%s1 + $0x1b8] sm:$0xff]
  %v78 = vld [vmem:[%s1 + $0x1c0] sm:$0xff]
  %v79 = vld [vmem:[%s1 + $0x1c8] sm:$0xff]
  %v80 = vld [vmem:[%s1 + $0x1d0] sm:$0xff]
  %v81 = vld [vmem:[%s1 + $0x1d8] sm:$0xff]
  %v82 = vld [vmem:[%s1 + $0x1e0] sm:$0xff]
  %v83 = vld [vmem:[%s1 + $0x1e8] sm:$0xff]
  %v84 = vld [vmem:[%s1 + $0x1f0] sm:$0xff]
  %v85 = vld [vmem:[%s1 + $0x1f8] sm:$0xff]
  %v86 = vld [vmem:[%s1 + $0x200] sm:$0xff]
  %v87 = vld [vmem:[%s1 + $0x208] sm:$0xff]
  %v88 = vld [vmem:[%s1 + $0x210] sm:$0xff]
  %v89 = vld [vmem:[%s1 + $0x218] sm:$0xff]
  %v90 = vld [vmem:[%s1 + $0x220] sm:$0xff]
  %v91 = vld [vmem:[%s1 + $0x228] sm:$0xff]
  %v92 = vld [vmem:[%s1 + $0x230] sm:$0xff]
  %v93 = vld [vmem:[%s1 + $0x238] sm:$0xff]
  %v94 = vld [vmem:[%s1 + $0x240] sm:$0xff]
  %v95 = vld [vmem:[%s1 + $0x248] sm:$0xff]
  %v96 = vld [vmem:[%s1 + $0x250] sm:$0xff]
  %v97 = vld [vmem:[%s1 + $0x258] sm:$0xff]
  %v98 = vld [vmem:[%s1 + $0x260] sm:$0xff]
  %v99 = vld [vmem:[%s1 + $0x268] sm:$0xff]
  %v100 = vld [vmem:[%s1 + $0x270] sm:$0xff]
  %v101 = vld [vmem:[%s1 + $0x278] sm:$0xff]
  %v102 = vld [vmem:[%s1 + $0x280] sm:$0xff]
  %v103 = vld [vmem:[%s1 + $0x288] sm:$0xff]
  %v104 = vld [vmem:[%s1 + $0x290] sm:$0xff]
  %v105 = vld [vmem:[%s1 + $0x298] sm:$0xff]
  %v106 = vld [vmem:[%s1 + $0x2a0] sm:$0xff]
  %v107 = vld [vmem:[%s1 + $0x2a8] sm:$0xff]
  %v108 = vld [vmem:[%s1 + $0x2b0] sm:$0xff]
  %v109 = vld [vmem:[%s1 + $0x2b8] sm:$0xff]
  %v110 = vld [vmem:[%s1 + $0x2c0] sm:$0xff]
  %v111 = vld [vmem:[%s1 + $0x2c8] sm:$0xff]
  %v112 = vld [vmem:[%s1 + $0x2d0] sm:$0xff]
  %v113 = vld [vmem:[%s1 + $0x2d8] sm:$0xff]
  %v114 = vld [vmem:[%s1 + $0x2e0] sm:$0xff]
  %v115 = vld [vmem:[%s1 + $0x2e8] sm:$0xff]
  %v116 = vld [vmem:[%s1 + $0x2f0] sm:$0xff]
  %v117 = vld [vmem:[%s1 + $0x2f8] sm:$0xff]
  %v118 = vld [vmem:[%s1 + $0x300] sm:$0xff]
  %v119 = vld [vmem:[%s1 + $0x308] sm:$0xff]
  %v120 = vld [vmem:[%s1 + $0x310] sm:$0xff]
  %v121 = vld [vmem:[%s1 + $0x318] sm:$0xff]
  %v122 = vld [vmem:[%s1 + $0x320] sm:$0xff]
  %v123 = vld [vmem:[%s1 + $0x328] sm:$0xff]
  %v124 = vld [vmem:[%s1 + $0x330] sm:$0xff]
  %v125 = vld [vmem:[%s1 + $0x338] sm:$0xff]
  %v126 = vld [vmem:[%s1 + $0x340] sm:$0xff]
  %v127 = vld [vmem:[%s1 + $0x348] sm:$0xff]
  %v128 = vld [vmem:[%s1 + $0x350] sm:$0xff]
  %v129 = vld [vmem:[%s1 + $0x358] sm:$0xff]
  %v130 = vld [vmem:[%s1 + $0x360] sm:$0xff]
  %v131 = vld [vmem:[%s1 + $0x368] sm:$0xff]
  %v132 = vld [vmem:[%s1 + $0x370] sm:$0xff]
  %v133 = vld [vmem:[%s1 + $0x378] sm:$0xff]
  %v134 = vld [vmem:[%s1 + $0x380] sm:$0xff]
  %v135 = vld [vmem:[%s1 + $0x388] sm:$0xff]
  %v136 = vld [vmem:[%s1 + $0x390] sm:$0xff]
  %v137 = vld [vmem:[%s1 + $0x398] sm:$0xff]
  %v138 = vld [vmem:[%s1 + $0x3a0] sm:$0xff]
  %v139 = vld [vmem:[%s1 + $0x3a8] sm:$0xff]
  %v140 = vld [vmem:[%s1 + $0x3b0] sm:$0xff]
  %v141 = vld [vmem:[%s1 + $0x3b8] sm:$0xff]
  %v142 = vld [vmem:[%s1 + $0x3c0] sm:$0xff]
  %v143 = vld [vmem:[%s1 + $0x3c8] sm:$0xff]
  %v144 = vld [vmem:[%s1 + $0x3d0] sm:$0xff]
  %v145 = vld [vmem:[%s1 + $0x3d8] sm:$0xff]
  %v146 = vld [vmem:[%s1 + $0x3e0] sm:$0xff]
  %v147 = vld [vmem:[%s1 + $0x3e8] sm:$0xff]
  %v148 = vld [vmem:[%s1 + $0x3f0] sm:$0xff]
  %v149 = vld [vmem:[%s1 + $0x3f8] sm:$0xff]
  %v150 = vld [vmem:[%s2] sm:$0x1]
  %v152 = vlaneseq
  %v153 = vshrl.u32 %v152, 7
  %v154 = vsub.s32 0, %v153
  %v155 = vrot.slane %v150, %v154
  %157 = vmatprep.subr.mxu0 0.0
  %158 = vmatpush1.msra.mxu0 %v22
  %159 = vmatprep.subr.mxu0 0.0
  %160 = vmatpush1.msra.mxu0 %v23
  %161 = vmatprep.subr.mxu0 0.0
  %162 = vmatpush1.msra.mxu0 %v24
  %163 = vmatprep.subr.mxu0 0.0
  %164 = vmatpush1.msra.mxu0 %v25
  %165 = vmatprep.subr.mxu0 0.0
  %166 = vmatpush1.msra.mxu0 %v26
  %167 = vmatprep.subr.mxu0 0.0
  %168 = vmatpush1.msra.mxu0 %v27
  %169 = vmatprep.subr.mxu0 0.0
  %170 = vmatpush1.msra.mxu0 %v28
  %171 = vmatprep.subr.mxu0 0.0
  %172 = vmatpush1.msra.mxu0 %v29
  %173 = vmatprep.subr.mxu0 0.0
  %174 = vmatpush1.msra.mxu0 %v30
  %175 = vmatprep.subr.mxu0 0.0
  %176 = vmatpush1.msra.mxu0 %v31
  %177 = vmatprep.subr.mxu0 0.0
  %178 = vmatpush1.msra.mxu0 %v32
  %179 = vmatprep.subr.mxu0 0.0
  %180 = vmatpush1.msra.mxu0 %v33
  %181 = vmatprep.subr.mxu0 0.0
  %182 = vmatpush1.msra.mxu0 %v34
  %183 = vmatprep.subr.mxu0 0.0
  %184 = vmatpush1.msra.mxu0 %v35
  %185 = vmatprep.subr.mxu0 0.0
  %186 = vmatpush1.msra.mxu0 %v36
  %187 = vmatprep.subr.mxu0 0.0
  %188 = vmatpush1.msra.mxu0 %v37
  %189 = vmatprep.subr.mxu0 0.0
  %190 = vmatpush1.msra.mxu0 %v38
  %191 = vmatprep.subr.mxu0 0.0
  %192 = vmatpush1.msra.mxu0 %v39
  %193 = vmatprep.subr.mxu0 0.0
  %194 = vmatpush1.msra.mxu0 %v40
  %195 = vmatprep.subr.mxu0 0.0
  %196 = vmatpush1.msra.mxu0 %v41
  %197 = vmatprep.subr.mxu0 0.0
  %198 = vmatpush1.msra.mxu0 %v42
  %199 = vmatprep.subr.mxu0 0.0
  %200 = vmatpush1.msra.mxu0 %v43
  %201 = vmatprep.subr.mxu0 0.0
  %202 = vmatpush1.msra.mxu0 %v44
  %203 = vmatprep.subr.mxu0 0.0
  %204 = vmatpush1.msra.mxu0 %v45
  %205 = vmatprep.subr.mxu0 0.0
  %206 = vmatpush1.msra.mxu0 %v46
  %207 = vmatprep.subr.mxu0 0.0
  %208 = vmatpush1.msra.mxu0 %v47
  %209 = vmatprep.subr.mxu0 0.0
  %210 = vmatpush1.msra.mxu0 %v48
  %211 = vmatprep.subr.mxu0 0.0
  %212 = vmatpush1.msra.mxu0 %v49
  %213 = vmatprep.subr.mxu0 0.0
  %214 = vmatpush1.msra.mxu0 %v50
  %215 = vmatprep.subr.mxu0 0.0
  %216 = vmatpush1.msra.mxu0 %v51
  %217 = vmatprep.subr.mxu0 0.0
  %218 = vmatpush1.msra.mxu0 %v52
  %219 = vmatprep.subr.mxu0 0.0
  %220 = vmatpush1.msra.mxu0 %v53
  %221 = vmatprep.mubr.f32.mxu0 %v15
  %222 = vmatmul.mubr.f32.gmra.mrb[0].mxu0 %v14
  %v223 = vpop.f32.mrb[0].mxu0
  %v224 = vadd.f32 %v155, %v223
  %v225 = vpop.f32.mrb[0].mxu0
  %226 = vdwg.mxu0
  %227 = vmatprep.subr.mxu0 0.0
  %228 = vmatpush1.msra.mxu0 %v54
  %229 = vmatprep.subr.mxu0 0.0
  %230 = vmatpush1.msra.mxu0 %v55
  %231 = vmatprep.subr.mxu0 0.0
  %232 = vmatpush1.msra.mxu0 %v56
  %233 = vmatprep.subr.mxu0 0.0
  %234 = vmatpush1.msra.mxu0 %v57
  %235 = vmatprep.subr.mxu0 0.0
  %236 = vmatpush1.msra.mxu0 %v58
  %237 = vmatprep.subr.mxu0 0.0
  %238 = vmatpush1.msra.mxu0 %v59
  %239 = vmatprep.subr.mxu0 0.0
  %240 = vmatpush1.msra.mxu0 %v60
  %241 = vmatprep.subr.mxu0 0.0
  %242 = vmatpush1.msra.mxu0 %v61
  %243 = vmatprep.subr.mxu0 0.0
  %244 = vmatpush1.msra.mxu0 %v62
  %245 = vmatprep.subr.mxu0 0.0
  %246 = vmatpush1.msra.mxu0 %v63
  %247 = vmatprep.subr.mxu0 0.0
  %248 = vmatpush1.msra.mxu0 %v64
  %249 = vmatprep.subr.mxu0 0.0
  %250 = vmatpush1.msra.mxu0 %v65
  %251 = vmatprep.subr.mxu0 0.0
  %252 = vmatpush1.msra.mxu0 %v66
  %253 = vmatprep.subr.mxu0 0.0
  %254 = vmatpush1.msra.mxu0 %v67
  %255 = vmatprep.subr.mxu0 0.0
  %256 = vmatpush1.msra.mxu0 %v68
  %257 = vmatprep.subr.mxu0 0.0
  %258 = vmatpush1.msra.mxu0 %v69
  %259 = vmatprep.subr.mxu0 0.0
  %260 = vmatpush1.msra.mxu0 %v70
  %261 = vmatprep.subr.mxu0 0.0
  %262 = vmatpush1.msra.mxu0 %v71
  %263 = vmatprep.subr.mxu0 0.0
  %264 = vmatpush1.msra.mxu0 %v72
  %265 = vmatprep.subr.mxu0 0.0
  %266 = vmatpush1.msra.mxu0 %v73
  %267 = vmatprep.subr.mxu0 0.0
  %268 = vmatpush1.msra.mxu0 %v74
  %269 = vmatprep.subr.mxu0 0.0
  %270 = vmatpush1.msra.mxu0 %v75
  %271 = vmatprep.subr.mxu0 0.0
  %272 = vmatpush1.msra.mxu0 %v76
  %273 = vmatprep.subr.mxu0 0.0
  %274 = vmatpush1.msra.mxu0 %v77
  %275 = vmatprep.subr.mxu0 0.0
  %276 = vmatpush1.msra.mxu0 %v78
  %277 = vmatprep.subr.mxu0 0.0
  %278 = vmatpush1.msra.mxu0 %v79
  %279 = vmatprep.subr.mxu0 0.0
  %280 = vmatpush1.msra.mxu0 %v80
  %281 = vmatprep.subr.mxu0 0.0
  %282 = vmatpush1.msra.mxu0 %v81
  %283 = vmatprep.subr.mxu0 0.0
  %284 = vmatpush1.msra.mxu0 %v82
  %285 = vmatprep.subr.mxu0 0.0
  %286 = vmatpush1.msra.mxu0 %v83
  %287 = vmatprep.subr.mxu0 0.0
  %288 = vmatpush1.msra.mxu0 %v84
  %289 = vmatprep.subr.mxu0 0.0
  %290 = vmatpush1.msra.mxu0 %v85
  %291 = vmatprep.mubr.f32.mxu0 %v17
  %292 = vmatmul.mubr.f32.gmra.mrb[0].mxu0 %v16
  %v293 = vpop.f32.mrb[0].mxu0
  %v294 = vadd.f32 %v224, %v293
  %v295 = vpop.f32.mrb[0].mxu0
  %296 = vdwg.mxu0
  %297 = vmatprep.subr.mxu0 0.0
  %298 = vmatpush1.msra.mxu0 %v86
  %299 = vmatprep.subr.mxu0 0.0
  %300 = vmatpush1.msra.mxu0 %v87
  %301 = vmatprep.subr.mxu0 0.0
  %302 = vmatpush1.msra.mxu0 %v88
  %303 = vmatprep.subr.mxu0 0.0
  %304 = vmatpush1.msra.mxu0 %v89
  %305 = vmatprep.subr.mxu0 0.0
  %306 = vmatpush1.msra.mxu0 %v90
  %307 = vmatprep.subr.mxu0 0.0
  %308 = vmatpush1.msra.mxu0 %v91
  %309 = vmatprep.subr.mxu0 0.0
  %310 = vmatpush1.msra.mxu0 %v92
  %311 = vmatprep.subr.mxu0 0.0
  %312 = vmatpush1.msra.mxu0 %v93
  %313 = vmatprep.subr.mxu0 0.0
  %314 = vmatpush1.msra.mxu0 %v94
  %315 = vmatprep.subr.mxu0 0.0
  %316 = vmatpush1.msra.mxu0 %v95
  %317 = vmatprep.subr.mxu0 0.0
  %318 = vmatpush1.msra.mxu0 %v96
  %319 = vmatprep.subr.mxu0 0.0
  %320 = vmatpush1.msra.mxu0 %v97
  %321 = vmatprep.subr.mxu0 0.0
  %322 = vmatpush1.msra.mxu0 %v98
  %323 = vmatprep.subr.mxu0 0.0
  %324 = vmatpush1.msra.mxu0 %v99
  %325 = vmatprep.subr.mxu0 0.0
  %326 = vmatpush1.msra.mxu0 %v100
  %327 = vmatprep.subr.mxu0 0.0
  %328 = vmatpush1.msra.mxu0 %v101
  %329 = vmatprep.subr.mxu0 0.0
  %330 = vmatpush1.msra.mxu0 %v102
  %331 = vmatprep.subr.mxu0 0.0
  %332 = vmatpush1.msra.mxu0 %v103
  %333 = vmatprep.subr.mxu0 0.0
  %334 = vmatpush1.msra.mxu0 %v104
  %335 = vmatprep.subr.mxu0 0.0
  %336 = vmatpush1.msra.mxu0 %v105
  %337 = vmatprep.subr.mxu0 0.0
  %338 = vmatpush1.msra.mxu0 %v106
  %339 = vmatprep.subr.mxu0 0.0
  %340 = vmatpush1.msra.mxu0 %v107
  %341 = vmatprep.subr.mxu0 0.0
  %342 = vmatpush1.msra.mxu0 %v108
  %343 = vmatprep.subr.mxu0 0.0
  %344 = vmatpush1.msra.mxu0 %v109
  %345 = vmatprep.subr.mxu0 0.0
  %346 = vmatpush1.msra.mxu0 %v110
  %347 = vmatprep.subr.mxu0 0.0
  %348 = vmatpush1.msra.mxu0 %v111
  %349 = vmatprep.subr.mxu0 0.0
  %350 = vmatpush1.msra.mxu0 %v112
  %351 = vmatprep.subr.mxu0 0.0
  %352 = vmatpush1.msra.mxu0 %v113
  %353 = vmatprep.subr.mxu0 0.0
  %354 = vmatpush1.msra.mxu0 %v114
  %355 = vmatprep.subr.mxu0 0.0
  %356 = vmatpush1.msra.mxu0 %v115
  %357 = vmatprep.subr.mxu0 0.0
  %358 = vmatpush1.msra.mxu0 %v116
  %359 = vmatprep.subr.mxu0 0.0
  %360 = vmatpush1.msra.mxu0 %v117
  %361 = vmatprep.mubr.f32.mxu0 %v19
  %362 = vmatmul.mubr.f32.gmra.mrb[0].mxu0 %v18
  %v363 = vpop.f32.mrb[0].mxu0
  %v364 = vadd.f32 %v294, %v363
  %v365 = vpop.f32.mrb[0].mxu0
  %366 = vdwg.mxu0
  %367 = vmatprep.subr.mxu0 0.0
  %368 = vmatpush1.msra.mxu0 %v118
  %369 = vmatprep.subr.mxu0 0.0
  %370 = vmatpush1.msra.mxu0 %v119
  %371 = vmatprep.subr.mxu0 0.0
  %372 = vmatpush1.msra.mxu0 %v120
  %373 = vmatprep.subr.mxu0 0.0
  %374 = vmatpush1.msra.mxu0 %v121
  %375 = vmatprep.subr.mxu0 0.0
  %376 = vmatpush1.msra.mxu0 %v122
  %377 = vmatprep.subr.mxu0 0.0
  %378 = vmatpush1.msra.mxu0 %v123
  %379 = vmatprep.subr.mxu0 0.0
  %380 = vmatpush1.msra.mxu0 %v124
  %381 = vmatprep.subr.mxu0 0.0
  %382 = vmatpush1.msra.mxu0 %v125
  %383 = vmatprep.subr.mxu0 0.0
  %384 = vmatpush1.msra.mxu0 %v126
  %385 = vmatprep.subr.mxu0 0.0
  %386 = vmatpush1.msra.mxu0 %v127
  %387 = vmatprep.subr.mxu0 0.0
  %388 = vmatpush1.msra.mxu0 %v128
  %389 = vmatprep.subr.mxu0 0.0
  %390 = vmatpush1.msra.mxu0 %v129
  %391 = vmatprep.subr.mxu0 0.0
  %392 = vmatpush1.msra.mxu0 %v130
  %393 = vmatprep.subr.mxu0 0.0
  %394 = vmatpush1.msra.mxu0 %v131
  %395 = vmatprep.subr.mxu0 0.0
  %396 = vmatpush1.msra.mxu0 %v132
  %397 = vmatprep.subr.mxu0 0.0
  %398 = vmatpush1.msra.mxu0 %v133
  %399 = vmatprep.subr.mxu0 0.0
  %400 = vmatpush1.msra.mxu0 %v134
  %401 = vmatprep.subr.mxu0 0.0
  %402 = vmatpush1.msra.mxu0 %v135
  %403 = vmatprep.subr.mxu0 0.0
  %404 = vmatpush1.msra.mxu0 %v136
  %405 = vmatprep.subr.mxu0 0.0
  %406 = vmatpush1.msra.mxu0 %v137
  %407 = vmatprep.subr.mxu0 0.0
  %408 = vmatpush1.msra.mxu0 %v138
  %409 = vmatprep.subr.mxu0 0.0
  %410 = vmatpush1.msra.mxu0 %v139
  %411 = vmatprep.subr.mxu0 0.0
  %412 = vmatpush1.msra.mxu0 %v140
  %413 = vmatprep.subr.mxu0 0.0
  %414 = vmatpush1.msra.mxu0 %v141
  %415 = vmatprep.subr.mxu0 0.0
  %416 = vmatpush1.msra.mxu0 %v142
  %417 = vmatprep.subr.mxu0 0.0
  %418 = vmatpush1.msra.mxu0 %v143
  %419 = vmatprep.subr.mxu0 0.0
  %420 = vmatpush1.msra.mxu0 %v144
  %421 = vmatprep.subr.mxu0 0.0
  %422 = vmatpush1.msra.mxu0 %v145
  %423 = vmatprep.subr.mxu0 0.0
  %424 = vmatpush1.msra.mxu0 %v146
  %425 = vmatprep.subr.mxu0 0.0
  %426 = vmatpush1.msra.mxu0 %v147
  %427 = vmatprep.subr.mxu0 0.0
  %428 = vmatpush1.msra.mxu0 %v148
  %429 = vmatprep.subr.mxu0 0.0
  %430 = vmatpush1.msra.mxu0 %v149
  %431 = vmatprep.mubr.f32.mxu0 %v21
  %432 = vmatmul.mubr.f32.gmra.mrb[0].mxu0 %v20
  %v433 = vpop.f32.mrb[0].mxu0
  %v434 = vadd.f32 %v364, %v433
  %v435 = vpop.f32.mrb[0].mxu0
  %436 = vdwg.mxu0
  %vm437 = vcmp.gt.f32.partialorder %v434, 0.0
  %v438 = vmul.f32 %v434, 0.1
  %v439 = vsel %vm437, %v434, %v438
  %440 = vst [vmem:[%s3] sm:$0xff] %v439
  // Predicated region
  $region14: #{depth_encoder_forward_layered.8} parent=0 // pred_check
    _
  $region15: #{depth_encoder_forward_layered.8} parent=0 // pred_check_branch
    %442 = sbr.rel (0) target = $region17
  $region16: #{depth_encoder_forward_layered.8} parent=0 // pred_region
    _
  $region17: #{depth_encoder_forward_layered.8} parent=0 // pred_fallthru
    _
  // Predicated region
  $region18: #{depth_encoder_forward_layered.8} parent=0 // pred_check
    _
  $region19: #{depth_encoder_forward_layered.8} parent=0 // pred_check_branch
    %444 = sbr.rel (0) target = $region21
  $region20: #{depth_encoder_forward_layered.8} parent=0 // pred_region
    _
  $region21: #{depth_encoder_forward_layered.8} parent=0 // pred_fallthru
    _

// kernel: depth_encoder_forward_layered.9
$region0: #{depth_encoder_forward_layered.9}
  #allocation0 [shape = 'u32[]', space=smem, size = 0x4, offset = 0x4, fixed_abs, tag = 'smem constant byte address 0x4 - core index']
  #allocation1 [shape = 'u32[144,128]{1,0:T(1,128)}', space=vmem, size = 0x12000, scoped, tag = 'internal scratch']
  %s0 = inlined_call_operand.vmem [shape: f32[2,2048], index: 0, kind: input, shape index: {}]
  %s1 = inlined_call_operand.vmem [shape: f32[2048,256], index: 1, kind: input, shape index: {}]
  %s2 = inlined_call_operand.vmem [shape: f32[1,256], index: 2, kind: input, shape index: {}]
  %s3 = inlined_call_operand.vmem [shape: f32[2,256], index: 3, kind: output, shape index: {}]
  %s4 = sld [smem:[#allocation0]]
  $region22: #{depth_encoder_forward_layered.9} parent=0
    _
  %s6 = ssub.s32 1, %s4
  %s7 = scalar_select 0, %s6, %s4
  // Predicated region
  $region2: #{depth_encoder_forward_layered.9} parent=0 // pred_check
    _
  $region3: #{depth_encoder_forward_layered.9} parent=0 // pred_check_branch
    %9 = sbr.rel (0) target = $region5
  $region4: #{depth_encoder_forward_layered.9} parent=0 // pred_region
    _
  $region5: #{depth_encoder_forward_layered.9} parent=0 // pred_fallthru
    _
  // Predicated region
  $region6: #{depth_encoder_forward_layered.9} parent=0 // pred_check
    _
  $region7: #{depth_encoder_forward_layered.9} parent=0 // pred_check_branch
    %11 = sbr.rel (0) target = $region9
  $region8: #{depth_encoder_forward_layered.9} parent=0 // pred_region
    _
  $region9: #{depth_encoder_forward_layered.9} parent=0 // pred_fallthru
    _
  // Predicated region
  $region10: #{depth_encoder_forward_layered.9} parent=0 // pred_check
    _
  $region11: #{depth_encoder_forward_layered.9} parent=0 // pred_check_branch
    %13 = sbr.rel (0) target = $region13
  $region12: #{depth_encoder_forward_layered.9} parent=0 // pred_region
    _
  $region13: #{depth_encoder_forward_layered.9} parent=0 // pred_fallthru
    _
  %v14 = vld [vmem:[%s0] sm:$0xff]
  %v15 = vld [vmem:[%s0 + $0x8] sm:$0xff]
  %v16 = vld [vmem:[%s0 + $0x10] sm:$0xff]
  %v17 = vld [vmem:[%s0 + $0x18] sm:$0xff]
  %v18 = vld [vmem:[%s1] sm:$0xff]
  %v19 = vld [vmem:[%s1 + $0x8] sm:$0xff]
  %v20 = vld [vmem:[%s1 + $0x10] sm:$0xff]
  %v21 = vld [vmem:[%s1 + $0x18] sm:$0xff]
  %v22 = vld [vmem:[%s1 + $0x20] sm:$0xff]
  %v23 = vld [vmem:[%s1 + $0x28] sm:$0xff]
  %v24 = vld [vmem:[%s1 + $0x30] sm:$0xff]
  %v25 = vld [vmem:[%s1 + $0x38] sm:$0xff]
  %v26 = vld [vmem:[%s1 + $0x40] sm:$0xff]
  %v27 = vld [vmem:[%s1 + $0x48] sm:$0xff]
  %v28 = vld [vmem:[%s1 + $0x50] sm:$0xff]
  %v29 = vld [vmem:[%s1 + $0x58] sm:$0xff]
  %v30 = vld [vmem:[%s1 + $0x60] sm:$0xff]
  %v31 = vld [vmem:[%s1 + $0x68] sm:$0xff]
  %v32 = vld [vmem:[%s1 + $0x70] sm:$0xff]
  %v33 = vld [vmem:[%s1 + $0x78] sm:$0xff]
  %v34 = vld [vmem:[%s1 + $0x80] sm:$0xff]
  %v35 = vld [vmem:[%s1 + $0x88] sm:$0xff]
  %v36 = vld [vmem:[%s1 + $0x90] sm:$0xff]
  %v37 = vld [vmem:[%s1 + $0x98] sm:$0xff]
  %v38 = vld [vmem:[%s1 + $0xa0] sm:$0xff]
  %v39 = vld [vmem:[%s1 + $0xa8] sm:$0xff]
  %v40 = vld [vmem:[%s1 + $0xb0] sm:$0xff]
  %v41 = vld [vmem:[%s1 + $0xb8] sm:$0xff]
  %v42 = vld [vmem:[%s1 + $0xc0] sm:$0xff]
  %v43 = vld [vmem:[%s1 + $0xc8] sm:$0xff]
  %v44 = vld [vmem:[%s1 + $0xd0] sm:$0xff]
  %v45 = vld [vmem:[%s1 + $0xd8] sm:$0xff]
  %v46 = vld [vmem:[%s1 + $0xe0] sm:$0xff]
  %v47 = vld [vmem:[%s1 + $0xe8] sm:$0xff]
  %v48 = vld [vmem:[%s1 + $0xf0] sm:$0xff]
  %v49 = vld [vmem:[%s1 + $0xf8] sm:$0xff]
  %v50 = vld [vmem:[%s1 + $0x100] sm:$0xff]
  %v51 = vld [vmem:[%s1 + $0x108] sm:$0xff]
  %v52 = vld [vmem:[%s1 + $0x110] sm:$0xff]
  %v53 = vld [vmem:[%s1 + $0x118] sm:$0xff]
  %v54 = vld [vmem:[%s1 + $0x120] sm:$0xff]
  %v55 = vld [vmem:[%s1 + $0x128] sm:$0xff]
  %v56 = vld [vmem:[%s1 + $0x130] sm:$0xff]
  %v57 = vld [vmem:[%s1 + $0x138] sm:$0xff]
  %v58 = vld [vmem:[%s1 + $0x140] sm:$0xff]
  %v59 = vld [vmem:[%s1 + $0x148] sm:$0xff]
  %v60 = vld [vmem:[%s1 + $0x150] sm:$0xff]
  %v61 = vld [vmem:[%s1 + $0x158] sm:$0xff]
  %v62 = vld [vmem:[%s1 + $0x160] sm:$0xff]
  %v63 = vld [vmem:[%s1 + $0x168] sm:$0xff]
  %v64 = vld [vmem:[%s1 + $0x170] sm:$0xff]
  %v65 = vld [vmem:[%s1 + $0x178] sm:$0xff]
  %v66 = vld [vmem:[%s1 + $0x180] sm:$0xff]
  %v67 = vld [vmem:[%s1 + $0x188] sm:$0xff]
  %v68 = vld [vmem:[%s1 + $0x190] sm:$0xff]
  %v69 = vld [vmem:[%s1 + $0x198] sm:$0xff]
  %v70 = vld [vmem:[%s1 + $0x1a0] sm:$0xff]
  %v71 = vld [vmem:[%s1 + $0x1a8] sm:$0xff]
  %v72 = vld [vmem:[%s1 + $0x1b0] sm:$0xff]
  %v73 = vld [vmem:[%s1 + $0x1b8] sm:$0xff]
  %v74 = vld [vmem:[%s1 + $0x1c0] sm:$0xff]
  %v75 = vld [vmem:[%s1 + $0x1c8] sm:$0xff]
  %v76 = vld [vmem:[%s1 + $0x1d0] sm:$0xff]
  %v77 = vld [vmem:[%s1 + $0x1d8] sm:$0xff]
  %v78 = vld [vmem:[%s1 + $0x1e0] sm:$0xff]
  %v79 = vld [vmem:[%s1 + $0x1e8] sm:$0xff]
  %v80 = vld [vmem:[%s1 + $0x1f0] sm:$0xff]
  %v81 = vld [vmem:[%s1 + $0x1f8] sm:$0xff]
  %v82 = vld [vmem:[%s1 + $0x200] sm:$0xff]
  %v83 = vld [vmem:[%s1 + $0x208] sm:$0xff]
  %v84 = vld [vmem:[%s1 + $0x210] sm:$0xff]
  %v85 = vld [vmem:[%s1 + $0x218] sm:$0xff]
  %v86 = vld [vmem:[%s1 + $0x220] sm:$0xff]
  %v87 = vld [vmem:[%s1 + $0x228] sm:$0xff]
  %v88 = vld [vmem:[%s1 + $0x230] sm:$0xff]
  %v89 = vld [vmem:[%s1 + $0x238] sm:$0xff]
  %v90 = vld [vmem:[%s1 + $0x240] sm:$0xff]
  %v91 = vld [vmem:[%s1 + $0x248] sm:$0xff]
  %v92 = vld [vmem:[%s1 + $0x250] sm:$0xff]
  %v93 = vld [vmem:[%s1 + $0x258] sm:$0xff]
  %v94 = vld [vmem:[%s1 + $0x260] sm:$0xff]
  %v95 = vld [vmem:[%s1 + $0x268] sm:$0xff]
  %v96 = vld [vmem:[%s1 + $0x270] sm:$0xff]
  %v97 = vld [vmem:[%s1 + $0x278] sm:$0xff]
  %v98 = vld [vmem:[%s1 + $0x280] sm:$0xff]
  %v99 = vld [vmem:[%s1 + $0x288] sm:$0xff]
  %v100 = vld [vmem:[%s1 + $0x290] sm:$0xff]
  %v101 = vld [vmem:[%s1 + $0x298] sm:$0xff]
  %v102 = vld [vmem:[%s1 + $0x2a0] sm:$0xff]
  %v103 = vld [vmem:[%s1 + $0x2a8] sm:$0xff]
  %v104 = vld [vmem:[%s1 + $0x2b0] sm:$0xff]
  %v105 = vld [vmem:[%s1 + $0x2b8] sm:$0xff]
  %v106 = vld [vmem:[%s1 + $0x2c0] sm:$0xff]
  %v107 = vld [vmem:[%s1 + $0x2c8] sm:$0xff]
  %v108 = vld [vmem:[%s1 + $0x2d0] sm:$0xff]
  %v109 = vld [vmem:[%s1 + $0x2d8] sm:$0xff]
  %v110 = vld [vmem:[%s1 + $0x2e0] sm:$0xff]
  %v111 = vld [vmem:[%s1 + $0x2e8] sm:$0xff]
  %v112 = vld [vmem:[%s1 + $0x2f0] sm:$0xff]
  %v113 = vld [vmem:[%s1 + $0x2f8] sm:$0xff]
  %v114 = vld [vmem:[%s1 + $0x300] sm:$0xff]
  %v115 = vld [vmem:[%s1 + $0x308] sm:$0xff]
  %v116 = vld [vmem:[%s1 + $0x310] sm:$0xff]
  %v117 = vld [vmem:[%s1 + $0x318] sm:$0xff]
  %v118 = vld [vmem:[%s1 + $0x320] sm:$0xff]
  %v119 = vld [vmem:[%s1 + $0x328] sm:$0xff]
  %v120 = vld [vmem:[%s1 + $0x330] sm:$0xff]
  %v121 = vld [vmem:[%s1 + $0x338] sm:$0xff]
  %v122 = vld [vmem:[%s1 + $0x340] sm:$0xff]
  %v123 = vld [vmem:[%s1 + $0x348] sm:$0xff]
  %v124 = vld [vmem:[%s1 + $0x350] sm:$0xff]
  %v125 = vld [vmem:[%s1 + $0x358] sm:$0xff]
  %v126 = vld [vmem:[%s1 + $0x360] sm:$0xff]
  %v127 = vld [vmem:[%s1 + $0x368] sm:$0xff]
  %v128 = vld [vmem:[%s1 + $0x370] sm:$0xff]
  %v129 = vld [vmem:[%s1 + $0x378] sm:$0xff]
  %v130 = vld [vmem:[%s1 + $0x380] sm:$0xff]
  %v131 = vld [vmem:[%s1 + $0x388] sm:$0xff]
  %v132 = vld [vmem:[%s1 + $0x390] sm:$0xff]
  %v133 = vld [vmem:[%s1 + $0x398] sm:$0xff]
  %v134 = vld [vmem:[%s1 + $0x3a0] sm:$0xff]
  %v135 = vld [vmem:[%s1 + $0x3a8] sm:$0xff]
  %v136 = vld [vmem:[%s1 + $0x3b0] sm:$0xff]
  %v137 = vld [vmem:[%s1 + $0x3b8] sm:$0xff]
  %v138 = vld [vmem:[%s1 + $0x3c0] sm:$0xff]
  %v139 = vld [vmem:[%s1 + $0x3c8] sm:$0xff]
  %v140 = vld [vmem:[%s1 + $0x3d0] sm:$0xff]
  %v141 = vld [vmem:[%s1 + $0x3d8] sm:$0xff]
  %v142 = vld [vmem:[%s1 + $0x3e0] sm:$0xff]
  %v143 = vld [vmem:[%s1 + $0x3e8] sm:$0xff]
  %v144 = vld [vmem:[%s1 + $0x3f0] sm:$0xff]
  %v145 = vld [vmem:[%s1 + $0x3f8] sm:$0xff]
  %v146 = vld [vmem:[%s1 + $0x400] sm:$0xff]
  %v147 = vld [vmem:[%s1 + $0x408] sm:$0xff]
  %v148 = vld [vmem:[%s1 + $0x410] sm:$0xff]
  %v149 = vld [vmem:[%s1 + $0x418] sm:$0xff]
  %v150 = vld [vmem:[%s1 + $0x420] sm:$0xff]
  %v151 = vld [vmem:[%s1 + $0x428] sm:$0xff]
  %v152 = vld [vmem:[%s1 + $0x430] sm:$0xff]
  %v153 = vld [vmem:[%s1 + $0x438] sm:$0xff]
  %v154 = vld [vmem:[%s1 + $0x440] sm:$0xff]
  %v155 = vld [vmem:[%s1 + $0x448] sm:$0xff]
  %v156 = vld [vmem:[%s1 + $0x450] sm:$0xff]
  %v157 = vld [vmem:[%s1 + $0x458] sm:$0xff]
  %v158 = vld [vmem:[%s1 + $0x460] sm:$0xff]
  %v159 = vld [vmem:[%s1 + $0x468] sm:$0xff]
  %v160 = vld [vmem:[%s1 + $0x470] sm:$0xff]
  %v161 = vld [vmem:[%s1 + $0x478] sm:$0xff]
  %v162 = vld [vmem:[%s1 + $0x480] sm:$0xff]
  %v163 = vld [vmem:[%s1 + $0x488] sm:$0xff]
  %v164 = vld [vmem:[%s1 + $0x490] sm:$0xff]
  %v165 = vld [vmem:[%s1 + $0x498] sm:$0xff]
  %v166 = vld [vmem:[%s1 + $0x4a0] sm:$0xff]
  %v167 = vld [vmem:[%s1 + $0x4a8] sm:$0xff]
  %v168 = vld [vmem:[%s1 + $0x4b0] sm:$0xff]
  %v169 = vld [vmem:[%s1 + $0x4b8] sm:$0xff]
  %v170 = vld [vmem:[%s1 + $0x4c0] sm:$0xff]
  %v171 = vld [vmem:[%s1 + $0x4c8] sm:$0xff]
  %v172 = vld [vmem:[%s1 + $0x4d0] sm:$0xff]
  %v173 = vld [vmem:[%s1 + $0x4d8] sm:$0xff]
  %v174 = vld [vmem:[%s1 + $0x4e0] sm:$0xff]
  %v175 = vld [vmem:[%s1 + $0x4e8] sm:$0xff]
  %v176 = vld [vmem:[%s1 + $0x4f0] sm:$0xff]
  %v177 = vld [vmem:[%s1 + $0x4f8] sm:$0xff]
  %v178 = vld [vmem:[%s1 + $0x500] sm:$0xff]
  %v179 = vld [vmem:[%s1 + $0x508] sm:$0xff]
  %v180 = vld [vmem:[%s1 + $0x510] sm:$0xff]
  %v181 = vld [vmem:[%s1 + $0x518] sm:$0xff]
  %v182 = vld [vmem:[%s1 + $0x520] sm:$0xff]
  %v183 = vld [vmem:[%s1 + $0x528] sm:$0xff]
  %v184 = vld [vmem:[%s1 + $0x530] sm:$0xff]
  %v185 = vld [vmem:[%s1 + $0x538] sm:$0xff]
  %v186 = vld [vmem:[%s1 + $0x540] sm:$0xff]
  %v187 = vld [vmem:[%s1 + $0x548] sm:$0xff]
  %v188 = vld [vmem:[%s1 + $0x550] sm:$0xff]
  %v189 = vld [vmem:[%s1 + $0x558] sm:$0xff]
  %v190 = vld [vmem:[%s1 + $0x560] sm:$0xff]
  %v191 = vld [vmem:[%s1 + $0x568] sm:$0xff]
  %v192 = vld [vmem:[%s1 + $0x570] sm:$0xff]
  %v193 = vld [vmem:[%s1 + $0x578] sm:$0xff]
  %v194 = vld [vmem:[%s1 + $0x580] sm:$0xff]
  %v195 = vld [vmem:[%s1 + $0x588] sm:$0xff]
  %v196 = vld [vmem:[%s1 + $0x590] sm:$0xff]
  %v197 = vld [vmem:[%s1 + $0x598] sm:$0xff]
  %v198 = vld [vmem:[%s1 + $0x5a0] sm:$0xff]
  %v199 = vld [vmem:[%s1 + $0x5a8] sm:$0xff]
  %v200 = vld [vmem:[%s1 + $0x5b0] sm:$0xff]
  %v201 = vld [vmem:[%s1 + $0x5b8] sm:$0xff]
  %v202 = vld [vmem:[%s1 + $0x5c0] sm:$0xff]
  %v203 = vld [vmem:[%s1 + $0x5c8] sm:$0xff]
  %v204 = vld [vmem:[%s1 + $0x5d0] sm:$0xff]
  %v205 = vld [vmem:[%s1 + $0x5d8] sm:$0xff]
  %v206 = vld [vmem:[%s1 + $0x5e0] sm:$0xff]
  %v207 = vld [vmem:[%s1 + $0x5e8] sm:$0xff]
  %v208 = vld [vmem:[%s1 + $0x5f0] sm:$0xff]
  %v209 = vld [vmem:[%s1 + $0x5f8] sm:$0xff]
  %v210 = vld [vmem:[%s1 + $0x600] sm:$0xff]
  %v211 = vld [vmem:[%s1 + $0x608] sm:$0xff]
  %v212 = vld [vmem:[%s1 + $0x610] sm:$0xff]
  %v213 = vld [vmem:[%s1 + $0x618] sm:$0xff]
  %v214 = vld [vmem:[%s1 + $0x620] sm:$0xff]
  %v215 = vld [vmem:[%s1 + $0x628] sm:$0xff]
  %v216 = vld [vmem:[%s1 + $0x630] sm:$0xff]
  %v217 = vld [vmem:[%s1 + $0x638] sm:$0xff]
  %v218 = vld [vmem:[%s1 + $0x640] sm:$0xff]
  %v219 = vld [vmem:[%s1 + $0x648] sm:$0xff]
  %v220 = vld [vmem:[%s1 + $0x650] sm:$0xff]
  %v221 = vld [vmem:[%s1 + $0x658] sm:$0xff]
  %v222 = vld [vmem:[%s1 + $0x660] sm:$0xff]
  %v223 = vld [vmem:[%s1 + $0x668] sm:$0xff]
  %v224 = vld [vmem:[%s1 + $0x670] sm:$0xff]
  %v225 = vld [vmem:[%s1 + $0x678] sm:$0xff]
  %v226 = vld [vmem:[%s1 + $0x680] sm:$0xff]
  %v227 = vld [vmem:[%s1 + $0x688] sm:$0xff]
  %v228 = vld [vmem:[%s1 + $0x690] sm:$0xff]
  %v229 = vld [vmem:[%s1 + $0x698] sm:$0xff]
  %v230 = vld [vmem:[%s1 + $0x6a0] sm:$0xff]
  %v231 = vld [vmem:[%s1 + $0x6a8] sm:$0xff]
  %v232 = vld [vmem:[%s1 + $0x6b0] sm:$0xff]
  %v233 = vld [vmem:[%s1 + $0x6b8] sm:$0xff]
  %v234 = vld [vmem:[%s1 + $0x6c0] sm:$0xff]
  %v235 = vld [vmem:[%s1 + $0x6c8] sm:$0xff]
  %v236 = vld [vmem:[%s1 + $0x6d0] sm:$0xff]
  %v237 = vld [vmem:[%s1 + $0x6d8] sm:$0xff]
  %v238 = vld [vmem:[%s1 + $0x6e0] sm:$0xff]
  %v239 = vld [vmem:[%s1 + $0x6e8] sm:$0xff]
  %v240 = vld [vmem:[%s1 + $0x6f0] sm:$0xff]
  %v241 = vld [vmem:[%s1 + $0x6f8] sm:$0xff]
  %v242 = vld [vmem:[%s1 + $0x700] sm:$0xff]
  %v243 = vld [vmem:[%s1 + $0x708] sm:$0xff]
  %v244 = vld [vmem:[%s1 + $0x710] sm:$0xff]
  %v245 = vld [vmem:[%s1 + $0x718] sm:$0xff]
  %v246 = vld [vmem:[%s1 + $0x720] sm:$0xff]
  %v247 = vld [vmem:[%s1 + $0x728] sm:$0xff]
  %v248 = vld [vmem:[%s1 + $0x730] sm:$0xff]
  %v249 = vld [vmem:[%s1 + $0x738] sm:$0xff]
  %v250 = vld [vmem:[%s1 + $0x740] sm:$0xff]
  %v251 = vld [vmem:[%s1 + $0x748] sm:$0xff]
  %v252 = vld [vmem:[%s1 + $0x750] sm:$0xff]
  %v253 = vld [vmem:[%s1 + $0x758] sm:$0xff]
  %v254 = vld [vmem:[%s1 + $0x760] sm:$0xff]
  %v255 = vld [vmem:[%s1 + $0x768] sm:$0xff]
  %v256 = vld [vmem:[%s1 + $0x770] sm:$0xff]
  %v257 = vld [vmem:[%s1 + $0x778] sm:$0xff]
  %v258 = vld [vmem:[%s1 + $0x780] sm:$0xff]
  %v259 = vld [vmem:[%s1 + $0x788] sm:$0xff]
  %v260 = vld [vmem:[%s1 + $0x790] sm:$0xff]
  %v261 = vld [vmem:[%s1 + $0x798] sm:$0xff]
  %v262 = vld [vmem:[%s1 + $0x7a0] sm:$0xff]
  %v263 = vld [vmem:[%s1 + $0x7a8] sm:$0xff]
  %v264 = vld [vmem:[%s1 + $0x7b0] sm:$0xff]
  %v265 = vld [vmem:[%s1 + $0x7b8] sm:$0xff]
  %v266 = vld [vmem:[%s1 + $0x7c0] sm:$0xff]
  %v267 = vld [vmem:[%s1 + $0x7c8] sm:$0xff]
  %v268 = vld [vmem:[%s1 + $0x7d0] sm:$0xff]
  %v269 = vld [vmem:[%s1 + $0x7d8] sm:$0xff]
  %v270 = vld [vmem:[%s1 + $0x7e0] sm:$0xff]
  %v271 = vld [vmem:[%s1 + $0x7e8] sm:$0xff]
  %v272 = vld [vmem:[%s1 + $0x7f0] sm:$0xff]
  %v273 = vld [vmem:[%s1 + $0x7f8] sm:$0xff]
  %v274 = vld [vmem:[%s1 + $0x800] sm:$0xff]
  %v275 = vld [vmem:[%s1 + $0x808] sm:$0xff]
  %v276 = vld [vmem:[%s1 + $0x810] sm:$0xff]
  %v277 = vld [vmem:[%s1 + $0x818] sm:$0xff]
  %v278 = vld [vmem:[%s1 + $0x820] sm:$0xff]
  %v279 = vld [vmem:[%s1 + $0x828] sm:$0xff]
  %v280 = vld [vmem:[%s1 + $0x830] sm:$0xff]
  %v281 = vld [vmem:[%s1 + $0x838] sm:$0xff]
  %v282 = vld [vmem:[%s1 + $0x840] sm:$0xff]
  %v283 = vld [vmem:[%s1 + $0x848] sm:$0xff]
  %v284 = vld [vmem:[%s1 + $0x850] sm:$0xff]
  %v285 = vld [vmem:[%s1 + $0x858] sm:$0xff]
  %v286 = vld [vmem:[%s1 + $0x860] sm:$0xff]
  %v287 = vld [vmem:[%s1 + $0x868] sm:$0xff]
  %v288 = vld [vmem:[%s1 + $0x870] sm:$0xff]
  %v289 = vld [vmem:[%s1 + $0x878] sm:$0xff]
  %v290 = vld [vmem:[%s1 + $0x880] sm:$0xff]
  %v291 = vld [vmem:[%s1 + $0x888] sm:$0xff]
  %v292 = vld [vmem:[%s1 + $0x890] sm:$0xff]
  %v293 = vld [vmem:[%s1 + $0x898] sm:$0xff]
  %v294 = vld [vmem:[%s1 + $0x8a0] sm:$0xff]
  %v295 = vld [vmem:[%s1 + $0x8a8] sm:$0xff]
  %v296 = vld [vmem:[%s1 + $0x8b0] sm:$0xff]
  %v297 = vld [vmem:[%s1 + $0x8b8] sm:$0xff]
  %v298 = vld [vmem:[%s1 + $0x8c0] sm:$0xff]
  %v299 = vld [vmem:[%s1 + $0x8c8] sm:$0xff]
  %v300 = vld [vmem:[%s1 + $0x8d0] sm:$0xff]
  %v301 = vld [vmem:[%s1 + $0x8d8] sm:$0xff]
  %v302 = vld [vmem:[%s1 + $0x8e0] sm:$0xff]
  %v303 = vld [vmem:[%s1 + $0x8e8] sm:$0xff]
  %v304 = vld [vmem:[%s1 + $0x8f0] sm:$0xff]
  %v305 = vld [vmem:[%s1 + $0x8f8] sm:$0xff]
  %v306 = vld [vmem:[%s1 + $0x900] sm:$0xff]
  %v307 = vld [vmem:[%s1 + $0x908] sm:$0xff]
  %v308 = vld [vmem:[%s1 + $0x910] sm:$0xff]
  %v309 = vld [vmem:[%s1 + $0x918] sm:$0xff]
  %v310 = vld [vmem:[%s1 + $0x920] sm:$0xff]
  %v311 = vld [vmem:[%s1 + $0x928] sm:$0xff]
  %v312 = vld [vmem:[%s1 + $0x930] sm:$0xff]
  %v313 = vld [vmem:[%s1 + $0x938] sm:$0xff]
  %v314 = vld [vmem:[%s1 + $0x940] sm:$0xff]
  %v315 = vld [vmem:[%s1 + $0x948] sm:$0xff]
  %v316 = vld [vmem:[%s1 + $0x950] sm:$0xff]
  %v317 = vld [vmem:[%s1 + $0x958] sm:$0xff]
  %v318 = vld [vmem:[%s1 + $0x960] sm:$0xff]
  %v319 = vld [vmem:[%s1 + $0x968] sm:$0xff]
  %v320 = vld [vmem:[%s1 + $0x970] sm:$0xff]
  %v321 = vld [vmem:[%s1 + $0x978] sm:$0xff]
  %v322 = vld [vmem:[%s1 + $0x980] sm:$0xff]
  %v323 = vld [vmem:[%s1 + $0x988] sm:$0xff]
  %v324 = vld [vmem:[%s1 + $0x990] sm:$0xff]
  %v325 = vld [vmem:[%s1 + $0x998] sm:$0xff]
  %v326 = vld [vmem:[%s1 + $0x9a0] sm:$0xff]
  %v327 = vld [vmem:[%s1 + $0x9a8] sm:$0xff]
  %v328 = vld [vmem:[%s1 + $0x9b0] sm:$0xff]
  %v329 = vld [vmem:[%s1 + $0x9b8] sm:$0xff]
  %v330 = vld [vmem:[%s1 + $0x9c0] sm:$0xff]
  %v331 = vld [vmem:[%s1 + $0x9c8] sm:$0xff]
  %v332 = vld [vmem:[%s1 + $0x9d0] sm:$0xff]
  %v333 = vld [vmem:[%s1 + $0x9d8] sm:$0xff]
  %v334 = vld [vmem:[%s1 + $0x9e0] sm:$0xff]
  %v335 = vld [vmem:[%s1 + $0x9e8] sm:$0xff]
  %v336 = vld [vmem:[%s1 + $0x9f0] sm:$0xff]
  %v337 = vld [vmem:[%s1 + $0x9f8] sm:$0xff]
  %v338 = vld [vmem:[%s1 + $0xa00] sm:$0xff]
  %v339 = vld [vmem:[%s1 + $0xa08] sm:$0xff]
  %v340 = vld [vmem:[%s1 + $0xa10] sm:$0xff]
  %v341 = vld [vmem:[%s1 + $0xa18] sm:$0xff]
  %v342 = vld [vmem:[%s1 + $0xa20] sm:$0xff]
  %v343 = vld [vmem:[%s1 + $0xa28] sm:$0xff]
  %v344 = vld [vmem:[%s1 + $0xa30] sm:$0xff]
  %v345 = vld [vmem:[%s1 + $0xa38] sm:$0xff]
  %v346 = vld [vmem:[%s1 + $0xa40] sm:$0xff]
  %v347 = vld [vmem:[%s1 + $0xa48] sm:$0xff]
  %v348 = vld [vmem:[%s1 + $0xa50] sm:$0xff]
  %v349 = vld [vmem:[%s1 + $0xa58] sm:$0xff]
  %v350 = vld [vmem:[%s1 + $0xa60] sm:$0xff]
  %v351 = vld [vmem:[%s1 + $0xa68] sm:$0xff]
  %v352 = vld [vmem:[%s1 + $0xa70] sm:$0xff]
  %v353 = vld [vmem:[%s1 + $0xa78] sm:$0xff]
  %v354 = vld [vmem:[%s1 + $0xa80] sm:$0xff]
  %v355 = vld [vmem:[%s1 + $0xa88] sm:$0xff]
  %v356 = vld [vmem:[%s1 + $0xa90] sm:$0xff]
  %v357 = vld [vmem:[%s1 + $0xa98] sm:$0xff]
  %v358 = vld [vmem:[%s1 + $0xaa0] sm:$0xff]
  %v359 = vld [vmem:[%s1 + $0xaa8] sm:$0xff]
  %v360 = vld [vmem:[%s1 + $0xab0] sm:$0xff]
  %v361 = vld [vmem:[%s1 + $0xab8] sm:$0xff]
  %v362 = vld [vmem:[%s1 + $0xac0] sm:$0xff]
  %v363 = vld [vmem:[%s1 + $0xac8] sm:$0xff]
  %v364 = vld [vmem:[%s1 + $0xad0] sm:$0xff]
  %v365 = vld [vmem:[%s1 + $0xad8] sm:$0xff]
  %v366 = vld [vmem:[%s1 + $0xae0] sm:$0xff]
  %v367 = vld [vmem:[%s1 + $0xae8] sm:$0xff]
  %v368 = vld [vmem:[%s1 + $0xaf0] sm:$0xff]
  %v369 = vld [vmem:[%s1 + $0xaf8] sm:$0xff]
  %v370 = vld [vmem:[%s1 + $0xb00] sm:$0xff]
  %v371 = vld [vmem:[%s1 + $0xb08] sm:$0xff]
  %v372 = vld [vmem:[%s1 + $0xb10] sm:$0xff]
  %v373 = vld [vmem:[%s1 + $0xb18] sm:$0xff]
  %v374 = vld [vmem:[%s1 + $0xb20] sm:$0xff]
  %v375 = vld [vmem:[%s1 + $0xb28] sm:$0xff]
  %v376 = vld [vmem:[%s1 + $0xb30] sm:$0xff]
  %v377 = vld [vmem:[%s1 + $0xb38] sm:$0xff]
  %v378 = vld [vmem:[%s1 + $0xb40] sm:$0xff]
  %v379 = vld [vmem:[%s1 + $0xb48] sm:$0xff]
  %v380 = vld [vmem:[%s1 + $0xb50] sm:$0xff]
  %v381 = vld [vmem:[%s1 + $0xb58] sm:$0xff]
  %v382 = vld [vmem:[%s1 + $0xb60] sm:$0xff]
  %v383 = vld [vmem:[%s1 + $0xb68] sm:$0xff]
  %v384 = vld [vmem:[%s1 + $0xb70] sm:$0xff]
  %v385 = vld [vmem:[%s1 + $0xb78] sm:$0xff]
  %v386 = vld [vmem:[%s1 + $0xb80] sm:$0xff]
  %v387 = vld [vmem:[%s1 + $0xb88] sm:$0xff]
  %v388 = vld [vmem:[%s1 + $0xb90] sm:$0xff]
  %v389 = vld [vmem:[%s1 + $0xb98] sm:$0xff]
  %v390 = vld [vmem:[%s1 + $0xba0] sm:$0xff]
  %v391 = vld [vmem:[%s1 + $0xba8] sm:$0xff]
  %v392 = vld [vmem:[%s1 + $0xbb0] sm:$0xff]
  %v393 = vld [vmem:[%s1 + $0xbb8] sm:$0xff]
  %v394 = vld [vmem:[%s1 + $0xbc0] sm:$0xff]
  %v395 = vld [vmem:[%s1 + $0xbc8] sm:$0xff]
  %v396 = vld [vmem:[%s1 + $0xbd0] sm:$0xff]
  %v397 = vld [vmem:[%s1 + $0xbd8] sm:$0xff]
  %v398 = vld [vmem:[%s1 + $0xbe0] sm:$0xff]
  %v399 = vld [vmem:[%s1 + $0xbe8] sm:$0xff]
  %v400 = vld [vmem:[%s1 + $0xbf0] sm:$0xff]
  %v401 = vld [vmem:[%s1 + $0xbf8] sm:$0xff]
  %v402 = vld [vmem:[%s1 + $0xc00] sm:$0xff]
  %v403 = vld [vmem:[%s1 + $0xc08] sm:$0xff]
  %v404 = vld [vmem:[%s1 + $0xc10] sm:$0xff]
  %v405 = vld [vmem:[%s1 + $0xc18] sm:$0xff]
  %v406 = vld [vmem:[%s1 + $0xc20] sm:$0xff]
  %v407 = vld [vmem:[%s1 + $0xc28] sm:$0xff]
  %v408 = vld [vmem:[%s1 + $0xc30] sm:$0xff]
  %v409 = vld [vmem:[%s1 + $0xc38] sm:$0xff]
  %v410 = vld [vmem:[%s1 + $0xc40] sm:$0xff]
  %v411 = vld [vmem:[%s1 + $0xc48] sm:$0xff]
  %v412 = vld [vmem:[%s1 + $0xc50] sm:$0xff]
  %v413 = vld [vmem:[%s1 + $0xc58] sm:$0xff]
  %v414 = vld [vmem:[%s1 + $0xc60] sm:$0xff]
  %v415 = vld [vmem:[%s1 + $0xc68] sm:$0xff]
  %v416 = vld [vmem:[%s1 + $0xc70] sm:$0xff]
  %v417 = vld [vmem:[%s1 + $0xc78] sm:$0xff]
  %v418 = vld [vmem:[%s1 + $0xc80] sm:$0xff]
  %v419 = vld [vmem:[%s1 + $0xc88] sm:$0xff]
  %v420 = vld [vmem:[%s1 + $0xc90] sm:$0xff]
  %v421 = vld [vmem:[%s1 + $0xc98] sm:$0xff]
  %v422 = vld [vmem:[%s1 + $0xca0] sm:$0xff]
  %v423 = vld [vmem:[%s1 + $0xca8] sm:$0xff]
  %v424 = vld [vmem:[%s1 + $0xcb0] sm:$0xff]
  %v425 = vld [vmem:[%s1 + $0xcb8] sm:$0xff]
  %v426 = vld [vmem:[%s1 + $0xcc0] sm:$0xff]
  %v427 = vld [vmem:[%s1 + $0xcc8] sm:$0xff]
  %v428 = vld [vmem:[%s1 + $0xcd0] sm:$0xff]
  %v429 = vld [vmem:[%s1 + $0xcd8] sm:$0xff]
  %v430 = vld [vmem:[%s1 + $0xce0] sm:$0xff]
  %v431 = vld [vmem:[%s1 + $0xce8] sm:$0xff]
  %v432 = vld [vmem:[%s1 + $0xcf0] sm:$0xff]
  %v433 = vld [vmem:[%s1 + $0xcf8] sm:$0xff]
  %v434 = vld [vmem:[%s1 + $0xd00] sm:$0xff]
  %v435 = vld [vmem:[%s1 + $0xd08] sm:$0xff]
  %v436 = vld [vmem:[%s1 + $0xd10] sm:$0xff]
  %v437 = vld [vmem:[%s1 + $0xd18] sm:$0xff]
  %v438 = vld [vmem:[%s1 + $0xd20] sm:$0xff]
  %v439 = vld [vmem:[%s1 + $0xd28] sm:$0xff]
  %v440 = vld [vmem:[%s1 + $0xd30] sm:$0xff]
  %v441 = vld [vmem:[%s1 + $0xd38] sm:$0xff]
  %v442 = vld [vmem:[%s1 + $0xd40] sm:$0xff]
  %v443 = vld [vmem:[%s1 + $0xd48] sm:$0xff]
  %v444 = vld [vmem:[%s1 + $0xd50] sm:$0xff]
  %v445 = vld [vmem:[%s1 + $0xd58] sm:$0xff]
  %v446 = vld [vmem:[%s1 + $0xd60] sm:$0xff]
  %v447 = vld [vmem:[%s1 + $0xd68] sm:$0xff]
  %v448 = vld [vmem:[%s1 + $0xd70] sm:$0xff]
  %v449 = vld [vmem:[%s1 + $0xd78] sm:$0xff]
  %v450 = vld [vmem:[%s1 + $0xd80] sm:$0xff]
  %v451 = vld [vmem:[%s1 + $0xd88] sm:$0xff]
  %v452 = vld [vmem:[%s1 + $0xd90] sm:$0xff]
  %v453 = vld [vmem:[%s1 + $0xd98] sm:$0xff]
  %v454 = vld [vmem:[%s1 + $0xda0] sm:$0xff]
  %v455 = vld [vmem:[%s1 + $0xda8] sm:$0xff]
  %v456 = vld [vmem:[%s1 + $0xdb0] sm:$0xff]
  %v457 = vld [vmem:[%s1 + $0xdb8] sm:$0xff]
  %v458 = vld [vmem:[%s1 + $0xdc0] sm:$0xff]
  %v459 = vld [vmem:[%s1 + $0xdc8] sm:$0xff]
  %v460 = vld [vmem:[%s1 + $0xdd0] sm:$0xff]
  %v461 = vld [vmem:[%s1 + $0xdd8] sm:$0xff]
  %v462 = vld [vmem:[%s1 + $0xde0] sm:$0xff]
  %v463 = vld [vmem:[%s1 + $0xde8] sm:$0xff]
  %v464 = vld [vmem:[%s1 + $0xdf0] sm:$0xff]
  %v465 = vld [vmem:[%s1 + $0xdf8] sm:$0xff]
  %v466 = vld [vmem:[%s1 + $0xe00] sm:$0xff]
  %v467 = vld [vmem:[%s1 + $0xe08] sm:$0xff]
  %v468 = vld [vmem:[%s1 + $0xe10] sm:$0xff]
  %v469 = vld [vmem:[%s1 + $0xe18] sm:$0xff]
  %v470 = vld [vmem:[%s1 + $0xe20] sm:$0xff]
  %v471 = vld [vmem:[%s1 + $0xe28] sm:$0xff]
  %v472 = vld [vmem:[%s1 + $0xe30] sm:$0xff]
  %v473 = vld [vmem:[%s1 + $0xe38] sm:$0xff]
  %v474 = vld [vmem:[%s1 + $0xe40] sm:$0xff]
  %v475 = vld [vmem:[%s1 + $0xe48] sm:$0xff]
  %v476 = vld [vmem:[%s1 + $0xe50] sm:$0xff]
  %v477 = vld [vmem:[%s1 + $0xe58] sm:$0xff]
  %v478 = vld [vmem:[%s1 + $0xe60] sm:$0xff]
  %v479 = vld [vmem:[%s1 + $0xe68] sm:$0xff]
  %v480 = vld [vmem:[%s1 + $0xe70] sm:$0xff]
  %v481 = vld [vmem:[%s1 + $0xe78] sm:$0xff]
  %v482 = vld [vmem:[%s1 + $0xe80] sm:$0xff]
  %v483 = vld [vmem:[%s1 + $0xe88] sm:$0xff]
  %v484 = vld [vmem:[%s1 + $0xe90] sm:$0xff]
  %v485 = vld [vmem:[%s1 + $0xe98] sm:$0xff]
  %v486 = vld [vmem:[%s1 + $0xea0] sm:$0xff]
  %v487 = vld [vmem:[%s1 + $0xea8] sm:$0xff]
  %v488 = vld [vmem:[%s1 + $0xeb0] sm:$0xff]
  %v489 = vld [vmem:[%s1 + $0xeb8] sm:$0xff]
  %v490 = vld [vmem:[%s1 + $0xec0] sm:$0xff]
  %v491 = vld [vmem:[%s1 + $0xec8] sm:$0xff]
  %v492 = vld [vmem:[%s1 + $0xed0] sm:$0xff]
  %v493 = vld [vmem:[%s1 + $0xed8] sm:$0xff]
  %v494 = vld [vmem:[%s1 + $0xee0] sm:$0xff]
  %v495 = vld [vmem:[%s1 + $0xee8] sm:$0xff]
  %v496 = vld [vmem:[%s1 + $0xef0] sm:$0xff]
  %v497 = vld [vmem:[%s1 + $0xef8] sm:$0xff]
  %v498 = vld [vmem:[%s1 + $0xf00] sm:$0xff]
  %v499 = vld [vmem:[%s1 + $0xf08] sm:$0xff]
  %v500 = vld [vmem:[%s1 + $0xf10] sm:$0xff]
  %v501 = vld [vmem:[%s1 + $0xf18] sm:$0xff]
  %v502 = vld [vmem:[%s1 + $0xf20] sm:$0xff]
  %v503 = vld [vmem:[%s1 + $0xf28] sm:$0xff]
  %v504 = vld [vmem:[%s1 + $0xf30] sm:$0xff]
  %v505 = vld [vmem:[%s1 + $0xf38] sm:$0xff]
  %v506 = vld [vmem:[%s1 + $0xf40] sm:$0xff]
  %v507 = vld [vmem:[%s1 + $0xf48] sm:$0xff]
  %v508 = vld [vmem:[%s1 + $0xf50] sm:$0xff]
  %v509 = vld [vmem:[%s1 + $0xf58] sm:$0xff]
  %v510 = vld [vmem:[%s1 + $0xf60] sm:$0xff]
  %v511 = vld [vmem:[%s1 + $0xf68] sm:$0xff]
  %v512 = vld [vmem:[%s1 + $0xf70] sm:$0xff]
  %v513 = vld [vmem:[%s1 + $0xf78] sm:$0xff]
  %v514 = vld [vmem:[%s1 + $0xf80] sm:$0xff]
  %v515 = vld [vmem:[%s1 + $0xf88] sm:$0xff]
  %v516 = vld [vmem:[%s1 + $0xf90] sm:$0xff]
  %v517 = vld [vmem:[%s1 + $0xf98] sm:$0xff]
  %v518 = vld [vmem:[%s1 + $0xfa0] sm:$0xff]
  %v519 = vld [vmem:[%s1 + $0xfa8] sm:$0xff]
  %v520 = vld [vmem:[%s1 + $0xfb0] sm:$0xff]
  %v521 = vld [vmem:[%s1 + $0xfb8] sm:$0xff]
  %v522 = vld [vmem:[%s1 + $0xfc0] sm:$0xff]
  %v523 = vld [vmem:[%s1 + $0xfc8] sm:$0xff]
  %v524 = vld [vmem:[%s1 + $0xfd0] sm:$0xff]
  %v525 = vld [vmem:[%s1 + $0xfd8] sm:$0xff]
  %v526 = vld [vmem:[%s1 + $0xfe0] sm:$0xff]
  %v527 = vld [vmem:[%s1 + $0xfe8] sm:$0xff]
  %v528 = vld [vmem:[%s1 + $0xff0] sm:$0xff]
  %v529 = vld [vmem:[%s1 + $0xff8] sm:$0xff]
  %v530 = vld [vmem:[%s2] sm:$0x3]
  %v532 = vlaneseq
  %v533 = vshrl.u32 %v532, 7
  %v534 = vsub.s32 0, %v533
  %v535 = vrot.slane %v530, %v534
  %v536 = vlaneseq
  %v537 = vshrl.u32 %v536, 7
  %v538 = vsub.s32 1, %v537
  %v539 = vrot.slane %v530, %v538
  %v546 = vcombine.high %v14, %v14
  %v548 = vunpack.c.l.s4 1983009808
  %v549 = vunpack.c.0.s8 %v548
  %v550 = vlaneseq
  %v551 = vshrl.u32 %v550, 7
  %v552 = vsub.s32 %v549, %v551
  %v553 = vrot.slane %v14, %v552
  %v555 = vunpack.c.l.s4 1983009808
  %v556 = vunpack.c.0.s8 %v555
  %v557 = vlaneseq
  %v558 = vshrl.u32 %v557, 7
  %v559 = vsub.s32 %v556, %v558
  %v560 = vrot.slane %v546, %v559
  %v561 = vcombine.high %v553, %v553
  %v562 = vcombine.high %v560, %v560
  %v563 = vcombine.high %v15, %v15
  %v565 = vunpack.c.l.s4 1983009808
  %v566 = vunpack.c.0.s8 %v565
  %v567 = vlaneseq
  %v568 = vshrl.u32 %v567, 7
  %v569 = vsub.s32 %v566, %v568
  %v570 = vrot.slane %v15, %v569
  %v572 = vunpack.c.l.s4 1983009808
  %v573 = vunpack.c.0.s8 %v572
  %v574 = vlaneseq
  %v575 = vshrl.u32 %v574, 7
  %v576 = vsub.s32 %v573, %v575
  %v577 = vrot.slane %v563, %v576
  %v578 = vcombine.high %v570, %v570
  %v579 = vcombine.high %v577, %v577
  %v580 = vcombine.high %v16, %v16
  %v582 = vunpack.c.l.s4 1983009808
  %v583 = vunpack.c.0.s8 %v582
  %v584 = vlaneseq
  %v585 = vshrl.u32 %v584, 7
  %v586 = vsub.s32 %v583, %v585
  %v587 = vrot.slane %v16, %v586
  %v589 = vunpack.c.l.s4 1983009808
  %v590 = vunpack.c.0.s8 %v589
  %v591 = vlaneseq
  %v592 = vshrl.u32 %v591, 7
  %v593 = vsub.s32 %v590, %v592
  %v594 = vrot.slane %v580, %v593
  %v595 = vcombine.high %v587, %v587
  %v596 = vcombine.high %v594, %v594
  %v597 = vcombine.high %v17, %v17
  %v599 = vunpack.c.l.s4 1983009808
  %v600 = vunpack.c.0.s8 %v599
  %v601 = vlaneseq
  %v602 = vshrl.u32 %v601, 7
  %v603 = vsub.s32 %v600, %v602
  %v604 = vrot.slane %v17, %v603
  %v606 = vunpack.c.l.s4 1983009808
  %v607 = vunpack.c.0.s8 %v606
  %v608 = vlaneseq
  %v609 = vshrl.u32 %v608, 7
  %v610 = vsub.s32 %v607, %v609
  %v611 = vrot.slane %v597, %v610
  %v612 = vcombine.high %v604, %v604
  %v613 = vcombine.high %v611, %v611
  %630 = vmatprep.subr.mxu0 %v19
  %631 = vmatpush1.msra.mxu0 %v18
  %632 = vmatprep.subr.mxu0 %v21
  %633 = vmatpush1.msra.mxu0 %v20
  %634 = vmatprep.subr.mxu0 %v23
  %635 = vmatpush1.msra.mxu0 %v22
  %636 = vmatprep.subr.mxu0 %v25
  %637 = vmatpush1.msra.mxu0 %v24
  %638 = vmatprep.subr.mxu0 %v27
  %639 = vmatpush1.msra.mxu0 %v26
  %640 = vmatprep.subr.mxu0 %v29
  %641 = vmatpush1.msra.mxu0 %v28
  %642 = vmatprep.subr.mxu0 %v31
  %643 = vmatpush1.msra.mxu0 %v30
  %644 = vmatprep.subr.mxu0 %v33
  %645 = vmatpush1.msra.mxu0 %v32
  %646 = vmatprep.subr.mxu0 %v35
  %647 = vmatpush1.msra.mxu0 %v34
  %648 = vmatprep.subr.mxu0 %v37
  %649 = vmatpush1.msra.mxu0 %v36
  %650 = vmatprep.subr.mxu0 %v39
  %651 = vmatpush1.msra.mxu0 %v38
  %652 = vmatprep.subr.mxu0 %v41
  %653 = vmatpush1.msra.mxu0 %v40
  %654 = vmatprep.subr.mxu0 %v43
  %655 = vmatpush1.msra.mxu0 %v42
  %656 = vmatprep.subr.mxu0 %v45
  %657 = vmatpush1.msra.mxu0 %v44
  %658 = vmatprep.subr.mxu0 %v47
  %659 = vmatpush1.msra.mxu0 %v46
  %660 = vmatprep.subr.mxu0 %v49
  %661 = vmatpush1.msra.mxu0 %v48
  %662 = vmatprep.subr.mxu0 %v51
  %663 = vmatpush1.msra.mxu0 %v50
  %664 = vmatprep.subr.mxu0 %v53
  %665 = vmatpush1.msra.mxu0 %v52
  %666 = vmatprep.subr.mxu0 %v55
  %667 = vmatpush1.msra.mxu0 %v54
  %668 = vmatprep.subr.mxu0 %v57
  %669 = vmatpush1.msra.mxu0 %v56
  %670 = vmatprep.subr.mxu0 %v59
  %671 = vmatpush1.msra.mxu0 %v58
  %672 = vmatprep.subr.mxu0 %v61
  %673 = vmatpush1.msra.mxu0 %v60
  %674 = vmatprep.subr.mxu0 %v63
  %675 = vmatpush1.msra.mxu0 %v62
  %676 = vmatprep.subr.mxu0 %v65
  %677 = vmatpush1.msra.mxu0 %v64
  %678 = vmatprep.subr.mxu0 %v67
  %679 = vmatpush1.msra.mxu0 %v66
  %680 = vmatprep.subr.mxu0 %v69
  %681 = vmatpush1.msra.mxu0 %v68
  %682 = vmatprep.subr.mxu0 %v71
  %683 = vmatpush1.msra.mxu0 %v70
  %684 = vmatprep.subr.mxu0 %v73
  %685 = vmatpush1.msra.mxu0 %v72
  %686 = vmatprep.subr.mxu0 %v75
  %687 = vmatpush1.msra.mxu0 %v74
  %688 = vmatprep.subr.mxu0 %v77
  %689 = vmatpush1.msra.mxu0 %v76
  %690 = vmatprep.subr.mxu0 %v79
  %691 = vmatpush1.msra.mxu0 %v78
  %692 = vmatprep.subr.mxu0 %v81
  %693 = vmatpush1.msra.mxu0 %v80
  %694 = vmatprep.mubr.f32.mxu0 %v561
  %695 = vmatmul.mubr.f32.gmra.mrb[0].mxu0 %v553
  %v696 = vpop.f32.mrb[0].mxu0
  %v697 = vadd.f32 %v535, %v696
  %v698 = vpop.f32.mrb[0].mxu0
  %v699 = vadd.f32 %v539, %v698
  %700 = vdwg.mxu0
  %701 = vmatprep.subr.mxu0 %v83
  %702 = vmatpush1.msra.mxu0 %v82
  %703 = vmatprep.subr.mxu0 %v85
  %704 = vmatpush1.msra.mxu0 %v84
  %705 = vmatprep.subr.mxu0 %v87
  %706 = vmatpush1.msra.mxu0 %v86
  %707 = vmatprep.subr.mxu0 %v89
  %708 = vmatpush1.msra.mxu0 %v88
  %709 = vmatprep.subr.mxu0 %v91
  %710 = vmatpush1.msra.mxu0 %v90
  %711 = vmatprep.subr.mxu0 %v93
  %712 = vmatpush1.msra.mxu0 %v92
  %713 = vmatprep.subr.mxu0 %v95
  %714 = vmatpush1.msra.mxu0 %v94
  %715 = vmatprep.subr.mxu0 %v97
  %716 = vmatpush1.msra.mxu0 %v96
  %717 = vmatprep.subr.mxu0 %v99
  %718 = vmatpush1.msra.mxu0 %v98
  %719 = vmatprep.subr.mxu0 %v101
  %720 = vmatpush1.msra.mxu0 %v100
  %721 = vmatprep.subr.mxu0 %v103
  %722 = vmatpush1.msra.mxu0 %v102
  %723 = vmatprep.subr.mxu0 %v105
  %724 = vmatpush1.msra.mxu0 %v104
  %725 = vmatprep.subr.mxu0 %v107
  %726 = vmatpush1.msra.mxu0 %v106
  %727 = vmatprep.subr.mxu0 %v109
  %728 = vmatpush1.msra.mxu0 %v108
  %729 = vmatprep.subr.mxu0 %v111
  %730 = vmatpush1.msra.mxu0 %v110
  %731 = vmatprep.subr.mxu0 %v113
  %732 = vmatpush1.msra.mxu0 %v112
  %733 = vmatprep.subr.mxu0 %v115
  %734 = vmatpush1.msra.mxu0 %v114
  %735 = vmatprep.subr.mxu0 %v117
  %736 = vmatpush1.msra.mxu0 %v116
  %737 = vmatprep.subr.mxu0 %v119
  %738 = vmatpush1.msra.mxu0 %v118
  %739 = vmatprep.subr.mxu0 %v121
  %740 = vmatpush1.msra.mxu0 %v120
  %741 = vmatprep.subr.mxu0 %v123
  %742 = vmatpush1.msra.mxu0 %v122
  %743 = vmatprep.subr.mxu0 %v125
  %744 = vmatpush1.msra.mxu0 %v124
  %745 = vmatprep.subr.mxu0 %v127
  %746 = vmatpush1.msra.mxu0 %v126
  %747 = vmatprep.subr.mxu0 %v129
  %748 = vmatpush1.msra.mxu0 %v128
  %749 = vmatprep.subr.mxu0 %v131
  %750 = vmatpush1.msra.mxu0 %v130
  %751 = vmatprep.subr.mxu0 %v133
  %752 = vmatpush1.msra.mxu0 %v132
  %753 = vmatprep.subr.mxu0 %v135
  %754 = vmatpush1.msra.mxu0 %v134
  %755 = vmatprep.subr.mxu0 %v137
  %756 = vmatpush1.msra.mxu0 %v136
  %757 = vmatprep.subr.mxu0 %v139
  %758 = vmatpush1.msra.mxu0 %v138
  %759 = vmatprep.subr.mxu0 %v141
  %760 = vmatpush1.msra.mxu0 %v140
  %761 = vmatprep.subr.mxu0 %v143
  %762 = vmatpush1.msra.mxu0 %v142
  %763 = vmatprep.subr.mxu0 %v145
  %764 = vmatpush1.msra.mxu0 %v144
  %765 = vmatprep.mubr.f32.mxu0 %v562
  %766 = vmatmul.mubr.f32.gmra.mrb[0].mxu0 %v560
  %v767 = vpop.f32.mrb[0].mxu0
  %v768 = vadd.f32 %v697, %v767
  %v769 = vpop.f32.mrb[0].mxu0
  %v770 = vadd.f32 %v699, %v769
  %771 = vdwg.mxu0
  %772 = vmatprep.subr.mxu0 %v147
  %773 = vmatpush1.msra.mxu0 %v146
  %774 = vmatprep.subr.mxu0 %v149
  %775 = vmatpush1.msra.mxu0 %v148
  %776 = vmatprep.subr.mxu0 %v151
  %777 = vmatpush1.msra.mxu0 %v150
  %778 = vmatprep.subr.mxu0 %v153
  %779 = vmatpush1.msra.mxu0 %v152
  %780 = vmatprep.subr.mxu0 %v155
  %781 = vmatpush1.msra.mxu0 %v154
  %782 = vmatprep.subr.mxu0 %v157
  %783 = vmatpush1.msra.mxu0 %v156
  %784 = vmatprep.subr.mxu0 %v159
  %785 = vmatpush1.msra.mxu0 %v158
  %786 = vmatprep.subr.mxu0 %v161
  %787 = vmatpush1.msra.mxu0 %v160
  %788 = vmatprep.subr.mxu0 %v163
  %789 = vmatpush1.msra.mxu0 %v162
  %790 = vmatprep.subr.mxu0 %v165
  %791 = vmatpush1.msra.mxu0 %v164
  %792 = vmatprep.subr.mxu0 %v167
  %793 = vmatpush1.msra.mxu0 %v166
  %794 = vmatprep.subr.mxu0 %v169
  %795 = vmatpush1.msra.mxu0 %v168
  %796 = vmatprep.subr.mxu0 %v171
  %797 = vmatpush1.msra.mxu0 %v170
  %798 = vmatprep.subr.mxu0 %v173
  %799 = vmatpush1.msra.mxu0 %v172
  %800 = vmatprep.subr.mxu0 %v175
  %801 = vmatpush1.msra.mxu0 %v174
  %802 = vmatprep.subr.mxu0 %v177
  %803 = vmatpush1.msra.mxu0 %v176
  %804 = vmatprep.subr.mxu0 %v179
  %805 = vmatpush1.msra.mxu0 %v178
  %806 = vmatprep.subr.mxu0 %v181
  %807 = vmatpush1.msra.mxu0 %v180
  %808 = vmatprep.subr.mxu0 %v183
  %809 = vmatpush1.msra.mxu0 %v182
  %810 = vmatprep.subr.mxu0 %v185
  %811 = vmatpush1.msra.mxu0 %v184
  %812 = vmatprep.subr.mxu0 %v187
  %813 = vmatpush1.msra.mxu0 %v186
  %814 = vmatprep.subr.mxu0 %v189
  %815 = vmatpush1.msra.mxu0 %v188
  %816 = vmatprep.subr.mxu0 %v191
  %817 = vmatpush1.msra.mxu0 %v190
  %818 = vmatprep.subr.mxu0 %v193
  %819 = vmatpush1.msra.mxu0 %v192
  %820 = vmatprep.subr.mxu0 %v195
  %821 = vmatpush1.msra.mxu0 %v194
  %822 = vmatprep.subr.mxu0 %v197
  %823 = vmatpush1.msra.mxu0 %v196
  %824 = vmatprep.subr.mxu0 %v199
  %825 = vmatpush1.msra.mxu0 %v198
  %826 = vmatprep.subr.mxu0 %v201
  %827 = vmatpush1.msra.mxu0 %v200
  %828 = vmatprep.subr.mxu0 %v203
  %829 = vmatpush1.msra.mxu0 %v202
  %830 = vmatprep.subr.mxu0 %v205
  %831 = vmatpush1.msra.mxu0 %v204
  %832 = vmatprep.subr.mxu0 %v207
  %833 = vmatpush1.msra.mxu0 %v206
  %834 = vmatprep.subr.mxu0 %v209
  %835 = vmatpush1.msra.mxu0 %v208
  %836 = vmatprep.mubr.f32.mxu0 %v578
  %837 = vmatmul.mubr.f32.gmra.mrb[0].mxu0 %v570
  %v838 = vpop.f32.mrb[0].mxu0
  %v839 = vadd.f32 %v768, %v838
  %v840 = vpop.f32.mrb[0].mxu0
  %v841 = vadd.f32 %v770, %v840
  %842 = vdwg.mxu0
  %843 = vmatprep.subr.mxu0 %v211
  %844 = vmatpush1.msra.mxu0 %v210
  %845 = vmatprep.subr.mxu0 %v213
  %846 = vmatpush1.msra.mxu0 %v212
  %847 = vmatprep.subr.mxu0 %v215
  %848 = vmatpush1.msra.mxu0 %v214
  %849 = vmatprep.subr.mxu0 %v217
  %850 = vmatpush1.msra.mxu0 %v216
  %851 = vmatprep.subr.mxu0 %v219
  %852 = vmatpush1.msra.mxu0 %v218
  %853 = vmatprep.subr.mxu0 %v221
  %854 = vmatpush1.msra.mxu0 %v220
  %855 = vmatprep.subr.mxu0 %v223
  %856 = vmatpush1.msra.mxu0 %v222
  %857 = vmatprep.subr.mxu0 %v225
  %858 = vmatpush1.msra.mxu0 %v224
  %859 = vmatprep.subr.mxu0 %v227
  %860 = vmatpush1.msra.mxu0 %v226
  %861 = vmatprep.subr.mxu0 %v229
  %862 = vmatpush1.msra.mxu0 %v228
  %863 = vmatprep.subr.mxu0 %v231
  %864 = vmatpush1.msra.mxu0 %v230
  %865 = vmatprep.subr.mxu0 %v233
  %866 = vmatpush1.msra.mxu0 %v232
  %867 = vmatprep.subr.mxu0 %v235
  %868 = vmatpush1.msra.mxu0 %v234
  %869 = vmatprep.subr.mxu0 %v237
  %870 = vmatpush1.msra.mxu0 %v236
  %871 = vmatprep.subr.mxu0 %v239
  %872 = vmatpush1.msra.mxu0 %v238
  %873 = vmatprep.subr.mxu0 %v241
  %874 = vmatpush1.msra.mxu0 %v240
  %875 = vmatprep.subr.mxu0 %v243
  %876 = vmatpush1.msra.mxu0 %v242
  %877 = vmatprep.subr.mxu0 %v245
  %878 = vmatpush1.msra.mxu0 %v244
  %879 = vmatprep.subr.mxu0 %v247
  %880 = vmatpush1.msra.mxu0 %v246
  %881 = vmatprep.subr.mxu0 %v249
  %882 = vmatpush1.msra.mxu0 %v248
  %883 = vmatprep.subr.mxu0 %v251
  %884 = vmatpush1.msra.mxu0 %v250
  %885 = vmatprep.subr.mxu0 %v253
  %886 = vmatpush1.msra.mxu0 %v252
  %887 = vmatprep.subr.mxu0 %v255
  %888 = vmatpush1.msra.mxu0 %v254
  %889 = vmatprep.subr.mxu0 %v257
  %890 = vmatpush1.msra.mxu0 %v256
  %891 = vmatprep.subr.mxu0 %v259
  %892 = vmatpush1.msra.mxu0 %v258
  %893 = vmatprep.subr.mxu0 %v261
  %894 = vmatpush1.msra.mxu0 %v260
  %895 = vmatprep.subr.mxu0 %v263
  %896 = vmatpush1.msra.mxu0 %v262
  %897 = vmatprep.subr.mxu0 %v265
  %898 = vmatpush1.msra.mxu0 %v264
  %899 = vmatprep.subr.mxu0 %v267
  %900 = vmatpush1.msra.mxu0 %v266
  %901 = vmatprep.subr.mxu0 %v269
  %902 = vmatpush1.msra.mxu0 %v268
  %903 = vmatprep.subr.mxu0 %v271
  %904 = vmatpush1.msra.mxu0 %v270
  %905 = vmatprep.subr.mxu0 %v273
  %906 = vmatpush1.msra.mxu0 %v272
  %907 = vmatprep.mubr.f32.mxu0 %v579
  %908 = vmatmul.mubr.f32.gmra.mrb[0].mxu0 %v577
  %v909 = vpop.f32.mrb[0].mxu0
  %v910 = vadd.f32 %v839, %v909
  %v911 = vpop.f32.mrb[0].mxu0
  %v912 = vadd.f32 %v841, %v911
  %913 = vdwg.mxu0
  %914 = vmatprep.subr.mxu0 %v275
  %915 = vmatpush1.msra.mxu0 %v274
  %916 = vmatprep.subr.mxu0 %v277
  %917 = vmatpush1.msra.mxu0 %v276
  %918 = vmatprep.subr.mxu0 %v279
  %919 = vmatpush1.msra.mxu0 %v278
  %920 = vmatprep.subr.mxu0 %v281
  %921 = vmatpush1.msra.mxu0 %v280
  %922 = vmatprep.subr.mxu0 %v283
  %923 = vmatpush1.msra.mxu0 %v282
  %924 = vmatprep.subr.mxu0 %v285
  %925 = vmatpush1.msra.mxu0 %v284
  %926 = vmatprep.subr.mxu0 %v287
  %927 = vmatpush1.msra.mxu0 %v286
  %928 = vmatprep.subr.mxu0 %v289
  %929 = vmatpush1.msra.mxu0 %v288
  %930 = vmatprep.subr.mxu0 %v291
  %931 = vmatpush1.msra.mxu0 %v290
  %932 = vmatprep.subr.mxu0 %v293
  %933 = vmatpush1.msra.mxu0 %v292
  %934 = vmatprep.subr.mxu0 %v295
  %935 = vmatpush1.msra.mxu0 %v294
  %936 = vmatprep.subr.mxu0 %v297
  %937 = vmatpush1.msra.mxu0 %v296
  %938 = vmatprep.subr.mxu0 %v299
  %939 = vmatpush1.msra.mxu0 %v298
  %940 = vmatprep.subr.mxu0 %v301
  %941 = vmatpush1.msra.mxu0 %v300
  %942 = vmatprep.subr.mxu0 %v303
  %943 = vmatpush1.msra.mxu0 %v302
  %944 = vmatprep.subr.mxu0 %v305
  %945 = vmatpush1.msra.mxu0 %v304
  %946 = vmatprep.subr.mxu0 %v307
  %947 = vmatpush1.msra.mxu0 %v306
  %948 = vmatprep.subr.mxu0 %v309
  %949 = vmatpush1.msra.mxu0 %v308
  %950 = vmatprep.subr.mxu0 %v311
  %951 = vmatpush1.msra.mxu0 %v310
  %952 = vmatprep.subr.mxu0 %v313
  %953 = vmatpush1.msra.mxu0 %v312
  %954 = vmatprep.subr.mxu0 %v315
  %955 = vmatpush1.msra.mxu0 %v314
  %956 = vmatprep.subr.mxu0 %v317
  %957 = vmatpush1.msra.mxu0 %v316
  %958 = vmatprep.subr.mxu0 %v319
  %959 = vmatpush1.msra.mxu0 %v318
  %960 = vmatprep.subr.mxu0 %v321
  %961 = vmatpush1.msra.mxu0 %v320
  %962 = vmatprep.subr.mxu0 %v323
  %963 = vmatpush1.msra.mxu0 %v322
  %964 = vmatprep.subr.mxu0 %v325
  %965 = vmatpush1.msra.mxu0 %v324
  %966 = vmatprep.subr.mxu0 %v327
  %967 = vmatpush1.msra.mxu0 %v326
  %968 = vmatprep.subr.mxu0 %v329
  %969 = vmatpush1.msra.mxu0 %v328
  %970 = vmatprep.subr.mxu0 %v331
  %971 = vmatpush1.msra.mxu0 %v330
  %972 = vmatprep.subr.mxu0 %v333
  %973 = vmatpush1.msra.mxu0 %v332
  %974 = vmatprep.subr.mxu0 %v335
  %975 = vmatpush1.msra.mxu0 %v334
  %976 = vmatprep.subr.mxu0 %v337
  %977 = vmatpush1.msra.mxu0 %v336
  %978 = vmatprep.mubr.f32.mxu0 %v595
  %979 = vmatmul.mubr.f32.gmra.mrb[0].mxu0 %v587
  %v980 = vpop.f32.mrb[0].mxu0
  %v981 = vadd.f32 %v910, %v980
  %v982 = vpop.f32.mrb[0].mxu0
  %v983 = vadd.f32 %v912, %v982
  %984 = vdwg.mxu0
  %985 = vmatprep.subr.mxu0 %v339
  %986 = vmatpush1.msra.mxu0 %v338
  %987 = vmatprep.subr.mxu0 %v341
  %988 = vmatpush1.msra.mxu0 %v340
  %989 = vmatprep.subr.mxu0 %v343
  %990 = vmatpush1.msra.mxu0 %v342
  %991 = vmatprep.subr.mxu0 %v345
  %992 = vmatpush1.msra.mxu0 %v344
  %993 = vmatprep.subr.mxu0 %v347
  %994 = vmatpush1.msra.mxu0 %v346
  %995 = vmatprep.subr.mxu0 %v349
  %996 = vmatpush1.msra.mxu0 %v348
  %997 = vmatprep.subr.mxu0 %v351
  %998 = vmatpush1.msra.mxu0 %v350
  %999 = vmatprep.subr.mxu0 %v353
  %1000 = vmatpush1.msra.mxu0 %v352
  %1001 = vmatprep.subr.mxu0 %v355
  %1002 = vmatpush1.msra.mxu0 %v354
  %1003 = vmatprep.subr.mxu0 %v357
  %1004 = vmatpush1.msra.mxu0 %v356
  %1005 = vmatprep.subr.mxu0 %v359
  %1006 = vmatpush1.msra.mxu0 %v358
  %1007 = vmatprep.subr.mxu0 %v361
  %1008 = vmatpush1.msra.mxu0 %v360
  %1009 = vmatprep.subr.mxu0 %v363
  %1010 = vmatpush1.msra.mxu0 %v362
  %1011 = vmatprep.subr.mxu0 %v365
  %1012 = vmatpush1.msra.mxu0 %v364
  %1013 = vmatprep.subr.mxu0 %v367
  %1014 = vmatpush1.msra.mxu0 %v366
  %1015 = vmatprep.subr.mxu0 %v369
  %1016 = vmatpush1.msra.mxu0 %v368
  %1017 = vmatprep.subr.mxu0 %v371
  %1018 = vmatpush1.msra.mxu0 %v370
  %1019 = vmatprep.subr.mxu0 %v373
  %1020 = vmatpush1.msra.mxu0 %v372
  %1021 = vmatprep.subr.mxu0 %v375
  %1022 = vmatpush1.msra.mxu0 %v374
  %1023 = vmatprep.subr.mxu0 %v377
  %1024 = vmatpush1.msra.mxu0 %v376
  %1025 = vmatprep.subr.mxu0 %v379
  %1026 = vmatpush1.msra.mxu0 %v378
  %1027 = vmatprep.subr.mxu0 %v381
  %1028 = vmatpush1.msra.mxu0 %v380
  %1029 = vmatprep.subr.mxu0 %v383
  %1030 = vmatpush1.msra.mxu0 %v382
  %1031 = vmatprep.subr.mxu0 %v385
  %1032 = vmatpush1.msra.mxu0 %v384
  %1033 = vmatprep.subr.mxu0 %v387
  %1034 = vmatpush1.msra.mxu0 %v386
  %1035 = vmatprep.subr.mxu0 %v389
  %1036 = vmatpush1.msra.mxu0 %v388
  %1037 = vmatprep.subr.mxu0 %v391
  %1038 = vmatpush1.msra.mxu0 %v390
  %1039 = vmatprep.subr.mxu0 %v393
  %1040 = vmatpush1.msra.mxu0 %v392
  %1041 = vmatprep.subr.mxu0 %v395
  %1042 = vmatpush1.msra.mxu0 %v394
  %1043 = vmatprep.subr.mxu0 %v397
  %1044 = vmatpush1.msra.mxu0 %v396
  %1045 = vmatprep.subr.mxu0 %v399
  %1046 = vmatpush1.msra.mxu0 %v398
  %1047 = vmatprep.subr.mxu0 %v401
  %1048 = vmatpush1.msra.mxu0 %v400
  %1049 = vmatprep.mubr.f32.mxu0 %v596
  %1050 = vmatmul.mubr.f32.gmra.mrb[0].mxu0 %v594
  %v1051 = vpop.f32.mrb[0].mxu0
  %v1052 = vadd.f32 %v981, %v1051
  %v1053 = vpop.f32.mrb[0].mxu0
  %v1054 = vadd.f32 %v983, %v1053
  %1055 = vdwg.mxu0
  %1056 = vmatprep.subr.mxu0 %v403
  %1057 = vmatpush1.msra.mxu0 %v402
  %1058 = vmatprep.subr.mxu0 %v405
  %1059 = vmatpush1.msra.mxu0 %v404
  %1060 = vmatprep.subr.mxu0 %v407
  %1061 = vmatpush1.msra.mxu0 %v406
  %1062 = vmatprep.subr.mxu0 %v409
  %1063 = vmatpush1.msra.mxu0 %v408
  %1064 = vmatprep.subr.mxu0 %v411
  %1065 = vmatpush1.msra.mxu0 %v410
  %1066 = vmatprep.subr.mxu0 %v413
  %1067 = vmatpush1.msra.mxu0 %v412
  %1068 = vmatprep.subr.mxu0 %v415
  %1069 = vmatpush1.msra.mxu0 %v414
  %1070 = vmatprep.subr.mxu0 %v417
  %1071 = vmatpush1.msra.mxu0 %v416
  %1072 = vmatprep.subr.mxu0 %v419
  %1073 = vmatpush1.msra.mxu0 %v418
  %1074 = vmatprep.subr.mxu0 %v421
  %1075 = vmatpush1.msra.mxu0 %v420
  %1076 = vmatprep.subr.mxu0 %v423
  %1077 = vmatpush1.msra.mxu0 %v422
  %1078 = vmatprep.subr.mxu0 %v425
  %1079 = vmatpush1.msra.mxu0 %v424
  %1080 = vmatprep.subr.mxu0 %v427
  %1081 = vmatpush1.msra.mxu0 %v426
  %1082 = vmatprep.subr.mxu0 %v429
  %1083 = vmatpush1.msra.mxu0 %v428
  %1084 = vmatprep.subr.mxu0 %v431
  %1085 = vmatpush1.msra.mxu0 %v430
  %1086 = vmatprep.subr.mxu0 %v433
  %1087 = vmatpush1.msra.mxu0 %v432
  %1088 = vmatprep.subr.mxu0 %v435
  %1089 = vmatpush1.msra.mxu0 %v434
  %1090 = vmatprep.subr.mxu0 %v437
  %1091 = vmatpush1.msra.mxu0 %v436
  %1092 = vmatprep.subr.mxu0 %v439
  %1093 = vmatpush1.msra.mxu0 %v438
  %1094 = vmatprep.subr.mxu0 %v441
  %1095 = vmatpush1.msra.mxu0 %v440
  %1096 = vmatprep.subr.mxu0 %v443
  %1097 = vmatpush1.msra.mxu0 %v442
  %1098 = vmatprep.subr.mxu0 %v445
  %1099 = vmatpush1.msra.mxu0 %v444
  %1100 = vmatprep.subr.mxu0 %v447
  %1101 = vmatpush1.msra.mxu0 %v446
  %1102 = vmatprep.subr.mxu0 %v449
  %1103 = vmatpush1.msra.mxu0 %v448
  %1104 = vmatprep.subr.mxu0 %v451
  %1105 = vmatpush1.msra.mxu0 %v450
  %1106 = vmatprep.subr.mxu0 %v453
  %1107 = vmatpush1.msra.mxu0 %v452
  %1108 = vmatprep.subr.mxu0 %v455
  %1109 = vmatpush1.msra.mxu0 %v454
  %1110 = vmatprep.subr.mxu0 %v457
  %1111 = vmatpush1.msra.mxu0 %v456
  %1112 = vmatprep.subr.mxu0 %v459
  %1113 = vmatpush1.msra.mxu0 %v458
  %1114 = vmatprep.subr.mxu0 %v461
  %1115 = vmatpush1.msra.mxu0 %v460
  %1116 = vmatprep.subr.mxu0 %v463
  %1117 = vmatpush1.msra.mxu0 %v462
  %1118 = vmatprep.subr.mxu0 %v465
  %1119 = vmatpush1.msra.mxu0 %v464
  %1120 = vmatprep.mubr.f32.mxu0 %v612
  %1121 = vmatmul.mubr.f32.gmra.mrb[0].mxu0 %v604
  %v1122 = vpop.f32.mrb[0].mxu0
  %v1123 = vadd.f32 %v1052, %v1122
  %v1124 = vpop.f32.mrb[0].mxu0
  %v1125 = vadd.f32 %v1054, %v1124
  %1126 = vdwg.mxu0
  %1127 = vmatprep.subr.mxu0 %v467
  %1128 = vmatpush1.msra.mxu0 %v466
  %1129 = vmatprep.subr.mxu0 %v469
  %1130 = vmatpush1.msra.mxu0 %v468
  %1131 = vmatprep.subr.mxu0 %v471
  %1132 = vmatpush1.msra.mxu0 %v470
  %1133 = vmatprep.subr.mxu0 %v473
  %1134 = vmatpush1.msra.mxu0 %v472
  %1135 = vmatprep.subr.mxu0 %v475
  %1136 = vmatpush1.msra.mxu0 %v474
  %1137 = vmatprep.subr.mxu0 %v477
  %1138 = vmatpush1.msra.mxu0 %v476
  %1139 = vmatprep.subr.mxu0 %v479
  %1140 = vmatpush1.msra.mxu0 %v478
  %1141 = vmatprep.subr.mxu0 %v481
  %1142 = vmatpush1.msra.mxu0 %v480
  %1143 = vmatprep.subr.mxu0 %v483
  %1144 = vmatpush1.msra.mxu0 %v482
  %1145 = vmatprep.subr.mxu0 %v485
  %1146 = vmatpush1.msra.mxu0 %v484
  %1147 = vmatprep.subr.mxu0 %v487
  %1148 = vmatpush1.msra.mxu0 %v486
  %1149 = vmatprep.subr.mxu0 %v489
  %1150 = vmatpush1.msra.mxu0 %v488
  %1151 = vmatprep.subr.mxu0 %v491
  %1152 = vmatpush1.msra.mxu0 %v490
  %1153 = vmatprep.subr.mxu0 %v493
  %1154 = vmatpush1.msra.mxu0 %v492
  %1155 = vmatprep.subr.mxu0 %v495
  %1156 = vmatpush1.msra.mxu0 %v494
  %1157 = vmatprep.subr.mxu0 %v497
  %1158 = vmatpush1.msra.mxu0 %v496
  %1159 = vmatprep.subr.mxu0 %v499
  %1160 = vmatpush1.msra.mxu0 %v498
  %1161 = vmatprep.subr.mxu0 %v501
  %1162 = vmatpush1.msra.mxu0 %v500
  %1163 = vmatprep.subr.mxu0 %v503
  %1164 = vmatpush1.msra.mxu0 %v502
  %1165 = vmatprep.subr.mxu0 %v505
  %1166 = vmatpush1.msra.mxu0 %v504
  %1167 = vmatprep.subr.mxu0 %v507
  %1168 = vmatpush1.msra.mxu0 %v506
  %1169 = vmatprep.subr.mxu0 %v509
  %1170 = vmatpush1.msra.mxu0 %v508
  %1171 = vmatprep.subr.mxu0 %v511
  %1172 = vmatpush1.msra.mxu0 %v510
  %1173 = vmatprep.subr.mxu0 %v513
  %1174 = vmatpush1.msra.mxu0 %v512
  %1175 = vmatprep.subr.mxu0 %v515
  %1176 = vmatpush1.msra.mxu0 %v514
  %1177 = vmatprep.subr.mxu0 %v517
  %1178 = vmatpush1.msra.mxu0 %v516
  %1179 = vmatprep.subr.mxu0 %v519
  %1180 = vmatpush1.msra.mxu0 %v518
  %1181 = vmatprep.subr.mxu0 %v521
  %1182 = vmatpush1.msra.mxu0 %v520
  %1183 = vmatprep.subr.mxu0 %v523
  %1184 = vmatpush1.msra.mxu0 %v522
  %1185 = vmatprep.subr.mxu0 %v525
  %1186 = vmatpush1.msra.mxu0 %v524
  %1187 = vmatprep.subr.mxu0 %v527
  %1188 = vmatpush1.msra.mxu0 %v526
  %1189 = vmatprep.subr.mxu0 %v529
  %1190 = vmatpush1.msra.mxu0 %v528
  %1191 = vmatprep.mubr.f32.mxu0 %v613
  %1192 = vmatmul.mubr.f32.gmra.mrb[0].mxu0 %v611
  %v1193 = vpop.f32.mrb[0].mxu0
  %v1194 = vadd.f32 %v1123, %v1193
  %v1195 = vpop.f32.mrb[0].mxu0
  %v1196 = vadd.f32 %v1125, %v1195
  %1197 = vdwg.mxu0
  %vm1198 = vcmp.gt.f32.partialorder %v1194, 0.0
  %vm1199 = vcmp.gt.f32.partialorder %v1196, 0.0
  %v1200 = vmul.f32 %v1194, 0.1
  %v1201 = vmul.f32 %v1196, 0.1
  %v1202 = vsel %vm1198, %v1194, %v1200
  %v1203 = vsel %vm1199, %v1196, %v1201
  %v1206 = vcombine.low %v1202, %v1203
  %v1208 = vunpack.c.l.s4 1983009808
  %v1209 = vunpack.c.0.s8 %v1208
  %v1210 = vlaneseq
  %v1211 = vshrl.u32 %v1210, 7
  %v1212 = vsub.s32 %v1209, %v1211
  %v1213 = vrot.slane %v1206, %v1212
  %1215 = vst [vmem:[%s3] sm:$0xf] %v1213
  // Predicated region
  $region14: #{depth_encoder_forward_layered.9} parent=0 // pred_check
    _
  $region15: #{depth_encoder_forward_layered.9} parent=0 // pred_check_branch
    %1217 = sbr.rel (0) target = $region17
  $region16: #{depth_encoder_forward_layered.9} parent=0 // pred_region
    _
  $region17: #{depth_encoder_forward_layered.9} parent=0 // pred_fallthru
    _
  // Predicated region
  $region18: #{depth_encoder_forward_layered.9} parent=0 // pred_check
    _
  $region19: #{depth_encoder_forward_layered.9} parent=0 // pred_check_branch
    %1219 = sbr.rel (0) target = $region21
  $region20: #{depth_encoder_forward_layered.9} parent=0 // pred_region
    _
  $region21: #{depth_encoder_forward_layered.9} parent=0 // pred_fallthru
    _

</llo_original>
